<compile_context>
chip_gen: v5e
topology: v5e:2x2
jax: 0.10.0
libtpu: 0.0.40
codegen_flags: <defaults>
</compile_context>

<pallas_src>
import jax
import jax.numpy as jnp
from jax import lax
from jax.experimental import pallas as pl
from jax.experimental.pallas import tpu as pltpu

LANE = 128


def _round_up(x, m):
    return (x + m - 1) // m * m


def _pick_row_chunk(H, W, target_m=128):
    """Rows per chunk so the matmul M dim is ~target_m and the f32 accumulator
    (M x C) stays comfortably inside the 64-vreg register file."""
    th = max(1, min(H, max(1, target_m // max(W, 1))))
    while H % th:
        th -= 1
    return th


def double_conv_kernel(x_ref, w1_ref, s1_ref, b1_ref, w2_ref, s2_ref, b2_ref,
                       o_ref, xpad_ref, mid_ref):
    # x_ref   : (1, H, W, Cin)        un-padded NHWC input tile (bf16)
    # w*_ref  : (3, 3, Cin_p, Cout_p) conv weights, HWIO, channel-padded (bf16)
    # s*/b*   : (1, C_p)              folded BN scale / shift (f32)
    # o_ref   : (1, H, W, Cout_p)     output tile (bf16, lane-dense channels)
    # xpad_ref: (H+2, W+2, Cin_p)     zero-bordered staging scratch (bf16)
    # mid_ref : (H+2, W+2, Cmid_p)    zero-bordered intermediate scratch (bf16)
    H, W = o_ref.shape[1], o_ref.shape[2]
    Cin = x_ref.shape[3]
    Cin_p = xpad_ref.shape[2]
    Cmid_p = mid_ref.shape[2]
    Cout_p = o_ref.shape[3]

    TH = _pick_row_chunk(H, W)

    # --- Stage input: one full unmasked zero store establishes the 1-pixel halo
    #     and the zero lane padding, then the real channels are written into the
    #     interior.  Channel padding happens here in VMEM, never in HBM.
    xpad_ref[...] = jnp.zeros_like(xpad_ref)
    xpad_ref[1:H + 1, 1:W + 1, 0:Cin] = x_ref[0].astype(xpad_ref.dtype)

    # Zero-borders (and zero lane padding) for the intermediate activation.
    mid_ref[...] = jnp.zeros_like(mid_ref)

    def conv3x3_bn_relu(src_ref, w_ref, scale, shift, cin, cout, store):
        # 3x3 / pad=1 conv as 9 MXU matmuls with K = cin (no im2col copy).
        # Accumulation stays in vregs per row-chunk; BN + ReLU fused per chunk.
        for r0 in range(0, H, TH):
            acc = jnp.zeros((TH * W, cout), jnp.float32)
            for dy in range(3):
                for dx in range(3):
                    lhs = src_ref[dy + r0: dy + r0 + TH, dx: dx + W, :]
                    lhs = lhs.reshape(TH * W, cin)          # free relabel (W%8==0)
                    acc = acc + jnp.dot(lhs, w_ref[dy, dx],
                                        preferred_element_type=jnp.float32)
            y = jnp.maximum(acc * scale + shift, 0.0)       # folded BN + ReLU (f32)
            store(r0, y)

    # conv1 -> BN -> ReLU, store bf16 into the zero-bordered mid scratch.
    s1 = s1_ref[...]
    b1 = b1_ref[...]

    def store_mid(r0, y):
        mid_ref[r0 + 1: r0 + TH + 1, 1:W + 1, :] = (
            y.reshape(TH, W, Cmid_p).astype(mid_ref.dtype))

    conv3x3_bn_relu(xpad_ref, w1_ref, s1, b1, Cin_p, Cmid_p, store_mid)

    # conv2 -> BN -> ReLU, lane-dense bf16 output store.
    s2 = s2_ref[...]
    b2 = b2_ref[...]

    def store_out(r0, y):
        o_ref[0:1, r0: r0 + TH, :, :] = (
            y.reshape(1, TH, W, Cout_p).astype(o_ref.dtype))

    conv3x3_bn_relu(mid_ref, w2_ref, s2, b2, Cmid_p, Cout_p, store_out)


def _vmem_limit_bytes(block_bytes):
    """Per-generation VMEM limit: actual footprint + headroom, capped at 3/4 of
    the queried capacity (128 MiB on v5e/v6e, 64 MiB per-core on v7x)."""
    cap = None
    try:
        cap = getattr(pltpu.get_tpu_info(), "vmem_capacity_bytes", None)
    except Exception:
        cap = None
    if not cap:
        cap = 64 * 1024 * 1024  # conservative (v7x per-core)
    want = int(block_bytes) + (16 << 20)
    return int(max(32 << 20, min(want, (cap * 3) // 4)))


def double_conv(x_nchw, w1, g1, b1, m1, v1, w2, g2, b2, m2, v2, eps=1e-5,
                to_nchw_f32=True):
    """x_nchw: (N, Cin, H, W); conv weights in PyTorch OIHW layout (no bias);
    BatchNorm in inference mode (running stats).  Set to_nchw_f32=False to get
    the kernel's native lane-padded bf16 NHWC output (saves two HBM passes when
    the consumer is another NHWC kernel)."""
    N, Cin, H, W = x_nchw.shape
    Cmid = w1.shape[0]
    Cout = w2.shape[0]

    Cin_p = _round_up(Cin, LANE)
    Cmid_p = _round_up(Cmid, LANE)
    Cout_p = _round_up(Cout, LANE)

    # NCHW -> NHWC, bf16 for the MXU.  No channel padding in HBM (done in VMEM).
    x_nhwc = jnp.transpose(x_nchw, (0, 2, 3, 1)).astype(jnp.bfloat16)

    # OIHW -> HWIO + channel pad: (3, 3, Ci_p, Co_p), so w[dy, dx] is (Ci_p, Co_p).
    def prep_w(w, ci_p, co_p):
        hwio = jnp.transpose(w, (2, 3, 1, 0)).astype(jnp.bfloat16)
        ci, co = hwio.shape[2], hwio.shape[3]
        return jnp.pad(hwio, ((0, 0), (0, 0), (0, ci_p - ci), (0, co_p - co)))

    w1_k = prep_w(w1, Cin_p, Cmid_p)
    w2_k = prep_w(w2, Cmid_p, Cout_p)

    # Fold BN (inference): y = conv * scale + shift (f32, zero in the padding).
    def fold_bn(g, b, m, v, c_p):
        inv = (g / jnp.sqrt(v + eps)).astype(jnp.float32)
        sh = (b - m * inv).astype(jnp.float32)
        c = inv.shape[0]
        return (jnp.pad(inv, (0, c_p - c)).reshape(1, c_p),
                jnp.pad(sh, (0, c_p - c)).reshape(1, c_p))

    s1, sh1 = fold_bn(g1, b1, m1, v1, Cmid_p)
    s2, sh2 = fold_bn(g2, b2, m2, v2, Cout_p)

    # Per-step VMEM footprint (scratches + double-buffered I/O / weights / BN).
    scratch_bytes = (H + 2) * (W + 2) * (Cin_p + Cmid_p) * 2
    io_bytes = H * W * (Cin + Cout_p) * 2
    w_bytes = 9 * (Cin_p * Cmid_p + Cmid_p * Cout_p) * 2
    bn_bytes = 2 * (Cmid_p + Cout_p) * 4
    block_bytes = scratch_bytes + 2 * (io_bytes + w_bytes + bn_bytes)

    out_nhwc = pl.pallas_call(
        double_conv_kernel,
        out_shape=jax.ShapeDtypeStruct((N, H, W, Cout_p), jnp.bfloat16),
        grid_spec=pltpu.PrefetchScalarGridSpec(
            num_scalar_prefetch=0,
            grid=(N,),
            in_specs=[
                pl.BlockSpec((1, H, W, Cin), lambda n: (n, 0, 0, 0)),
                pl.BlockSpec((3, 3, Cin_p, Cmid_p), lambda n: (0, 0, 0, 0)),
                pl.BlockSpec((1, Cmid_p), lambda n: (0, 0)),
                pl.BlockSpec((1, Cmid_p), lambda n: (0, 0)),
                pl.BlockSpec((3, 3, Cmid_p, Cout_p), lambda n: (0, 0, 0, 0)),
                pl.BlockSpec((1, Cout_p), lambda n: (0, 0)),
                pl.BlockSpec((1, Cout_p), lambda n: (0, 0)),
            ],
            out_specs=pl.BlockSpec((1, H, W, Cout_p), lambda n: (n, 0, 0, 0)),
            scratch_shapes=[
                pltpu.VMEM((H + 2, W + 2, Cin_p), jnp.bfloat16),
                pltpu.VMEM((H + 2, W + 2, Cmid_p), jnp.bfloat16),
            ],
        ),
        compiler_params=pltpu.CompilerParams(
            dimension_semantics=("parallel",),
            vmem_limit_bytes=_vmem_limit_bytes(block_bytes),
        ),
    )(x_nhwc, w1_k, s1, sh1, w2_k, s2, sh2)

    if not to_nchw_f32:
        return out_nhwc[..., :Cout]
    # PyTorch interface parity: drop channel padding, back to NCHW f32.
    return jnp.transpose(out_nhwc[..., :Cout], (0, 3, 1, 2)).astype(jnp.float32)


def double_conv_reference(x_nchw, w1, g1, b1, m1, v1, w2, g2, b2, m2, v2,
                          eps=1e-5):
    """Pure-JAX reference (lax conv, NCHW) with inference-mode BN.  Conv inputs
    are rounded to bf16 (the kernel feeds the MXU bf16 operands with f32
    accumulation), so both paths do the same math up to summation order and the
    kernel's final bf16 output rounding."""
    def q(a):
        return a.astype(jnp.bfloat16).astype(jnp.float32)

    def bn_relu(y, g, b, m, v):
        g = g[None, :, None, None]
        b = b[None, :, None, None]
        m = m[None, :, None, None]
        v = v[None, :, None, None]
        return jnp.maximum((y - m) / jnp.sqrt(v + eps) * g + b, 0.0)

    dn = ('NCHW', 'OIHW', 'NCHW')
    y = lax.conv_general_dilated(q(x_nchw), q(w1), (1, 1), 'SAME',
                                 dimension_numbers=dn,
                                 precision=lax.Precision.HIGHEST)
    y = bn_relu(y, g1, b1, m1, v1)
    y = lax.conv_general_dilated(q(y), q(w2), (1, 1), 'SAME',
                                 dimension_numbers=dn,
                                 precision=lax.Precision.HIGHEST)
    y = bn_relu(y, g2, b2, m2, v2)
    return y


if __name__ == "__main__":
    # Small shapes consistent with the module: DoubleConv(in=4, out=8)
    N, Cin, H, W = 2, 4, 16, 16
    Cmid = 8   # mid_channels defaults to out_channels
    Cout = 8

    key = jax.random.PRNGKey(0)
    ks = jax.random.split(key, 11)

    x = jax.random.normal(ks[0], (N, Cin, H, W), dtype=jnp.float32)

    # Conv weights (PyTorch OIHW), no bias
    w1 = jax.random.normal(ks[1], (Cmid, Cin, 3, 3), dtype=jnp.float32) * 0.1
    w2 = jax.random.normal(ks[2], (Cout, Cmid, 3, 3), dtype=jnp.float32) * 0.1

    # BatchNorm params (gamma, beta, running_mean, running_var)
    g1 = 1.0 + 0.1 * jax.random.normal(ks[3], (Cmid,), dtype=jnp.float32)
    b1 = 0.1 * jax.random.normal(ks[4], (Cmid,), dtype=jnp.float32)
    m1 = 0.1 * jax.random.normal(ks[5], (Cmid,), dtype=jnp.float32)
    v1 = jnp.abs(jax.random.normal(ks[6], (Cmid,), dtype=jnp.float32)) + 0.5

    g2 = 1.0 + 0.1 * jax.random.normal(ks[7], (Cout,), dtype=jnp.float32)
    b2 = 0.1 * jax.random.normal(ks[8], (Cout,), dtype=jnp.float32)
    m2 = 0.1 * jax.random.normal(ks[9], (Cout,), dtype=jnp.float32)
    v2 = jnp.abs(jax.random.normal(ks[10], (Cout,), dtype=jnp.float32)) + 0.5

    out = double_conv(x, w1, g1, b1, m1, v1, w2, g2, b2, m2, v2)
    out = jax.block_until_ready(out)

    ref = double_conv_reference(x, w1, g1, b1, m1, v1, w2, g2, b2, m2, v2)
    ref = jax.block_until_ready(ref)

    assert out.shape == (N, Cout, H, W), out.shape
    max_err = float(jnp.max(jnp.abs(out - ref)))
    # Kernel output is bf16 (review item: halve HBM writeback) -> looser tolerance.
    assert jnp.allclose(out, ref, atol=2e-2, rtol=2e-2), max_err

    print("KERNEL_OK")
</pallas_src>

<mosaic_0001>
module attributes {stable_mosaic.version = 11 : i64} {
  func.func @double_conv_kernel(%arg0: i32, %arg1: memref<1x16x16x4xbf16, #tpu.memory_space<vmem>>, %arg2: memref<3x3x128x128xbf16, #tpu.memory_space<vmem>>, %arg3: memref<1x128xf32, #tpu.memory_space<vmem>>, %arg4: memref<1x128xf32, #tpu.memory_space<vmem>>, %arg5: memref<3x3x128x128xbf16, #tpu.memory_space<vmem>>, %arg6: memref<1x128xf32, #tpu.memory_space<vmem>>, %arg7: memref<1x128xf32, #tpu.memory_space<vmem>>, %arg8: memref<1x16x16x128xbf16, #tpu.memory_space<vmem>>, %arg9: memref<18x18x128xbf16, #tpu.memory_space<vmem>>, %arg10: memref<18x18x128xbf16, #tpu.memory_space<vmem>>) attributes {dimension_semantics = [#tpu.dimension_semantics<parallel>], iteration_bounds = array<i64: 2>, scalar_prefetch = 0 : i64, scratch_operands = 2 : i64, tpu.core_type = #tpu.core_type<tc>, window_params = [{transform_indices = @transform_0, window_bounds = array<i64: 1, 16, 16, 4>}, {pipeline_mode = #tpu.pipeline_mode<synchronous>, transform_indices = @transform_1, window_bounds = array<i64: 3, 3, 128, 128>}, {pipeline_mode = #tpu.pipeline_mode<synchronous>, transform_indices = @transform_2, window_bounds = array<i64: 1, 128>}, {pipeline_mode = #tpu.pipeline_mode<synchronous>, transform_indices = @transform_3, window_bounds = array<i64: 1, 128>}, {pipeline_mode = #tpu.pipeline_mode<synchronous>, transform_indices = @transform_4, window_bounds = array<i64: 3, 3, 128, 128>}, {pipeline_mode = #tpu.pipeline_mode<synchronous>, transform_indices = @transform_5, window_bounds = array<i64: 1, 128>}, {pipeline_mode = #tpu.pipeline_mode<synchronous>, transform_indices = @transform_6, window_bounds = array<i64: 1, 128>}, {transform_indices = @transform_7, window_bounds = array<i64: 1, 16, 16, 128>}]} {
    %cst = arith.constant 0.000000e+00 : bf16
    %0 = vector.broadcast %cst : bf16 to vector<18x18x128xbf16>
    %c0 = arith.constant 0 : index
    %c0_0 = arith.constant 0 : index
    %c0_1 = arith.constant 0 : index
    %1 = vector.load %arg9[%c0, %c0_0, %c0_1] : memref<18x18x128xbf16, #tpu.memory_space<vmem>>, vector<18x18x128xbf16>
    tpu.vector_store %arg9[%c0, %c0_0, %c0_1], %0 {strides = array<i32>} : memref<18x18x128xbf16, #tpu.memory_space<vmem>>, vector<18x18x128xbf16>,
    %c0_2 = arith.constant 0 : index
    %c0_3 = arith.constant 0 : index
    %c0_4 = arith.constant 0 : index
    %c0_5 = arith.constant 0 : index
    %2 = vector.load %arg1[%c0_2, %c0_3, %c0_4, %c0_5] : memref<1x16x16x4xbf16, #tpu.memory_space<vmem>>, vector<1x16x16x4xbf16>
    %3 = vector.shape_cast %2 : vector<1x16x16x4xbf16> to vector<16x16x4xbf16>
    %c1 = arith.constant 1 : index
    %c1_6 = arith.constant 1 : index
    %c0_7 = arith.constant 0 : index
    %4 = vector.load %arg9[%c1, %c1_6, %c0_7] : memref<18x18x128xbf16, #tpu.memory_space<vmem>>, vector<16x16x4xbf16>
    tpu.vector_store %arg9[%c1, %c1_6, %c0_7], %3 {strides = array<i32>} : memref<18x18x128xbf16, #tpu.memory_space<vmem>>, vector<16x16x4xbf16>,
    %cst_8 = arith.constant 0.000000e+00 : bf16
    %5 = vector.broadcast %cst_8 : bf16 to vector<18x18x128xbf16>
    %c0_9 = arith.constant 0 : index
    %c0_10 = arith.constant 0 : index
    %c0_11 = arith.constant 0 : index
    %6 = vector.load %arg10[%c0_9, %c0_10, %c0_11] : memref<18x18x128xbf16, #tpu.memory_space<vmem>>, vector<18x18x128xbf16>
    tpu.vector_store %arg10[%c0_9, %c0_10, %c0_11], %5 {strides = array<i32>} : memref<18x18x128xbf16, #tpu.memory_space<vmem>>, vector<18x18x128xbf16>,
    %c0_12 = arith.constant 0 : index
    %c0_13 = arith.constant 0 : index
    %7 = vector.load %arg3[%c0_12, %c0_13] : memref<1x128xf32, #tpu.memory_space<vmem>>, vector<1x128xf32>
    %c0_14 = arith.constant 0 : index
    %c0_15 = arith.constant 0 : index
    %8 = vector.load %arg4[%c0_14, %c0_15] : memref<1x128xf32, #tpu.memory_space<vmem>>, vector<1x128xf32>
    %cst_16 = arith.constant 0.000000e+00 : f32
    %9 = vector.broadcast %cst_16 : f32 to vector<128x128xf32>
    %c0_17 = arith.constant 0 : index
    %c0_18 = arith.constant 0 : index
    %c0_19 = arith.constant 0 : index
    %10 = vector.load %arg9[%c0_17, %c0_18, %c0_19] : memref<18x18x128xbf16, #tpu.memory_space<vmem>>, vector<8x16x128xbf16>
    %11 = vector.shape_cast %10 : vector<8x16x128xbf16> to vector<128x128xbf16>
    %c0_20 = arith.constant 0 : index
    %c0_21 = arith.constant 0 : index
    %c0_22 = arith.constant 0 : index
    %c0_23 = arith.constant 0 : index
    %12 = vector.load %arg2[%c0_20, %c0_21, %c0_22, %c0_23] : memref<3x3x128x128xbf16, #tpu.memory_space<vmem>>, vector<1x1x128x128xbf16>
    %13 = vector.shape_cast %12 : vector<1x1x128x128xbf16> to vector<128x128xbf16>
    %cst_24 = arith.constant dense<0.000000e+00> : vector<128x128xf32>
    %14 = tpu.matmul %11, %13, %cst_24 {dimension_numbers = #tpu.dot_dimension_numbers<[1], [0], [0], [1], [0, 0, 1, 1], [], []>} : vector<128x128xbf16>, vector<128x128xbf16>, vector<128x128xf32> -> vector<128x128xf32>
    %15 = arith.addf %9, %14 : vector<128x128xf32>
    %c0_25 = arith.constant 0 : index
    %c1_26 = arith.constant 1 : index
    %c0_27 = arith.constant 0 : index
    %16 = vector.load %arg9[%c0_25, %c1_26, %c0_27] : memref<18x18x128xbf16, #tpu.memory_space<vmem>>, vector<8x16x128xbf16>
    %17 = vector.shape_cast %16 : vector<8x16x128xbf16> to vector<128x128xbf16>
    %c0_28 = arith.constant 0 : index
    %c1_29 = arith.constant 1 : index
    %c0_30 = arith.constant 0 : index
    %c0_31 = arith.constant 0 : index
    %18 = vector.load %arg2[%c0_28, %c1_29, %c0_30, %c0_31] : memref<3x3x128x128xbf16, #tpu.memory_space<vmem>>, vector<1x1x128x128xbf16>
    %19 = vector.shape_cast %18 : vector<1x1x128x128xbf16> to vector<128x128xbf16>
    %cst_32 = arith.constant dense<0.000000e+00> : vector<128x128xf32>
    %20 = tpu.matmul %17, %19, %cst_32 {dimension_numbers = #tpu.dot_dimension_numbers<[1], [0], [0], [1], [0, 0, 1, 1], [], []>} : vector<128x128xbf16>, vector<128x128xbf16>, vector<128x128xf32> -> vector<128x128xf32>
    %21 = arith.addf %15, %20 : vector<128x128xf32>
    %c0_33 = arith.constant 0 : index
    %c2 = arith.constant 2 : index
    %c0_34 = arith.constant 0 : index
    %22 = vector.load %arg9[%c0_33, %c2, %c0_34] : memref<18x18x128xbf16, #tpu.memory_space<vmem>>, vector<8x16x128xbf16>
    %23 = vector.shape_cast %22 : vector<8x16x128xbf16> to vector<128x128xbf16>
    %c0_35 = arith.constant 0 : index
    %c2_36 = arith.constant 2 : index
    %c0_37 = arith.constant 0 : index
    %c0_38 = arith.constant 0 : index
    %24 = vector.load %arg2[%c0_35, %c2_36, %c0_37, %c0_38] : memref<3x3x128x128xbf16, #tpu.memory_space<vmem>>, vector<1x1x128x128xbf16>
    %25 = vector.shape_cast %24 : vector<1x1x128x128xbf16> to vector<128x128xbf16>
    %cst_39 = arith.constant dense<0.000000e+00> : vector<128x128xf32>
    %26 = tpu.matmul %23, %25, %cst_39 {dimension_numbers = #tpu.dot_dimension_numbers<[1], [0], [0], [1], [0, 0, 1, 1], [], []>} : vector<128x128xbf16>, vector<128x128xbf16>, vector<128x128xf32> -> vector<128x128xf32>
    %27 = arith.addf %21, %26 : vector<128x128xf32>
    %c1_40 = arith.constant 1 : index
    %c0_41 = arith.constant 0 : index
    %c0_42 = arith.constant 0 : index
    %28 = vector.load %arg9[%c1_40, %c0_41, %c0_42] : memref<18x18x128xbf16, #tpu.memory_space<vmem>>, vector<8x16x128xbf16>
    %29 = vector.shape_cast %28 : vector<8x16x128xbf16> to vector<128x128xbf16>
    %c1_43 = arith.constant 1 : index
    %c0_44 = arith.constant 0 : index
    %c0_45 = arith.constant 0 : index
    %c0_46 = arith.constant 0 : index
    %30 = vector.load %arg2[%c1_43, %c0_44, %c0_45, %c0_46] : memref<3x3x128x128xbf16, #tpu.memory_space<vmem>>, vector<1x1x128x128xbf16>
    %31 = vector.shape_cast %30 : vector<1x1x128x128xbf16> to vector<128x128xbf16>
    %cst_47 = arith.constant dense<0.000000e+00> : vector<128x128xf32>
    %32 = tpu.matmul %29, %31, %cst_47 {dimension_numbers = #tpu.dot_dimension_numbers<[1], [0], [0], [1], [0, 0, 1, 1], [], []>} : vector<128x128xbf16>, vector<128x128xbf16>, vector<128x128xf32> -> vector<128x128xf32>
    %33 = arith.addf %27, %32 : vector<128x128xf32>
    %c1_48 = arith.constant 1 : index
    %c1_49 = arith.constant 1 : index
    %c0_50 = arith.constant 0 : index
    %34 = vector.load %arg9[%c1_48, %c1_49, %c0_50] : memref<18x18x128xbf16, #tpu.memory_space<vmem>>, vector<8x16x128xbf16>
    %35 = vector.shape_cast %34 : vector<8x16x128xbf16> to vector<128x128xbf16>
    %c1_51 = arith.constant 1 : index
    %c1_52 = arith.constant 1 : index
    %c0_53 = arith.constant 0 : index
    %c0_54 = arith.constant 0 : index
    %36 = vector.load %arg2[%c1_51, %c1_52, %c0_53, %c0_54] : memref<3x3x128x128xbf16, #tpu.memory_space<vmem>>, vector<1x1x128x128xbf16>
    %37 = vector.shape_cast %36 : vector<1x1x128x128xbf16> to vector<128x128xbf16>
    %cst_55 = arith.constant dense<0.000000e+00> : vector<128x128xf32>
    %38 = tpu.matmul %35, %37, %cst_55 {dimension_numbers = #tpu.dot_dimension_numbers<[1], [0], [0], [1], [0, 0, 1, 1], [], []>} : vector<128x128xbf16>, vector<128x128xbf16>, vector<128x128xf32> -> vector<128x128xf32>
    %39 = arith.addf %33, %38 : vector<128x128xf32>
    %c1_56 = arith.constant 1 : index
    %c2_57 = arith.constant 2 : index
    %c0_58 = arith.constant 0 : index
    %40 = vector.load %arg9[%c1_56, %c2_57, %c0_58] : memref<18x18x128xbf16, #tpu.memory_space<vmem>>, vector<8x16x128xbf16>
    %41 = vector.shape_cast %40 : vector<8x16x128xbf16> to vector<128x128xbf16>
    %c1_59 = arith.constant 1 : index
    %c2_60 = arith.constant 2 : index
    %c0_61 = arith.constant 0 : index
    %c0_62 = arith.constant 0 : index
    %42 = vector.load %arg2[%c1_59, %c2_60, %c0_61, %c0_62] : memref<3x3x128x128xbf16, #tpu.memory_space<vmem>>, vector<1x1x128x128xbf16>
    %43 = vector.shape_cast %42 : vector<1x1x128x128xbf16> to vector<128x128xbf16>
    %cst_63 = arith.constant dense<0.000000e+00> : vector<128x128xf32>
    %44 = tpu.matmul %41, %43, %cst_63 {dimension_numbers = #tpu.dot_dimension_numbers<[1], [0], [0], [1], [0, 0, 1, 1], [], []>} : vector<128x128xbf16>, vector<128x128xbf16>, vector<128x128xf32> -> vector<128x128xf32>
    %45 = arith.addf %39, %44 : vector<128x128xf32>
    %c2_64 = arith.constant 2 : index
    %c0_65 = arith.constant 0 : index
    %c0_66 = arith.constant 0 : index
    %46 = vector.load %arg9[%c2_64, %c0_65, %c0_66] : memref<18x18x128xbf16, #tpu.memory_space<vmem>>, vector<8x16x128xbf16>
    %47 = vector.shape_cast %46 : vector<8x16x128xbf16> to vector<128x128xbf16>
    %c2_67 = arith.constant 2 : index
    %c0_68 = arith.constant 0 : index
    %c0_69 = arith.constant 0 : index
    %c0_70 = arith.constant 0 : index
    %48 = vector.load %arg2[%c2_67, %c0_68, %c0_69, %c0_70] : memref<3x3x128x128xbf16, #tpu.memory_space<vmem>>, vector<1x1x128x128xbf16>
    %49 = vector.shape_cast %48 : vector<1x1x128x128xbf16> to vector<128x128xbf16>
    %cst_71 = arith.constant dense<0.000000e+00> : vector<128x128xf32>
    %50 = tpu.matmul %47, %49, %cst_71 {dimension_numbers = #tpu.dot_dimension_numbers<[1], [0], [0], [1], [0, 0, 1, 1], [], []>} : vector<128x128xbf16>, vector<128x128xbf16>, vector<128x128xf32> -> vector<128x128xf32>
    %51 = arith.addf %45, %50 : vector<128x128xf32>
    %c2_72 = arith.constant 2 : index
    %c1_73 = arith.constant 1 : index
    %c0_74 = arith.constant 0 : index
    %52 = vector.load %arg9[%c2_72, %c1_73, %c0_74] : memref<18x18x128xbf16, #tpu.memory_space<vmem>>, vector<8x16x128xbf16>
    %53 = vector.shape_cast %52 : vector<8x16x128xbf16> to vector<128x128xbf16>
    %c2_75 = arith.constant 2 : index
    %c1_76 = arith.constant 1 : index
    %c0_77 = arith.constant 0 : index
    %c0_78 = arith.constant 0 : index
    %54 = vector.load %arg2[%c2_75, %c1_76, %c0_77, %c0_78] : memref<3x3x128x128xbf16, #tpu.memory_space<vmem>>, vector<1x1x128x128xbf16>
    %55 = vector.shape_cast %54 : vector<1x1x128x128xbf16> to vector<128x128xbf16>
    %cst_79 = arith.constant dense<0.000000e+00> : vector<128x128xf32>
    %56 = tpu.matmul %53, %55, %cst_79 {dimension_numbers = #tpu.dot_dimension_numbers<[1], [0], [0], [1], [0, 0, 1, 1], [], []>} : vector<128x128xbf16>, vector<128x128xbf16>, vector<128x128xf32> -> vector<128x128xf32>
    %57 = arith.addf %51, %56 : vector<128x128xf32>
    %c2_80 = arith.constant 2 : index
    %c2_81 = arith.constant 2 : index
    %c0_82 = arith.constant 0 : index
    %58 = vector.load %arg9[%c2_80, %c2_81, %c0_82] : memref<18x18x128xbf16, #tpu.memory_space<vmem>>, vector<8x16x128xbf16>
    %59 = vector.shape_cast %58 : vector<8x16x128xbf16> to vector<128x128xbf16>
    %c2_83 = arith.constant 2 : index
    %c2_84 = arith.constant 2 : index
    %c0_85 = arith.constant 0 : index
    %c0_86 = arith.constant 0 : index
    %60 = vector.load %arg2[%c2_83, %c2_84, %c0_85, %c0_86] : memref<3x3x128x128xbf16, #tpu.memory_space<vmem>>, vector<1x1x128x128xbf16>
    %61 = vector.shape_cast %60 : vector<1x1x128x128xbf16> to vector<128x128xbf16>
    %cst_87 = arith.constant dense<0.000000e+00> : vector<128x128xf32>
    %62 = tpu.matmul %59, %61, %cst_87 {dimension_numbers = #tpu.dot_dimension_numbers<[1], [0], [0], [1], [0, 0, 1, 1], [], []>} : vector<128x128xbf16>, vector<128x128xbf16>, vector<128x128xf32> -> vector<128x128xf32>
    %63 = arith.addf %57, %62 : vector<128x128xf32>
    %64 = vector.broadcast %7 : vector<1x128xf32> to vector<128x128xf32>
    %65 = arith.mulf %63, %64 : vector<128x128xf32>
    %66 = vector.broadcast %8 : vector<1x128xf32> to vector<128x128xf32>
    %67 = arith.addf %65, %66 : vector<128x128xf32>
    %cst_88 = arith.constant 0.000000e+00 : f32
    %68 = vector.broadcast %cst_88 : f32 to vector<128x128xf32>
    %69 = arith.maximumf %67, %68 : vector<128x128xf32>
    %70 = vector.shape_cast %69 : vector<128x128xf32> to vector<8x16x128xf32>
    %71 = arith.truncf %70 : vector<8x16x128xf32> to vector<8x16x128xbf16>
    %c1_89 = arith.constant 1 : index
    %c1_90 = arith.constant 1 : index
    %c0_91 = arith.constant 0 : index
    %72 = vector.load %arg10[%c1_89, %c1_90, %c0_91] : memref<18x18x128xbf16, #tpu.memory_space<vmem>>, vector<8x16x128xbf16>
    tpu.vector_store %arg10[%c1_89, %c1_90, %c0_91], %71 {strides = array<i32>} : memref<18x18x128xbf16, #tpu.memory_space<vmem>>, vector<8x16x128xbf16>,
    %cst_92 = arith.constant 0.000000e+00 : f32
    %73 = vector.broadcast %cst_92 : f32 to vector<128x128xf32>
    %c8 = arith.constant 8 : index
    %c0_93 = arith.constant 0 : index
    %c0_94 = arith.constant 0 : index
    %74 = vector.load %arg9[%c8, %c0_93, %c0_94] : memref<18x18x128xbf16, #tpu.memory_space<vmem>>, vector<8x16x128xbf16>
    %75 = vector.shape_cast %74 : vector<8x16x128xbf16> to vector<128x128xbf16>
    %c0_95 = arith.constant 0 : index
    %c0_96 = arith.constant 0 : index
    %c0_97 = arith.constant 0 : index
    %c0_98 = arith.constant 0 : index
    %76 = vector.load %arg2[%c0_95, %c0_96, %c0_97, %c0_98] : memref<3x3x128x128xbf16, #tpu.memory_space<vmem>>, vector<1x1x128x128xbf16>
    %77 = vector.shape_cast %76 : vector<1x1x128x128xbf16> to vector<128x128xbf16>
    %cst_99 = arith.constant dense<0.000000e+00> : vector<128x128xf32>
    %78 = tpu.matmul %75, %77, %cst_99 {dimension_numbers = #tpu.dot_dimension_numbers<[1], [0], [0], [1], [0, 0, 1, 1], [], []>} : vector<128x128xbf16>, vector<128x128xbf16>, vector<128x128xf32> -> vector<128x128xf32>
    %79 = arith.addf %73, %78 : vector<128x128xf32>
    %c8_100 = arith.constant 8 : index
    %c1_101 = arith.constant 1 : index
    %c0_102 = arith.constant 0 : index
    %80 = vector.load %arg9[%c8_100, %c1_101, %c0_102] : memref<18x18x128xbf16, #tpu.memory_space<vmem>>, vector<8x16x128xbf16>
    %81 = vector.shape_cast %80 : vector<8x16x128xbf16> to vector<128x128xbf16>
    %c0_103 = arith.constant 0 : index
    %c1_104 = arith.constant 1 : index
    %c0_105 = arith.constant 0 : index
    %c0_106 = arith.constant 0 : index
    %82 = vector.load %arg2[%c0_103, %c1_104, %c0_105, %c0_106] : memref<3x3x128x128xbf16, #tpu.memory_space<vmem>>, vector<1x1x128x128xbf16>
    %83 = vector.shape_cast %82 : vector<1x1x128x128xbf16> to vector<128x128xbf16>
    %cst_107 = arith.constant dense<0.000000e+00> : vector<128x128xf32>
    %84 = tpu.matmul %81, %83, %cst_107 {dimension_numbers = #tpu.dot_dimension_numbers<[1], [0], [0], [1], [0, 0, 1, 1], [], []>} : vector<128x128xbf16>, vector<128x128xbf16>, vector<128x128xf32> -> vector<128x128xf32>
    %85 = arith.addf %79, %84 : vector<128x128xf32>
    %c8_108 = arith.constant 8 : index
    %c2_109 = arith.constant 2 : index
    %c0_110 = arith.constant 0 : index
    %86 = vector.load %arg9[%c8_108, %c2_109, %c0_110] : memref<18x18x128xbf16, #tpu.memory_space<vmem>>, vector<8x16x128xbf16>
    %87 = vector.shape_cast %86 : vector<8x16x128xbf16> to vector<128x128xbf16>
    %c0_111 = arith.constant 0 : index
    %c2_112 = arith.constant 2 : index
    %c0_113 = arith.constant 0 : index
    %c0_114 = arith.constant 0 : index
    %88 = vector.load %arg2[%c0_111, %c2_112, %c0_113, %c0_114] : memref<3x3x128x128xbf16, #tpu.memory_space<vmem>>, vector<1x1x128x128xbf16>
    %89 = vector.shape_cast %88 : vector<1x1x128x128xbf16> to vector<128x128xbf16>
    %cst_115 = arith.constant dense<0.000000e+00> : vector<128x128xf32>
    %90 = tpu.matmul %87, %89, %cst_115 {dimension_numbers = #tpu.dot_dimension_numbers<[1], [0], [0], [1], [0, 0, 1, 1], [], []>} : vector<128x128xbf16>, vector<128x128xbf16>, vector<128x128xf32> -> vector<128x128xf32>
    %91 = arith.addf %85, %90 : vector<128x128xf32>
    %c9 = arith.constant 9 : index
    %c0_116 = arith.constant 0 : index
    %c0_117 = arith.constant 0 : index
    %92 = vector.load %arg9[%c9, %c0_116, %c0_117] : memref<18x18x128xbf16, #tpu.memory_space<vmem>>, vector<8x16x128xbf16>
    %93 = vector.shape_cast %92 : vector<8x16x128xbf16> to vector<128x128xbf16>
    %c1_118 = arith.constant 1 : index
    %c0_119 = arith.constant 0 : index
    %c0_120 = arith.constant 0 : index
    %c0_121 = arith.constant 0 : index
    %94 = vector.load %arg2[%c1_118, %c0_119, %c0_120, %c0_121] : memref<3x3x128x128xbf16, #tpu.memory_space<vmem>>, vector<1x1x128x128xbf16>
    %95 = vector.shape_cast %94 : vector<1x1x128x128xbf16> to vector<128x128xbf16>
    %cst_122 = arith.constant dense<0.000000e+00> : vector<128x128xf32>
    %96 = tpu.matmul %93, %95, %cst_122 {dimension_numbers = #tpu.dot_dimension_numbers<[1], [0], [0], [1], [0, 0, 1, 1], [], []>} : vector<128x128xbf16>, vector<128x128xbf16>, vector<128x128xf32> -> vector<128x128xf32>
    %97 = arith.addf %91, %96 : vector<128x128xf32>
    %c9_123 = arith.constant 9 : index
    %c1_124 = arith.constant 1 : index
    %c0_125 = arith.constant 0 : index
    %98 = vector.load %arg9[%c9_123, %c1_124, %c0_125] : memref<18x18x128xbf16, #tpu.memory_space<vmem>>, vector<8x16x128xbf16>
    %99 = vector.shape_cast %98 : vector<8x16x128xbf16> to vector<128x128xbf16>
    %c1_126 = arith.constant 1 : index
    %c1_127 = arith.constant 1 : index
    %c0_128 = arith.constant 0 : index
    %c0_129 = arith.constant 0 : index
    %100 = vector.load %arg2[%c1_126, %c1_127, %c0_128, %c0_129] : memref<3x3x128x128xbf16, #tpu.memory_space<vmem>>, vector<1x1x128x128xbf16>
    %101 = vector.shape_cast %100 : vector<1x1x128x128xbf16> to vector<128x128xbf16>
    %cst_130 = arith.constant dense<0.000000e+00> : vector<128x128xf32>
    %102 = tpu.matmul %99, %101, %cst_130 {dimension_numbers = #tpu.dot_dimension_numbers<[1], [0], [0], [1], [0, 0, 1, 1], [], []>} : vector<128x128xbf16>, vector<128x128xbf16>, vector<128x128xf32> -> vector<128x128xf32>
    %103 = arith.addf %97, %102 : vector<128x128xf32>
    %c9_131 = arith.constant 9 : index
    %c2_132 = arith.constant 2 : index
    %c0_133 = arith.constant 0 : index
    %104 = vector.load %arg9[%c9_131, %c2_132, %c0_133] : memref<18x18x128xbf16, #tpu.memory_space<vmem>>, vector<8x16x128xbf16>
    %105 = vector.shape_cast %104 : vector<8x16x128xbf16> to vector<128x128xbf16>
    %c1_134 = arith.constant 1 : index
    %c2_135 = arith.constant 2 : index
    %c0_136 = arith.constant 0 : index
    %c0_137 = arith.constant 0 : index
    %106 = vector.load %arg2[%c1_134, %c2_135, %c0_136, %c0_137] : memref<3x3x128x128xbf16, #tpu.memory_space<vmem>>, vector<1x1x128x128xbf16>
    %107 = vector.shape_cast %106 : vector<1x1x128x128xbf16> to vector<128x128xbf16>
    %cst_138 = arith.constant dense<0.000000e+00> : vector<128x128xf32>
    %108 = tpu.matmul %105, %107, %cst_138 {dimension_numbers = #tpu.dot_dimension_numbers<[1], [0], [0], [1], [0, 0, 1, 1], [], []>} : vector<128x128xbf16>, vector<128x128xbf16>, vector<128x128xf32> -> vector<128x128xf32>
    %109 = arith.addf %103, %108 : vector<128x128xf32>
    %c10 = arith.constant 10 : index
    %c0_139 = arith.constant 0 : index
    %c0_140 = arith.constant 0 : index
    %110 = vector.load %arg9[%c10, %c0_139, %c0_140] : memref<18x18x128xbf16, #tpu.memory_space<vmem>>, vector<8x16x128xbf16>
    %111 = vector.shape_cast %110 : vector<8x16x128xbf16> to vector<128x128xbf16>
    %c2_141 = arith.constant 2 : index
    %c0_142 = arith.constant 0 : index
    %c0_143 = arith.constant 0 : index
    %c0_144 = arith.constant 0 : index
    %112 = vector.load %arg2[%c2_141, %c0_142, %c0_143, %c0_144] : memref<3x3x128x128xbf16, #tpu.memory_space<vmem>>, vector<1x1x128x128xbf16>
    %113 = vector.shape_cast %112 : vector<1x1x128x128xbf16> to vector<128x128xbf16>
    %cst_145 = arith.constant dense<0.000000e+00> : vector<128x128xf32>
    %114 = tpu.matmul %111, %113, %cst_145 {dimension_numbers = #tpu.dot_dimension_numbers<[1], [0], [0], [1], [0, 0, 1, 1], [], []>} : vector<128x128xbf16>, vector<128x128xbf16>, vector<128x128xf32> -> vector<128x128xf32>
    %115 = arith.addf %109, %114 : vector<128x128xf32>
    %c10_146 = arith.constant 10 : index
    %c1_147 = arith.constant 1 : index
    %c0_148 = arith.constant 0 : index
    %116 = vector.load %arg9[%c10_146, %c1_147, %c0_148] : memref<18x18x128xbf16, #tpu.memory_space<vmem>>, vector<8x16x128xbf16>
    %117 = vector.shape_cast %116 : vector<8x16x128xbf16> to vector<128x128xbf16>
    %c2_149 = arith.constant 2 : index
    %c1_150 = arith.constant 1 : index
    %c0_151 = arith.constant 0 : index
    %c0_152 = arith.constant 0 : index
    %118 = vector.load %arg2[%c2_149, %c1_150, %c0_151, %c0_152] : memref<3x3x128x128xbf16, #tpu.memory_space<vmem>>, vector<1x1x128x128xbf16>
    %119 = vector.shape_cast %118 : vector<1x1x128x128xbf16> to vector<128x128xbf16>
    %cst_153 = arith.constant dense<0.000000e+00> : vector<128x128xf32>
    %120 = tpu.matmul %117, %119, %cst_153 {dimension_numbers = #tpu.dot_dimension_numbers<[1], [0], [0], [1], [0, 0, 1, 1], [], []>} : vector<128x128xbf16>, vector<128x128xbf16>, vector<128x128xf32> -> vector<128x128xf32>
    %121 = arith.addf %115, %120 : vector<128x128xf32>
    %c10_154 = arith.constant 10 : index
    %c2_155 = arith.constant 2 : index
    %c0_156 = arith.constant 0 : index
    %122 = vector.load %arg9[%c10_154, %c2_155, %c0_156] : memref<18x18x128xbf16, #tpu.memory_space<vmem>>, vector<8x16x128xbf16>
    %123 = vector.shape_cast %122 : vector<8x16x128xbf16> to vector<128x128xbf16>
    %c2_157 = arith.constant 2 : index
    %c2_158 = arith.constant 2 : index
    %c0_159 = arith.constant 0 : index
    %c0_160 = arith.constant 0 : index
    %124 = vector.load %arg2[%c2_157, %c2_158, %c0_159, %c0_160] : memref<3x3x128x128xbf16, #tpu.memory_space<vmem>>, vector<1x1x128x128xbf16>
    %125 = vector.shape_cast %124 : vector<1x1x128x128xbf16> to vector<128x128xbf16>
    %cst_161 = arith.constant dense<0.000000e+00> : vector<128x128xf32>
    %126 = tpu.matmul %123, %125, %cst_161 {dimension_numbers = #tpu.dot_dimension_numbers<[1], [0], [0], [1], [0, 0, 1, 1], [], []>} : vector<128x128xbf16>, vector<128x128xbf16>, vector<128x128xf32> -> vector<128x128xf32>
    %127 = arith.addf %121, %126 : vector<128x128xf32>
    %128 = vector.broadcast %7 : vector<1x128xf32> to vector<128x128xf32>
    %129 = arith.mulf %127, %128 : vector<128x128xf32>
    %130 = vector.broadcast %8 : vector<1x128xf32> to vector<128x128xf32>
    %131 = arith.addf %129, %130 : vector<128x128xf32>
    %cst_162 = arith.constant 0.000000e+00 : f32
    %132 = vector.broadcast %cst_162 : f32 to vector<128x128xf32>
    %133 = arith.maximumf %131, %132 : vector<128x128xf32>
    %134 = vector.shape_cast %133 : vector<128x128xf32> to vector<8x16x128xf32>
    %135 = arith.truncf %134 : vector<8x16x128xf32> to vector<8x16x128xbf16>
    %c9_163 = arith.constant 9 : index
    %c1_164 = arith.constant 1 : index
    %c0_165 = arith.constant 0 : index
    %136 = vector.load %arg10[%c9_163, %c1_164, %c0_165] : memref<18x18x128xbf16, #tpu.memory_space<vmem>>, vector<8x16x128xbf16>
    tpu.vector_store %arg10[%c9_163, %c1_164, %c0_165], %135 {strides = array<i32>} : memref<18x18x128xbf16, #tpu.memory_space<vmem>>, vector<8x16x128xbf16>,
    %c0_166 = arith.constant 0 : index
    %c0_167 = arith.constant 0 : index
    %137 = vector.load %arg6[%c0_166, %c0_167] : memref<1x128xf32, #tpu.memory_space<vmem>>, vector<1x128xf32>
    %c0_168 = arith.constant 0 : index
    %c0_169 = arith.constant 0 : index
    %138 = vector.load %arg7[%c0_168, %c0_169] : memref<1x128xf32, #tpu.memory_space<vmem>>, vector<1x128xf32>
    %cst_170 = arith.constant 0.000000e+00 : f32
    %139 = vector.broadcast %cst_170 : f32 to vector<128x128xf32>
    %c0_171 = arith.constant 0 : index
    %c0_172 = arith.constant 0 : index
    %c0_173 = arith.constant 0 : index
    %140 = vector.load %arg10[%c0_171, %c0_172, %c0_173] : memref<18x18x128xbf16, #tpu.memory_space<vmem>>, vector<8x16x128xbf16>
    %141 = vector.shape_cast %140 : vector<8x16x128xbf16> to vector<128x128xbf16>
    %c0_174 = arith.constant 0 : index
    %c0_175 = arith.constant 0 : index
    %c0_176 = arith.constant 0 : index
    %c0_177 = arith.constant 0 : index
    %142 = vector.load %arg5[%c0_174, %c0_175, %c0_176, %c0_177] : memref<3x3x128x128xbf16, #tpu.memory_space<vmem>>, vector<1x1x128x128xbf16>
    %143 = vector.shape_cast %142 : vector<1x1x128x128xbf16> to vector<128x128xbf16>
    %cst_178 = arith.constant dense<0.000000e+00> : vector<128x128xf32>
    %144 = tpu.matmul %141, %143, %cst_178 {dimension_numbers = #tpu.dot_dimension_numbers<[1], [0], [0], [1], [0, 0, 1, 1], [], []>} : vector<128x128xbf16>, vector<128x128xbf16>, vector<128x128xf32> -> vector<128x128xf32>
    %145 = arith.addf %139, %144 : vector<128x128xf32>
    %c0_179 = arith.constant 0 : index
    %c1_180 = arith.constant 1 : index
    %c0_181 = arith.constant 0 : index
    %146 = vector.load %arg10[%c0_179, %c1_180, %c0_181] : memref<18x18x128xbf16, #tpu.memory_space<vmem>>, vector<8x16x128xbf16>
    %147 = vector.shape_cast %146 : vector<8x16x128xbf16> to vector<128x128xbf16>
    %c0_182 = arith.constant 0 : index
    %c1_183 = arith.constant 1 : index
    %c0_184 = arith.constant 0 : index
    %c0_185 = arith.constant 0 : index
    %148 = vector.load %arg5[%c0_182, %c1_183, %c0_184, %c0_185] : memref<3x3x128x128xbf16, #tpu.memory_space<vmem>>, vector<1x1x128x128xbf16>
    %149 = vector.shape_cast %148 : vector<1x1x128x128xbf16> to vector<128x128xbf16>
    %cst_186 = arith.constant dense<0.000000e+00> : vector<128x128xf32>
    %150 = tpu.matmul %147, %149, %cst_186 {dimension_numbers = #tpu.dot_dimension_numbers<[1], [0], [0], [1], [0, 0, 1, 1], [], []>} : vector<128x128xbf16>, vector<128x128xbf16>, vector<128x128xf32> -> vector<128x128xf32>
    %151 = arith.addf %145, %150 : vector<128x128xf32>
    %c0_187 = arith.constant 0 : index
    %c2_188 = arith.constant 2 : index
    %c0_189 = arith.constant 0 : index
    %152 = vector.load %arg10[%c0_187, %c2_188, %c0_189] : memref<18x18x128xbf16, #tpu.memory_space<vmem>>, vector<8x16x128xbf16>
    %153 = vector.shape_cast %152 : vector<8x16x128xbf16> to vector<128x128xbf16>
    %c0_190 = arith.constant 0 : index
    %c2_191 = arith.constant 2 : index
    %c0_192 = arith.constant 0 : index
    %c0_193 = arith.constant 0 : index
    %154 = vector.load %arg5[%c0_190, %c2_191, %c0_192, %c0_193] : memref<3x3x128x128xbf16, #tpu.memory_space<vmem>>, vector<1x1x128x128xbf16>
    %155 = vector.shape_cast %154 : vector<1x1x128x128xbf16> to vector<128x128xbf16>
    %cst_194 = arith.constant dense<0.000000e+00> : vector<128x128xf32>
    %156 = tpu.matmul %153, %155, %cst_194 {dimension_numbers = #tpu.dot_dimension_numbers<[1], [0], [0], [1], [0, 0, 1, 1], [], []>} : vector<128x128xbf16>, vector<128x128xbf16>, vector<128x128xf32> -> vector<128x128xf32>
    %157 = arith.addf %151, %156 : vector<128x128xf32>
    %c1_195 = arith.constant 1 : index
    %c0_196 = arith.constant 0 : index
    %c0_197 = arith.constant 0 : index
    %158 = vector.load %arg10[%c1_195, %c0_196, %c0_197] : memref<18x18x128xbf16, #tpu.memory_space<vmem>>, vector<8x16x128xbf16>
    %159 = vector.shape_cast %158 : vector<8x16x128xbf16> to vector<128x128xbf16>
    %c1_198 = arith.constant 1 : index
    %c0_199 = arith.constant 0 : index
    %c0_200 = arith.constant 0 : index
    %c0_201 = arith.constant 0 : index
    %160 = vector.load %arg5[%c1_198, %c0_199, %c0_200, %c0_201] : memref<3x3x128x128xbf16, #tpu.memory_space<vmem>>, vector<1x1x128x128xbf16>
    %161 = vector.shape_cast %160 : vector<1x1x128x128xbf16> to vector<128x128xbf16>
    %cst_202 = arith.constant dense<0.000000e+00> : vector<128x128xf32>
    %162 = tpu.matmul %159, %161, %cst_202 {dimension_numbers = #tpu.dot_dimension_numbers<[1], [0], [0], [1], [0, 0, 1, 1], [], []>} : vector<128x128xbf16>, vector<128x128xbf16>, vector<128x128xf32> -> vector<128x128xf32>
    %163 = arith.addf %157, %162 : vector<128x128xf32>
    %c1_203 = arith.constant 1 : index
    %c1_204 = arith.constant 1 : index
    %c0_205 = arith.constant 0 : index
    %164 = vector.load %arg10[%c1_203, %c1_204, %c0_205] : memref<18x18x128xbf16, #tpu.memory_space<vmem>>, vector<8x16x128xbf16>
    %165 = vector.shape_cast %164 : vector<8x16x128xbf16> to vector<128x128xbf16>
    %c1_206 = arith.constant 1 : index
    %c1_207 = arith.constant 1 : index
    %c0_208 = arith.constant 0 : index
    %c0_209 = arith.constant 0 : index
    %166 = vector.load %arg5[%c1_206, %c1_207, %c0_208, %c0_209] : memref<3x3x128x128xbf16, #tpu.memory_space<vmem>>, vector<1x1x128x128xbf16>
    %167 = vector.shape_cast %166 : vector<1x1x128x128xbf16> to vector<128x128xbf16>
    %cst_210 = arith.constant dense<0.000000e+00> : vector<128x128xf32>
    %168 = tpu.matmul %165, %167, %cst_210 {dimension_numbers = #tpu.dot_dimension_numbers<[1], [0], [0], [1], [0, 0, 1, 1], [], []>} : vector<128x128xbf16>, vector<128x128xbf16>, vector<128x128xf32> -> vector<128x128xf32>
    %169 = arith.addf %163, %168 : vector<128x128xf32>
    %c1_211 = arith.constant 1 : index
    %c2_212 = arith.constant 2 : index
    %c0_213 = arith.constant 0 : index
    %170 = vector.load %arg10[%c1_211, %c2_212, %c0_213] : memref<18x18x128xbf16, #tpu.memory_space<vmem>>, vector<8x16x128xbf16>
    %171 = vector.shape_cast %170 : vector<8x16x128xbf16> to vector<128x128xbf16>
    %c1_214 = arith.constant 1 : index
    %c2_215 = arith.constant 2 : index
    %c0_216 = arith.constant 0 : index
    %c0_217 = arith.constant 0 : index
    %172 = vector.load %arg5[%c1_214, %c2_215, %c0_216, %c0_217] : memref<3x3x128x128xbf16, #tpu.memory_space<vmem>>, vector<1x1x128x128xbf16>
    %173 = vector.shape_cast %172 : vector<1x1x128x128xbf16> to vector<128x128xbf16>
    %cst_218 = arith.constant dense<0.000000e+00> : vector<128x128xf32>
    %174 = tpu.matmul %171, %173, %cst_218 {dimension_numbers = #tpu.dot_dimension_numbers<[1], [0], [0], [1], [0, 0, 1, 1], [], []>} : vector<128x128xbf16>, vector<128x128xbf16>, vector<128x128xf32> -> vector<128x128xf32>
    %175 = arith.addf %169, %174 : vector<128x128xf32>
    %c2_219 = arith.constant 2 : index
    %c0_220 = arith.constant 0 : index
    %c0_221 = arith.constant 0 : index
    %176 = vector.load %arg10[%c2_219, %c0_220, %c0_221] : memref<18x18x128xbf16, #tpu.memory_space<vmem>>, vector<8x16x128xbf16>
    %177 = vector.shape_cast %176 : vector<8x16x128xbf16> to vector<128x128xbf16>
    %c2_222 = arith.constant 2 : index
    %c0_223 = arith.constant 0 : index
    %c0_224 = arith.constant 0 : index
    %c0_225 = arith.constant 0 : index
    %178 = vector.load %arg5[%c2_222, %c0_223, %c0_224, %c0_225] : memref<3x3x128x128xbf16, #tpu.memory_space<vmem>>, vector<1x1x128x128xbf16>
    %179 = vector.shape_cast %178 : vector<1x1x128x128xbf16> to vector<128x128xbf16>
    %cst_226 = arith.constant dense<0.000000e+00> : vector<128x128xf32>
    %180 = tpu.matmul %177, %179, %cst_226 {dimension_numbers = #tpu.dot_dimension_numbers<[1], [0], [0], [1], [0, 0, 1, 1], [], []>} : vector<128x128xbf16>, vector<128x128xbf16>, vector<128x128xf32> -> vector<128x128xf32>
    %181 = arith.addf %175, %180 : vector<128x128xf32>
    %c2_227 = arith.constant 2 : index
    %c1_228 = arith.constant 1 : index
    %c0_229 = arith.constant 0 : index
    %182 = vector.load %arg10[%c2_227, %c1_228, %c0_229] : memref<18x18x128xbf16, #tpu.memory_space<vmem>>, vector<8x16x128xbf16>
    %183 = vector.shape_cast %182 : vector<8x16x128xbf16> to vector<128x128xbf16>
    %c2_230 = arith.constant 2 : index
    %c1_231 = arith.constant 1 : index
    %c0_232 = arith.constant 0 : index
    %c0_233 = arith.constant 0 : index
    %184 = vector.load %arg5[%c2_230, %c1_231, %c0_232, %c0_233] : memref<3x3x128x128xbf16, #tpu.memory_space<vmem>>, vector<1x1x128x128xbf16>
    %185 = vector.shape_cast %184 : vector<1x1x128x128xbf16> to vector<128x128xbf16>
    %cst_234 = arith.constant dense<0.000000e+00> : vector<128x128xf32>
    %186 = tpu.matmul %183, %185, %cst_234 {dimension_numbers = #tpu.dot_dimension_numbers<[1], [0], [0], [1], [0, 0, 1, 1], [], []>} : vector<128x128xbf16>, vector<128x128xbf16>, vector<128x128xf32> -> vector<128x128xf32>
    %187 = arith.addf %181, %186 : vector<128x128xf32>
    %c2_235 = arith.constant 2 : index
    %c2_236 = arith.constant 2 : index
    %c0_237 = arith.constant 0 : index
    %188 = vector.load %arg10[%c2_235, %c2_236, %c0_237] : memref<18x18x128xbf16, #tpu.memory_space<vmem>>, vector<8x16x128xbf16>
    %189 = vector.shape_cast %188 : vector<8x16x128xbf16> to vector<128x128xbf16>
    %c2_238 = arith.constant 2 : index
    %c2_239 = arith.constant 2 : index
    %c0_240 = arith.constant 0 : index
    %c0_241 = arith.constant 0 : index
    %190 = vector.load %arg5[%c2_238, %c2_239, %c0_240, %c0_241] : memref<3x3x128x128xbf16, #tpu.memory_space<vmem>>, vector<1x1x128x128xbf16>
    %191 = vector.shape_cast %190 : vector<1x1x128x128xbf16> to vector<128x128xbf16>
    %cst_242 = arith.constant dense<0.000000e+00> : vector<128x128xf32>
    %192 = tpu.matmul %189, %191, %cst_242 {dimension_numbers = #tpu.dot_dimension_numbers<[1], [0], [0], [1], [0, 0, 1, 1], [], []>} : vector<128x128xbf16>, vector<128x128xbf16>, vector<128x128xf32> -> vector<128x128xf32>
    %193 = arith.addf %187, %192 : vector<128x128xf32>
    %194 = vector.broadcast %137 : vector<1x128xf32> to vector<128x128xf32>
    %195 = arith.mulf %193, %194 : vector<128x128xf32>
    %196 = vector.broadcast %138 : vector<1x128xf32> to vector<128x128xf32>
    %197 = arith.addf %195, %196 : vector<128x128xf32>
    %cst_243 = arith.constant 0.000000e+00 : f32
    %198 = vector.broadcast %cst_243 : f32 to vector<128x128xf32>
    %199 = arith.maximumf %197, %198 : vector<128x128xf32>
    %200 = vector.shape_cast %199 : vector<128x128xf32> to vector<1x8x16x128xf32>
    %201 = arith.truncf %200 : vector<1x8x16x128xf32> to vector<1x8x16x128xbf16>
    %c0_244 = arith.constant 0 : index
    %c0_245 = arith.constant 0 : index
    %c0_246 = arith.constant 0 : index
    %c0_247 = arith.constant 0 : index
    %202 = vector.load %arg8[%c0_244, %c0_245, %c0_246, %c0_247] : memref<1x16x16x128xbf16, #tpu.memory_space<vmem>>, vector<1x8x16x128xbf16>
    tpu.vector_store %arg8[%c0_244, %c0_245, %c0_246, %c0_247], %201 {strides = array<i32>} : memref<1x16x16x128xbf16, #tpu.memory_space<vmem>>, vector<1x8x16x128xbf16>,
    %cst_248 = arith.constant 0.000000e+00 : f32
    %203 = vector.broadcast %cst_248 : f32 to vector<128x128xf32>
    %c8_249 = arith.constant 8 : index
    %c0_250 = arith.constant 0 : index
    %c0_251 = arith.constant 0 : index
    %204 = vector.load %arg10[%c8_249, %c0_250, %c0_251] : memref<18x18x128xbf16, #tpu.memory_space<vmem>>, vector<8x16x128xbf16>
    %205 = vector.shape_cast %204 : vector<8x16x128xbf16> to vector<128x128xbf16>
    %c0_252 = arith.constant 0 : index
    %c0_253 = arith.constant 0 : index
    %c0_254 = arith.constant 0 : index
    %c0_255 = arith.constant 0 : index
    %206 = vector.load %arg5[%c0_252, %c0_253, %c0_254, %c0_255] : memref<3x3x128x128xbf16, #tpu.memory_space<vmem>>, vector<1x1x128x128xbf16>
    %207 = vector.shape_cast %206 : vector<1x1x128x128xbf16> to vector<128x128xbf16>
    %cst_256 = arith.constant dense<0.000000e+00> : vector<128x128xf32>
    %208 = tpu.matmul %205, %207, %cst_256 {dimension_numbers = #tpu.dot_dimension_numbers<[1], [0], [0], [1], [0, 0, 1, 1], [], []>} : vector<128x128xbf16>, vector<128x128xbf16>, vector<128x128xf32> -> vector<128x128xf32>
    %209 = arith.addf %203, %208 : vector<128x128xf32>
    %c8_257 = arith.constant 8 : index
    %c1_258 = arith.constant 1 : index
    %c0_259 = arith.constant 0 : index
    %210 = vector.load %arg10[%c8_257, %c1_258, %c0_259] : memref<18x18x128xbf16, #tpu.memory_space<vmem>>, vector<8x16x128xbf16>
    %211 = vector.shape_cast %210 : vector<8x16x128xbf16> to vector<128x128xbf16>
    %c0_260 = arith.constant 0 : index
    %c1_261 = arith.constant 1 : index
    %c0_262 = arith.constant 0 : index
    %c0_263 = arith.constant 0 : index
    %212 = vector.load %arg5[%c0_260, %c1_261, %c0_262, %c0_263] : memref<3x3x128x128xbf16, #tpu.memory_space<vmem>>, vector<1x1x128x128xbf16>
    %213 = vector.shape_cast %212 : vector<1x1x128x128xbf16> to vector<128x128xbf16>
    %cst_264 = arith.constant dense<0.000000e+00> : vector<128x128xf32>
    %214 = tpu.matmul %211, %213, %cst_264 {dimension_numbers = #tpu.dot_dimension_numbers<[1], [0], [0], [1], [0, 0, 1, 1], [], []>} : vector<128x128xbf16>, vector<128x128xbf16>, vector<128x128xf32> -> vector<128x128xf32>
    %215 = arith.addf %209, %214 : vector<128x128xf32>
    %c8_265 = arith.constant 8 : index
    %c2_266 = arith.constant 2 : index
    %c0_267 = arith.constant 0 : index
    %216 = vector.load %arg10[%c8_265, %c2_266, %c0_267] : memref<18x18x128xbf16, #tpu.memory_space<vmem>>, vector<8x16x128xbf16>
    %217 = vector.shape_cast %216 : vector<8x16x128xbf16> to vector<128x128xbf16>
    %c0_268 = arith.constant 0 : index
    %c2_269 = arith.constant 2 : index
    %c0_270 = arith.constant 0 : index
    %c0_271 = arith.constant 0 : index
    %218 = vector.load %arg5[%c0_268, %c2_269, %c0_270, %c0_271] : memref<3x3x128x128xbf16, #tpu.memory_space<vmem>>, vector<1x1x128x128xbf16>
    %219 = vector.shape_cast %218 : vector<1x1x128x128xbf16> to vector<128x128xbf16>
    %cst_272 = arith.constant dense<0.000000e+00> : vector<128x128xf32>
    %220 = tpu.matmul %217, %219, %cst_272 {dimension_numbers = #tpu.dot_dimension_numbers<[1], [0], [0], [1], [0, 0, 1, 1], [], []>} : vector<128x128xbf16>, vector<128x128xbf16>, vector<128x128xf32> -> vector<128x128xf32>
    %221 = arith.addf %215, %220 : vector<128x128xf32>
    %c9_273 = arith.constant 9 : index
    %c0_274 = arith.constant 0 : index
    %c0_275 = arith.constant 0 : index
    %222 = vector.load %arg10[%c9_273, %c0_274, %c0_275] : memref<18x18x128xbf16, #tpu.memory_space<vmem>>, vector<8x16x128xbf16>
    %223 = vector.shape_cast %222 : vector<8x16x128xbf16> to vector<128x128xbf16>
    %c1_276 = arith.constant 1 : index
    %c0_277 = arith.constant 0 : index
    %c0_278 = arith.constant 0 : index
    %c0_279 = arith.constant 0 : index
    %224 = vector.load %arg5[%c1_276, %c0_277, %c0_278, %c0_279] : memref<3x3x128x128xbf16, #tpu.memory_space<vmem>>, vector<1x1x128x128xbf16>
    %225 = vector.shape_cast %224 : vector<1x1x128x128xbf16> to vector<128x128xbf16>
    %cst_280 = arith.constant dense<0.000000e+00> : vector<128x128xf32>
    %226 = tpu.matmul %223, %225, %cst_280 {dimension_numbers = #tpu.dot_dimension_numbers<[1], [0], [0], [1], [0, 0, 1, 1], [], []>} : vector<128x128xbf16>, vector<128x128xbf16>, vector<128x128xf32> -> vector<128x128xf32>
    %227 = arith.addf %221, %226 : vector<128x128xf32>
    %c9_281 = arith.constant 9 : index
    %c1_282 = arith.constant 1 : index
    %c0_283 = arith.constant 0 : index
    %228 = vector.load %arg10[%c9_281, %c1_282, %c0_283] : memref<18x18x128xbf16, #tpu.memory_space<vmem>>, vector<8x16x128xbf16>
    %229 = vector.shape_cast %228 : vector<8x16x128xbf16> to vector<128x128xbf16>
    %c1_284 = arith.constant 1 : index
    %c1_285 = arith.constant 1 : index
    %c0_286 = arith.constant 0 : index
    %c0_287 = arith.constant 0 : index
    %230 = vector.load %arg5[%c1_284, %c1_285, %c0_286, %c0_287] : memref<3x3x128x128xbf16, #tpu.memory_space<vmem>>, vector<1x1x128x128xbf16>
    %231 = vector.shape_cast %230 : vector<1x1x128x128xbf16> to vector<128x128xbf16>
    %cst_288 = arith.constant dense<0.000000e+00> : vector<128x128xf32>
    %232 = tpu.matmul %229, %231, %cst_288 {dimension_numbers = #tpu.dot_dimension_numbers<[1], [0], [0], [1], [0, 0, 1, 1], [], []>} : vector<128x128xbf16>, vector<128x128xbf16>, vector<128x128xf32> -> vector<128x128xf32>
    %233 = arith.addf %227, %232 : vector<128x128xf32>
    %c9_289 = arith.constant 9 : index
    %c2_290 = arith.constant 2 : index
    %c0_291 = arith.constant 0 : index
    %234 = vector.load %arg10[%c9_289, %c2_290, %c0_291] : memref<18x18x128xbf16, #tpu.memory_space<vmem>>, vector<8x16x128xbf16>
    %235 = vector.shape_cast %234 : vector<8x16x128xbf16> to vector<128x128xbf16>
    %c1_292 = arith.constant 1 : index
    %c2_293 = arith.constant 2 : index
    %c0_294 = arith.constant 0 : index
    %c0_295 = arith.constant 0 : index
    %236 = vector.load %arg5[%c1_292, %c2_293, %c0_294, %c0_295] : memref<3x3x128x128xbf16, #tpu.memory_space<vmem>>, vector<1x1x128x128xbf16>
    %237 = vector.shape_cast %236 : vector<1x1x128x128xbf16> to vector<128x128xbf16>
    %cst_296 = arith.constant dense<0.000000e+00> : vector<128x128xf32>
    %238 = tpu.matmul %235, %237, %cst_296 {dimension_numbers = #tpu.dot_dimension_numbers<[1], [0], [0], [1], [0, 0, 1, 1], [], []>} : vector<128x128xbf16>, vector<128x128xbf16>, vector<128x128xf32> -> vector<128x128xf32>
    %239 = arith.addf %233, %238 : vector<128x128xf32>
    %c10_297 = arith.constant 10 : index
    %c0_298 = arith.constant 0 : index
    %c0_299 = arith.constant 0 : index
    %240 = vector.load %arg10[%c10_297, %c0_298, %c0_299] : memref<18x18x128xbf16, #tpu.memory_space<vmem>>, vector<8x16x128xbf16>
    %241 = vector.shape_cast %240 : vector<8x16x128xbf16> to vector<128x128xbf16>
    %c2_300 = arith.constant 2 : index
    %c0_301 = arith.constant 0 : index
    %c0_302 = arith.constant 0 : index
    %c0_303 = arith.constant 0 : index
    %242 = vector.load %arg5[%c2_300, %c0_301, %c0_302, %c0_303] : memref<3x3x128x128xbf16, #tpu.memory_space<vmem>>, vector<1x1x128x128xbf16>
    %243 = vector.shape_cast %242 : vector<1x1x128x128xbf16> to vector<128x128xbf16>
    %cst_304 = arith.constant dense<0.000000e+00> : vector<128x128xf32>
    %244 = tpu.matmul %241, %243, %cst_304 {dimension_numbers = #tpu.dot_dimension_numbers<[1], [0], [0], [1], [0, 0, 1, 1], [], []>} : vector<128x128xbf16>, vector<128x128xbf16>, vector<128x128xf32> -> vector<128x128xf32>
    %245 = arith.addf %239, %244 : vector<128x128xf32>
    %c10_305 = arith.constant 10 : index
    %c1_306 = arith.constant 1 : index
    %c0_307 = arith.constant 0 : index
    %246 = vector.load %arg10[%c10_305, %c1_306, %c0_307] : memref<18x18x128xbf16, #tpu.memory_space<vmem>>, vector<8x16x128xbf16>
    %247 = vector.shape_cast %246 : vector<8x16x128xbf16> to vector<128x128xbf16>
    %c2_308 = arith.constant 2 : index
    %c1_309 = arith.constant 1 : index
    %c0_310 = arith.constant 0 : index
    %c0_311 = arith.constant 0 : index
    %248 = vector.load %arg5[%c2_308, %c1_309, %c0_310, %c0_311] : memref<3x3x128x128xbf16, #tpu.memory_space<vmem>>, vector<1x1x128x128xbf16>
    %249 = vector.shape_cast %248 : vector<1x1x128x128xbf16> to vector<128x128xbf16>
    %cst_312 = arith.constant dense<0.000000e+00> : vector<128x128xf32>
    %250 = tpu.matmul %247, %249, %cst_312 {dimension_numbers = #tpu.dot_dimension_numbers<[1], [0], [0], [1], [0, 0, 1, 1], [], []>} : vector<128x128xbf16>, vector<128x128xbf16>, vector<128x128xf32> -> vector<128x128xf32>
    %251 = arith.addf %245, %250 : vector<128x128xf32>
    %c10_313 = arith.constant 10 : index
    %c2_314 = arith.constant 2 : index
    %c0_315 = arith.constant 0 : index
    %252 = vector.load %arg10[%c10_313, %c2_314, %c0_315] : memref<18x18x128xbf16, #tpu.memory_space<vmem>>, vector<8x16x128xbf16>
    %253 = vector.shape_cast %252 : vector<8x16x128xbf16> to vector<128x128xbf16>
    %c2_316 = arith.constant 2 : index
    %c2_317 = arith.constant 2 : index
    %c0_318 = arith.constant 0 : index
    %c0_319 = arith.constant 0 : index
    %254 = vector.load %arg5[%c2_316, %c2_317, %c0_318, %c0_319] : memref<3x3x128x128xbf16, #tpu.memory_space<vmem>>, vector<1x1x128x128xbf16>
    %255 = vector.shape_cast %254 : vector<1x1x128x128xbf16> to vector<128x128xbf16>
    %cst_320 = arith.constant dense<0.000000e+00> : vector<128x128xf32>
    %256 = tpu.matmul %253, %255, %cst_320 {dimension_numbers = #tpu.dot_dimension_numbers<[1], [0], [0], [1], [0, 0, 1, 1], [], []>} : vector<128x128xbf16>, vector<128x128xbf16>, vector<128x128xf32> -> vector<128x128xf32>
    %257 = arith.addf %251, %256 : vector<128x128xf32>
    %258 = vector.broadcast %137 : vector<1x128xf32> to vector<128x128xf32>
    %259 = arith.mulf %257, %258 : vector<128x128xf32>
    %260 = vector.broadcast %138 : vector<1x128xf32> to vector<128x128xf32>
    %261 = arith.addf %259, %260 : vector<128x128xf32>
    %cst_321 = arith.constant 0.000000e+00 : f32
    %262 = vector.broadcast %cst_321 : f32 to vector<128x128xf32>
    %263 = arith.maximumf %261, %262 : vector<128x128xf32>
    %264 = vector.shape_cast %263 : vector<128x128xf32> to vector<1x8x16x128xf32>
    %265 = arith.truncf %264 : vector<1x8x16x128xf32> to vector<1x8x16x128xbf16>
    %c0_322 = arith.constant 0 : index
    %c8_323 = arith.constant 8 : index
    %c0_324 = arith.constant 0 : index
    %c0_325 = arith.constant 0 : index
    %266 = vector.load %arg8[%c0_322, %c8_323, %c0_324, %c0_325] : memref<1x16x16x128xbf16, #tpu.memory_space<vmem>>, vector<1x8x16x128xbf16>
    tpu.vector_store %arg8[%c0_322, %c8_323, %c0_324, %c0_325], %265 {strides = array<i32>} : memref<1x16x16x128xbf16, #tpu.memory_space<vmem>>, vector<1x8x16x128xbf16>,
    return
  }
  func.func @transform_0(%arg0: i32) -> (i32, i32, i32, i32) {
    %c0_i32 = arith.constant 0 : i32
    %c0_i32_0 = arith.constant 0 : i32
    %c0_i32_1 = arith.constant 0 : i32
    %c0_i32_2 = arith.constant 0 : i32
    return %arg0, %c0_i32, %c0_i32_0, %c0_i32_1 : i32, i32, i32, i32
  }
  func.func @transform_1(%arg0: i32) -> (i32, i32, i32, i32) {
    %c0_i32 = arith.constant 0 : i32
    %c0_i32_0 = arith.constant 0 : i32
    %c0_i32_1 = arith.constant 0 : i32
    %c0_i32_2 = arith.constant 0 : i32
    %c0_i32_3 = arith.constant 0 : i32
    return %c0_i32, %c0_i32_0, %c0_i32_1, %c0_i32_2 : i32, i32, i32, i32
  }
  func.func @transform_2(%arg0: i32) -> (i32, i32) {
    %c0_i32 = arith.constant 0 : i32
    %c0_i32_0 = arith.constant 0 : i32
    %c0_i32_1 = arith.constant 0 : i32
    return %c0_i32, %c0_i32_0 : i32, i32
  }
  func.func @transform_3(%arg0: i32) -> (i32, i32) {
    %c0_i32 = arith.constant 0 : i32
    %c0_i32_0 = arith.constant 0 : i32
    %c0_i32_1 = arith.constant 0 : i32
    return %c0_i32, %c0_i32_0 : i32, i32
  }
  func.func @transform_4(%arg0: i32) -> (i32, i32, i32, i32) {
    %c0_i32 = arith.constant 0 : i32
    %c0_i32_0 = arith.constant 0 : i32
    %c0_i32_1 = arith.constant 0 : i32
    %c0_i32_2 = arith.constant 0 : i32
    %c0_i32_3 = arith.constant 0 : i32
    return %c0_i32, %c0_i32_0, %c0_i32_1, %c0_i32_2 : i32, i32, i32, i32
  }
  func.func @transform_5(%arg0: i32) -> (i32, i32) {
    %c0_i32 = arith.constant 0 : i32
    %c0_i32_0 = arith.constant 0 : i32
    %c0_i32_1 = arith.constant 0 : i32
    return %c0_i32, %c0_i32_0 : i32, i32
  }
  func.func @transform_6(%arg0: i32) -> (i32, i32) {
    %c0_i32 = arith.constant 0 : i32
    %c0_i32_0 = arith.constant 0 : i32
    %c0_i32_1 = arith.constant 0 : i32
    return %c0_i32, %c0_i32_0 : i32, i32
  }
  func.func @transform_7(%arg0: i32) -> (i32, i32, i32, i32) {
    %c0_i32 = arith.constant 0 : i32
    %c0_i32_0 = arith.constant 0 : i32
    %c0_i32_1 = arith.constant 0 : i32
    %c0_i32_2 = arith.constant 0 : i32
    return %arg0, %c0_i32, %c0_i32_0, %c0_i32_1 : i32, i32, i32, i32
  }
}

</mosaic_0001>

<llo_original>
// kernel: tpu_custom_call.1
$region0: #{tpu_custom_call.1}
  #allocation0 [shape = 'u32[]', space=smem, size = 0x4, offset = 0x4, fixed_abs, tag = 'smem constant byte address 0x4 - core index']
  #allocation1 [shape = 'u32[72,128]{1,0:T(1,128)}', space=vmem, size = 0x9000, scoped, tag = 'internal scratch']
  #allocation2 [shape = 'bf16[18,18,128]{2,1,0:T(8,128)(2,1)}', space=vmem, size = 0x1b000, scoped, tag = 'scratch operand']
  #allocation3 [shape = 'bf16[18,18,128]{2,1,0:T(8,128)(2,1)}', space=vmem, size = 0x1b000, scoped, tag = 'scratch operand']
  %s0 = inlined_call_operand.vmem [shape: bf16[2,16,16,4], index: 0, kind: input, shape index: {}]
  %s1 = inlined_call_operand.hbm [shape: bf16[3,3,128,128], index: 1, kind: input, shape index: {}]
  %s2 = inlined_call_operand.vmem [shape: f32[1,128], index: 2, kind: input, shape index: {}]
  %s3 = inlined_call_operand.vmem [shape: f32[1,128], index: 3, kind: input, shape index: {}]
  %s4 = inlined_call_operand.hbm [shape: bf16[3,3,128,128], index: 4, kind: input, shape index: {}]
  %s5 = inlined_call_operand.vmem [shape: f32[1,128], index: 5, kind: input, shape index: {}]
  %s6 = inlined_call_operand.vmem [shape: f32[1,128], index: 6, kind: input, shape index: {}]
  %s7 = inlined_call_operand.hbm [shape: bf16[2,16,16,128], index: 7, kind: output, shape index: {}]
  %s8 = sld [smem:[#allocation0]]
  $region69: #{tpu_custom_call.1} parent=0
    _
  %s10 = ssub.s32 1, %s8
  %s11 = scalar_select 0, %s10, %s8
  $region1: #{tpu_custom_call.1} parent=0
    #allocation4 [shape = 'u8[294912]{0}', space=vmem, size = 0x48000, scoped, tag = 'input window, operand 1, single buffered']
    #allocation5 [shape = 's32[2]{0}', space=sflag, size = 0x8, scoped, tag = 'scoped memory for tpu_custom_call.1']
    #allocation6 [shape = 's32[2]{0}', space=sflag, size = 0x8, scoped, tag = 'scoped memory for tpu_custom_call.1']
    #allocation7 [shape = 'u8[294912]{0}', space=vmem, size = 0x48000, scoped, tag = 'input window, operand 4, single buffered']
    #allocation8 [shape = 's32[1]{0}', space=sflag, size = 0x4, scoped, tag = 'scoped memory for tpu_custom_call.1']
    #allocation9 [shape = 'u8[131072]{0}', space=vmem, size = 0x20000, scoped, tag = 'output window, operand 0']
    %12 = vsyncpa [#allocation5], 0
    %13 = vsyncpa [#allocation8], 0
    %14 = vsyncpa [#allocation6], 0
    %s15 = scalar_lea.sflag [#allocation6], 1
    %16 = vsyncpa %s15, 0
    loop: start=0, step=1, limit=4
    $region2: #{tpu_custom_call.1} parent=1 // loop_pre_header
      _
    $region3: #{tpu_custom_call.1} parent=1 // loop_header
      %s18 = sphi 0, %s22
      %p19 = scmp.ge.s32.totalorder %s18, 4
      %s28 = sphi 0, %s30
      %s31 = sphi 0, %s28
      %s32 = sphi 0, %s31
      %s48 = sphi 0, %s32
      %s52 = sphi 0, %s52
      %s54 = sphi 0, %s52
      %s55 = sphi 0, %s54
      %s69 = sphi 0, %s55
      %s73 = sphi 0, %s73
      %s75 = sphi 0, %s73
      %s76 = sphi 0, %s75
      %s90 = sphi 0, %s76
      %s94 = sphi 0, %s94
      %s96 = sphi 0, %s94
      %s97 = sphi 0, %s96
      %s111 = sphi 0, %s97
      %s115 = sphi 0, %s115
      %s117 = sphi 0, %s115
      %s118 = sphi 0, %s117
      %s132 = sphi 0, %s118
      %s136 = sphi 0, %s136
      %s138 = sphi 0, %s136
      %s139 = sphi 0, %s138
      %s153 = sphi 0, %s139
      %s157 = sphi 0, %s157
      %s159 = sphi 0, %s157
      %s160 = sphi 0, %s159
      %s174 = sphi 0, %s160
      %s180 = sphi 0, %s182
      %s183 = sphi 0, %s180
      %s184 = sphi 0, %s183
      %s200 = sphi 0, %s184
    $region4: #{tpu_custom_call.1} parent=1 // loop_header_branch
      %21 = sbr.rel (%p19) target = $region8
    $region5: #{tpu_custom_call.1} parent=1 // loop_body
      %s23 = ssub.s32 %s18, 1
      %s24 = ssub.s32 %s18, 2
      %s25 = sadd.s32 %s18, 1
      %s26 = ssub.s32 %s18, %s25
      %p27 = scmp.eq.s32.totalorder %s26, 0
      %s29 = sadd.s32 %s28, 1
      %s30 = scalar_select %p27, %s28, %s29
      %p33 = pneg %p27
      %p34 = scmp.eq.s32.totalorder %s18, 1
      %p35 = por %p33, %p34
      %p36 = scmp.ne.s32.totalorder %s28, %s31
      %p37 = scmp.eq.s32.totalorder %s18, 0
      %p38 = por %p36, %p37
      %p39 = scmp.ne.s32.totalorder %s28, %s31
      %p40 = scmp.eq.s32.totalorder %s23, 1
      %p41 = por %p39, %p40
      %p42 = scmp.ne.s32.totalorder %s31, %s32
      %p43 = scmp.eq.s32.totalorder %s23, 0
      %p44 = por %p42, %p43
      %p45 = scmp.ne.s32.totalorder %s31, %s32
      %p46 = scmp.eq.s32.totalorder %s24, 1
      %p47 = por %p45, %p46
      %p49 = scmp.ne.s32.totalorder %s32, %s48
      %p50 = scmp.eq.s32.totalorder %s24, 0
      %p51 = por %p49, %p50
      %s53 = sadd.s32 %s52, 1
      %p56 = scmp.eq.s32.totalorder %s18, 1
      %p57 = scmp.ne.s32.totalorder %s52, %s54
      %p58 = scmp.eq.s32.totalorder %s18, 0
      %p59 = por %p57, %p58
      %p60 = scmp.ne.s32.totalorder %s52, %s54
      %p61 = scmp.eq.s32.totalorder %s23, 1
      %p62 = por %p60, %p61
      %p63 = scmp.ne.s32.totalorder %s54, %s55
      %p64 = scmp.eq.s32.totalorder %s23, 0
      %p65 = por %p63, %p64
      %p66 = scmp.ne.s32.totalorder %s54, %s55
      %p67 = scmp.eq.s32.totalorder %s24, 1
      %p68 = por %p66, %p67
      %p70 = scmp.ne.s32.totalorder %s55, %s69
      %p71 = scmp.eq.s32.totalorder %s24, 0
      %p72 = por %p70, %p71
      %s74 = sadd.s32 %s73, 1
      %p77 = scmp.eq.s32.totalorder %s18, 1
      %p78 = scmp.ne.s32.totalorder %s73, %s75
      %p79 = scmp.eq.s32.totalorder %s18, 0
      %p80 = por %p78, %p79
      %p81 = scmp.ne.s32.totalorder %s73, %s75
      %p82 = scmp.eq.s32.totalorder %s23, 1
      %p83 = por %p81, %p82
      %p84 = scmp.ne.s32.totalorder %s75, %s76
      %p85 = scmp.eq.s32.totalorder %s23, 0
      %p86 = por %p84, %p85
      %p87 = scmp.ne.s32.totalorder %s75, %s76
      %p88 = scmp.eq.s32.totalorder %s24, 1
      %p89 = por %p87, %p88
      %p91 = scmp.ne.s32.totalorder %s76, %s90
      %p92 = scmp.eq.s32.totalorder %s24, 0
      %p93 = por %p91, %p92
      %s95 = sadd.s32 %s94, 1
      %p98 = scmp.eq.s32.totalorder %s18, 1
      %p99 = scmp.ne.s32.totalorder %s94, %s96
      %p100 = scmp.eq.s32.totalorder %s18, 0
      %p101 = por %p99, %p100
      %p102 = scmp.ne.s32.totalorder %s94, %s96
      %p103 = scmp.eq.s32.totalorder %s23, 1
      %p104 = por %p102, %p103
      %p105 = scmp.ne.s32.totalorder %s96, %s97
      %p106 = scmp.eq.s32.totalorder %s23, 0
      %p107 = por %p105, %p106
      %p108 = scmp.ne.s32.totalorder %s96, %s97
      %p109 = scmp.eq.s32.totalorder %s24, 1
      %p110 = por %p108, %p109
      %p112 = scmp.ne.s32.totalorder %s97, %s111
      %p113 = scmp.eq.s32.totalorder %s24, 0
      %p114 = por %p112, %p113
      %s116 = sadd.s32 %s115, 1
      %p119 = scmp.eq.s32.totalorder %s18, 1
      %p120 = scmp.ne.s32.totalorder %s115, %s117
      %p121 = scmp.eq.s32.totalorder %s18, 0
      %p122 = por %p120, %p121
      %p123 = scmp.ne.s32.totalorder %s115, %s117
      %p124 = scmp.eq.s32.totalorder %s23, 1
      %p125 = por %p123, %p124
      %p126 = scmp.ne.s32.totalorder %s117, %s118
      %p127 = scmp.eq.s32.totalorder %s23, 0
      %p128 = por %p126, %p127
      %p129 = scmp.ne.s32.totalorder %s117, %s118
      %p130 = scmp.eq.s32.totalorder %s24, 1
      %p131 = por %p129, %p130
      %p133 = scmp.ne.s32.totalorder %s118, %s132
      %p134 = scmp.eq.s32.totalorder %s24, 0
      %p135 = por %p133, %p134
      %s137 = sadd.s32 %s136, 1
      %p140 = scmp.eq.s32.totalorder %s18, 1
      %p141 = scmp.ne.s32.totalorder %s136, %s138
      %p142 = scmp.eq.s32.totalorder %s18, 0
      %p143 = por %p141, %p142
      %p144 = scmp.ne.s32.totalorder %s136, %s138
      %p145 = scmp.eq.s32.totalorder %s23, 1
      %p146 = por %p144, %p145
      %p147 = scmp.ne.s32.totalorder %s138, %s139
      %p148 = scmp.eq.s32.totalorder %s23, 0
      %p149 = por %p147, %p148
      %p150 = scmp.ne.s32.totalorder %s138, %s139
      %p151 = scmp.eq.s32.totalorder %s24, 1
      %p152 = por %p150, %p151
      %p154 = scmp.ne.s32.totalorder %s139, %s153
      %p155 = scmp.eq.s32.totalorder %s24, 0
      %p156 = por %p154, %p155
      %s158 = sadd.s32 %s157, 1
      %p161 = scmp.eq.s32.totalorder %s18, 1
      %p162 = scmp.ne.s32.totalorder %s157, %s159
      %p163 = scmp.eq.s32.totalorder %s18, 0
      %p164 = por %p162, %p163
      %p165 = scmp.ne.s32.totalorder %s157, %s159
      %p166 = scmp.eq.s32.totalorder %s23, 1
      %p167 = por %p165, %p166
      %p168 = scmp.ne.s32.totalorder %s159, %s160
      %p169 = scmp.eq.s32.totalorder %s23, 0
      %p170 = por %p168, %p169
      %p171 = scmp.ne.s32.totalorder %s159, %s160
      %p172 = scmp.eq.s32.totalorder %s24, 1
      %p173 = por %p171, %p172
      %p175 = scmp.ne.s32.totalorder %s160, %s174
      %p176 = scmp.eq.s32.totalorder %s24, 0
      %p177 = por %p175, %p176
      %s178 = ssub.s32 %s18, %s25
      %p179 = scmp.eq.s32.totalorder %s178, 0
      %s181 = sadd.s32 %s180, 1
      %s182 = scalar_select %p179, %s180, %s181
      %p185 = pneg %p179
      %p186 = scmp.eq.s32.totalorder %s18, 1
      %p187 = por %p185, %p186
      %p188 = scmp.ne.s32.totalorder %s180, %s183
      %p189 = scmp.eq.s32.totalorder %s18, 0
      %p190 = por %p188, %p189
      %p191 = scmp.ne.s32.totalorder %s180, %s183
      %p192 = scmp.eq.s32.totalorder %s23, 1
      %p193 = por %p191, %p192
      %p194 = scmp.ne.s32.totalorder %s183, %s184
      %p195 = scmp.eq.s32.totalorder %s23, 0
      %p196 = por %p194, %p195
      %p197 = scmp.ne.s32.totalorder %s183, %s184
      %p198 = scmp.eq.s32.totalorder %s24, 1
      %p199 = por %p197, %p198
      %p201 = scmp.ne.s32.totalorder %s184, %s200
      %p202 = scmp.eq.s32.totalorder %s24, 0
      %p203 = por %p201, %p202
      %p204 = scmp.le.s32.totalorder 1, %s18
      %p205 = scmp.lt.s32.totalorder %s18, 3
      %p206 = pnand %p204, %p205
      %p207 = pneg %p206
      // Predicated region
      $region9: #{tpu_custom_call.1} parent=5 // pred_check
        _
      $region10: #{tpu_custom_call.1} parent=5 // pred_check_branch
        %209 = sbr.rel (%p206) target = $region12
      $region11: #{tpu_custom_call.1} parent=5 // pred_region
        %s210 = ssub.s32 %s18, 1
        // Predicated region
        $region13: #{tpu_custom_call.1} parent=11 // pred_check
          %p211 = pneg %p65
        $region14: #{tpu_custom_call.1} parent=11 // pred_check_branch
          %213 = sbr.rel (%p211) target = $region16
        $region15: #{tpu_custom_call.1} parent=11 // pred_region
          %215 = vsyncadd [#allocation5], 0
          %s216 = sshll.u32 %s1, 4
          %s217 = int_to_ptr.hbm [resolvable:$true] %s216
          %s218 = sshll.u32 [#allocation4], 4
          %s219 = int_to_ptr.vmem [resolvable:$true] %s218
          %224 = dma.hbm_to_vmem [thread:$0]  %s217, 9216, %s219, [#allocation5], 64, 64, 4
        $region16: #{tpu_custom_call.1} parent=11 // pred_fallthru
          _
        // Predicated region
        $region17: #{tpu_custom_call.1} parent=11 // pred_check
          %p225 = pneg %p86
        $region18: #{tpu_custom_call.1} parent=11 // pred_check_branch
          %227 = sbr.rel (%p225) target = $region20
        $region19: #{tpu_custom_call.1} parent=11 // pred_region
          _
        $region20: #{tpu_custom_call.1} parent=11 // pred_fallthru
          _
        // Predicated region
        $region21: #{tpu_custom_call.1} parent=11 // pred_check
          %p228 = pneg %p107
        $region22: #{tpu_custom_call.1} parent=11 // pred_check_branch
          %230 = sbr.rel (%p228) target = $region24
        $region23: #{tpu_custom_call.1} parent=11 // pred_region
          _
        $region24: #{tpu_custom_call.1} parent=11 // pred_fallthru
          _
        // Predicated region
        $region25: #{tpu_custom_call.1} parent=11 // pred_check
          %p231 = pneg %p128
        $region26: #{tpu_custom_call.1} parent=11 // pred_check_branch
          %233 = sbr.rel (%p231) target = $region28
        $region27: #{tpu_custom_call.1} parent=11 // pred_region
          %235 = vsyncadd [#allocation8], 0
          %s236 = sshll.u32 %s4, 4
          %s237 = int_to_ptr.hbm [resolvable:$true] %s236
          %s238 = sshll.u32 [#allocation7], 4
          %s239 = int_to_ptr.vmem [resolvable:$true] %s238
          %244 = dma.hbm_to_vmem [thread:$0]  %s237, 9216, %s239, [#allocation8], 64, 64, 4
        $region28: #{tpu_custom_call.1} parent=11 // pred_fallthru
          _
        // Predicated region
        $region29: #{tpu_custom_call.1} parent=11 // pred_check
          %p245 = pneg %p149
        $region30: #{tpu_custom_call.1} parent=11 // pred_check_branch
          %247 = sbr.rel (%p245) target = $region32
        $region31: #{tpu_custom_call.1} parent=11 // pred_region
          _
        $region32: #{tpu_custom_call.1} parent=11 // pred_fallthru
          _
        // Predicated region
        $region33: #{tpu_custom_call.1} parent=11 // pred_check
          %p248 = pneg %p170
        $region34: #{tpu_custom_call.1} parent=11 // pred_check_branch
          %250 = sbr.rel (%p248) target = $region36
        $region35: #{tpu_custom_call.1} parent=11 // pred_region
          _
        $region36: #{tpu_custom_call.1} parent=11 // pred_fallthru
          _
      $region12: #{tpu_custom_call.1} parent=5 // pred_fallthru
        _
      %p251 = scmp.lt.s32.totalorder %s18, 2
      // Predicated region
      $region37: #{tpu_custom_call.1} parent=5 // pred_check
        %p252 = pneg %p251
      $region38: #{tpu_custom_call.1} parent=5 // pred_check_branch
        %254 = sbr.rel (%p252) target = $region40
      $region39: #{tpu_custom_call.1} parent=5 // pred_region
        // Predicated region
        $region41: #{tpu_custom_call.1} parent=39 // pred_check
          %p255 = pneg %p38
        $region42: #{tpu_custom_call.1} parent=39 // pred_check_branch
          %257 = sbr.rel (%p255) target = $region44
        $region43: #{tpu_custom_call.1} parent=39 // pred_region
          %p258 = scmp.lt.s32.totalorder %s18, 1
          %s259 = scalar_select %p258, %s18, 1
          %s260 = smul.addr %s259, 32
          %s261 = smul.addr %s260, 4
          %s262 = scalar_lea.vmem %s0, %s261
        $region44: #{tpu_custom_call.1} parent=39 // pred_fallthru
          _
      $region40: #{tpu_custom_call.1} parent=5 // pred_fallthru
        _
      %p263 = scmp.le.s32.totalorder 1, %s18
      %p264 = scmp.lt.s32.totalorder %s18, 3
      %p265 = pnand %p263, %p264
      %p266 = pneg %p265
      // Predicated region
      $region45: #{tpu_custom_call.1} parent=5 // pred_check
        _
      $region46: #{tpu_custom_call.1} parent=5 // pred_check_branch
        %268 = sbr.rel (%p265) target = $region48
      $region47: #{tpu_custom_call.1} parent=5 // pred_region
        %s269 = ssub.s32 %s18, 1
        // Predicated region
        $region49: #{tpu_custom_call.1} parent=47 // pred_check
          %p270 = pneg %p65
        $region50: #{tpu_custom_call.1} parent=47 // pred_check_branch
          %272 = sbr.rel (%p270) target = $region52
        $region51: #{tpu_custom_call.1} parent=47 // pred_region
          %274 = dma.done [#allocation5], 9216
        $region52: #{tpu_custom_call.1} parent=47 // pred_fallthru
          _
        // Predicated region
        $region53: #{tpu_custom_call.1} parent=47 // pred_check
          %p275 = pneg %p128
        $region54: #{tpu_custom_call.1} parent=47 // pred_check_branch
          %277 = sbr.rel (%p275) target = $region56
        $region55: #{tpu_custom_call.1} parent=47 // pred_region
          %279 = dma.done [#allocation8], 9216
        $region56: #{tpu_custom_call.1} parent=47 // pred_fallthru
          _
        %p280 = scmp.lt.s32.totalorder %s23, 1
        %s281 = scalar_select %p280, %s23, 1
        %s282 = smul.addr %s281, 32
        %s283 = smul.addr %s282, 4
        %s284 = scalar_lea.vmem %s0, %s283
        %p285 = pneg %p44
        %p286 = pneg %p41
        %p287 = pneg %p65
        %p288 = pneg %p62
        %p289 = pneg %p86
        %p290 = pneg %p83
        %p291 = pneg %p107
        %p292 = pneg %p104
        %p293 = pneg %p128
        %p294 = pneg %p125
        %p295 = pneg %p149
        %p296 = pneg %p146
        %p297 = pneg %p170
        %p298 = pneg %p167
        %p299 = pneg %p196
        %p300 = pneg %p193
        %s301 = sand.u32 %s183, 1
        %s302 = scalar_lea.sflag [#allocation6], %s301
        %s303 = sand.u32 %s183, 1
        %s304 = smul.addr %s303, 128
        %s305 = scalar_lea.vmem [#allocation9], %s304
        %p306 = scmp.lt.s32.totalorder %s23, 1
        %s307 = scalar_select %p306, %s23, 1
        %s308 = smul.addr %s307, 32
        %s309 = smul.addr %s308, 4
        %s310 = scalar_lea.vmem %s0, %s309
        %312 = vst [vmem:[#allocation2] sm:$0xf] 0
        %313 = vst [vmem:[#allocation2 + $0x4] sm:$0xf] 0
        %314 = vst [vmem:[#allocation2 + $0x8] sm:$0x1] 0
        %315 = vst [vmem:[#allocation2 + $0xc] sm:$0xf] 0
        %316 = vst [vmem:[#allocation2 + $0x10] sm:$0xf] 0
        %317 = vst [vmem:[#allocation2 + $0x14] sm:$0x1] 0
        %318 = vst [vmem:[#allocation2 + $0x18] sm:$0xf] 0
        %319 = vst [vmem:[#allocation2 + $0x1c] sm:$0xf] 0
        %320 = vst [vmem:[#allocation2 + $0x20] sm:$0x1] 0
        %321 = vst [vmem:[#allocation2 + $0x24] sm:$0xf] 0
        %322 = vst [vmem:[#allocation2 + $0x28] sm:$0xf] 0
        %323 = vst [vmem:[#allocation2 + $0x2c] sm:$0x1] 0
        %324 = vst [vmem:[#allocation2 + $0x30] sm:$0xf] 0
        %325 = vst [vmem:[#allocation2 + $0x34] sm:$0xf] 0
        %326 = vst [vmem:[#allocation2 + $0x38] sm:$0x1] 0
        %327 = vst [vmem:[#allocation2 + $0x3c] sm:$0xf] 0
        %328 = vst [vmem:[#allocation2 + $0x40] sm:$0xf] 0
        %329 = vst [vmem:[#allocation2 + $0x44] sm:$0x1] 0
        %330 = vst [vmem:[#allocation2 + $0x48] sm:$0xf] 0
        %331 = vst [vmem:[#allocation2 + $0x4c] sm:$0xf] 0
        %332 = vst [vmem:[#allocation2 + $0x50] sm:$0x1] 0
        %333 = vst [vmem:[#allocation2 + $0x54] sm:$0xf] 0
        %334 = vst [vmem:[#allocation2 + $0x58] sm:$0xf] 0
        %335 = vst [vmem:[#allocation2 + $0x5c] sm:$0x1] 0
        %336 = vst [vmem:[#allocation2 + $0x60] sm:$0xf] 0
        %337 = vst [vmem:[#allocation2 + $0x64] sm:$0xf] 0
        %338 = vst [vmem:[#allocation2 + $0x68] sm:$0x1] 0
        %339 = vst [vmem:[#allocation2 + $0x6c] sm:$0xf] 0
        %340 = vst [vmem:[#allocation2 + $0x70] sm:$0xf] 0
        %341 = vst [vmem:[#allocation2 + $0x74] sm:$0x1] 0
        %342 = vst [vmem:[#allocation2 + $0x78] sm:$0xf] 0
        %343 = vst [vmem:[#allocation2 + $0x7c] sm:$0xf] 0
        %344 = vst [vmem:[#allocation2 + $0x80] sm:$0x1] 0
        %345 = vst [vmem:[#allocation2 + $0x84] sm:$0xf] 0
        %346 = vst [vmem:[#allocation2 + $0x88] sm:$0xf] 0
        %347 = vst [vmem:[#allocation2 + $0x8c] sm:$0x1] 0
        %348 = vst [vmem:[#allocation2 + $0x90] sm:$0xf] 0
        %349 = vst [vmem:[#allocation2 + $0x94] sm:$0xf] 0
        %350 = vst [vmem:[#allocation2 + $0x98] sm:$0x1] 0
        %351 = vst [vmem:[#allocation2 + $0x9c] sm:$0xf] 0
        %352 = vst [vmem:[#allocation2 + $0xa0] sm:$0xf] 0
        %353 = vst [vmem:[#allocation2 + $0xa4] sm:$0x1] 0
        %354 = vst [vmem:[#allocation2 + $0xa8] sm:$0xf] 0
        %355 = vst [vmem:[#allocation2 + $0xac] sm:$0xf] 0
        %356 = vst [vmem:[#allocation2 + $0xb0] sm:$0x1] 0
        %357 = vst [vmem:[#allocation2 + $0xb4] sm:$0xf] 0
        %358 = vst [vmem:[#allocation2 + $0xb8] sm:$0xf] 0
        %359 = vst [vmem:[#allocation2 + $0xbc] sm:$0x1] 0
        %360 = vst [vmem:[#allocation2 + $0xc0] sm:$0xf] 0
        %361 = vst [vmem:[#allocation2 + $0xc4] sm:$0xf] 0
        %362 = vst [vmem:[#allocation2 + $0xc8] sm:$0x1] 0
        %363 = vst [vmem:[#allocation2 + $0xcc] sm:$0xf] 0
        %364 = vst [vmem:[#allocation2 + $0xd0] sm:$0xf] 0
        %365 = vst [vmem:[#allocation2 + $0xd4] sm:$0x1] 0
        %v366 = vld [vmem:[%s310] sm:$0xf]
        %v367 = vld [vmem:[%s310 + $0x4] sm:$0xf]
        %v368 = vld [vmem:[%s310 + $0x8] sm:$0xf]
        %v369 = vld [vmem:[%s310 + $0xc] sm:$0xf]
        %v370 = vld [vmem:[%s310 + $0x10] sm:$0xf]
        %v371 = vld [vmem:[%s310 + $0x14] sm:$0xf]
        %v372 = vld [vmem:[%s310 + $0x18] sm:$0xf]
        %v373 = vld [vmem:[%s310 + $0x1c] sm:$0xf]
        %v374 = vld [vmem:[%s310 + $0x20] sm:$0xf]
        %v375 = vld [vmem:[%s310 + $0x24] sm:$0xf]
        %v376 = vld [vmem:[%s310 + $0x28] sm:$0xf]
        %v377 = vld [vmem:[%s310 + $0x2c] sm:$0xf]
        %v378 = vld [vmem:[%s310 + $0x30] sm:$0xf]
        %v379 = vld [vmem:[%s310 + $0x34] sm:$0xf]
        %v380 = vld [vmem:[%s310 + $0x38] sm:$0xf]
        %v381 = vld [vmem:[%s310 + $0x3c] sm:$0xf]
        %v382 = vld [vmem:[%s310 + $0x40] sm:$0xf]
        %v383 = vld [vmem:[%s310 + $0x44] sm:$0xf]
        %v384 = vld [vmem:[%s310 + $0x48] sm:$0xf]
        %v385 = vld [vmem:[%s310 + $0x4c] sm:$0xf]
        %v386 = vld [vmem:[%s310 + $0x50] sm:$0xf]
        %v387 = vld [vmem:[%s310 + $0x54] sm:$0xf]
        %v388 = vld [vmem:[%s310 + $0x58] sm:$0xf]
        %v389 = vld [vmem:[%s310 + $0x5c] sm:$0xf]
        %v390 = vld [vmem:[%s310 + $0x60] sm:$0xf]
        %v391 = vld [vmem:[%s310 + $0x64] sm:$0xf]
        %v392 = vld [vmem:[%s310 + $0x68] sm:$0xf]
        %v393 = vld [vmem:[%s310 + $0x6c] sm:$0xf]
        %v394 = vld [vmem:[%s310 + $0x70] sm:$0xf]
        %v395 = vld [vmem:[%s310 + $0x74] sm:$0xf]
        %v396 = vld [vmem:[%s310 + $0x78] sm:$0xf]
        %v397 = vld [vmem:[%s310 + $0x7c] sm:$0xf]
        %vm398 = vsmask.f32 256
        %vm399 = vsmask.f32 4368
        %vm400 = vmor %vm398, %vm399
        %v402 = vshrl.u32 %v366, 16
        %v404 = vrot.slane %v402, 7
        %v405 = vshll.u32 %v366, 16
        %v407 = vor.u32 %v404, %v405
        %v408 = vrot.slane %v404, 4
        %v410 = vshrl.u32 %v367, 16
        %v412 = vrot.slane %v410, 7
        %v413 = vshll.u32 %v367, 16
        %v415 = vor.u32 %v412, %v413
        %v416 = vsel %vm400, %v408, %v415
        %v417 = vrot.slane %v412, 4
        %v419 = vshrl.u32 %v368, 16
        %v421 = vrot.slane %v419, 7
        %v422 = vshll.u32 %v368, 16
        %v424 = vor.u32 %v421, %v422
        %v425 = vrot.slane %v421, 4
        %v427 = vshrl.u32 %v369, 16
        %v429 = vrot.slane %v427, 7
        %v430 = vshll.u32 %v369, 16
        %v432 = vor.u32 %v429, %v430
        %v433 = vsel %vm400, %v425, %v432
        %v434 = vrot.slane %v429, 4
        %v436 = vshrl.u32 %v370, 16
        %v438 = vrot.slane %v436, 7
        %v439 = vshll.u32 %v370, 16
        %v441 = vor.u32 %v438, %v439
        %v442 = vrot.slane %v438, 4
        %v444 = vshrl.u32 %v371, 16
        %v446 = vrot.slane %v444, 7
        %v447 = vshll.u32 %v371, 16
        %v449 = vor.u32 %v446, %v447
        %v450 = vsel %vm400, %v442, %v449
        %v451 = vrot.slane %v446, 4
        %v453 = vshrl.u32 %v372, 16
        %v455 = vrot.slane %v453, 7
        %v456 = vshll.u32 %v372, 16
        %v458 = vor.u32 %v455, %v456
        %v459 = vrot.slane %v455, 4
        %v461 = vshrl.u32 %v373, 16
        %v463 = vrot.slane %v461, 7
        %v464 = vshll.u32 %v373, 16
        %v466 = vor.u32 %v463, %v464
        %v467 = vsel %vm400, %v459, %v466
        %v468 = vrot.slane %v463, 4
        %v470 = vshrl.u32 %v374, 16
        %v472 = vrot.slane %v470, 7
        %v473 = vshll.u32 %v374, 16
        %v475 = vor.u32 %v472, %v473
        %v476 = vrot.slane %v472, 4
        %v478 = vshrl.u32 %v375, 16
        %v480 = vrot.slane %v478, 7
        %v481 = vshll.u32 %v375, 16
        %v483 = vor.u32 %v480, %v481
        %v484 = vsel %vm400, %v476, %v483
        %v485 = vrot.slane %v480, 4
        %v487 = vshrl.u32 %v376, 16
        %v489 = vrot.slane %v487, 7
        %v490 = vshll.u32 %v376, 16
        %v492 = vor.u32 %v489, %v490
        %v493 = vrot.slane %v489, 4
        %v495 = vshrl.u32 %v377, 16
        %v497 = vrot.slane %v495, 7
        %v498 = vshll.u32 %v377, 16
        %v500 = vor.u32 %v497, %v498
        %v501 = vsel %vm400, %v493, %v500
        %v502 = vrot.slane %v497, 4
        %v504 = vshrl.u32 %v378, 16
        %v506 = vrot.slane %v504, 7
        %v507 = vshll.u32 %v378, 16
        %v509 = vor.u32 %v506, %v507
        %v510 = vrot.slane %v506, 4
        %v512 = vshrl.u32 %v379, 16
        %v514 = vrot.slane %v512, 7
        %v515 = vshll.u32 %v379, 16
        %v517 = vor.u32 %v514, %v515
        %v518 = vsel %vm400, %v510, %v517
        %v519 = vrot.slane %v514, 4
        %v521 = vshrl.u32 %v380, 16
        %v523 = vrot.slane %v521, 7
        %v524 = vshll.u32 %v380, 16
        %v526 = vor.u32 %v523, %v524
        %v527 = vrot.slane %v523, 4
        %v529 = vshrl.u32 %v381, 16
        %v531 = vrot.slane %v529, 7
        %v532 = vshll.u32 %v381, 16
        %v534 = vor.u32 %v531, %v532
        %v535 = vsel %vm400, %v527, %v534
        %v536 = vrot.slane %v531, 4
        %v538 = vshrl.u32 %v382, 16
        %v540 = vrot.slane %v538, 7
        %v541 = vshll.u32 %v382, 16
        %v543 = vor.u32 %v540, %v541
        %v544 = vrot.slane %v540, 4
        %v546 = vshrl.u32 %v383, 16
        %v548 = vrot.slane %v546, 7
        %v549 = vshll.u32 %v383, 16
        %v551 = vor.u32 %v548, %v549
        %v552 = vsel %vm400, %v544, %v551
        %v553 = vrot.slane %v548, 4
        %v555 = vshrl.u32 %v384, 16
        %v557 = vrot.slane %v555, 7
        %v558 = vshll.u32 %v384, 16
        %v560 = vor.u32 %v557, %v558
        %v561 = vrot.slane %v557, 4
        %v563 = vshrl.u32 %v385, 16
        %v565 = vrot.slane %v563, 7
        %v566 = vshll.u32 %v385, 16
        %v568 = vor.u32 %v565, %v566
        %v569 = vsel %vm400, %v561, %v568
        %v570 = vrot.slane %v565, 4
        %v572 = vshrl.u32 %v386, 16
        %v574 = vrot.slane %v572, 7
        %v575 = vshll.u32 %v386, 16
        %v577 = vor.u32 %v574, %v575
        %v578 = vrot.slane %v574, 4
        %v580 = vshrl.u32 %v387, 16
        %v582 = vrot.slane %v580, 7
        %v583 = vshll.u32 %v387, 16
        %v585 = vor.u32 %v582, %v583
        %v586 = vsel %vm400, %v578, %v585
        %v587 = vrot.slane %v582, 4
        %v589 = vshrl.u32 %v388, 16
        %v591 = vrot.slane %v589, 7
        %v592 = vshll.u32 %v388, 16
        %v594 = vor.u32 %v591, %v592
        %v595 = vrot.slane %v591, 4
        %v597 = vshrl.u32 %v389, 16
        %v599 = vrot.slane %v597, 7
        %v600 = vshll.u32 %v389, 16
        %v602 = vor.u32 %v599, %v600
        %v603 = vsel %vm400, %v595, %v602
        %v604 = vrot.slane %v599, 4
        %v606 = vshrl.u32 %v390, 16
        %v608 = vrot.slane %v606, 7
        %v609 = vshll.u32 %v390, 16
        %v611 = vor.u32 %v608, %v609
        %v612 = vrot.slane %v608, 4
        %v614 = vshrl.u32 %v391, 16
        %v616 = vrot.slane %v614, 7
        %v617 = vshll.u32 %v391, 16
        %v619 = vor.u32 %v616, %v617
        %v620 = vsel %vm400, %v612, %v619
        %v621 = vrot.slane %v616, 4
        %v623 = vshrl.u32 %v392, 16
        %v625 = vrot.slane %v623, 7
        %v626 = vshll.u32 %v392, 16
        %v628 = vor.u32 %v625, %v626
        %v629 = vrot.slane %v625, 4
        %v631 = vshrl.u32 %v393, 16
        %v633 = vrot.slane %v631, 7
        %v634 = vshll.u32 %v393, 16
        %v636 = vor.u32 %v633, %v634
        %v637 = vsel %vm400, %v629, %v636
        %v638 = vrot.slane %v633, 4
        %v640 = vshrl.u32 %v394, 16
        %v642 = vrot.slane %v640, 7
        %v643 = vshll.u32 %v394, 16
        %v645 = vor.u32 %v642, %v643
        %v646 = vrot.slane %v642, 4
        %v648 = vshrl.u32 %v395, 16
        %v650 = vrot.slane %v648, 7
        %v651 = vshll.u32 %v395, 16
        %v653 = vor.u32 %v650, %v651
        %v654 = vsel %vm400, %v646, %v653
        %v655 = vrot.slane %v650, 4
        %v657 = vshrl.u32 %v396, 16
        %v659 = vrot.slane %v657, 7
        %v660 = vshll.u32 %v396, 16
        %v662 = vor.u32 %v659, %v660
        %v663 = vrot.slane %v659, 4
        %v665 = vshrl.u32 %v397, 16
        %v667 = vrot.slane %v665, 7
        %v668 = vshll.u32 %v397, 16
        %v670 = vor.u32 %v667, %v668
        %v671 = vsel %vm400, %v663, %v670
        %v672 = vrot.slane %v667, 4
        %s721 = scalar_lea.vmem [#allocation2], 12
        %vm722 = vcmask 27648
        %vm723 = vsmask.f32 7938
        %vm724 = vmand %vm722, %vm723
        %v725 = vld [vmem:[%s721] sm:$0xf]
        %v726 = vsel %vm724, %v407, %v725
        %727 = vst [vmem:[%s721] sm:$0xf] %v726
        %vm728 = vcmask 27648
        %729 = vst.msk [vmem:[%s721 + $0x4] sm:$0xf] %vm728, %v416
        %vm730 = vcmask 24576
        %vm731 = vmand %vm730, %vm398
        %v732 = vld [vmem:[%s721 + $0x8] sm:$0x1]
        %v733 = vsel %vm731, %v417, %v732
        %734 = vst [vmem:[%s721 + $0x8] sm:$0x1] %v733
        %v735 = vld [vmem:[%s721 + $0xc] sm:$0xf]
        %v736 = vsel %vm724, %v424, %v735
        %737 = vst [vmem:[%s721 + $0xc] sm:$0xf] %v736
        %738 = vst.msk [vmem:[%s721 + $0x10] sm:$0xf] %vm728, %v433
        %v739 = vld [vmem:[%s721 + $0x14] sm:$0x1]
        %v740 = vsel %vm731, %v434, %v739
        %741 = vst [vmem:[%s721 + $0x14] sm:$0x1] %v740
        %v742 = vld [vmem:[%s721 + $0x18] sm:$0xf]
        %v743 = vsel %vm724, %v441, %v742
        %744 = vst [vmem:[%s721 + $0x18] sm:$0xf] %v743
        %745 = vst.msk [vmem:[%s721 + $0x1c] sm:$0xf] %vm728, %v450
        %v746 = vld [vmem:[%s721 + $0x20] sm:$0x1]
        %v747 = vsel %vm731, %v451, %v746
        %748 = vst [vmem:[%s721 + $0x20] sm:$0x1] %v747
        %v749 = vld [vmem:[%s721 + $0x24] sm:$0xf]
        %v750 = vsel %vm724, %v458, %v749
        %751 = vst [vmem:[%s721 + $0x24] sm:$0xf] %v750
        %752 = vst.msk [vmem:[%s721 + $0x28] sm:$0xf] %vm728, %v467
        %v753 = vld [vmem:[%s721 + $0x2c] sm:$0x1]
        %v754 = vsel %vm731, %v468, %v753
        %755 = vst [vmem:[%s721 + $0x2c] sm:$0x1] %v754
        %v756 = vld [vmem:[%s721 + $0x30] sm:$0xf]
        %v757 = vsel %vm724, %v475, %v756
        %758 = vst [vmem:[%s721 + $0x30] sm:$0xf] %v757
        %759 = vst.msk [vmem:[%s721 + $0x34] sm:$0xf] %vm728, %v484
        %v760 = vld [vmem:[%s721 + $0x38] sm:$0x1]
        %v761 = vsel %vm731, %v485, %v760
        %762 = vst [vmem:[%s721 + $0x38] sm:$0x1] %v761
        %v763 = vld [vmem:[%s721 + $0x3c] sm:$0xf]
        %v764 = vsel %vm724, %v492, %v763
        %765 = vst [vmem:[%s721 + $0x3c] sm:$0xf] %v764
        %766 = vst.msk [vmem:[%s721 + $0x40] sm:$0xf] %vm728, %v501
        %v767 = vld [vmem:[%s721 + $0x44] sm:$0x1]
        %v768 = vsel %vm731, %v502, %v767
        %769 = vst [vmem:[%s721 + $0x44] sm:$0x1] %v768
        %v770 = vld [vmem:[%s721 + $0x48] sm:$0xf]
        %v771 = vsel %vm724, %v509, %v770
        %772 = vst [vmem:[%s721 + $0x48] sm:$0xf] %v771
        %773 = vst.msk [vmem:[%s721 + $0x4c] sm:$0xf] %vm728, %v518
        %v774 = vld [vmem:[%s721 + $0x50] sm:$0x1]
        %v775 = vsel %vm731, %v519, %v774
        %776 = vst [vmem:[%s721 + $0x50] sm:$0x1] %v775
        %v777 = vld [vmem:[%s721 + $0x54] sm:$0xf]
        %v778 = vsel %vm724, %v526, %v777
        %779 = vst [vmem:[%s721 + $0x54] sm:$0xf] %v778
        %780 = vst.msk [vmem:[%s721 + $0x58] sm:$0xf] %vm728, %v535
        %v781 = vld [vmem:[%s721 + $0x5c] sm:$0x1]
        %v782 = vsel %vm731, %v536, %v781
        %783 = vst [vmem:[%s721 + $0x5c] sm:$0x1] %v782
        %v784 = vld [vmem:[%s721 + $0x60] sm:$0xf]
        %v785 = vsel %vm724, %v543, %v784
        %786 = vst [vmem:[%s721 + $0x60] sm:$0xf] %v785
        %787 = vst.msk [vmem:[%s721 + $0x64] sm:$0xf] %vm728, %v552
        %v788 = vld [vmem:[%s721 + $0x68] sm:$0x1]
        %v789 = vsel %vm731, %v553, %v788
        %790 = vst [vmem:[%s721 + $0x68] sm:$0x1] %v789
        %v791 = vld [vmem:[%s721 + $0x6c] sm:$0xf]
        %v792 = vsel %vm724, %v560, %v791
        %793 = vst [vmem:[%s721 + $0x6c] sm:$0xf] %v792
        %794 = vst.msk [vmem:[%s721 + $0x70] sm:$0xf] %vm728, %v569
        %v795 = vld [vmem:[%s721 + $0x74] sm:$0x1]
        %v796 = vsel %vm731, %v570, %v795
        %797 = vst [vmem:[%s721 + $0x74] sm:$0x1] %v796
        %v798 = vld [vmem:[%s721 + $0x78] sm:$0xf]
        %v799 = vsel %vm724, %v577, %v798
        %800 = vst [vmem:[%s721 + $0x78] sm:$0xf] %v799
        %801 = vst.msk [vmem:[%s721 + $0x7c] sm:$0xf] %vm728, %v586
        %v802 = vld [vmem:[%s721 + $0x80] sm:$0x1]
        %v803 = vsel %vm731, %v587, %v802
        %804 = vst [vmem:[%s721 + $0x80] sm:$0x1] %v803
        %v805 = vld [vmem:[%s721 + $0x84] sm:$0xf]
        %v806 = vsel %vm724, %v594, %v805
        %807 = vst [vmem:[%s721 + $0x84] sm:$0xf] %v806
        %808 = vst.msk [vmem:[%s721 + $0x88] sm:$0xf] %vm728, %v603
        %v809 = vld [vmem:[%s721 + $0x8c] sm:$0x1]
        %v810 = vsel %vm731, %v604, %v809
        %811 = vst [vmem:[%s721 + $0x8c] sm:$0x1] %v810
        %v812 = vld [vmem:[%s721 + $0x90] sm:$0xf]
        %v813 = vsel %vm724, %v611, %v812
        %814 = vst [vmem:[%s721 + $0x90] sm:$0xf] %v813
        %815 = vst.msk [vmem:[%s721 + $0x94] sm:$0xf] %vm728, %v620
        %v816 = vld [vmem:[%s721 + $0x98] sm:$0x1]
        %v817 = vsel %vm731, %v621, %v816
        %818 = vst [vmem:[%s721 + $0x98] sm:$0x1] %v817
        %v819 = vld [vmem:[%s721 + $0x9c] sm:$0xf]
        %v820 = vsel %vm724, %v628, %v819
        %821 = vst [vmem:[%s721 + $0x9c] sm:$0xf] %v820
        %822 = vst.msk [vmem:[%s721 + $0xa0] sm:$0xf] %vm728, %v637
        %v823 = vld [vmem:[%s721 + $0xa4] sm:$0x1]
        %v824 = vsel %vm731, %v638, %v823
        %825 = vst [vmem:[%s721 + $0xa4] sm:$0x1] %v824
        %v826 = vld [vmem:[%s721 + $0xa8] sm:$0xf]
        %v827 = vsel %vm724, %v645, %v826
        %828 = vst [vmem:[%s721 + $0xa8] sm:$0xf] %v827
        %829 = vst.msk [vmem:[%s721 + $0xac] sm:$0xf] %vm728, %v654
        %v830 = vld [vmem:[%s721 + $0xb0] sm:$0x1]
        %v831 = vsel %vm731, %v655, %v830
        %832 = vst [vmem:[%s721 + $0xb0] sm:$0x1] %v831
        %v833 = vld [vmem:[%s721 + $0xb4] sm:$0xf]
        %v834 = vsel %vm724, %v662, %v833
        %835 = vst [vmem:[%s721 + $0xb4] sm:$0xf] %v834
        %836 = vst.msk [vmem:[%s721 + $0xb8] sm:$0xf] %vm728, %v671
        %v837 = vld [vmem:[%s721 + $0xbc] sm:$0x1]
        %v838 = vsel %vm731, %v672, %v837
        %839 = vst [vmem:[%s721 + $0xbc] sm:$0x1] %v838
        %840 = vst [vmem:[#allocation3] sm:$0xf] 0
        %841 = vst [vmem:[#allocation3 + $0x4] sm:$0xf] 0
        %842 = vst [vmem:[#allocation3 + $0x8] sm:$0x1] 0
        %843 = vst [vmem:[#allocation3 + $0xc] sm:$0xf] 0
        %844 = vst [vmem:[#allocation3 + $0x10] sm:$0xf] 0
        %845 = vst [vmem:[#allocation3 + $0x14] sm:$0x1] 0
        %846 = vst [vmem:[#allocation3 + $0x18] sm:$0xf] 0
        %847 = vst [vmem:[#allocation3 + $0x1c] sm:$0xf] 0
        %848 = vst [vmem:[#allocation3 + $0x20] sm:$0x1] 0
        %849 = vst [vmem:[#allocation3 + $0x24] sm:$0xf] 0
        %850 = vst [vmem:[#allocation3 + $0x28] sm:$0xf] 0
        %851 = vst [vmem:[#allocation3 + $0x2c] sm:$0x1] 0
        %852 = vst [vmem:[#allocation3 + $0x30] sm:$0xf] 0
        %853 = vst [vmem:[#allocation3 + $0x34] sm:$0xf] 0
        %854 = vst [vmem:[#allocation3 + $0x38] sm:$0x1] 0
        %855 = vst [vmem:[#allocation3 + $0x3c] sm:$0xf] 0
        %856 = vst [vmem:[#allocation3 + $0x40] sm:$0xf] 0
        %857 = vst [vmem:[#allocation3 + $0x44] sm:$0x1] 0
        %858 = vst [vmem:[#allocation3 + $0x48] sm:$0xf] 0
        %859 = vst [vmem:[#allocation3 + $0x4c] sm:$0xf] 0
        %860 = vst [vmem:[#allocation3 + $0x50] sm:$0x1] 0
        %861 = vst [vmem:[#allocation3 + $0x54] sm:$0xf] 0
        %862 = vst [vmem:[#allocation3 + $0x58] sm:$0xf] 0
        %863 = vst [vmem:[#allocation3 + $0x5c] sm:$0x1] 0
        %864 = vst [vmem:[#allocation3 + $0x60] sm:$0xf] 0
        %865 = vst [vmem:[#allocation3 + $0x64] sm:$0xf] 0
        %866 = vst [vmem:[#allocation3 + $0x68] sm:$0x1] 0
        %867 = vst [vmem:[#allocation3 + $0x6c] sm:$0xf] 0
        %868 = vst [vmem:[#allocation3 + $0x70] sm:$0xf] 0
        %869 = vst [vmem:[#allocation3 + $0x74] sm:$0x1] 0
        %870 = vst [vmem:[#allocation3 + $0x78] sm:$0xf] 0
        %871 = vst [vmem:[#allocation3 + $0x7c] sm:$0xf] 0
        %872 = vst [vmem:[#allocation3 + $0x80] sm:$0x1] 0
        %873 = vst [vmem:[#allocation3 + $0x84] sm:$0xf] 0
        %874 = vst [vmem:[#allocation3 + $0x88] sm:$0xf] 0
        %875 = vst [vmem:[#allocation3 + $0x8c] sm:$0x1] 0
        %876 = vst [vmem:[#allocation3 + $0x90] sm:$0xf] 0
        %877 = vst [vmem:[#allocation3 + $0x94] sm:$0xf] 0
        %878 = vst [vmem:[#allocation3 + $0x98] sm:$0x1] 0
        %879 = vst [vmem:[#allocation3 + $0x9c] sm:$0xf] 0
        %880 = vst [vmem:[#allocation3 + $0xa0] sm:$0xf] 0
        %881 = vst [vmem:[#allocation3 + $0xa4] sm:$0x1] 0
        %882 = vst [vmem:[#allocation3 + $0xa8] sm:$0xf] 0
        %883 = vst [vmem:[#allocation3 + $0xac] sm:$0xf] 0
        %884 = vst [vmem:[#allocation3 + $0xb0] sm:$0x1] 0
        %885 = vst [vmem:[#allocation3 + $0xb4] sm:$0xf] 0
        %886 = vst [vmem:[#allocation3 + $0xb8] sm:$0xf] 0
        %887 = vst [vmem:[#allocation3 + $0xbc] sm:$0x1] 0
        %888 = vst [vmem:[#allocation3 + $0xc0] sm:$0xf] 0
        %889 = vst [vmem:[#allocation3 + $0xc4] sm:$0xf] 0
        %890 = vst [vmem:[#allocation3 + $0xc8] sm:$0x1] 0
        %891 = vst [vmem:[#allocation3 + $0xcc] sm:$0xf] 0
        %892 = vst [vmem:[#allocation3 + $0xd0] sm:$0xf] 0
        %893 = vst [vmem:[#allocation3 + $0xd4] sm:$0x1] 0
        %v894 = vld [vmem:[%s2] sm:$0x1]
        %v895 = vld [vmem:[%s3] sm:$0x1]
        %v896 = vld [vmem:[#allocation2] sm:$0xf]
        %v897 = vld [vmem:[#allocation2 + $0x4] sm:$0xf]
        %v898 = vld [vmem:[#allocation2 + $0xc] sm:$0xf]
        %v899 = vld [vmem:[#allocation2 + $0x10] sm:$0xf]
        %v900 = vld [vmem:[#allocation2 + $0x18] sm:$0xf]
        %v901 = vld [vmem:[#allocation2 + $0x1c] sm:$0xf]
        %v902 = vld [vmem:[#allocation2 + $0x24] sm:$0xf]
        %v903 = vld [vmem:[#allocation2 + $0x28] sm:$0xf]
        %v904 = vld [vmem:[#allocation2 + $0x30] sm:$0xf]
        %v905 = vld [vmem:[#allocation2 + $0x34] sm:$0xf]
        %v906 = vld [vmem:[#allocation2 + $0x3c] sm:$0xf]
        %v907 = vld [vmem:[#allocation2 + $0x40] sm:$0xf]
        %v908 = vld [vmem:[#allocation2 + $0x48] sm:$0xf]
        %v909 = vld [vmem:[#allocation2 + $0x4c] sm:$0xf]
        %v910 = vld [vmem:[#allocation2 + $0x54] sm:$0xf]
        %v911 = vld [vmem:[#allocation2 + $0x58] sm:$0xf]
        %v912 = vld [vmem:[#allocation4] sm:$0xf]
        %v913 = vld [vmem:[#allocation4 + $0x4] sm:$0xf]
        %v914 = vld [vmem:[#allocation4 + $0x8] sm:$0xf]
        %v915 = vld [vmem:[#allocation4 + $0xc] sm:$0xf]
        %v916 = vld [vmem:[#allocation4 + $0x10] sm:$0xf]
        %v917 = vld [vmem:[#allocation4 + $0x14] sm:$0xf]
        %v918 = vld [vmem:[#allocation4 + $0x18] sm:$0xf]
        %v919 = vld [vmem:[#allocation4 + $0x1c] sm:$0xf]
        %v920 = vld [vmem:[#allocation4 + $0x20] sm:$0xf]
        %v921 = vld [vmem:[#allocation4 + $0x24] sm:$0xf]
        %v922 = vld [vmem:[#allocation4 + $0x28] sm:$0xf]
        %v923 = vld [vmem:[#allocation4 + $0x2c] sm:$0xf]
        %v924 = vld [vmem:[#allocation4 + $0x30] sm:$0xf]
        %v925 = vld [vmem:[#allocation4 + $0x34] sm:$0xf]
        %v926 = vld [vmem:[#allocation4 + $0x38] sm:$0xf]
        %v927 = vld [vmem:[#allocation4 + $0x3c] sm:$0xf]
        %v928 = vld [vmem:[#allocation2 + $0x8] sm:$0x1]
        %v929 = vld [vmem:[#allocation2 + $0x14] sm:$0x1]
        %v930 = vld [vmem:[#allocation2 + $0x20] sm:$0x1]
        %v931 = vld [vmem:[#allocation2 + $0x2c] sm:$0x1]
        %v932 = vld [vmem:[#allocation2 + $0x38] sm:$0x1]
        %v933 = vld [vmem:[#allocation2 + $0x44] sm:$0x1]
        %v934 = vld [vmem:[#allocation2 + $0x50] sm:$0x1]
        %v935 = vld [vmem:[#allocation2 + $0x5c] sm:$0x1]
        %vm936 = vsmask.f32 3328
        %vm937 = vsmask.f32 7440
        %vm938 = vmor %vm936, %vm937
        %v940 = vshrl.u32 %v896, 16
        %v942 = vrot.slane %v940, 4
        %v943 = vshll.u32 %v896, 16
        %v945 = vrot.slane %v943, 5
        %v946 = vor.u32 %v942, %v945
        %v947 = vrot.slane %v946, 4
        %v949 = vshll.u32 %v897, 16
        %v951 = vrot.slane %v949, 5
        %v952 = vsel %vm938, %v947, %v951
        %v953 = vshrl.u32 %v897, 16
        %v955 = vrot.slane %v953, 4
        %v956 = vor.u32 %v955, %v951
        %v957 = vrot.slane %v956, 4
        %v959 = vshll.u32 %v928, 16
        %v961 = vrot.slane %v959, 5
        %v962 = vsel %vm938, %v957, %v961
        %v964 = vshrl.u32 %v898, 16
        %v966 = vrot.slane %v964, 4
        %v967 = vshll.u32 %v898, 16
        %v969 = vrot.slane %v967, 5
        %v970 = vor.u32 %v966, %v969
        %v971 = vrot.slane %v970, 4
        %v973 = vshll.u32 %v899, 16
        %v975 = vrot.slane %v973, 5
        %v976 = vsel %vm938, %v971, %v975
        %v977 = vshrl.u32 %v899, 16
        %v979 = vrot.slane %v977, 4
        %v980 = vor.u32 %v979, %v975
        %v981 = vrot.slane %v980, 4
        %v983 = vshll.u32 %v929, 16
        %v985 = vrot.slane %v983, 5
        %v986 = vsel %vm938, %v981, %v985
        %v988 = vshrl.u32 %v900, 16
        %v990 = vrot.slane %v988, 4
        %v991 = vshll.u32 %v900, 16
        %v993 = vrot.slane %v991, 5
        %v994 = vor.u32 %v990, %v993
        %v995 = vrot.slane %v994, 4
        %v997 = vshll.u32 %v901, 16
        %v999 = vrot.slane %v997, 5
        %v1000 = vsel %vm938, %v995, %v999
        %v1001 = vshrl.u32 %v901, 16
        %v1003 = vrot.slane %v1001, 4
        %v1004 = vor.u32 %v1003, %v999
        %v1005 = vrot.slane %v1004, 4
        %v1007 = vshll.u32 %v930, 16
        %v1009 = vrot.slane %v1007, 5
        %v1010 = vsel %vm938, %v1005, %v1009
        %v1012 = vshrl.u32 %v902, 16
        %v1014 = vrot.slane %v1012, 4
        %v1015 = vshll.u32 %v902, 16
        %v1017 = vrot.slane %v1015, 5
        %v1018 = vor.u32 %v1014, %v1017
        %v1019 = vrot.slane %v1018, 4
        %v1021 = vshll.u32 %v903, 16
        %v1023 = vrot.slane %v1021, 5
        %v1024 = vsel %vm938, %v1019, %v1023
        %v1025 = vshrl.u32 %v903, 16
        %v1027 = vrot.slane %v1025, 4
        %v1028 = vor.u32 %v1027, %v1023
        %v1029 = vrot.slane %v1028, 4
        %v1031 = vshll.u32 %v931, 16
        %v1033 = vrot.slane %v1031, 5
        %v1034 = vsel %vm938, %v1029, %v1033
        %v1036 = vshrl.u32 %v904, 16
        %v1038 = vrot.slane %v1036, 4
        %v1039 = vshll.u32 %v904, 16
        %v1041 = vrot.slane %v1039, 5
        %v1042 = vor.u32 %v1038, %v1041
        %v1043 = vrot.slane %v1042, 4
        %v1045 = vshll.u32 %v905, 16
        %v1047 = vrot.slane %v1045, 5
        %v1048 = vsel %vm938, %v1043, %v1047
        %v1049 = vshrl.u32 %v905, 16
        %v1051 = vrot.slane %v1049, 4
        %v1052 = vor.u32 %v1051, %v1047
        %v1053 = vrot.slane %v1052, 4
        %v1055 = vshll.u32 %v932, 16
        %v1057 = vrot.slane %v1055, 5
        %v1058 = vsel %vm938, %v1053, %v1057
        %v1060 = vshrl.u32 %v906, 16
        %v1062 = vrot.slane %v1060, 4
        %v1063 = vshll.u32 %v906, 16
        %v1065 = vrot.slane %v1063, 5
        %v1066 = vor.u32 %v1062, %v1065
        %v1067 = vrot.slane %v1066, 4
        %v1069 = vshll.u32 %v907, 16
        %v1071 = vrot.slane %v1069, 5
        %v1072 = vsel %vm938, %v1067, %v1071
        %v1073 = vshrl.u32 %v907, 16
        %v1075 = vrot.slane %v1073, 4
        %v1076 = vor.u32 %v1075, %v1071
        %v1077 = vrot.slane %v1076, 4
        %v1079 = vshll.u32 %v933, 16
        %v1081 = vrot.slane %v1079, 5
        %v1082 = vsel %vm938, %v1077, %v1081
        %v1084 = vshrl.u32 %v908, 16
        %v1086 = vrot.slane %v1084, 4
        %v1087 = vshll.u32 %v908, 16
        %v1089 = vrot.slane %v1087, 5
        %v1090 = vor.u32 %v1086, %v1089
        %v1091 = vrot.slane %v1090, 4
        %v1093 = vshll.u32 %v909, 16
        %v1095 = vrot.slane %v1093, 5
        %v1096 = vsel %vm938, %v1091, %v1095
        %v1097 = vshrl.u32 %v909, 16
        %v1099 = vrot.slane %v1097, 4
        %v1100 = vor.u32 %v1099, %v1095
        %v1101 = vrot.slane %v1100, 4
        %v1103 = vshll.u32 %v934, 16
        %v1105 = vrot.slane %v1103, 5
        %v1106 = vsel %vm938, %v1101, %v1105
        %v1108 = vshrl.u32 %v910, 16
        %v1110 = vrot.slane %v1108, 4
        %v1111 = vshll.u32 %v910, 16
        %v1113 = vrot.slane %v1111, 5
        %v1114 = vor.u32 %v1110, %v1113
        %v1115 = vrot.slane %v1114, 4
        %v1117 = vshll.u32 %v911, 16
        %v1119 = vrot.slane %v1117, 5
        %v1120 = vsel %vm938, %v1115, %v1119
        %v1121 = vshrl.u32 %v911, 16
        %v1123 = vrot.slane %v1121, 4
        %v1124 = vor.u32 %v1123, %v1119
        %v1125 = vrot.slane %v1124, 4
        %v1127 = vshll.u32 %v935, 16
        %v1129 = vrot.slane %v1127, 5
        %v1130 = vsel %vm938, %v1125, %v1129
        %s1131 = scalar_lea.vmem [#allocation4], 64
        %v1132 = vld [vmem:[%s1131] sm:$0xf]
        %v1133 = vld [vmem:[%s1131 + $0x4] sm:$0xf]
        %v1134 = vld [vmem:[%s1131 + $0x8] sm:$0xf]
        %v1135 = vld [vmem:[%s1131 + $0xc] sm:$0xf]
        %v1136 = vld [vmem:[%s1131 + $0x10] sm:$0xf]
        %v1137 = vld [vmem:[%s1131 + $0x14] sm:$0xf]
        %v1138 = vld [vmem:[%s1131 + $0x18] sm:$0xf]
        %v1139 = vld [vmem:[%s1131 + $0x1c] sm:$0xf]
        %v1140 = vld [vmem:[%s1131 + $0x20] sm:$0xf]
        %v1141 = vld [vmem:[%s1131 + $0x24] sm:$0xf]
        %v1142 = vld [vmem:[%s1131 + $0x28] sm:$0xf]
        %v1143 = vld [vmem:[%s1131 + $0x2c] sm:$0xf]
        %v1144 = vld [vmem:[%s1131 + $0x30] sm:$0xf]
        %v1145 = vld [vmem:[%s1131 + $0x34] sm:$0xf]
        %v1146 = vld [vmem:[%s1131 + $0x38] sm:$0xf]
        %v1147 = vld [vmem:[%s1131 + $0x3c] sm:$0xf]
        %v1148 = vunpack.c.l.b16 %v952
        %v1149 = vunpack.c.l.b16 %v962
        %v1150 = vunpack.c.l.b16 %v976
        %v1151 = vunpack.c.l.b16 %v986
        %v1152 = vunpack.c.l.b16 %v1000
        %v1153 = vunpack.c.l.b16 %v1010
        %v1154 = vunpack.c.l.b16 %v1024
        %v1155 = vunpack.c.l.b16 %v1034
        %v1156 = vunpack.c.l.b16 %v1048
        %v1157 = vunpack.c.l.b16 %v1058
        %v1158 = vunpack.c.l.b16 %v1072
        %v1159 = vunpack.c.l.b16 %v1082
        %v1160 = vunpack.c.l.b16 %v1096
        %v1161 = vunpack.c.l.b16 %v1106
        %v1162 = vunpack.c.l.b16 %v1120
        %v1163 = vunpack.c.l.b16 %v1130
        %v1164 = vpack.c.b16 %v1149, %v1148
        %v1165 = vpack.c.b16 %v1151, %v1150
        %v1166 = vpack.c.b16 %v1153, %v1152
        %v1167 = vpack.c.b16 %v1155, %v1154
        %v1168 = vpack.c.b16 %v1157, %v1156
        %v1169 = vpack.c.b16 %v1159, %v1158
        %v1170 = vpack.c.b16 %v1161, %v1160
        %v1171 = vpack.c.b16 %v1163, %v1162
        %v1196 = vunpack.c.l.b16 %v1132
        %v1197 = vunpack.c.l.b16 %v1133
        %v1198 = vunpack.c.l.b16 %v1134
        %v1199 = vunpack.c.l.b16 %v1135
        %v1200 = vunpack.c.l.b16 %v1136
        %v1201 = vunpack.c.l.b16 %v1137
        %v1202 = vunpack.c.l.b16 %v1138
        %v1203 = vunpack.c.l.b16 %v1139
        %v1204 = vunpack.c.l.b16 %v1140
        %v1205 = vunpack.c.l.b16 %v1141
        %v1206 = vunpack.c.l.b16 %v1142
        %v1207 = vunpack.c.l.b16 %v1143
        %v1208 = vunpack.c.l.b16 %v1144
        %v1209 = vunpack.c.l.b16 %v1145
        %v1210 = vunpack.c.l.b16 %v1146
        %v1211 = vunpack.c.l.b16 %v1147
        %v1212 = vpack.c.b16 %v1197, %v1196
        %v1213 = vpack.c.b16 %v1199, %v1198
        %v1214 = vpack.c.b16 %v1201, %v1200
        %v1215 = vpack.c.b16 %v1203, %v1202
        %v1216 = vpack.c.b16 %v1205, %v1204
        %v1217 = vpack.c.b16 %v1207, %v1206
        %v1218 = vpack.c.b16 %v1209, %v1208
        %v1219 = vpack.c.b16 %v1211, %v1210
        %1228 = vmatpush.bf16.msra.mxu0 %v1219
        %1229 = vmatpush.bf16.msra.mxu0 %v1218
        %1230 = vmatpush.bf16.msra.mxu0 %v1217
        %1231 = vmatpush.bf16.msra.mxu0 %v1216
        %1232 = vmatpush.bf16.msra.mxu0 %v1215
        %1233 = vmatpush.bf16.msra.mxu0 %v1214
        %1234 = vmatpush.bf16.msra.mxu0 %v1213
        %1235 = vmatpush.bf16.msra.mxu0 %v1212
        %1236 = vmatmul.bf16.gmra.mxu0 %v1164
        %v1237 = vpop.f32.mrf.mxu0
        %v1238 = vadd.f32 0.0, %v1237
        %v1239 = vpop.f32.mrf.mxu0
        %v1240 = vadd.f32 0.0, %v1239
        %1241 = vmatmul.bf16.gmra.mxu0 %v1165
        %v1242 = vpop.f32.mrf.mxu0
        %v1243 = vadd.f32 0.0, %v1242
        %v1244 = vpop.f32.mrf.mxu0
        %v1245 = vadd.f32 0.0, %v1244
        %1246 = vmatmul.bf16.gmra.mxu0 %v1166
        %v1247 = vpop.f32.mrf.mxu0
        %v1248 = vadd.f32 0.0, %v1247
        %v1249 = vpop.f32.mrf.mxu0
        %v1250 = vadd.f32 0.0, %v1249
        %1251 = vmatmul.bf16.gmra.mxu0 %v1167
        %v1252 = vpop.f32.mrf.mxu0
        %v1253 = vadd.f32 0.0, %v1252
        %v1254 = vpop.f32.mrf.mxu0
        %v1255 = vadd.f32 0.0, %v1254
        %1256 = vmatmul.bf16.gmra.mxu0 %v1168
        %v1257 = vpop.f32.mrf.mxu0
        %v1258 = vadd.f32 0.0, %v1257
        %v1259 = vpop.f32.mrf.mxu0
        %v1260 = vadd.f32 0.0, %v1259
        %1261 = vmatmul.bf16.gmra.mxu0 %v1169
        %v1262 = vpop.f32.mrf.mxu0
        %v1263 = vadd.f32 0.0, %v1262
        %v1264 = vpop.f32.mrf.mxu0
        %v1265 = vadd.f32 0.0, %v1264
        %1266 = vmatmul.bf16.gmra.mxu0 %v1170
        %v1267 = vpop.f32.mrf.mxu0
        %v1268 = vadd.f32 0.0, %v1267
        %v1269 = vpop.f32.mrf.mxu0
        %v1270 = vadd.f32 0.0, %v1269
        %1271 = vmatmul.bf16.gmra.mxu0 %v1171
        %v1272 = vpop.f32.mrf.mxu0
        %v1273 = vadd.f32 0.0, %v1272
        %v1274 = vpop.f32.mrf.mxu0
        %v1275 = vadd.f32 0.0, %v1274
        %1276 = vdwg.mxu0
        %v1293 = vunpack.c.l.b16 %v896
        %v1294 = vunpack.c.l.b16 %v897
        %v1295 = vunpack.c.l.b16 %v898
        %v1296 = vunpack.c.l.b16 %v899
        %v1297 = vunpack.c.l.b16 %v900
        %v1298 = vunpack.c.l.b16 %v901
        %v1299 = vunpack.c.l.b16 %v902
        %v1300 = vunpack.c.l.b16 %v903
        %v1301 = vunpack.c.l.b16 %v904
        %v1302 = vunpack.c.l.b16 %v905
        %v1303 = vunpack.c.l.b16 %v906
        %v1304 = vunpack.c.l.b16 %v907
        %v1305 = vunpack.c.l.b16 %v908
        %v1306 = vunpack.c.l.b16 %v909
        %v1307 = vunpack.c.l.b16 %v910
        %v1308 = vunpack.c.l.b16 %v911
        %v1309 = vpack.c.b16 %v1294, %v1293
        %v1310 = vpack.c.b16 %v1296, %v1295
        %v1311 = vpack.c.b16 %v1298, %v1297
        %v1312 = vpack.c.b16 %v1300, %v1299
        %v1313 = vpack.c.b16 %v1302, %v1301
        %v1314 = vpack.c.b16 %v1304, %v1303
        %v1315 = vpack.c.b16 %v1306, %v1305
        %v1316 = vpack.c.b16 %v1308, %v1307
        %v1341 = vunpack.c.l.b16 %v912
        %v1342 = vunpack.c.l.b16 %v913
        %v1343 = vunpack.c.l.b16 %v914
        %v1344 = vunpack.c.l.b16 %v915
        %v1345 = vunpack.c.l.b16 %v916
        %v1346 = vunpack.c.l.b16 %v917
        %v1347 = vunpack.c.l.b16 %v918
        %v1348 = vunpack.c.l.b16 %v919
        %v1349 = vunpack.c.l.b16 %v920
        %v1350 = vunpack.c.l.b16 %v921
        %v1351 = vunpack.c.l.b16 %v922
        %v1352 = vunpack.c.l.b16 %v923
        %v1353 = vunpack.c.l.b16 %v924
        %v1354 = vunpack.c.l.b16 %v925
        %v1355 = vunpack.c.l.b16 %v926
        %v1356 = vunpack.c.l.b16 %v927
        %v1357 = vpack.c.b16 %v1342, %v1341
        %v1358 = vpack.c.b16 %v1344, %v1343
        %v1359 = vpack.c.b16 %v1346, %v1345
        %v1360 = vpack.c.b16 %v1348, %v1347
        %v1361 = vpack.c.b16 %v1350, %v1349
        %v1362 = vpack.c.b16 %v1352, %v1351
        %v1363 = vpack.c.b16 %v1354, %v1353
        %v1364 = vpack.c.b16 %v1356, %v1355
        %1373 = vmatpush.bf16.msra.mxu0 %v1364
        %1374 = vmatpush.bf16.msra.mxu0 %v1363
        %1375 = vmatpush.bf16.msra.mxu0 %v1362
        %1376 = vmatpush.bf16.msra.mxu0 %v1361
        %1377 = vmatpush.bf16.msra.mxu0 %v1360
        %1378 = vmatpush.bf16.msra.mxu0 %v1359
        %1379 = vmatpush.bf16.msra.mxu0 %v1358
        %1380 = vmatpush.bf16.msra.mxu0 %v1357
        %1381 = vmatmul.bf16.gmra.mxu0 %v1309
        %v1382 = vpop.f32.mrf.mxu0
        %v1383 = vadd.f32 %v1238, %v1382
        %v1384 = vpop.f32.mrf.mxu0
        %v1385 = vadd.f32 %v1240, %v1384
        %1386 = vmatmul.bf16.gmra.mxu0 %v1310
        %v1387 = vpop.f32.mrf.mxu0
        %v1388 = vadd.f32 %v1243, %v1387
        %v1389 = vpop.f32.mrf.mxu0
        %v1390 = vadd.f32 %v1245, %v1389
        %1391 = vmatmul.bf16.gmra.mxu0 %v1311
        %v1392 = vpop.f32.mrf.mxu0
        %v1393 = vadd.f32 %v1248, %v1392
        %v1394 = vpop.f32.mrf.mxu0
        %v1395 = vadd.f32 %v1250, %v1394
        %1396 = vmatmul.bf16.gmra.mxu0 %v1312
        %v1397 = vpop.f32.mrf.mxu0
        %v1398 = vadd.f32 %v1253, %v1397
        %v1399 = vpop.f32.mrf.mxu0
        %v1400 = vadd.f32 %v1255, %v1399
        %1401 = vmatmul.bf16.gmra.mxu0 %v1313
        %v1402 = vpop.f32.mrf.mxu0
        %v1403 = vadd.f32 %v1258, %v1402
        %v1404 = vpop.f32.mrf.mxu0
        %v1405 = vadd.f32 %v1260, %v1404
        %1406 = vmatmul.bf16.gmra.mxu0 %v1314
        %v1407 = vpop.f32.mrf.mxu0
        %v1408 = vadd.f32 %v1263, %v1407
        %v1409 = vpop.f32.mrf.mxu0
        %v1410 = vadd.f32 %v1265, %v1409
        %1411 = vmatmul.bf16.gmra.mxu0 %v1315
        %v1412 = vpop.f32.mrf.mxu0
        %v1413 = vadd.f32 %v1268, %v1412
        %v1414 = vpop.f32.mrf.mxu0
        %v1415 = vadd.f32 %v1270, %v1414
        %1416 = vmatmul.bf16.gmra.mxu0 %v1316
        %v1417 = vpop.f32.mrf.mxu0
        %v1418 = vadd.f32 %v1273, %v1417
        %v1419 = vpop.f32.mrf.mxu0
        %v1420 = vadd.f32 %v1275, %v1419
        %1421 = vdwg.mxu0
        %v1422 = vld [vmem:[#allocation2] sm:$0xe]
        %v1423 = vld [vmem:[#allocation2 + $0xc] sm:$0xe]
        %v1424 = vld [vmem:[#allocation2 + $0x18] sm:$0xe]
        %v1425 = vld [vmem:[#allocation2 + $0x24] sm:$0xe]
        %v1426 = vld [vmem:[#allocation2 + $0x30] sm:$0xe]
        %v1427 = vld [vmem:[#allocation2 + $0x3c] sm:$0xe]
        %v1428 = vld [vmem:[#allocation2 + $0x48] sm:$0xe]
        %v1429 = vld [vmem:[#allocation2 + $0x54] sm:$0xe]
        %vm1446 = vcmask 1042432
        %vm1447 = vcmask 1046532
        %vm1448 = vmor %vm1446, %vm1447
        %v1449 = vrot.slane %v1422, 5
        %v1450 = vrot.slane %v1449, 4
        %v1451 = vrot.slane %v897, 5
        %v1452 = vsel %vm1448, %v1450, %v1451
        %v1453 = vrot.slane %v1451, 4
        %v1454 = vrot.slane %v928, 5
        %v1455 = vsel %vm1448, %v1453, %v1454
        %v1456 = vrot.slane %v1423, 5
        %v1457 = vrot.slane %v1456, 4
        %v1458 = vrot.slane %v899, 5
        %v1459 = vsel %vm1448, %v1457, %v1458
        %v1460 = vrot.slane %v1458, 4
        %v1461 = vrot.slane %v929, 5
        %v1462 = vsel %vm1448, %v1460, %v1461
        %v1463 = vrot.slane %v1424, 5
        %v1464 = vrot.slane %v1463, 4
        %v1465 = vrot.slane %v901, 5
        %v1466 = vsel %vm1448, %v1464, %v1465
        %v1467 = vrot.slane %v1465, 4
        %v1468 = vrot.slane %v930, 5
        %v1469 = vsel %vm1448, %v1467, %v1468
        %v1470 = vrot.slane %v1425, 5
        %v1471 = vrot.slane %v1470, 4
        %v1472 = vrot.slane %v903, 5
        %v1473 = vsel %vm1448, %v1471, %v1472
        %v1474 = vrot.slane %v1472, 4
        %v1475 = vrot.slane %v931, 5
        %v1476 = vsel %vm1448, %v1474, %v1475
        %v1477 = vrot.slane %v1426, 5
        %v1478 = vrot.slane %v1477, 4
        %v1479 = vrot.slane %v905, 5
        %v1480 = vsel %vm1448, %v1478, %v1479
        %v1481 = vrot.slane %v1479, 4
        %v1482 = vrot.slane %v932, 5
        %v1483 = vsel %vm1448, %v1481, %v1482
        %v1484 = vrot.slane %v1427, 5
        %v1485 = vrot.slane %v1484, 4
        %v1486 = vrot.slane %v907, 5
        %v1487 = vsel %vm1448, %v1485, %v1486
        %v1488 = vrot.slane %v1486, 4
        %v1489 = vrot.slane %v933, 5
        %v1490 = vsel %vm1448, %v1488, %v1489
        %v1491 = vrot.slane %v1428, 5
        %v1492 = vrot.slane %v1491, 4
        %v1493 = vrot.slane %v909, 5
        %v1494 = vsel %vm1448, %v1492, %v1493
        %v1495 = vrot.slane %v1493, 4
        %v1496 = vrot.slane %v934, 5
        %v1497 = vsel %vm1448, %v1495, %v1496
        %v1498 = vrot.slane %v1429, 5
        %v1499 = vrot.slane %v1498, 4
        %v1500 = vrot.slane %v911, 5
        %v1501 = vsel %vm1448, %v1499, %v1500
        %v1502 = vrot.slane %v1500, 4
        %v1503 = vrot.slane %v935, 5
        %v1504 = vsel %vm1448, %v1502, %v1503
        %s1505 = scalar_lea.vmem [#allocation4], 128
        %v1506 = vld [vmem:[%s1505] sm:$0xf]
        %v1507 = vld [vmem:[%s1505 + $0x4] sm:$0xf]
        %v1508 = vld [vmem:[%s1505 + $0x8] sm:$0xf]
        %v1509 = vld [vmem:[%s1505 + $0xc] sm:$0xf]
        %v1510 = vld [vmem:[%s1505 + $0x10] sm:$0xf]
        %v1511 = vld [vmem:[%s1505 + $0x14] sm:$0xf]
        %v1512 = vld [vmem:[%s1505 + $0x18] sm:$0xf]
        %v1513 = vld [vmem:[%s1505 + $0x1c] sm:$0xf]
        %v1514 = vld [vmem:[%s1505 + $0x20] sm:$0xf]
        %v1515 = vld [vmem:[%s1505 + $0x24] sm:$0xf]
        %v1516 = vld [vmem:[%s1505 + $0x28] sm:$0xf]
        %v1517 = vld [vmem:[%s1505 + $0x2c] sm:$0xf]
        %v1518 = vld [vmem:[%s1505 + $0x30] sm:$0xf]
        %v1519 = vld [vmem:[%s1505 + $0x34] sm:$0xf]
        %v1520 = vld [vmem:[%s1505 + $0x38] sm:$0xf]
        %v1521 = vld [vmem:[%s1505 + $0x3c] sm:$0xf]
        %v1522 = vunpack.c.l.b16 %v1452
        %v1523 = vunpack.c.l.b16 %v1455
        %v1524 = vunpack.c.l.b16 %v1459
        %v1525 = vunpack.c.l.b16 %v1462
        %v1526 = vunpack.c.l.b16 %v1466
        %v1527 = vunpack.c.l.b16 %v1469
        %v1528 = vunpack.c.l.b16 %v1473
        %v1529 = vunpack.c.l.b16 %v1476
        %v1530 = vunpack.c.l.b16 %v1480
        %v1531 = vunpack.c.l.b16 %v1483
        %v1532 = vunpack.c.l.b16 %v1487
        %v1533 = vunpack.c.l.b16 %v1490
        %v1534 = vunpack.c.l.b16 %v1494
        %v1535 = vunpack.c.l.b16 %v1497
        %v1536 = vunpack.c.l.b16 %v1501
        %v1537 = vunpack.c.l.b16 %v1504
        %v1538 = vpack.c.b16 %v1523, %v1522
        %v1539 = vpack.c.b16 %v1525, %v1524
        %v1540 = vpack.c.b16 %v1527, %v1526
        %v1541 = vpack.c.b16 %v1529, %v1528
        %v1542 = vpack.c.b16 %v1531, %v1530
        %v1543 = vpack.c.b16 %v1533, %v1532
        %v1544 = vpack.c.b16 %v1535, %v1534
        %v1545 = vpack.c.b16 %v1537, %v1536
        %v1570 = vunpack.c.l.b16 %v1506
        %v1571 = vunpack.c.l.b16 %v1507
        %v1572 = vunpack.c.l.b16 %v1508
        %v1573 = vunpack.c.l.b16 %v1509
        %v1574 = vunpack.c.l.b16 %v1510
        %v1575 = vunpack.c.l.b16 %v1511
        %v1576 = vunpack.c.l.b16 %v1512
        %v1577 = vunpack.c.l.b16 %v1513
        %v1578 = vunpack.c.l.b16 %v1514
        %v1579 = vunpack.c.l.b16 %v1515
        %v1580 = vunpack.c.l.b16 %v1516
        %v1581 = vunpack.c.l.b16 %v1517
        %v1582 = vunpack.c.l.b16 %v1518
        %v1583 = vunpack.c.l.b16 %v1519
        %v1584 = vunpack.c.l.b16 %v1520
        %v1585 = vunpack.c.l.b16 %v1521
        %v1586 = vpack.c.b16 %v1571, %v1570
        %v1587 = vpack.c.b16 %v1573, %v1572
        %v1588 = vpack.c.b16 %v1575, %v1574
        %v1589 = vpack.c.b16 %v1577, %v1576
        %v1590 = vpack.c.b16 %v1579, %v1578
        %v1591 = vpack.c.b16 %v1581, %v1580
        %v1592 = vpack.c.b16 %v1583, %v1582
        %v1593 = vpack.c.b16 %v1585, %v1584
        %1602 = vmatpush.bf16.msra.mxu0 %v1593
        %1603 = vmatpush.bf16.msra.mxu0 %v1592
        %1604 = vmatpush.bf16.msra.mxu0 %v1591
        %1605 = vmatpush.bf16.msra.mxu0 %v1590
        %1606 = vmatpush.bf16.msra.mxu0 %v1589
        %1607 = vmatpush.bf16.msra.mxu0 %v1588
        %1608 = vmatpush.bf16.msra.mxu0 %v1587
        %1609 = vmatpush.bf16.msra.mxu0 %v1586
        %1610 = vmatmul.bf16.gmra.mxu0 %v1538
        %v1611 = vpop.f32.mrf.mxu0
        %v1612 = vadd.f32 0.0, %v1611
        %v1613 = vpop.f32.mrf.mxu0
        %v1614 = vadd.f32 0.0, %v1613
        %1615 = vmatmul.bf16.gmra.mxu0 %v1539
        %v1616 = vpop.f32.mrf.mxu0
        %v1617 = vadd.f32 0.0, %v1616
        %v1618 = vpop.f32.mrf.mxu0
        %v1619 = vadd.f32 0.0, %v1618
        %1620 = vmatmul.bf16.gmra.mxu0 %v1540
        %v1621 = vpop.f32.mrf.mxu0
        %v1622 = vadd.f32 0.0, %v1621
        %v1623 = vpop.f32.mrf.mxu0
        %v1624 = vadd.f32 0.0, %v1623
        %1625 = vmatmul.bf16.gmra.mxu0 %v1541
        %v1626 = vpop.f32.mrf.mxu0
        %v1627 = vadd.f32 0.0, %v1626
        %v1628 = vpop.f32.mrf.mxu0
        %v1629 = vadd.f32 0.0, %v1628
        %1630 = vmatmul.bf16.gmra.mxu0 %v1542
        %v1631 = vpop.f32.mrf.mxu0
        %v1632 = vadd.f32 0.0, %v1631
        %v1633 = vpop.f32.mrf.mxu0
        %v1634 = vadd.f32 0.0, %v1633
        %1635 = vmatmul.bf16.gmra.mxu0 %v1543
        %v1636 = vpop.f32.mrf.mxu0
        %v1637 = vadd.f32 0.0, %v1636
        %v1638 = vpop.f32.mrf.mxu0
        %v1639 = vadd.f32 0.0, %v1638
        %1640 = vmatmul.bf16.gmra.mxu0 %v1544
        %v1641 = vpop.f32.mrf.mxu0
        %v1642 = vadd.f32 0.0, %v1641
        %v1643 = vpop.f32.mrf.mxu0
        %v1644 = vadd.f32 0.0, %v1643
        %1645 = vmatmul.bf16.gmra.mxu0 %v1545
        %v1646 = vpop.f32.mrf.mxu0
        %v1647 = vadd.f32 0.0, %v1646
        %v1648 = vpop.f32.mrf.mxu0
        %v1649 = vadd.f32 0.0, %v1648
        %1650 = vdwg.mxu0
        %v1651 = vadd.f32 %v1383, %v1612
        %v1652 = vadd.f32 %v1385, %v1614
        %v1653 = vadd.f32 %v1388, %v1617
        %v1654 = vadd.f32 %v1390, %v1619
        %v1655 = vadd.f32 %v1393, %v1622
        %v1656 = vadd.f32 %v1395, %v1624
        %v1657 = vadd.f32 %v1398, %v1627
        %v1658 = vadd.f32 %v1400, %v1629
        %v1659 = vadd.f32 %v1403, %v1632
        %v1660 = vadd.f32 %v1405, %v1634
        %v1661 = vadd.f32 %v1408, %v1637
        %v1662 = vadd.f32 %v1410, %v1639
        %v1663 = vadd.f32 %v1413, %v1642
        %v1664 = vadd.f32 %v1415, %v1644
        %v1665 = vadd.f32 %v1418, %v1647
        %v1666 = vadd.f32 %v1420, %v1649
        %v1667 = vld [vmem:[%s721] sm:$0xf]
        %v1668 = vld [vmem:[%s721 + $0x4] sm:$0xf]
        %v1669 = vld [vmem:[%s721 + $0xc] sm:$0xf]
        %v1670 = vld [vmem:[%s721 + $0x10] sm:$0xf]
        %v1671 = vld [vmem:[%s721 + $0x18] sm:$0xf]
        %v1672 = vld [vmem:[%s721 + $0x1c] sm:$0xf]
        %v1673 = vld [vmem:[%s721 + $0x24] sm:$0xf]
        %v1674 = vld [vmem:[%s721 + $0x28] sm:$0xf]
        %v1675 = vld [vmem:[%s721 + $0x30] sm:$0xf]
        %v1676 = vld [vmem:[%s721 + $0x34] sm:$0xf]
        %v1677 = vld [vmem:[%s721 + $0x3c] sm:$0xf]
        %v1678 = vld [vmem:[%s721 + $0x40] sm:$0xf]
        %v1679 = vld [vmem:[%s721 + $0x48] sm:$0xf]
        %v1680 = vld [vmem:[%s721 + $0x4c] sm:$0xf]
        %v1681 = vld [vmem:[%s721 + $0x54] sm:$0xf]
        %v1682 = vld [vmem:[%s721 + $0x58] sm:$0xf]
        %s1683 = scalar_lea.vmem [#allocation4], 192
        %v1684 = vld [vmem:[%s1683] sm:$0xf]
        %v1685 = vld [vmem:[%s1683 + $0x4] sm:$0xf]
        %v1686 = vld [vmem:[%s1683 + $0x8] sm:$0xf]
        %v1687 = vld [vmem:[%s1683 + $0xc] sm:$0xf]
        %v1688 = vld [vmem:[%s1683 + $0x10] sm:$0xf]
        %v1689 = vld [vmem:[%s1683 + $0x14] sm:$0xf]
        %v1690 = vld [vmem:[%s1683 + $0x18] sm:$0xf]
        %v1691 = vld [vmem:[%s1683 + $0x1c] sm:$0xf]
        %v1692 = vld [vmem:[%s1683 + $0x20] sm:$0xf]
        %v1693 = vld [vmem:[%s1683 + $0x24] sm:$0xf]
        %v1694 = vld [vmem:[%s1683 + $0x28] sm:$0xf]
        %v1695 = vld [vmem:[%s1683 + $0x2c] sm:$0xf]
        %v1696 = vld [vmem:[%s1683 + $0x30] sm:$0xf]
        %v1697 = vld [vmem:[%s1683 + $0x34] sm:$0xf]
        %v1698 = vld [vmem:[%s1683 + $0x38] sm:$0xf]
        %v1699 = vld [vmem:[%s1683 + $0x3c] sm:$0xf]
        %v1716 = vunpack.c.l.b16 %v1667
        %v1717 = vunpack.c.l.b16 %v1668
        %v1718 = vunpack.c.l.b16 %v1669
        %v1719 = vunpack.c.l.b16 %v1670
        %v1720 = vunpack.c.l.b16 %v1671
        %v1721 = vunpack.c.l.b16 %v1672
        %v1722 = vunpack.c.l.b16 %v1673
        %v1723 = vunpack.c.l.b16 %v1674
        %v1724 = vunpack.c.l.b16 %v1675
        %v1725 = vunpack.c.l.b16 %v1676
        %v1726 = vunpack.c.l.b16 %v1677
        %v1727 = vunpack.c.l.b16 %v1678
        %v1728 = vunpack.c.l.b16 %v1679
        %v1729 = vunpack.c.l.b16 %v1680
        %v1730 = vunpack.c.l.b16 %v1681
        %v1731 = vunpack.c.l.b16 %v1682
        %v1732 = vpack.c.b16 %v1717, %v1716
        %v1733 = vpack.c.b16 %v1719, %v1718
        %v1734 = vpack.c.b16 %v1721, %v1720
        %v1735 = vpack.c.b16 %v1723, %v1722
        %v1736 = vpack.c.b16 %v1725, %v1724
        %v1737 = vpack.c.b16 %v1727, %v1726
        %v1738 = vpack.c.b16 %v1729, %v1728
        %v1739 = vpack.c.b16 %v1731, %v1730
        %v1764 = vunpack.c.l.b16 %v1684
        %v1765 = vunpack.c.l.b16 %v1685
        %v1766 = vunpack.c.l.b16 %v1686
        %v1767 = vunpack.c.l.b16 %v1687
        %v1768 = vunpack.c.l.b16 %v1688
        %v1769 = vunpack.c.l.b16 %v1689
        %v1770 = vunpack.c.l.b16 %v1690
        %v1771 = vunpack.c.l.b16 %v1691
        %v1772 = vunpack.c.l.b16 %v1692
        %v1773 = vunpack.c.l.b16 %v1693
        %v1774 = vunpack.c.l.b16 %v1694
        %v1775 = vunpack.c.l.b16 %v1695
        %v1776 = vunpack.c.l.b16 %v1696
        %v1777 = vunpack.c.l.b16 %v1697
        %v1778 = vunpack.c.l.b16 %v1698
        %v1779 = vunpack.c.l.b16 %v1699
        %v1780 = vpack.c.b16 %v1765, %v1764
        %v1781 = vpack.c.b16 %v1767, %v1766
        %v1782 = vpack.c.b16 %v1769, %v1768
        %v1783 = vpack.c.b16 %v1771, %v1770
        %v1784 = vpack.c.b16 %v1773, %v1772
        %v1785 = vpack.c.b16 %v1775, %v1774
        %v1786 = vpack.c.b16 %v1777, %v1776
        %v1787 = vpack.c.b16 %v1779, %v1778
        %1796 = vmatpush.bf16.msra.mxu0 %v1787
        %1797 = vmatpush.bf16.msra.mxu0 %v1786
        %1798 = vmatpush.bf16.msra.mxu0 %v1785
        %1799 = vmatpush.bf16.msra.mxu0 %v1784
        %1800 = vmatpush.bf16.msra.mxu0 %v1783
        %1801 = vmatpush.bf16.msra.mxu0 %v1782
        %1802 = vmatpush.bf16.msra.mxu0 %v1781
        %1803 = vmatpush.bf16.msra.mxu0 %v1780
        %1804 = vmatmul.bf16.gmra.mxu0 %v1732
        %v1805 = vpop.f32.mrf.mxu0
        %v1806 = vadd.f32 0.0, %v1805
        %v1807 = vpop.f32.mrf.mxu0
        %v1808 = vadd.f32 0.0, %v1807
        %1809 = vmatmul.bf16.gmra.mxu0 %v1733
        %v1810 = vpop.f32.mrf.mxu0
        %v1811 = vadd.f32 0.0, %v1810
        %v1812 = vpop.f32.mrf.mxu0
        %v1813 = vadd.f32 0.0, %v1812
        %1814 = vmatmul.bf16.gmra.mxu0 %v1734
        %v1815 = vpop.f32.mrf.mxu0
        %v1816 = vadd.f32 0.0, %v1815
        %v1817 = vpop.f32.mrf.mxu0
        %v1818 = vadd.f32 0.0, %v1817
        %1819 = vmatmul.bf16.gmra.mxu0 %v1735
        %v1820 = vpop.f32.mrf.mxu0
        %v1821 = vadd.f32 0.0, %v1820
        %v1822 = vpop.f32.mrf.mxu0
        %v1823 = vadd.f32 0.0, %v1822
        %1824 = vmatmul.bf16.gmra.mxu0 %v1736
        %v1825 = vpop.f32.mrf.mxu0
        %v1826 = vadd.f32 0.0, %v1825
        %v1827 = vpop.f32.mrf.mxu0
        %v1828 = vadd.f32 0.0, %v1827
        %1829 = vmatmul.bf16.gmra.mxu0 %v1737
        %v1830 = vpop.f32.mrf.mxu0
        %v1831 = vadd.f32 0.0, %v1830
        %v1832 = vpop.f32.mrf.mxu0
        %v1833 = vadd.f32 0.0, %v1832
        %1834 = vmatmul.bf16.gmra.mxu0 %v1738
        %v1835 = vpop.f32.mrf.mxu0
        %v1836 = vadd.f32 0.0, %v1835
        %v1837 = vpop.f32.mrf.mxu0
        %v1838 = vadd.f32 0.0, %v1837
        %1839 = vmatmul.bf16.gmra.mxu0 %v1739
        %v1840 = vpop.f32.mrf.mxu0
        %v1841 = vadd.f32 0.0, %v1840
        %v1842 = vpop.f32.mrf.mxu0
        %v1843 = vadd.f32 0.0, %v1842
        %1844 = vdwg.mxu0
        %v1845 = vadd.f32 %v1651, %v1806
        %v1846 = vadd.f32 %v1652, %v1808
        %v1847 = vadd.f32 %v1653, %v1811
        %v1848 = vadd.f32 %v1654, %v1813
        %v1849 = vadd.f32 %v1655, %v1816
        %v1850 = vadd.f32 %v1656, %v1818
        %v1851 = vadd.f32 %v1657, %v1821
        %v1852 = vadd.f32 %v1658, %v1823
        %v1853 = vadd.f32 %v1659, %v1826
        %v1854 = vadd.f32 %v1660, %v1828
        %v1855 = vadd.f32 %v1661, %v1831
        %v1856 = vadd.f32 %v1662, %v1833
        %v1857 = vadd.f32 %v1663, %v1836
        %v1858 = vadd.f32 %v1664, %v1838
        %v1859 = vadd.f32 %v1665, %v1841
        %v1860 = vadd.f32 %v1666, %v1843
        %v1861 = vld [vmem:[%s721] sm:$0xf]
        %v1862 = vld [vmem:[%s721 + $0x4] sm:$0xf]
        %v1863 = vld [vmem:[%s721 + $0x8] sm:$0x1]
        %v1864 = vld [vmem:[%s721 + $0xc] sm:$0xf]
        %v1865 = vld [vmem:[%s721 + $0x10] sm:$0xf]
        %v1866 = vld [vmem:[%s721 + $0x14] sm:$0x1]
        %v1867 = vld [vmem:[%s721 + $0x18] sm:$0xf]
        %v1868 = vld [vmem:[%s721 + $0x1c] sm:$0xf]
        %v1869 = vld [vmem:[%s721 + $0x20] sm:$0x1]
        %v1870 = vld [vmem:[%s721 + $0x24] sm:$0xf]
        %v1871 = vld [vmem:[%s721 + $0x28] sm:$0xf]
        %v1872 = vld [vmem:[%s721 + $0x2c] sm:$0x1]
        %v1873 = vld [vmem:[%s721 + $0x30] sm:$0xf]
        %v1874 = vld [vmem:[%s721 + $0x34] sm:$0xf]
        %v1875 = vld [vmem:[%s721 + $0x38] sm:$0x1]
        %v1876 = vld [vmem:[%s721 + $0x3c] sm:$0xf]
        %v1877 = vld [vmem:[%s721 + $0x40] sm:$0xf]
        %v1878 = vld [vmem:[%s721 + $0x44] sm:$0x1]
        %v1879 = vld [vmem:[%s721 + $0x48] sm:$0xf]
        %v1880 = vld [vmem:[%s721 + $0x4c] sm:$0xf]
        %v1881 = vld [vmem:[%s721 + $0x50] sm:$0x1]
        %v1882 = vld [vmem:[%s721 + $0x54] sm:$0xf]
        %v1883 = vld [vmem:[%s721 + $0x58] sm:$0xf]
        %v1884 = vld [vmem:[%s721 + $0x5c] sm:$0x1]
        %v1886 = vshrl.u32 %v1861, 16
        %v1888 = vrot.slane %v1886, 4
        %v1889 = vshll.u32 %v1861, 16
        %v1891 = vrot.slane %v1889, 5
        %v1892 = vor.u32 %v1888, %v1891
        %v1893 = vrot.slane %v1892, 4
        %v1895 = vshll.u32 %v1862, 16
        %v1897 = vrot.slane %v1895, 5
        %v1898 = vsel %vm938, %v1893, %v1897
        %v1899 = vshrl.u32 %v1862, 16
        %v1901 = vrot.slane %v1899, 4
        %v1902 = vor.u32 %v1901, %v1897
        %v1903 = vrot.slane %v1902, 4
        %v1905 = vshll.u32 %v1863, 16
        %v1907 = vrot.slane %v1905, 5
        %v1908 = vsel %vm938, %v1903, %v1907
        %v1910 = vshrl.u32 %v1864, 16
        %v1912 = vrot.slane %v1910, 4
        %v1913 = vshll.u32 %v1864, 16
        %v1915 = vrot.slane %v1913, 5
        %v1916 = vor.u32 %v1912, %v1915
        %v1917 = vrot.slane %v1916, 4
        %v1919 = vshll.u32 %v1865, 16
        %v1921 = vrot.slane %v1919, 5
        %v1922 = vsel %vm938, %v1917, %v1921
        %v1923 = vshrl.u32 %v1865, 16
        %v1925 = vrot.slane %v1923, 4
        %v1926 = vor.u32 %v1925, %v1921
        %v1927 = vrot.slane %v1926, 4
        %v1929 = vshll.u32 %v1866, 16
        %v1931 = vrot.slane %v1929, 5
        %v1932 = vsel %vm938, %v1927, %v1931
        %v1934 = vshrl.u32 %v1867, 16
        %v1936 = vrot.slane %v1934, 4
        %v1937 = vshll.u32 %v1867, 16
        %v1939 = vrot.slane %v1937, 5
        %v1940 = vor.u32 %v1936, %v1939
        %v1941 = vrot.slane %v1940, 4
        %v1943 = vshll.u32 %v1868, 16
        %v1945 = vrot.slane %v1943, 5
        %v1946 = vsel %vm938, %v1941, %v1945
        %v1947 = vshrl.u32 %v1868, 16
        %v1949 = vrot.slane %v1947, 4
        %v1950 = vor.u32 %v1949, %v1945
        %v1951 = vrot.slane %v1950, 4
        %v1953 = vshll.u32 %v1869, 16
        %v1955 = vrot.slane %v1953, 5
        %v1956 = vsel %vm938, %v1951, %v1955
        %v1958 = vshrl.u32 %v1870, 16
        %v1960 = vrot.slane %v1958, 4
        %v1961 = vshll.u32 %v1870, 16
        %v1963 = vrot.slane %v1961, 5
        %v1964 = vor.u32 %v1960, %v1963
        %v1965 = vrot.slane %v1964, 4
        %v1967 = vshll.u32 %v1871, 16
        %v1969 = vrot.slane %v1967, 5
        %v1970 = vsel %vm938, %v1965, %v1969
        %v1971 = vshrl.u32 %v1871, 16
        %v1973 = vrot.slane %v1971, 4
        %v1974 = vor.u32 %v1973, %v1969
        %v1975 = vrot.slane %v1974, 4
        %v1977 = vshll.u32 %v1872, 16
        %v1979 = vrot.slane %v1977, 5
        %v1980 = vsel %vm938, %v1975, %v1979
        %v1982 = vshrl.u32 %v1873, 16
        %v1984 = vrot.slane %v1982, 4
        %v1985 = vshll.u32 %v1873, 16
        %v1987 = vrot.slane %v1985, 5
        %v1988 = vor.u32 %v1984, %v1987
        %v1989 = vrot.slane %v1988, 4
        %v1991 = vshll.u32 %v1874, 16
        %v1993 = vrot.slane %v1991, 5
        %v1994 = vsel %vm938, %v1989, %v1993
        %v1995 = vshrl.u32 %v1874, 16
        %v1997 = vrot.slane %v1995, 4
        %v1998 = vor.u32 %v1997, %v1993
        %v1999 = vrot.slane %v1998, 4
        %v2001 = vshll.u32 %v1875, 16
        %v2003 = vrot.slane %v2001, 5
        %v2004 = vsel %vm938, %v1999, %v2003
        %v2006 = vshrl.u32 %v1876, 16
        %v2008 = vrot.slane %v2006, 4
        %v2009 = vshll.u32 %v1876, 16
        %v2011 = vrot.slane %v2009, 5
        %v2012 = vor.u32 %v2008, %v2011
        %v2013 = vrot.slane %v2012, 4
        %v2015 = vshll.u32 %v1877, 16
        %v2017 = vrot.slane %v2015, 5
        %v2018 = vsel %vm938, %v2013, %v2017
        %v2019 = vshrl.u32 %v1877, 16
        %v2021 = vrot.slane %v2019, 4
        %v2022 = vor.u32 %v2021, %v2017
        %v2023 = vrot.slane %v2022, 4
        %v2025 = vshll.u32 %v1878, 16
        %v2027 = vrot.slane %v2025, 5
        %v2028 = vsel %vm938, %v2023, %v2027
        %v2030 = vshrl.u32 %v1879, 16
        %v2032 = vrot.slane %v2030, 4
        %v2033 = vshll.u32 %v1879, 16
        %v2035 = vrot.slane %v2033, 5
        %v2036 = vor.u32 %v2032, %v2035
        %v2037 = vrot.slane %v2036, 4
        %v2039 = vshll.u32 %v1880, 16
        %v2041 = vrot.slane %v2039, 5
        %v2042 = vsel %vm938, %v2037, %v2041
        %v2043 = vshrl.u32 %v1880, 16
        %v2045 = vrot.slane %v2043, 4
        %v2046 = vor.u32 %v2045, %v2041
        %v2047 = vrot.slane %v2046, 4
        %v2049 = vshll.u32 %v1881, 16
        %v2051 = vrot.slane %v2049, 5
        %v2052 = vsel %vm938, %v2047, %v2051
        %v2054 = vshrl.u32 %v1882, 16
        %v2056 = vrot.slane %v2054, 4
        %v2057 = vshll.u32 %v1882, 16
        %v2059 = vrot.slane %v2057, 5
        %v2060 = vor.u32 %v2056, %v2059
        %v2061 = vrot.slane %v2060, 4
        %v2063 = vshll.u32 %v1883, 16
        %v2065 = vrot.slane %v2063, 5
        %v2066 = vsel %vm938, %v2061, %v2065
        %v2067 = vshrl.u32 %v1883, 16
        %v2069 = vrot.slane %v2067, 4
        %v2070 = vor.u32 %v2069, %v2065
        %v2071 = vrot.slane %v2070, 4
        %v2073 = vshll.u32 %v1884, 16
        %v2075 = vrot.slane %v2073, 5
        %v2076 = vsel %vm938, %v2071, %v2075
        %s2077 = scalar_lea.vmem [#allocation4], 256
        %v2078 = vld [vmem:[%s2077] sm:$0xf]
        %v2079 = vld [vmem:[%s2077 + $0x4] sm:$0xf]
        %v2080 = vld [vmem:[%s2077 + $0x8] sm:$0xf]
        %v2081 = vld [vmem:[%s2077 + $0xc] sm:$0xf]
        %v2082 = vld [vmem:[%s2077 + $0x10] sm:$0xf]
        %v2083 = vld [vmem:[%s2077 + $0x14] sm:$0xf]
        %v2084 = vld [vmem:[%s2077 + $0x18] sm:$0xf]
        %v2085 = vld [vmem:[%s2077 + $0x1c] sm:$0xf]
        %v2086 = vld [vmem:[%s2077 + $0x20] sm:$0xf]
        %v2087 = vld [vmem:[%s2077 + $0x24] sm:$0xf]
        %v2088 = vld [vmem:[%s2077 + $0x28] sm:$0xf]
        %v2089 = vld [vmem:[%s2077 + $0x2c] sm:$0xf]
        %v2090 = vld [vmem:[%s2077 + $0x30] sm:$0xf]
        %v2091 = vld [vmem:[%s2077 + $0x34] sm:$0xf]
        %v2092 = vld [vmem:[%s2077 + $0x38] sm:$0xf]
        %v2093 = vld [vmem:[%s2077 + $0x3c] sm:$0xf]
        %v2094 = vunpack.c.l.b16 %v1898
        %v2095 = vunpack.c.l.b16 %v1908
        %v2096 = vunpack.c.l.b16 %v1922
        %v2097 = vunpack.c.l.b16 %v1932
        %v2098 = vunpack.c.l.b16 %v1946
        %v2099 = vunpack.c.l.b16 %v1956
        %v2100 = vunpack.c.l.b16 %v1970
        %v2101 = vunpack.c.l.b16 %v1980
        %v2102 = vunpack.c.l.b16 %v1994
        %v2103 = vunpack.c.l.b16 %v2004
        %v2104 = vunpack.c.l.b16 %v2018
        %v2105 = vunpack.c.l.b16 %v2028
        %v2106 = vunpack.c.l.b16 %v2042
        %v2107 = vunpack.c.l.b16 %v2052
        %v2108 = vunpack.c.l.b16 %v2066
        %v2109 = vunpack.c.l.b16 %v2076
        %v2110 = vpack.c.b16 %v2095, %v2094
        %v2111 = vpack.c.b16 %v2097, %v2096
        %v2112 = vpack.c.b16 %v2099, %v2098
        %v2113 = vpack.c.b16 %v2101, %v2100
        %v2114 = vpack.c.b16 %v2103, %v2102
        %v2115 = vpack.c.b16 %v2105, %v2104
        %v2116 = vpack.c.b16 %v2107, %v2106
        %v2117 = vpack.c.b16 %v2109, %v2108
        %v2142 = vunpack.c.l.b16 %v2078
        %v2143 = vunpack.c.l.b16 %v2079
        %v2144 = vunpack.c.l.b16 %v2080
        %v2145 = vunpack.c.l.b16 %v2081
        %v2146 = vunpack.c.l.b16 %v2082
        %v2147 = vunpack.c.l.b16 %v2083
        %v2148 = vunpack.c.l.b16 %v2084
        %v2149 = vunpack.c.l.b16 %v2085
        %v2150 = vunpack.c.l.b16 %v2086
        %v2151 = vunpack.c.l.b16 %v2087
        %v2152 = vunpack.c.l.b16 %v2088
        %v2153 = vunpack.c.l.b16 %v2089
        %v2154 = vunpack.c.l.b16 %v2090
        %v2155 = vunpack.c.l.b16 %v2091
        %v2156 = vunpack.c.l.b16 %v2092
        %v2157 = vunpack.c.l.b16 %v2093
        %v2158 = vpack.c.b16 %v2143, %v2142
        %v2159 = vpack.c.b16 %v2145, %v2144
        %v2160 = vpack.c.b16 %v2147, %v2146
        %v2161 = vpack.c.b16 %v2149, %v2148
        %v2162 = vpack.c.b16 %v2151, %v2150
        %v2163 = vpack.c.b16 %v2153, %v2152
        %v2164 = vpack.c.b16 %v2155, %v2154
        %v2165 = vpack.c.b16 %v2157, %v2156
        %2174 = vmatpush.bf16.msra.mxu0 %v2165
        %2175 = vmatpush.bf16.msra.mxu0 %v2164
        %2176 = vmatpush.bf16.msra.mxu0 %v2163
        %2177 = vmatpush.bf16.msra.mxu0 %v2162
        %2178 = vmatpush.bf16.msra.mxu0 %v2161
        %2179 = vmatpush.bf16.msra.mxu0 %v2160
        %2180 = vmatpush.bf16.msra.mxu0 %v2159
        %2181 = vmatpush.bf16.msra.mxu0 %v2158
        %2182 = vmatmul.bf16.gmra.mxu0 %v2110
        %v2183 = vpop.f32.mrf.mxu0
        %v2184 = vadd.f32 0.0, %v2183
        %v2185 = vpop.f32.mrf.mxu0
        %v2186 = vadd.f32 0.0, %v2185
        %2187 = vmatmul.bf16.gmra.mxu0 %v2111
        %v2188 = vpop.f32.mrf.mxu0
        %v2189 = vadd.f32 0.0, %v2188
        %v2190 = vpop.f32.mrf.mxu0
        %v2191 = vadd.f32 0.0, %v2190
        %2192 = vmatmul.bf16.gmra.mxu0 %v2112
        %v2193 = vpop.f32.mrf.mxu0
        %v2194 = vadd.f32 0.0, %v2193
        %v2195 = vpop.f32.mrf.mxu0
        %v2196 = vadd.f32 0.0, %v2195
        %2197 = vmatmul.bf16.gmra.mxu0 %v2113
        %v2198 = vpop.f32.mrf.mxu0
        %v2199 = vadd.f32 0.0, %v2198
        %v2200 = vpop.f32.mrf.mxu0
        %v2201 = vadd.f32 0.0, %v2200
        %2202 = vmatmul.bf16.gmra.mxu0 %v2114
        %v2203 = vpop.f32.mrf.mxu0
        %v2204 = vadd.f32 0.0, %v2203
        %v2205 = vpop.f32.mrf.mxu0
        %v2206 = vadd.f32 0.0, %v2205
        %2207 = vmatmul.bf16.gmra.mxu0 %v2115
        %v2208 = vpop.f32.mrf.mxu0
        %v2209 = vadd.f32 0.0, %v2208
        %v2210 = vpop.f32.mrf.mxu0
        %v2211 = vadd.f32 0.0, %v2210
        %2212 = vmatmul.bf16.gmra.mxu0 %v2116
        %v2213 = vpop.f32.mrf.mxu0
        %v2214 = vadd.f32 0.0, %v2213
        %v2215 = vpop.f32.mrf.mxu0
        %v2216 = vadd.f32 0.0, %v2215
        %2217 = vmatmul.bf16.gmra.mxu0 %v2117
        %v2218 = vpop.f32.mrf.mxu0
        %v2219 = vadd.f32 0.0, %v2218
        %v2220 = vpop.f32.mrf.mxu0
        %v2221 = vadd.f32 0.0, %v2220
        %2222 = vdwg.mxu0
        %v2223 = vadd.f32 %v1845, %v2184
        %v2224 = vadd.f32 %v1846, %v2186
        %v2225 = vadd.f32 %v1847, %v2189
        %v2226 = vadd.f32 %v1848, %v2191
        %v2227 = vadd.f32 %v1849, %v2194
        %v2228 = vadd.f32 %v1850, %v2196
        %v2229 = vadd.f32 %v1851, %v2199
        %v2230 = vadd.f32 %v1852, %v2201
        %v2231 = vadd.f32 %v1853, %v2204
        %v2232 = vadd.f32 %v1854, %v2206
        %v2233 = vadd.f32 %v1855, %v2209
        %v2234 = vadd.f32 %v1856, %v2211
        %v2235 = vadd.f32 %v1857, %v2214
        %v2236 = vadd.f32 %v1858, %v2216
        %v2237 = vadd.f32 %v1859, %v2219
        %v2238 = vadd.f32 %v1860, %v2221
        %v2239 = vld [vmem:[%s721] sm:$0xe]
        %v2240 = vld [vmem:[%s721 + $0xc] sm:$0xe]
        %v2241 = vld [vmem:[%s721 + $0x18] sm:$0xe]
        %v2242 = vld [vmem:[%s721 + $0x24] sm:$0xe]
        %v2243 = vld [vmem:[%s721 + $0x30] sm:$0xe]
        %v2244 = vld [vmem:[%s721 + $0x3c] sm:$0xe]
        %v2245 = vld [vmem:[%s721 + $0x48] sm:$0xe]
        %v2246 = vld [vmem:[%s721 + $0x54] sm:$0xe]
        %v2271 = vrot.slane %v2239, 5
        %v2272 = vrot.slane %v2271, 4
        %v2273 = vrot.slane %v1862, 5
        %v2274 = vsel %vm1448, %v2272, %v2273
        %v2275 = vrot.slane %v2273, 4
        %v2276 = vrot.slane %v1863, 5
        %v2277 = vsel %vm1448, %v2275, %v2276
        %v2278 = vrot.slane %v2240, 5
        %v2279 = vrot.slane %v2278, 4
        %v2280 = vrot.slane %v1865, 5
        %v2281 = vsel %vm1448, %v2279, %v2280
        %v2282 = vrot.slane %v2280, 4
        %v2283 = vrot.slane %v1866, 5
        %v2284 = vsel %vm1448, %v2282, %v2283
        %v2285 = vrot.slane %v2241, 5
        %v2286 = vrot.slane %v2285, 4
        %v2287 = vrot.slane %v1868, 5
        %v2288 = vsel %vm1448, %v2286, %v2287
        %v2289 = vrot.slane %v2287, 4
        %v2290 = vrot.slane %v1869, 5
        %v2291 = vsel %vm1448, %v2289, %v2290
        %v2292 = vrot.slane %v2242, 5
        %v2293 = vrot.slane %v2292, 4
        %v2294 = vrot.slane %v1871, 5
        %v2295 = vsel %vm1448, %v2293, %v2294
        %v2296 = vrot.slane %v2294, 4
        %v2297 = vrot.slane %v1872, 5
        %v2298 = vsel %vm1448, %v2296, %v2297
        %v2299 = vrot.slane %v2243, 5
        %v2300 = vrot.slane %v2299, 4
        %v2301 = vrot.slane %v1874, 5
        %v2302 = vsel %vm1448, %v2300, %v2301
        %v2303 = vrot.slane %v2301, 4
        %v2304 = vrot.slane %v1875, 5
        %v2305 = vsel %vm1448, %v2303, %v2304
        %v2306 = vrot.slane %v2244, 5
        %v2307 = vrot.slane %v2306, 4
        %v2308 = vrot.slane %v1877, 5
        %v2309 = vsel %vm1448, %v2307, %v2308
        %v2310 = vrot.slane %v2308, 4
        %v2311 = vrot.slane %v1878, 5
        %v2312 = vsel %vm1448, %v2310, %v2311
        %v2313 = vrot.slane %v2245, 5
        %v2314 = vrot.slane %v2313, 4
        %v2315 = vrot.slane %v1880, 5
        %v2316 = vsel %vm1448, %v2314, %v2315
        %v2317 = vrot.slane %v2315, 4
        %v2318 = vrot.slane %v1881, 5
        %v2319 = vsel %vm1448, %v2317, %v2318
        %v2320 = vrot.slane %v2246, 5
        %v2321 = vrot.slane %v2320, 4
        %v2322 = vrot.slane %v1883, 5
        %v2323 = vsel %vm1448, %v2321, %v2322
        %v2324 = vrot.slane %v2322, 4
        %v2325 = vrot.slane %v1884, 5
        %v2326 = vsel %vm1448, %v2324, %v2325
        %s2327 = scalar_lea.vmem [#allocation4], 320
        %v2328 = vld [vmem:[%s2327] sm:$0xf]
        %v2329 = vld [vmem:[%s2327 + $0x4] sm:$0xf]
        %v2330 = vld [vmem:[%s2327 + $0x8] sm:$0xf]
        %v2331 = vld [vmem:[%s2327 + $0xc] sm:$0xf]
        %v2332 = vld [vmem:[%s2327 + $0x10] sm:$0xf]
        %v2333 = vld [vmem:[%s2327 + $0x14] sm:$0xf]
        %v2334 = vld [vmem:[%s2327 + $0x18] sm:$0xf]
        %v2335 = vld [vmem:[%s2327 + $0x1c] sm:$0xf]
        %v2336 = vld [vmem:[%s2327 + $0x20] sm:$0xf]
        %v2337 = vld [vmem:[%s2327 + $0x24] sm:$0xf]
        %v2338 = vld [vmem:[%s2327 + $0x28] sm:$0xf]
        %v2339 = vld [vmem:[%s2327 + $0x2c] sm:$0xf]
        %v2340 = vld [vmem:[%s2327 + $0x30] sm:$0xf]
        %v2341 = vld [vmem:[%s2327 + $0x34] sm:$0xf]
        %v2342 = vld [vmem:[%s2327 + $0x38] sm:$0xf]
        %v2343 = vld [vmem:[%s2327 + $0x3c] sm:$0xf]
        %v2344 = vunpack.c.l.b16 %v2274
        %v2345 = vunpack.c.l.b16 %v2277
        %v2346 = vunpack.c.l.b16 %v2281
        %v2347 = vunpack.c.l.b16 %v2284
        %v2348 = vunpack.c.l.b16 %v2288
        %v2349 = vunpack.c.l.b16 %v2291
        %v2350 = vunpack.c.l.b16 %v2295
        %v2351 = vunpack.c.l.b16 %v2298
        %v2352 = vunpack.c.l.b16 %v2302
        %v2353 = vunpack.c.l.b16 %v2305
        %v2354 = vunpack.c.l.b16 %v2309
        %v2355 = vunpack.c.l.b16 %v2312
        %v2356 = vunpack.c.l.b16 %v2316
        %v2357 = vunpack.c.l.b16 %v2319
        %v2358 = vunpack.c.l.b16 %v2323
        %v2359 = vunpack.c.l.b16 %v2326
        %v2360 = vpack.c.b16 %v2345, %v2344
        %v2361 = vpack.c.b16 %v2347, %v2346
        %v2362 = vpack.c.b16 %v2349, %v2348
        %v2363 = vpack.c.b16 %v2351, %v2350
        %v2364 = vpack.c.b16 %v2353, %v2352
        %v2365 = vpack.c.b16 %v2355, %v2354
        %v2366 = vpack.c.b16 %v2357, %v2356
        %v2367 = vpack.c.b16 %v2359, %v2358
        %v2392 = vunpack.c.l.b16 %v2328
        %v2393 = vunpack.c.l.b16 %v2329
        %v2394 = vunpack.c.l.b16 %v2330
        %v2395 = vunpack.c.l.b16 %v2331
        %v2396 = vunpack.c.l.b16 %v2332
        %v2397 = vunpack.c.l.b16 %v2333
        %v2398 = vunpack.c.l.b16 %v2334
        %v2399 = vunpack.c.l.b16 %v2335
        %v2400 = vunpack.c.l.b16 %v2336
        %v2401 = vunpack.c.l.b16 %v2337
        %v2402 = vunpack.c.l.b16 %v2338
        %v2403 = vunpack.c.l.b16 %v2339
        %v2404 = vunpack.c.l.b16 %v2340
        %v2405 = vunpack.c.l.b16 %v2341
        %v2406 = vunpack.c.l.b16 %v2342
        %v2407 = vunpack.c.l.b16 %v2343
        %v2408 = vpack.c.b16 %v2393, %v2392
        %v2409 = vpack.c.b16 %v2395, %v2394
        %v2410 = vpack.c.b16 %v2397, %v2396
        %v2411 = vpack.c.b16 %v2399, %v2398
        %v2412 = vpack.c.b16 %v2401, %v2400
        %v2413 = vpack.c.b16 %v2403, %v2402
        %v2414 = vpack.c.b16 %v2405, %v2404
        %v2415 = vpack.c.b16 %v2407, %v2406
        %2424 = vmatpush.bf16.msra.mxu0 %v2415
        %2425 = vmatpush.bf16.msra.mxu0 %v2414
        %2426 = vmatpush.bf16.msra.mxu0 %v2413
        %2427 = vmatpush.bf16.msra.mxu0 %v2412
        %2428 = vmatpush.bf16.msra.mxu0 %v2411
        %2429 = vmatpush.bf16.msra.mxu0 %v2410
        %2430 = vmatpush.bf16.msra.mxu0 %v2409
        %2431 = vmatpush.bf16.msra.mxu0 %v2408
        %2432 = vmatmul.bf16.gmra.mxu0 %v2360
        %v2433 = vpop.f32.mrf.mxu0
        %v2434 = vadd.f32 0.0, %v2433
        %v2435 = vpop.f32.mrf.mxu0
        %v2436 = vadd.f32 0.0, %v2435
        %2437 = vmatmul.bf16.gmra.mxu0 %v2361
        %v2438 = vpop.f32.mrf.mxu0
        %v2439 = vadd.f32 0.0, %v2438
        %v2440 = vpop.f32.mrf.mxu0
        %v2441 = vadd.f32 0.0, %v2440
        %2442 = vmatmul.bf16.gmra.mxu0 %v2362
        %v2443 = vpop.f32.mrf.mxu0
        %v2444 = vadd.f32 0.0, %v2443
        %v2445 = vpop.f32.mrf.mxu0
        %v2446 = vadd.f32 0.0, %v2445
        %2447 = vmatmul.bf16.gmra.mxu0 %v2363
        %v2448 = vpop.f32.mrf.mxu0
        %v2449 = vadd.f32 0.0, %v2448
        %v2450 = vpop.f32.mrf.mxu0
        %v2451 = vadd.f32 0.0, %v2450
        %2452 = vmatmul.bf16.gmra.mxu0 %v2364
        %v2453 = vpop.f32.mrf.mxu0
        %v2454 = vadd.f32 0.0, %v2453
        %v2455 = vpop.f32.mrf.mxu0
        %v2456 = vadd.f32 0.0, %v2455
        %2457 = vmatmul.bf16.gmra.mxu0 %v2365
        %v2458 = vpop.f32.mrf.mxu0
        %v2459 = vadd.f32 0.0, %v2458
        %v2460 = vpop.f32.mrf.mxu0
        %v2461 = vadd.f32 0.0, %v2460
        %2462 = vmatmul.bf16.gmra.mxu0 %v2366
        %v2463 = vpop.f32.mrf.mxu0
        %v2464 = vadd.f32 0.0, %v2463
        %v2465 = vpop.f32.mrf.mxu0
        %v2466 = vadd.f32 0.0, %v2465
        %2467 = vmatmul.bf16.gmra.mxu0 %v2367
        %v2468 = vpop.f32.mrf.mxu0
        %v2469 = vadd.f32 0.0, %v2468
        %v2470 = vpop.f32.mrf.mxu0
        %v2471 = vadd.f32 0.0, %v2470
        %2472 = vdwg.mxu0
        %v2473 = vadd.f32 %v2223, %v2434
        %v2474 = vadd.f32 %v2224, %v2436
        %v2475 = vadd.f32 %v2225, %v2439
        %v2476 = vadd.f32 %v2226, %v2441
        %v2477 = vadd.f32 %v2227, %v2444
        %v2478 = vadd.f32 %v2228, %v2446
        %v2479 = vadd.f32 %v2229, %v2449
        %v2480 = vadd.f32 %v2230, %v2451
        %v2481 = vadd.f32 %v2231, %v2454
        %v2482 = vadd.f32 %v2232, %v2456
        %v2483 = vadd.f32 %v2233, %v2459
        %v2484 = vadd.f32 %v2234, %v2461
        %v2485 = vadd.f32 %v2235, %v2464
        %v2486 = vadd.f32 %v2236, %v2466
        %v2487 = vadd.f32 %v2237, %v2469
        %v2488 = vadd.f32 %v2238, %v2471
        %s2489 = scalar_lea.vmem [#allocation2], 24
        %v2490 = vld [vmem:[%s2489] sm:$0xf]
        %v2491 = vld [vmem:[%s2489 + $0x4] sm:$0xf]
        %v2492 = vld [vmem:[%s2489 + $0xc] sm:$0xf]
        %v2493 = vld [vmem:[%s2489 + $0x10] sm:$0xf]
        %v2494 = vld [vmem:[%s2489 + $0x18] sm:$0xf]
        %v2495 = vld [vmem:[%s2489 + $0x1c] sm:$0xf]
        %v2496 = vld [vmem:[%s2489 + $0x24] sm:$0xf]
        %v2497 = vld [vmem:[%s2489 + $0x28] sm:$0xf]
        %v2498 = vld [vmem:[%s2489 + $0x30] sm:$0xf]
        %v2499 = vld [vmem:[%s2489 + $0x34] sm:$0xf]
        %v2500 = vld [vmem:[%s2489 + $0x3c] sm:$0xf]
        %v2501 = vld [vmem:[%s2489 + $0x40] sm:$0xf]
        %v2502 = vld [vmem:[%s2489 + $0x48] sm:$0xf]
        %v2503 = vld [vmem:[%s2489 + $0x4c] sm:$0xf]
        %v2504 = vld [vmem:[%s2489 + $0x54] sm:$0xf]
        %v2505 = vld [vmem:[%s2489 + $0x58] sm:$0xf]
        %s2506 = scalar_lea.vmem [#allocation4], 384
        %v2507 = vld [vmem:[%s2506] sm:$0xf]
        %v2508 = vld [vmem:[%s2506 + $0x4] sm:$0xf]
        %v2509 = vld [vmem:[%s2506 + $0x8] sm:$0xf]
        %v2510 = vld [vmem:[%s2506 + $0xc] sm:$0xf]
        %v2511 = vld [vmem:[%s2506 + $0x10] sm:$0xf]
        %v2512 = vld [vmem:[%s2506 + $0x14] sm:$0xf]
        %v2513 = vld [vmem:[%s2506 + $0x18] sm:$0xf]
        %v2514 = vld [vmem:[%s2506 + $0x1c] sm:$0xf]
        %v2515 = vld [vmem:[%s2506 + $0x20] sm:$0xf]
        %v2516 = vld [vmem:[%s2506 + $0x24] sm:$0xf]
        %v2517 = vld [vmem:[%s2506 + $0x28] sm:$0xf]
        %v2518 = vld [vmem:[%s2506 + $0x2c] sm:$0xf]
        %v2519 = vld [vmem:[%s2506 + $0x30] sm:$0xf]
        %v2520 = vld [vmem:[%s2506 + $0x34] sm:$0xf]
        %v2521 = vld [vmem:[%s2506 + $0x38] sm:$0xf]
        %v2522 = vld [vmem:[%s2506 + $0x3c] sm:$0xf]
        %v2539 = vunpack.c.l.b16 %v2490
        %v2540 = vunpack.c.l.b16 %v2491
        %v2541 = vunpack.c.l.b16 %v2492
        %v2542 = vunpack.c.l.b16 %v2493
        %v2543 = vunpack.c.l.b16 %v2494
        %v2544 = vunpack.c.l.b16 %v2495
        %v2545 = vunpack.c.l.b16 %v2496
        %v2546 = vunpack.c.l.b16 %v2497
        %v2547 = vunpack.c.l.b16 %v2498
        %v2548 = vunpack.c.l.b16 %v2499
        %v2549 = vunpack.c.l.b16 %v2500
        %v2550 = vunpack.c.l.b16 %v2501
        %v2551 = vunpack.c.l.b16 %v2502
        %v2552 = vunpack.c.l.b16 %v2503
        %v2553 = vunpack.c.l.b16 %v2504
        %v2554 = vunpack.c.l.b16 %v2505
        %v2555 = vpack.c.b16 %v2540, %v2539
        %v2556 = vpack.c.b16 %v2542, %v2541
        %v2557 = vpack.c.b16 %v2544, %v2543
        %v2558 = vpack.c.b16 %v2546, %v2545
        %v2559 = vpack.c.b16 %v2548, %v2547
        %v2560 = vpack.c.b16 %v2550, %v2549
        %v2561 = vpack.c.b16 %v2552, %v2551
        %v2562 = vpack.c.b16 %v2554, %v2553
        %v2587 = vunpack.c.l.b16 %v2507
        %v2588 = vunpack.c.l.b16 %v2508
        %v2589 = vunpack.c.l.b16 %v2509
        %v2590 = vunpack.c.l.b16 %v2510
        %v2591 = vunpack.c.l.b16 %v2511
        %v2592 = vunpack.c.l.b16 %v2512
        %v2593 = vunpack.c.l.b16 %v2513
        %v2594 = vunpack.c.l.b16 %v2514
        %v2595 = vunpack.c.l.b16 %v2515
        %v2596 = vunpack.c.l.b16 %v2516
        %v2597 = vunpack.c.l.b16 %v2517
        %v2598 = vunpack.c.l.b16 %v2518
        %v2599 = vunpack.c.l.b16 %v2519
        %v2600 = vunpack.c.l.b16 %v2520
        %v2601 = vunpack.c.l.b16 %v2521
        %v2602 = vunpack.c.l.b16 %v2522
        %v2603 = vpack.c.b16 %v2588, %v2587
        %v2604 = vpack.c.b16 %v2590, %v2589
        %v2605 = vpack.c.b16 %v2592, %v2591
        %v2606 = vpack.c.b16 %v2594, %v2593
        %v2607 = vpack.c.b16 %v2596, %v2595
        %v2608 = vpack.c.b16 %v2598, %v2597
        %v2609 = vpack.c.b16 %v2600, %v2599
        %v2610 = vpack.c.b16 %v2602, %v2601
        %2619 = vmatpush.bf16.msra.mxu0 %v2610
        %2620 = vmatpush.bf16.msra.mxu0 %v2609
        %2621 = vmatpush.bf16.msra.mxu0 %v2608
        %2622 = vmatpush.bf16.msra.mxu0 %v2607
        %2623 = vmatpush.bf16.msra.mxu0 %v2606
        %2624 = vmatpush.bf16.msra.mxu0 %v2605
        %2625 = vmatpush.bf16.msra.mxu0 %v2604
        %2626 = vmatpush.bf16.msra.mxu0 %v2603
        %2627 = vmatmul.bf16.gmra.mxu0 %v2555
        %v2628 = vpop.f32.mrf.mxu0
        %v2629 = vadd.f32 0.0, %v2628
        %v2630 = vpop.f32.mrf.mxu0
        %v2631 = vadd.f32 0.0, %v2630
        %2632 = vmatmul.bf16.gmra.mxu0 %v2556
        %v2633 = vpop.f32.mrf.mxu0
        %v2634 = vadd.f32 0.0, %v2633
        %v2635 = vpop.f32.mrf.mxu0
        %v2636 = vadd.f32 0.0, %v2635
        %2637 = vmatmul.bf16.gmra.mxu0 %v2557
        %v2638 = vpop.f32.mrf.mxu0
        %v2639 = vadd.f32 0.0, %v2638
        %v2640 = vpop.f32.mrf.mxu0
        %v2641 = vadd.f32 0.0, %v2640
        %2642 = vmatmul.bf16.gmra.mxu0 %v2558
        %v2643 = vpop.f32.mrf.mxu0
        %v2644 = vadd.f32 0.0, %v2643
        %v2645 = vpop.f32.mrf.mxu0
        %v2646 = vadd.f32 0.0, %v2645
        %2647 = vmatmul.bf16.gmra.mxu0 %v2559
        %v2648 = vpop.f32.mrf.mxu0
        %v2649 = vadd.f32 0.0, %v2648
        %v2650 = vpop.f32.mrf.mxu0
        %v2651 = vadd.f32 0.0, %v2650
        %2652 = vmatmul.bf16.gmra.mxu0 %v2560
        %v2653 = vpop.f32.mrf.mxu0
        %v2654 = vadd.f32 0.0, %v2653
        %v2655 = vpop.f32.mrf.mxu0
        %v2656 = vadd.f32 0.0, %v2655
        %2657 = vmatmul.bf16.gmra.mxu0 %v2561
        %v2658 = vpop.f32.mrf.mxu0
        %v2659 = vadd.f32 0.0, %v2658
        %v2660 = vpop.f32.mrf.mxu0
        %v2661 = vadd.f32 0.0, %v2660
        %2662 = vmatmul.bf16.gmra.mxu0 %v2562
        %v2663 = vpop.f32.mrf.mxu0
        %v2664 = vadd.f32 0.0, %v2663
        %v2665 = vpop.f32.mrf.mxu0
        %v2666 = vadd.f32 0.0, %v2665
        %2667 = vdwg.mxu0
        %v2668 = vadd.f32 %v2473, %v2629
        %v2669 = vadd.f32 %v2474, %v2631
        %v2670 = vadd.f32 %v2475, %v2634
        %v2671 = vadd.f32 %v2476, %v2636
        %v2672 = vadd.f32 %v2477, %v2639
        %v2673 = vadd.f32 %v2478, %v2641
        %v2674 = vadd.f32 %v2479, %v2644
        %v2675 = vadd.f32 %v2480, %v2646
        %v2676 = vadd.f32 %v2481, %v2649
        %v2677 = vadd.f32 %v2482, %v2651
        %v2678 = vadd.f32 %v2483, %v2654
        %v2679 = vadd.f32 %v2484, %v2656
        %v2680 = vadd.f32 %v2485, %v2659
        %v2681 = vadd.f32 %v2486, %v2661
        %v2682 = vadd.f32 %v2487, %v2664
        %v2683 = vadd.f32 %v2488, %v2666
        %v2684 = vld [vmem:[%s2489] sm:$0xf]
        %v2685 = vld [vmem:[%s2489 + $0x4] sm:$0xf]
        %v2686 = vld [vmem:[%s2489 + $0x8] sm:$0x1]
        %v2687 = vld [vmem:[%s2489 + $0xc] sm:$0xf]
        %v2688 = vld [vmem:[%s2489 + $0x10] sm:$0xf]
        %v2689 = vld [vmem:[%s2489 + $0x14] sm:$0x1]
        %v2690 = vld [vmem:[%s2489 + $0x18] sm:$0xf]
        %v2691 = vld [vmem:[%s2489 + $0x1c] sm:$0xf]
        %v2692 = vld [vmem:[%s2489 + $0x20] sm:$0x1]
        %v2693 = vld [vmem:[%s2489 + $0x24] sm:$0xf]
        %v2694 = vld [vmem:[%s2489 + $0x28] sm:$0xf]
        %v2695 = vld [vmem:[%s2489 + $0x2c] sm:$0x1]
        %v2696 = vld [vmem:[%s2489 + $0x30] sm:$0xf]
        %v2697 = vld [vmem:[%s2489 + $0x34] sm:$0xf]
        %v2698 = vld [vmem:[%s2489 + $0x38] sm:$0x1]
        %v2699 = vld [vmem:[%s2489 + $0x3c] sm:$0xf]
        %v2700 = vld [vmem:[%s2489 + $0x40] sm:$0xf]
        %v2701 = vld [vmem:[%s2489 + $0x44] sm:$0x1]
        %v2702 = vld [vmem:[%s2489 + $0x48] sm:$0xf]
        %v2703 = vld [vmem:[%s2489 + $0x4c] sm:$0xf]
        %v2704 = vld [vmem:[%s2489 + $0x50] sm:$0x1]
        %v2705 = vld [vmem:[%s2489 + $0x54] sm:$0xf]
        %v2706 = vld [vmem:[%s2489 + $0x58] sm:$0xf]
        %v2707 = vld [vmem:[%s2489 + $0x5c] sm:$0x1]
        %v2709 = vshrl.u32 %v2684, 16
        %v2711 = vrot.slane %v2709, 4
        %v2712 = vshll.u32 %v2684, 16
        %v2714 = vrot.slane %v2712, 5
        %v2715 = vor.u32 %v2711, %v2714
        %v2716 = vrot.slane %v2715, 4
        %v2718 = vshll.u32 %v2685, 16
        %v2720 = vrot.slane %v2718, 5
        %v2721 = vsel %vm938, %v2716, %v2720
        %v2722 = vshrl.u32 %v2685, 16
        %v2724 = vrot.slane %v2722, 4
        %v2725 = vor.u32 %v2724, %v2720
        %v2726 = vrot.slane %v2725, 4
        %v2728 = vshll.u32 %v2686, 16
        %v2730 = vrot.slane %v2728, 5
        %v2731 = vsel %vm938, %v2726, %v2730
        %v2733 = vshrl.u32 %v2687, 16
        %v2735 = vrot.slane %v2733, 4
        %v2736 = vshll.u32 %v2687, 16
        %v2738 = vrot.slane %v2736, 5
        %v2739 = vor.u32 %v2735, %v2738
        %v2740 = vrot.slane %v2739, 4
        %v2742 = vshll.u32 %v2688, 16
        %v2744 = vrot.slane %v2742, 5
        %v2745 = vsel %vm938, %v2740, %v2744
        %v2746 = vshrl.u32 %v2688, 16
        %v2748 = vrot.slane %v2746, 4
        %v2749 = vor.u32 %v2748, %v2744
        %v2750 = vrot.slane %v2749, 4
        %v2752 = vshll.u32 %v2689, 16
        %v2754 = vrot.slane %v2752, 5
        %v2755 = vsel %vm938, %v2750, %v2754
        %v2757 = vshrl.u32 %v2690, 16
        %v2759 = vrot.slane %v2757, 4
        %v2760 = vshll.u32 %v2690, 16
        %v2762 = vrot.slane %v2760, 5
        %v2763 = vor.u32 %v2759, %v2762
        %v2764 = vrot.slane %v2763, 4
        %v2766 = vshll.u32 %v2691, 16
        %v2768 = vrot.slane %v2766, 5
        %v2769 = vsel %vm938, %v2764, %v2768
        %v2770 = vshrl.u32 %v2691, 16
        %v2772 = vrot.slane %v2770, 4
        %v2773 = vor.u32 %v2772, %v2768
        %v2774 = vrot.slane %v2773, 4
        %v2776 = vshll.u32 %v2692, 16
        %v2778 = vrot.slane %v2776, 5
        %v2779 = vsel %vm938, %v2774, %v2778
        %v2781 = vshrl.u32 %v2693, 16
        %v2783 = vrot.slane %v2781, 4
        %v2784 = vshll.u32 %v2693, 16
        %v2786 = vrot.slane %v2784, 5
        %v2787 = vor.u32 %v2783, %v2786
        %v2788 = vrot.slane %v2787, 4
        %v2790 = vshll.u32 %v2694, 16
        %v2792 = vrot.slane %v2790, 5
        %v2793 = vsel %vm938, %v2788, %v2792
        %v2794 = vshrl.u32 %v2694, 16
        %v2796 = vrot.slane %v2794, 4
        %v2797 = vor.u32 %v2796, %v2792
        %v2798 = vrot.slane %v2797, 4
        %v2800 = vshll.u32 %v2695, 16
        %v2802 = vrot.slane %v2800, 5
        %v2803 = vsel %vm938, %v2798, %v2802
        %v2805 = vshrl.u32 %v2696, 16
        %v2807 = vrot.slane %v2805, 4
        %v2808 = vshll.u32 %v2696, 16
        %v2810 = vrot.slane %v2808, 5
        %v2811 = vor.u32 %v2807, %v2810
        %v2812 = vrot.slane %v2811, 4
        %v2814 = vshll.u32 %v2697, 16
        %v2816 = vrot.slane %v2814, 5
        %v2817 = vsel %vm938, %v2812, %v2816
        %v2818 = vshrl.u32 %v2697, 16
        %v2820 = vrot.slane %v2818, 4
        %v2821 = vor.u32 %v2820, %v2816
        %v2822 = vrot.slane %v2821, 4
        %v2824 = vshll.u32 %v2698, 16
        %v2826 = vrot.slane %v2824, 5
        %v2827 = vsel %vm938, %v2822, %v2826
        %v2829 = vshrl.u32 %v2699, 16
        %v2831 = vrot.slane %v2829, 4
        %v2832 = vshll.u32 %v2699, 16
        %v2834 = vrot.slane %v2832, 5
        %v2835 = vor.u32 %v2831, %v2834
        %v2836 = vrot.slane %v2835, 4
        %v2838 = vshll.u32 %v2700, 16
        %v2840 = vrot.slane %v2838, 5
        %v2841 = vsel %vm938, %v2836, %v2840
        %v2842 = vshrl.u32 %v2700, 16
        %v2844 = vrot.slane %v2842, 4
        %v2845 = vor.u32 %v2844, %v2840
        %v2846 = vrot.slane %v2845, 4
        %v2848 = vshll.u32 %v2701, 16
        %v2850 = vrot.slane %v2848, 5
        %v2851 = vsel %vm938, %v2846, %v2850
        %v2853 = vshrl.u32 %v2702, 16
        %v2855 = vrot.slane %v2853, 4
        %v2856 = vshll.u32 %v2702, 16
        %v2858 = vrot.slane %v2856, 5
        %v2859 = vor.u32 %v2855, %v2858
        %v2860 = vrot.slane %v2859, 4
        %v2862 = vshll.u32 %v2703, 16
        %v2864 = vrot.slane %v2862, 5
        %v2865 = vsel %vm938, %v2860, %v2864
        %v2866 = vshrl.u32 %v2703, 16
        %v2868 = vrot.slane %v2866, 4
        %v2869 = vor.u32 %v2868, %v2864
        %v2870 = vrot.slane %v2869, 4
        %v2872 = vshll.u32 %v2704, 16
        %v2874 = vrot.slane %v2872, 5
        %v2875 = vsel %vm938, %v2870, %v2874
        %v2877 = vshrl.u32 %v2705, 16
        %v2879 = vrot.slane %v2877, 4
        %v2880 = vshll.u32 %v2705, 16
        %v2882 = vrot.slane %v2880, 5
        %v2883 = vor.u32 %v2879, %v2882
        %v2884 = vrot.slane %v2883, 4
        %v2886 = vshll.u32 %v2706, 16
        %v2888 = vrot.slane %v2886, 5
        %v2889 = vsel %vm938, %v2884, %v2888
        %v2890 = vshrl.u32 %v2706, 16
        %v2892 = vrot.slane %v2890, 4
        %v2893 = vor.u32 %v2892, %v2888
        %v2894 = vrot.slane %v2893, 4
        %v2896 = vshll.u32 %v2707, 16
        %v2898 = vrot.slane %v2896, 5
        %v2899 = vsel %vm938, %v2894, %v2898
        %s2900 = scalar_lea.vmem [#allocation4], 448
        %v2901 = vld [vmem:[%s2900] sm:$0xf]
        %v2902 = vld [vmem:[%s2900 + $0x4] sm:$0xf]
        %v2903 = vld [vmem:[%s2900 + $0x8] sm:$0xf]
        %v2904 = vld [vmem:[%s2900 + $0xc] sm:$0xf]
        %v2905 = vld [vmem:[%s2900 + $0x10] sm:$0xf]
        %v2906 = vld [vmem:[%s2900 + $0x14] sm:$0xf]
        %v2907 = vld [vmem:[%s2900 + $0x18] sm:$0xf]
        %v2908 = vld [vmem:[%s2900 + $0x1c] sm:$0xf]
        %v2909 = vld [vmem:[%s2900 + $0x20] sm:$0xf]
        %v2910 = vld [vmem:[%s2900 + $0x24] sm:$0xf]
        %v2911 = vld [vmem:[%s2900 + $0x28] sm:$0xf]
        %v2912 = vld [vmem:[%s2900 + $0x2c] sm:$0xf]
        %v2913 = vld [vmem:[%s2900 + $0x30] sm:$0xf]
        %v2914 = vld [vmem:[%s2900 + $0x34] sm:$0xf]
        %v2915 = vld [vmem:[%s2900 + $0x38] sm:$0xf]
        %v2916 = vld [vmem:[%s2900 + $0x3c] sm:$0xf]
        %v2917 = vunpack.c.l.b16 %v2721
        %v2918 = vunpack.c.l.b16 %v2731
        %v2919 = vunpack.c.l.b16 %v2745
        %v2920 = vunpack.c.l.b16 %v2755
        %v2921 = vunpack.c.l.b16 %v2769
        %v2922 = vunpack.c.l.b16 %v2779
        %v2923 = vunpack.c.l.b16 %v2793
        %v2924 = vunpack.c.l.b16 %v2803
        %v2925 = vunpack.c.l.b16 %v2817
        %v2926 = vunpack.c.l.b16 %v2827
        %v2927 = vunpack.c.l.b16 %v2841
        %v2928 = vunpack.c.l.b16 %v2851
        %v2929 = vunpack.c.l.b16 %v2865
        %v2930 = vunpack.c.l.b16 %v2875
        %v2931 = vunpack.c.l.b16 %v2889
        %v2932 = vunpack.c.l.b16 %v2899
        %v2933 = vpack.c.b16 %v2918, %v2917
        %v2934 = vpack.c.b16 %v2920, %v2919
        %v2935 = vpack.c.b16 %v2922, %v2921
        %v2936 = vpack.c.b16 %v2924, %v2923
        %v2937 = vpack.c.b16 %v2926, %v2925
        %v2938 = vpack.c.b16 %v2928, %v2927
        %v2939 = vpack.c.b16 %v2930, %v2929
        %v2940 = vpack.c.b16 %v2932, %v2931
        %v2965 = vunpack.c.l.b16 %v2901
        %v2966 = vunpack.c.l.b16 %v2902
        %v2967 = vunpack.c.l.b16 %v2903
        %v2968 = vunpack.c.l.b16 %v2904
        %v2969 = vunpack.c.l.b16 %v2905
        %v2970 = vunpack.c.l.b16 %v2906
        %v2971 = vunpack.c.l.b16 %v2907
        %v2972 = vunpack.c.l.b16 %v2908
        %v2973 = vunpack.c.l.b16 %v2909
        %v2974 = vunpack.c.l.b16 %v2910
        %v2975 = vunpack.c.l.b16 %v2911
        %v2976 = vunpack.c.l.b16 %v2912
        %v2977 = vunpack.c.l.b16 %v2913
        %v2978 = vunpack.c.l.b16 %v2914
        %v2979 = vunpack.c.l.b16 %v2915
        %v2980 = vunpack.c.l.b16 %v2916
        %v2981 = vpack.c.b16 %v2966, %v2965
        %v2982 = vpack.c.b16 %v2968, %v2967
        %v2983 = vpack.c.b16 %v2970, %v2969
        %v2984 = vpack.c.b16 %v2972, %v2971
        %v2985 = vpack.c.b16 %v2974, %v2973
        %v2986 = vpack.c.b16 %v2976, %v2975
        %v2987 = vpack.c.b16 %v2978, %v2977
        %v2988 = vpack.c.b16 %v2980, %v2979
        %2997 = vmatpush.bf16.msra.mxu0 %v2988
        %2998 = vmatpush.bf16.msra.mxu0 %v2987
        %2999 = vmatpush.bf16.msra.mxu0 %v2986
        %3000 = vmatpush.bf16.msra.mxu0 %v2985
        %3001 = vmatpush.bf16.msra.mxu0 %v2984
        %3002 = vmatpush.bf16.msra.mxu0 %v2983
        %3003 = vmatpush.bf16.msra.mxu0 %v2982
        %3004 = vmatpush.bf16.msra.mxu0 %v2981
        %3005 = vmatmul.bf16.gmra.mxu0 %v2933
        %v3006 = vpop.f32.mrf.mxu0
        %v3007 = vadd.f32 0.0, %v3006
        %v3008 = vpop.f32.mrf.mxu0
        %v3009 = vadd.f32 0.0, %v3008
        %3010 = vmatmul.bf16.gmra.mxu0 %v2934
        %v3011 = vpop.f32.mrf.mxu0
        %v3012 = vadd.f32 0.0, %v3011
        %v3013 = vpop.f32.mrf.mxu0
        %v3014 = vadd.f32 0.0, %v3013
        %3015 = vmatmul.bf16.gmra.mxu0 %v2935
        %v3016 = vpop.f32.mrf.mxu0
        %v3017 = vadd.f32 0.0, %v3016
        %v3018 = vpop.f32.mrf.mxu0
        %v3019 = vadd.f32 0.0, %v3018
        %3020 = vmatmul.bf16.gmra.mxu0 %v2936
        %v3021 = vpop.f32.mrf.mxu0
        %v3022 = vadd.f32 0.0, %v3021
        %v3023 = vpop.f32.mrf.mxu0
        %v3024 = vadd.f32 0.0, %v3023
        %3025 = vmatmul.bf16.gmra.mxu0 %v2937
        %v3026 = vpop.f32.mrf.mxu0
        %v3027 = vadd.f32 0.0, %v3026
        %v3028 = vpop.f32.mrf.mxu0
        %v3029 = vadd.f32 0.0, %v3028
        %3030 = vmatmul.bf16.gmra.mxu0 %v2938
        %v3031 = vpop.f32.mrf.mxu0
        %v3032 = vadd.f32 0.0, %v3031
        %v3033 = vpop.f32.mrf.mxu0
        %v3034 = vadd.f32 0.0, %v3033
        %3035 = vmatmul.bf16.gmra.mxu0 %v2939
        %v3036 = vpop.f32.mrf.mxu0
        %v3037 = vadd.f32 0.0, %v3036
        %v3038 = vpop.f32.mrf.mxu0
        %v3039 = vadd.f32 0.0, %v3038
        %3040 = vmatmul.bf16.gmra.mxu0 %v2940
        %v3041 = vpop.f32.mrf.mxu0
        %v3042 = vadd.f32 0.0, %v3041
        %v3043 = vpop.f32.mrf.mxu0
        %v3044 = vadd.f32 0.0, %v3043
        %3045 = vdwg.mxu0
        %v3046 = vadd.f32 %v2668, %v3007
        %v3047 = vadd.f32 %v2669, %v3009
        %v3048 = vadd.f32 %v2670, %v3012
        %v3049 = vadd.f32 %v2671, %v3014
        %v3050 = vadd.f32 %v2672, %v3017
        %v3051 = vadd.f32 %v2673, %v3019
        %v3052 = vadd.f32 %v2674, %v3022
        %v3053 = vadd.f32 %v2675, %v3024
        %v3054 = vadd.f32 %v2676, %v3027
        %v3055 = vadd.f32 %v2677, %v3029
        %v3056 = vadd.f32 %v2678, %v3032
        %v3057 = vadd.f32 %v2679, %v3034
        %v3058 = vadd.f32 %v2680, %v3037
        %v3059 = vadd.f32 %v2681, %v3039
        %v3060 = vadd.f32 %v2682, %v3042
        %v3061 = vadd.f32 %v2683, %v3044
        %v3062 = vld [vmem:[%s2489] sm:$0xe]
        %v3063 = vld [vmem:[%s2489 + $0xc] sm:$0xe]
        %v3064 = vld [vmem:[%s2489 + $0x18] sm:$0xe]
        %v3065 = vld [vmem:[%s2489 + $0x24] sm:$0xe]
        %v3066 = vld [vmem:[%s2489 + $0x30] sm:$0xe]
        %v3067 = vld [vmem:[%s2489 + $0x3c] sm:$0xe]
        %v3068 = vld [vmem:[%s2489 + $0x48] sm:$0xe]
        %v3069 = vld [vmem:[%s2489 + $0x54] sm:$0xe]
        %v3094 = vrot.slane %v3062, 5
        %v3095 = vrot.slane %v3094, 4
        %v3096 = vrot.slane %v2685, 5
        %v3097 = vsel %vm1448, %v3095, %v3096
        %v3098 = vrot.slane %v3096, 4
        %v3099 = vrot.slane %v2686, 5
        %v3100 = vsel %vm1448, %v3098, %v3099
        %v3101 = vrot.slane %v3063, 5
        %v3102 = vrot.slane %v3101, 4
        %v3103 = vrot.slane %v2688, 5
        %v3104 = vsel %vm1448, %v3102, %v3103
        %v3105 = vrot.slane %v3103, 4
        %v3106 = vrot.slane %v2689, 5
        %v3107 = vsel %vm1448, %v3105, %v3106
        %v3108 = vrot.slane %v3064, 5
        %v3109 = vrot.slane %v3108, 4
        %v3110 = vrot.slane %v2691, 5
        %v3111 = vsel %vm1448, %v3109, %v3110
        %v3112 = vrot.slane %v3110, 4
        %v3113 = vrot.slane %v2692, 5
        %v3114 = vsel %vm1448, %v3112, %v3113
        %v3115 = vrot.slane %v3065, 5
        %v3116 = vrot.slane %v3115, 4
        %v3117 = vrot.slane %v2694, 5
        %v3118 = vsel %vm1448, %v3116, %v3117
        %v3119 = vrot.slane %v3117, 4
        %v3120 = vrot.slane %v2695, 5
        %v3121 = vsel %vm1448, %v3119, %v3120
        %v3122 = vrot.slane %v3066, 5
        %v3123 = vrot.slane %v3122, 4
        %v3124 = vrot.slane %v2697, 5
        %v3125 = vsel %vm1448, %v3123, %v3124
        %v3126 = vrot.slane %v3124, 4
        %v3127 = vrot.slane %v2698, 5
        %v3128 = vsel %vm1448, %v3126, %v3127
        %v3129 = vrot.slane %v3067, 5
        %v3130 = vrot.slane %v3129, 4
        %v3131 = vrot.slane %v2700, 5
        %v3132 = vsel %vm1448, %v3130, %v3131
        %v3133 = vrot.slane %v3131, 4
        %v3134 = vrot.slane %v2701, 5
        %v3135 = vsel %vm1448, %v3133, %v3134
        %v3136 = vrot.slane %v3068, 5
        %v3137 = vrot.slane %v3136, 4
        %v3138 = vrot.slane %v2703, 5
        %v3139 = vsel %vm1448, %v3137, %v3138
        %v3140 = vrot.slane %v3138, 4
        %v3141 = vrot.slane %v2704, 5
        %v3142 = vsel %vm1448, %v3140, %v3141
        %v3143 = vrot.slane %v3069, 5
        %v3144 = vrot.slane %v3143, 4
        %v3145 = vrot.slane %v2706, 5
        %v3146 = vsel %vm1448, %v3144, %v3145
        %v3147 = vrot.slane %v3145, 4
        %v3148 = vrot.slane %v2707, 5
        %v3149 = vsel %vm1448, %v3147, %v3148
        %s3150 = scalar_lea.vmem [#allocation4], 512
        %v3151 = vld [vmem:[%s3150] sm:$0xf]
        %v3152 = vld [vmem:[%s3150 + $0x4] sm:$0xf]
        %v3153 = vld [vmem:[%s3150 + $0x8] sm:$0xf]
        %v3154 = vld [vmem:[%s3150 + $0xc] sm:$0xf]
        %v3155 = vld [vmem:[%s3150 + $0x10] sm:$0xf]
        %v3156 = vld [vmem:[%s3150 + $0x14] sm:$0xf]
        %v3157 = vld [vmem:[%s3150 + $0x18] sm:$0xf]
        %v3158 = vld [vmem:[%s3150 + $0x1c] sm:$0xf]
        %v3159 = vld [vmem:[%s3150 + $0x20] sm:$0xf]
        %v3160 = vld [vmem:[%s3150 + $0x24] sm:$0xf]
        %v3161 = vld [vmem:[%s3150 + $0x28] sm:$0xf]
        %v3162 = vld [vmem:[%s3150 + $0x2c] sm:$0xf]
        %v3163 = vld [vmem:[%s3150 + $0x30] sm:$0xf]
        %v3164 = vld [vmem:[%s3150 + $0x34] sm:$0xf]
        %v3165 = vld [vmem:[%s3150 + $0x38] sm:$0xf]
        %v3166 = vld [vmem:[%s3150 + $0x3c] sm:$0xf]
        %v3167 = vunpack.c.l.b16 %v3097
        %v3168 = vunpack.c.l.b16 %v3100
        %v3169 = vunpack.c.l.b16 %v3104
        %v3170 = vunpack.c.l.b16 %v3107
        %v3171 = vunpack.c.l.b16 %v3111
        %v3172 = vunpack.c.l.b16 %v3114
        %v3173 = vunpack.c.l.b16 %v3118
        %v3174 = vunpack.c.l.b16 %v3121
        %v3175 = vunpack.c.l.b16 %v3125
        %v3176 = vunpack.c.l.b16 %v3128
        %v3177 = vunpack.c.l.b16 %v3132
        %v3178 = vunpack.c.l.b16 %v3135
        %v3179 = vunpack.c.l.b16 %v3139
        %v3180 = vunpack.c.l.b16 %v3142
        %v3181 = vunpack.c.l.b16 %v3146
        %v3182 = vunpack.c.l.b16 %v3149
        %v3183 = vpack.c.b16 %v3168, %v3167
        %v3184 = vpack.c.b16 %v3170, %v3169
        %v3185 = vpack.c.b16 %v3172, %v3171
        %v3186 = vpack.c.b16 %v3174, %v3173
        %v3187 = vpack.c.b16 %v3176, %v3175
        %v3188 = vpack.c.b16 %v3178, %v3177
        %v3189 = vpack.c.b16 %v3180, %v3179
        %v3190 = vpack.c.b16 %v3182, %v3181
        %v3215 = vunpack.c.l.b16 %v3151
        %v3216 = vunpack.c.l.b16 %v3152
        %v3217 = vunpack.c.l.b16 %v3153
        %v3218 = vunpack.c.l.b16 %v3154
        %v3219 = vunpack.c.l.b16 %v3155
        %v3220 = vunpack.c.l.b16 %v3156
        %v3221 = vunpack.c.l.b16 %v3157
        %v3222 = vunpack.c.l.b16 %v3158
        %v3223 = vunpack.c.l.b16 %v3159
        %v3224 = vunpack.c.l.b16 %v3160
        %v3225 = vunpack.c.l.b16 %v3161
        %v3226 = vunpack.c.l.b16 %v3162
        %v3227 = vunpack.c.l.b16 %v3163
        %v3228 = vunpack.c.l.b16 %v3164
        %v3229 = vunpack.c.l.b16 %v3165
        %v3230 = vunpack.c.l.b16 %v3166
        %v3231 = vpack.c.b16 %v3216, %v3215
        %v3232 = vpack.c.b16 %v3218, %v3217
        %v3233 = vpack.c.b16 %v3220, %v3219
        %v3234 = vpack.c.b16 %v3222, %v3221
        %v3235 = vpack.c.b16 %v3224, %v3223
        %v3236 = vpack.c.b16 %v3226, %v3225
        %v3237 = vpack.c.b16 %v3228, %v3227
        %v3238 = vpack.c.b16 %v3230, %v3229
        %3247 = vmatpush.bf16.msra.mxu0 %v3238
        %3248 = vmatpush.bf16.msra.mxu0 %v3237
        %3249 = vmatpush.bf16.msra.mxu0 %v3236
        %3250 = vmatpush.bf16.msra.mxu0 %v3235
        %3251 = vmatpush.bf16.msra.mxu0 %v3234
        %3252 = vmatpush.bf16.msra.mxu0 %v3233
        %3253 = vmatpush.bf16.msra.mxu0 %v3232
        %3254 = vmatpush.bf16.msra.mxu0 %v3231
        %3255 = vmatmul.bf16.gmra.mxu0 %v3183
        %v3256 = vpop.f32.mrf.mxu0
        %v3257 = vadd.f32 0.0, %v3256
        %v3258 = vpop.f32.mrf.mxu0
        %v3259 = vadd.f32 0.0, %v3258
        %3260 = vmatmul.bf16.gmra.mxu0 %v3184
        %v3261 = vpop.f32.mrf.mxu0
        %v3262 = vadd.f32 0.0, %v3261
        %v3263 = vpop.f32.mrf.mxu0
        %v3264 = vadd.f32 0.0, %v3263
        %3265 = vmatmul.bf16.gmra.mxu0 %v3185
        %v3266 = vpop.f32.mrf.mxu0
        %v3267 = vadd.f32 0.0, %v3266
        %v3268 = vpop.f32.mrf.mxu0
        %v3269 = vadd.f32 0.0, %v3268
        %3270 = vmatmul.bf16.gmra.mxu0 %v3186
        %v3271 = vpop.f32.mrf.mxu0
        %v3272 = vadd.f32 0.0, %v3271
        %v3273 = vpop.f32.mrf.mxu0
        %v3274 = vadd.f32 0.0, %v3273
        %3275 = vmatmul.bf16.gmra.mxu0 %v3187
        %v3276 = vpop.f32.mrf.mxu0
        %v3277 = vadd.f32 0.0, %v3276
        %v3278 = vpop.f32.mrf.mxu0
        %v3279 = vadd.f32 0.0, %v3278
        %3280 = vmatmul.bf16.gmra.mxu0 %v3188
        %v3281 = vpop.f32.mrf.mxu0
        %v3282 = vadd.f32 0.0, %v3281
        %v3283 = vpop.f32.mrf.mxu0
        %v3284 = vadd.f32 0.0, %v3283
        %3285 = vmatmul.bf16.gmra.mxu0 %v3189
        %v3286 = vpop.f32.mrf.mxu0
        %v3287 = vadd.f32 0.0, %v3286
        %v3288 = vpop.f32.mrf.mxu0
        %v3289 = vadd.f32 0.0, %v3288
        %3290 = vmatmul.bf16.gmra.mxu0 %v3190
        %v3291 = vpop.f32.mrf.mxu0
        %v3292 = vadd.f32 0.0, %v3291
        %v3293 = vpop.f32.mrf.mxu0
        %v3294 = vadd.f32 0.0, %v3293
        %3295 = vdwg.mxu0
        %v3296 = vadd.f32 %v3046, %v3257
        %v3297 = vadd.f32 %v3047, %v3259
        %v3298 = vadd.f32 %v3048, %v3262
        %v3299 = vadd.f32 %v3049, %v3264
        %v3300 = vadd.f32 %v3050, %v3267
        %v3301 = vadd.f32 %v3051, %v3269
        %v3302 = vadd.f32 %v3052, %v3272
        %v3303 = vadd.f32 %v3053, %v3274
        %v3304 = vadd.f32 %v3054, %v3277
        %v3305 = vadd.f32 %v3055, %v3279
        %v3306 = vadd.f32 %v3056, %v3282
        %v3307 = vadd.f32 %v3057, %v3284
        %v3308 = vadd.f32 %v3058, %v3287
        %v3309 = vadd.f32 %v3059, %v3289
        %v3310 = vadd.f32 %v3060, %v3292
        %v3311 = vadd.f32 %v3061, %v3294
        %v3313 = vperm.slane %v894, 0
        %v3315 = vmul.f32 %v3296, %v3313
        %v3316 = vmul.f32 %v3297, %v3313
        %v3317 = vmul.f32 %v3298, %v3313
        %v3318 = vmul.f32 %v3299, %v3313
        %v3319 = vmul.f32 %v3300, %v3313
        %v3320 = vmul.f32 %v3301, %v3313
        %v3321 = vmul.f32 %v3302, %v3313
        %v3322 = vmul.f32 %v3303, %v3313
        %v3323 = vmul.f32 %v3304, %v3313
        %v3324 = vmul.f32 %v3305, %v3313
        %v3325 = vmul.f32 %v3306, %v3313
        %v3326 = vmul.f32 %v3307, %v3313
        %v3327 = vmul.f32 %v3308, %v3313
        %v3328 = vmul.f32 %v3309, %v3313
        %v3329 = vmul.f32 %v3310, %v3313
        %v3330 = vmul.f32 %v3311, %v3313
        %v3332 = vperm.slane %v895, 0
        %v3334 = vadd.f32 %v3315, %v3332
        %v3335 = vadd.f32 %v3316, %v3332
        %v3336 = vadd.f32 %v3317, %v3332
        %v3337 = vadd.f32 %v3318, %v3332
        %v3338 = vadd.f32 %v3319, %v3332
        %v3339 = vadd.f32 %v3320, %v3332
        %v3340 = vadd.f32 %v3321, %v3332
        %v3341 = vadd.f32 %v3322, %v3332
        %v3342 = vadd.f32 %v3323, %v3332
        %v3343 = vadd.f32 %v3324, %v3332
        %v3344 = vadd.f32 %v3325, %v3332
        %v3345 = vadd.f32 %v3326, %v3332
        %v3346 = vadd.f32 %v3327, %v3332
        %v3347 = vadd.f32 %v3328, %v3332
        %v3348 = vadd.f32 %v3329, %v3332
        %v3349 = vadd.f32 %v3330, %v3332
        %v3350 = vmax.f32 %v3334, 0.0
        %v3351 = vmax.f32 %v3335, 0.0
        %v3352 = vmax.f32 %v3336, 0.0
        %v3353 = vmax.f32 %v3337, 0.0
        %v3354 = vmax.f32 %v3338, 0.0
        %v3355 = vmax.f32 %v3339, 0.0
        %v3356 = vmax.f32 %v3340, 0.0
        %v3357 = vmax.f32 %v3341, 0.0
        %v3358 = vmax.f32 %v3342, 0.0
        %v3359 = vmax.f32 %v3343, 0.0
        %v3360 = vmax.f32 %v3344, 0.0
        %v3361 = vmax.f32 %v3345, 0.0
        %v3362 = vmax.f32 %v3346, 0.0
        %v3363 = vmax.f32 %v3347, 0.0
        %v3364 = vmax.f32 %v3348, 0.0
        %v3365 = vmax.f32 %v3349, 0.0
        %v3366 = vpack.c.bf16 %v3350, %v3350
        %v3367 = vpack.c.bf16 %v3351, %v3351
        %v3368 = vpack.c.bf16 %v3352, %v3352
        %v3369 = vpack.c.bf16 %v3353, %v3353
        %v3370 = vpack.c.bf16 %v3354, %v3354
        %v3371 = vpack.c.bf16 %v3355, %v3355
        %v3372 = vpack.c.bf16 %v3356, %v3356
        %v3373 = vpack.c.bf16 %v3357, %v3357
        %v3374 = vpack.c.bf16 %v3358, %v3358
        %v3375 = vpack.c.bf16 %v3359, %v3359
        %v3376 = vpack.c.bf16 %v3360, %v3360
        %v3377 = vpack.c.bf16 %v3361, %v3361
        %v3378 = vpack.c.bf16 %v3362, %v3362
        %v3379 = vpack.c.bf16 %v3363, %v3363
        %v3380 = vpack.c.bf16 %v3364, %v3364
        %v3381 = vpack.c.bf16 %v3365, %v3365
        %v3383 = vshrl.u32 %v3366, 16
        %v3385 = vrot.slane %v3383, 7
        %v3386 = vshll.u32 %v3366, 16
        %v3388 = vor.u32 %v3385, %v3386
        %v3389 = vrot.slane %v3385, 4
        %v3391 = vshrl.u32 %v3367, 16
        %v3393 = vrot.slane %v3391, 7
        %v3394 = vshll.u32 %v3367, 16
        %v3396 = vor.u32 %v3393, %v3394
        %v3397 = vsel %vm400, %v3389, %v3396
        %v3398 = vrot.slane %v3393, 4
        %v3400 = vshrl.u32 %v3368, 16
        %v3402 = vrot.slane %v3400, 7
        %v3403 = vshll.u32 %v3368, 16
        %v3405 = vor.u32 %v3402, %v3403
        %v3406 = vrot.slane %v3402, 4
        %v3408 = vshrl.u32 %v3369, 16
        %v3410 = vrot.slane %v3408, 7
        %v3411 = vshll.u32 %v3369, 16
        %v3413 = vor.u32 %v3410, %v3411
        %v3414 = vsel %vm400, %v3406, %v3413
        %v3415 = vrot.slane %v3410, 4
        %v3417 = vshrl.u32 %v3370, 16
        %v3419 = vrot.slane %v3417, 7
        %v3420 = vshll.u32 %v3370, 16
        %v3422 = vor.u32 %v3419, %v3420
        %v3423 = vrot.slane %v3419, 4
        %v3425 = vshrl.u32 %v3371, 16
        %v3427 = vrot.slane %v3425, 7
        %v3428 = vshll.u32 %v3371, 16
        %v3430 = vor.u32 %v3427, %v3428
        %v3431 = vsel %vm400, %v3423, %v3430
        %v3432 = vrot.slane %v3427, 4
        %v3434 = vshrl.u32 %v3372, 16
        %v3436 = vrot.slane %v3434, 7
        %v3437 = vshll.u32 %v3372, 16
        %v3439 = vor.u32 %v3436, %v3437
        %v3440 = vrot.slane %v3436, 4
        %v3442 = vshrl.u32 %v3373, 16
        %v3444 = vrot.slane %v3442, 7
        %v3445 = vshll.u32 %v3373, 16
        %v3447 = vor.u32 %v3444, %v3445
        %v3448 = vsel %vm400, %v3440, %v3447
        %v3449 = vrot.slane %v3444, 4
        %v3451 = vshrl.u32 %v3374, 16
        %v3453 = vrot.slane %v3451, 7
        %v3454 = vshll.u32 %v3374, 16
        %v3456 = vor.u32 %v3453, %v3454
        %v3457 = vrot.slane %v3453, 4
        %v3459 = vshrl.u32 %v3375, 16
        %v3461 = vrot.slane %v3459, 7
        %v3462 = vshll.u32 %v3375, 16
        %v3464 = vor.u32 %v3461, %v3462
        %v3465 = vsel %vm400, %v3457, %v3464
        %v3466 = vrot.slane %v3461, 4
        %v3468 = vshrl.u32 %v3376, 16
        %v3470 = vrot.slane %v3468, 7
        %v3471 = vshll.u32 %v3376, 16
        %v3473 = vor.u32 %v3470, %v3471
        %v3474 = vrot.slane %v3470, 4
        %v3476 = vshrl.u32 %v3377, 16
        %v3478 = vrot.slane %v3476, 7
        %v3479 = vshll.u32 %v3377, 16
        %v3481 = vor.u32 %v3478, %v3479
        %v3482 = vsel %vm400, %v3474, %v3481
        %v3483 = vrot.slane %v3478, 4
        %v3485 = vshrl.u32 %v3378, 16
        %v3487 = vrot.slane %v3485, 7
        %v3488 = vshll.u32 %v3378, 16
        %v3490 = vor.u32 %v3487, %v3488
        %v3491 = vrot.slane %v3487, 4
        %v3493 = vshrl.u32 %v3379, 16
        %v3495 = vrot.slane %v3493, 7
        %v3496 = vshll.u32 %v3379, 16
        %v3498 = vor.u32 %v3495, %v3496
        %v3499 = vsel %vm400, %v3491, %v3498
        %v3500 = vrot.slane %v3495, 4
        %v3502 = vshrl.u32 %v3380, 16
        %v3504 = vrot.slane %v3502, 7
        %v3505 = vshll.u32 %v3380, 16
        %v3507 = vor.u32 %v3504, %v3505
        %v3508 = vrot.slane %v3504, 4
        %v3510 = vshrl.u32 %v3381, 16
        %v3512 = vrot.slane %v3510, 7
        %v3513 = vshll.u32 %v3381, 16
        %v3515 = vor.u32 %v3512, %v3513
        %v3516 = vsel %vm400, %v3508, %v3515
        %v3517 = vrot.slane %v3512, 4
        %s3542 = scalar_lea.vmem [#allocation3], 12
        %vm3543 = vcmask 1043456
        %vm3544 = vmand %vm3543, %vm723
        %v3545 = vld [vmem:[%s3542] sm:$0xf]
        %v3546 = vsel %vm3544, %v3388, %v3545
        %3547 = vst [vmem:[%s3542] sm:$0xf] %v3546
        %3548 = vst [vmem:[%s3542 + $0x4] sm:$0xf] %v3397
        %vm3549 = vcmask 1040384
        %vm3550 = vmand %vm3549, %vm398
        %v3551 = vld [vmem:[%s3542 + $0x8] sm:$0x1]
        %v3552 = vsel %vm3550, %v3398, %v3551
        %3553 = vst [vmem:[%s3542 + $0x8] sm:$0x1] %v3552
        %v3554 = vld [vmem:[%s3542 + $0xc] sm:$0xf]
        %v3555 = vsel %vm3544, %v3405, %v3554
        %3556 = vst [vmem:[%s3542 + $0xc] sm:$0xf] %v3555
        %3557 = vst [vmem:[%s3542 + $0x10] sm:$0xf] %v3414
        %v3558 = vld [vmem:[%s3542 + $0x14] sm:$0x1]
        %v3559 = vsel %vm3550, %v3415, %v3558
        %3560 = vst [vmem:[%s3542 + $0x14] sm:$0x1] %v3559
        %v3561 = vld [vmem:[%s3542 + $0x18] sm:$0xf]
        %v3562 = vsel %vm3544, %v3422, %v3561
        %3563 = vst [vmem:[%s3542 + $0x18] sm:$0xf] %v3562
        %3564 = vst [vmem:[%s3542 + $0x1c] sm:$0xf] %v3431
        %v3565 = vld [vmem:[%s3542 + $0x20] sm:$0x1]
        %v3566 = vsel %vm3550, %v3432, %v3565
        %3567 = vst [vmem:[%s3542 + $0x20] sm:$0x1] %v3566
        %v3568 = vld [vmem:[%s3542 + $0x24] sm:$0xf]
        %v3569 = vsel %vm3544, %v3439, %v3568
        %3570 = vst [vmem:[%s3542 + $0x24] sm:$0xf] %v3569
        %3571 = vst [vmem:[%s3542 + $0x28] sm:$0xf] %v3448
        %v3572 = vld [vmem:[%s3542 + $0x2c] sm:$0x1]
        %v3573 = vsel %vm3550, %v3449, %v3572
        %3574 = vst [vmem:[%s3542 + $0x2c] sm:$0x1] %v3573
        %v3575 = vld [vmem:[%s3542 + $0x30] sm:$0xf]
        %v3576 = vsel %vm3544, %v3456, %v3575
        %3577 = vst [vmem:[%s3542 + $0x30] sm:$0xf] %v3576
        %3578 = vst [vmem:[%s3542 + $0x34] sm:$0xf] %v3465
        %v3579 = vld [vmem:[%s3542 + $0x38] sm:$0x1]
        %v3580 = vsel %vm3550, %v3466, %v3579
        %3581 = vst [vmem:[%s3542 + $0x38] sm:$0x1] %v3580
        %v3582 = vld [vmem:[%s3542 + $0x3c] sm:$0xf]
        %v3583 = vsel %vm3544, %v3473, %v3582
        %3584 = vst [vmem:[%s3542 + $0x3c] sm:$0xf] %v3583
        %3585 = vst [vmem:[%s3542 + $0x40] sm:$0xf] %v3482
        %v3586 = vld [vmem:[%s3542 + $0x44] sm:$0x1]
        %v3587 = vsel %vm3550, %v3483, %v3586
        %3588 = vst [vmem:[%s3542 + $0x44] sm:$0x1] %v3587
        %v3589 = vld [vmem:[%s3542 + $0x48] sm:$0xf]
        %v3590 = vsel %vm3544, %v3490, %v3589
        %3591 = vst [vmem:[%s3542 + $0x48] sm:$0xf] %v3590
        %3592 = vst [vmem:[%s3542 + $0x4c] sm:$0xf] %v3499
        %v3593 = vld [vmem:[%s3542 + $0x50] sm:$0x1]
        %v3594 = vsel %vm3550, %v3500, %v3593
        %3595 = vst [vmem:[%s3542 + $0x50] sm:$0x1] %v3594
        %v3596 = vld [vmem:[%s3542 + $0x54] sm:$0xf]
        %v3597 = vsel %vm3544, %v3507, %v3596
        %3598 = vst [vmem:[%s3542 + $0x54] sm:$0xf] %v3597
        %3599 = vst [vmem:[%s3542 + $0x58] sm:$0xf] %v3516
        %v3600 = vld [vmem:[%s3542 + $0x5c] sm:$0x1]
        %v3601 = vsel %vm3550, %v3517, %v3600
        %3602 = vst [vmem:[%s3542 + $0x5c] sm:$0x1] %v3601
        %s3603 = scalar_lea.vmem [#allocation2], 96
        %v3604 = vld [vmem:[%s3603] sm:$0xf]
        %v3605 = vld [vmem:[%s3603 + $0x4] sm:$0xf]
        %v3606 = vld [vmem:[%s3603 + $0xc] sm:$0xf]
        %v3607 = vld [vmem:[%s3603 + $0x10] sm:$0xf]
        %v3608 = vld [vmem:[%s3603 + $0x18] sm:$0xf]
        %v3609 = vld [vmem:[%s3603 + $0x1c] sm:$0xf]
        %v3610 = vld [vmem:[%s3603 + $0x24] sm:$0xf]
        %v3611 = vld [vmem:[%s3603 + $0x28] sm:$0xf]
        %v3612 = vld [vmem:[%s3603 + $0x30] sm:$0xf]
        %v3613 = vld [vmem:[%s3603 + $0x34] sm:$0xf]
        %v3614 = vld [vmem:[%s3603 + $0x3c] sm:$0xf]
        %v3615 = vld [vmem:[%s3603 + $0x40] sm:$0xf]
        %v3616 = vld [vmem:[%s3603 + $0x48] sm:$0xf]
        %v3617 = vld [vmem:[%s3603 + $0x4c] sm:$0xf]
        %v3618 = vld [vmem:[%s3603 + $0x54] sm:$0xf]
        %v3619 = vld [vmem:[%s3603 + $0x58] sm:$0xf]
        %v3620 = vld [vmem:[#allocation4] sm:$0xf]
        %v3621 = vld [vmem:[#allocation4 + $0x4] sm:$0xf]
        %v3622 = vld [vmem:[#allocation4 + $0x8] sm:$0xf]
        %v3623 = vld [vmem:[#allocation4 + $0xc] sm:$0xf]
        %v3624 = vld [vmem:[#allocation4 + $0x10] sm:$0xf]
        %v3625 = vld [vmem:[#allocation4 + $0x14] sm:$0xf]
        %v3626 = vld [vmem:[#allocation4 + $0x18] sm:$0xf]
        %v3627 = vld [vmem:[#allocation4 + $0x1c] sm:$0xf]
        %v3628 = vld [vmem:[#allocation4 + $0x20] sm:$0xf]
        %v3629 = vld [vmem:[#allocation4 + $0x24] sm:$0xf]
        %v3630 = vld [vmem:[#allocation4 + $0x28] sm:$0xf]
        %v3631 = vld [vmem:[#allocation4 + $0x2c] sm:$0xf]
        %v3632 = vld [vmem:[#allocation4 + $0x30] sm:$0xf]
        %v3633 = vld [vmem:[#allocation4 + $0x34] sm:$0xf]
        %v3634 = vld [vmem:[#allocation4 + $0x38] sm:$0xf]
        %v3635 = vld [vmem:[#allocation4 + $0x3c] sm:$0xf]
        %v3636 = vld [vmem:[%s3603 + $0x8] sm:$0x1]
        %v3637 = vld [vmem:[%s3603 + $0x14] sm:$0x1]
        %v3638 = vld [vmem:[%s3603 + $0x20] sm:$0x1]
        %v3639 = vld [vmem:[%s3603 + $0x2c] sm:$0x1]
        %v3640 = vld [vmem:[%s3603 + $0x38] sm:$0x1]
        %v3641 = vld [vmem:[%s3603 + $0x44] sm:$0x1]
        %v3642 = vld [vmem:[%s3603 + $0x50] sm:$0x1]
        %v3643 = vld [vmem:[%s3603 + $0x5c] sm:$0x1]
        %v3645 = vshrl.u32 %v3604, 16
        %v3647 = vrot.slane %v3645, 4
        %v3648 = vshll.u32 %v3604, 16
        %v3650 = vrot.slane %v3648, 5
        %v3651 = vor.u32 %v3647, %v3650
        %v3652 = vrot.slane %v3651, 4
        %v3654 = vshll.u32 %v3605, 16
        %v3656 = vrot.slane %v3654, 5
        %v3657 = vsel %vm938, %v3652, %v3656
        %v3658 = vshrl.u32 %v3605, 16
        %v3660 = vrot.slane %v3658, 4
        %v3661 = vor.u32 %v3660, %v3656
        %v3662 = vrot.slane %v3661, 4
        %v3664 = vshll.u32 %v3636, 16
        %v3666 = vrot.slane %v3664, 5
        %v3667 = vsel %vm938, %v3662, %v3666
        %v3669 = vshrl.u32 %v3606, 16
        %v3671 = vrot.slane %v3669, 4
        %v3672 = vshll.u32 %v3606, 16
        %v3674 = vrot.slane %v3672, 5
        %v3675 = vor.u32 %v3671, %v3674
        %v3676 = vrot.slane %v3675, 4
        %v3678 = vshll.u32 %v3607, 16
        %v3680 = vrot.slane %v3678, 5
        %v3681 = vsel %vm938, %v3676, %v3680
        %v3682 = vshrl.u32 %v3607, 16
        %v3684 = vrot.slane %v3682, 4
        %v3685 = vor.u32 %v3684, %v3680
        %v3686 = vrot.slane %v3685, 4
        %v3688 = vshll.u32 %v3637, 16
        %v3690 = vrot.slane %v3688, 5
        %v3691 = vsel %vm938, %v3686, %v3690
        %v3693 = vshrl.u32 %v3608, 16
        %v3695 = vrot.slane %v3693, 4
        %v3696 = vshll.u32 %v3608, 16
        %v3698 = vrot.slane %v3696, 5
        %v3699 = vor.u32 %v3695, %v3698
        %v3700 = vrot.slane %v3699, 4
        %v3702 = vshll.u32 %v3609, 16
        %v3704 = vrot.slane %v3702, 5
        %v3705 = vsel %vm938, %v3700, %v3704
        %v3706 = vshrl.u32 %v3609, 16
        %v3708 = vrot.slane %v3706, 4
        %v3709 = vor.u32 %v3708, %v3704
        %v3710 = vrot.slane %v3709, 4
        %v3712 = vshll.u32 %v3638, 16
        %v3714 = vrot.slane %v3712, 5
        %v3715 = vsel %vm938, %v3710, %v3714
        %v3717 = vshrl.u32 %v3610, 16
        %v3719 = vrot.slane %v3717, 4
        %v3720 = vshll.u32 %v3610, 16
        %v3722 = vrot.slane %v3720, 5
        %v3723 = vor.u32 %v3719, %v3722
        %v3724 = vrot.slane %v3723, 4
        %v3726 = vshll.u32 %v3611, 16
        %v3728 = vrot.slane %v3726, 5
        %v3729 = vsel %vm938, %v3724, %v3728
        %v3730 = vshrl.u32 %v3611, 16
        %v3732 = vrot.slane %v3730, 4
        %v3733 = vor.u32 %v3732, %v3728
        %v3734 = vrot.slane %v3733, 4
        %v3736 = vshll.u32 %v3639, 16
        %v3738 = vrot.slane %v3736, 5
        %v3739 = vsel %vm938, %v3734, %v3738
        %v3741 = vshrl.u32 %v3612, 16
        %v3743 = vrot.slane %v3741, 4
        %v3744 = vshll.u32 %v3612, 16
        %v3746 = vrot.slane %v3744, 5
        %v3747 = vor.u32 %v3743, %v3746
        %v3748 = vrot.slane %v3747, 4
        %v3750 = vshll.u32 %v3613, 16
        %v3752 = vrot.slane %v3750, 5
        %v3753 = vsel %vm938, %v3748, %v3752
        %v3754 = vshrl.u32 %v3613, 16
        %v3756 = vrot.slane %v3754, 4
        %v3757 = vor.u32 %v3756, %v3752
        %v3758 = vrot.slane %v3757, 4
        %v3760 = vshll.u32 %v3640, 16
        %v3762 = vrot.slane %v3760, 5
        %v3763 = vsel %vm938, %v3758, %v3762
        %v3765 = vshrl.u32 %v3614, 16
        %v3767 = vrot.slane %v3765, 4
        %v3768 = vshll.u32 %v3614, 16
        %v3770 = vrot.slane %v3768, 5
        %v3771 = vor.u32 %v3767, %v3770
        %v3772 = vrot.slane %v3771, 4
        %v3774 = vshll.u32 %v3615, 16
        %v3776 = vrot.slane %v3774, 5
        %v3777 = vsel %vm938, %v3772, %v3776
        %v3778 = vshrl.u32 %v3615, 16
        %v3780 = vrot.slane %v3778, 4
        %v3781 = vor.u32 %v3780, %v3776
        %v3782 = vrot.slane %v3781, 4
        %v3784 = vshll.u32 %v3641, 16
        %v3786 = vrot.slane %v3784, 5
        %v3787 = vsel %vm938, %v3782, %v3786
        %v3789 = vshrl.u32 %v3616, 16
        %v3791 = vrot.slane %v3789, 4
        %v3792 = vshll.u32 %v3616, 16
        %v3794 = vrot.slane %v3792, 5
        %v3795 = vor.u32 %v3791, %v3794
        %v3796 = vrot.slane %v3795, 4
        %v3798 = vshll.u32 %v3617, 16
        %v3800 = vrot.slane %v3798, 5
        %v3801 = vsel %vm938, %v3796, %v3800
        %v3802 = vshrl.u32 %v3617, 16
        %v3804 = vrot.slane %v3802, 4
        %v3805 = vor.u32 %v3804, %v3800
        %v3806 = vrot.slane %v3805, 4
        %v3808 = vshll.u32 %v3642, 16
        %v3810 = vrot.slane %v3808, 5
        %v3811 = vsel %vm938, %v3806, %v3810
        %v3813 = vshrl.u32 %v3618, 16
        %v3815 = vrot.slane %v3813, 4
        %v3816 = vshll.u32 %v3618, 16
        %v3818 = vrot.slane %v3816, 5
        %v3819 = vor.u32 %v3815, %v3818
        %v3820 = vrot.slane %v3819, 4
        %v3822 = vshll.u32 %v3619, 16
        %v3824 = vrot.slane %v3822, 5
        %v3825 = vsel %vm938, %v3820, %v3824
        %v3826 = vshrl.u32 %v3619, 16
        %v3828 = vrot.slane %v3826, 4
        %v3829 = vor.u32 %v3828, %v3824
        %v3830 = vrot.slane %v3829, 4
        %v3832 = vshll.u32 %v3643, 16
        %v3834 = vrot.slane %v3832, 5
        %v3835 = vsel %vm938, %v3830, %v3834
        %v3836 = vld [vmem:[%s1131] sm:$0xf]
        %v3837 = vld [vmem:[%s1131 + $0x4] sm:$0xf]
        %v3838 = vld [vmem:[%s1131 + $0x8] sm:$0xf]
        %v3839 = vld [vmem:[%s1131 + $0xc] sm:$0xf]
        %v3840 = vld [vmem:[%s1131 + $0x10] sm:$0xf]
        %v3841 = vld [vmem:[%s1131 + $0x14] sm:$0xf]
        %v3842 = vld [vmem:[%s1131 + $0x18] sm:$0xf]
        %v3843 = vld [vmem:[%s1131 + $0x1c] sm:$0xf]
        %v3844 = vld [vmem:[%s1131 + $0x20] sm:$0xf]
        %v3845 = vld [vmem:[%s1131 + $0x24] sm:$0xf]
        %v3846 = vld [vmem:[%s1131 + $0x28] sm:$0xf]
        %v3847 = vld [vmem:[%s1131 + $0x2c] sm:$0xf]
        %v3848 = vld [vmem:[%s1131 + $0x30] sm:$0xf]
        %v3849 = vld [vmem:[%s1131 + $0x34] sm:$0xf]
        %v3850 = vld [vmem:[%s1131 + $0x38] sm:$0xf]
        %v3851 = vld [vmem:[%s1131 + $0x3c] sm:$0xf]
        %v3852 = vunpack.c.l.b16 %v3657
        %v3853 = vunpack.c.l.b16 %v3667
        %v3854 = vunpack.c.l.b16 %v3681
        %v3855 = vunpack.c.l.b16 %v3691
        %v3856 = vunpack.c.l.b16 %v3705
        %v3857 = vunpack.c.l.b16 %v3715
        %v3858 = vunpack.c.l.b16 %v3729
        %v3859 = vunpack.c.l.b16 %v3739
        %v3860 = vunpack.c.l.b16 %v3753
        %v3861 = vunpack.c.l.b16 %v3763
        %v3862 = vunpack.c.l.b16 %v3777
        %v3863 = vunpack.c.l.b16 %v3787
        %v3864 = vunpack.c.l.b16 %v3801
        %v3865 = vunpack.c.l.b16 %v3811
        %v3866 = vunpack.c.l.b16 %v3825
        %v3867 = vunpack.c.l.b16 %v3835
        %v3868 = vpack.c.b16 %v3853, %v3852
        %v3869 = vpack.c.b16 %v3855, %v3854
        %v3870 = vpack.c.b16 %v3857, %v3856
        %v3871 = vpack.c.b16 %v3859, %v3858
        %v3872 = vpack.c.b16 %v3861, %v3860
        %v3873 = vpack.c.b16 %v3863, %v3862
        %v3874 = vpack.c.b16 %v3865, %v3864
        %v3875 = vpack.c.b16 %v3867, %v3866
        %v3900 = vunpack.c.l.b16 %v3836
        %v3901 = vunpack.c.l.b16 %v3837
        %v3902 = vunpack.c.l.b16 %v3838
        %v3903 = vunpack.c.l.b16 %v3839
        %v3904 = vunpack.c.l.b16 %v3840
        %v3905 = vunpack.c.l.b16 %v3841
        %v3906 = vunpack.c.l.b16 %v3842
        %v3907 = vunpack.c.l.b16 %v3843
        %v3908 = vunpack.c.l.b16 %v3844
        %v3909 = vunpack.c.l.b16 %v3845
        %v3910 = vunpack.c.l.b16 %v3846
        %v3911 = vunpack.c.l.b16 %v3847
        %v3912 = vunpack.c.l.b16 %v3848
        %v3913 = vunpack.c.l.b16 %v3849
        %v3914 = vunpack.c.l.b16 %v3850
        %v3915 = vunpack.c.l.b16 %v3851
        %v3916 = vpack.c.b16 %v3901, %v3900
        %v3917 = vpack.c.b16 %v3903, %v3902
        %v3918 = vpack.c.b16 %v3905, %v3904
        %v3919 = vpack.c.b16 %v3907, %v3906
        %v3920 = vpack.c.b16 %v3909, %v3908
        %v3921 = vpack.c.b16 %v3911, %v3910
        %v3922 = vpack.c.b16 %v3913, %v3912
        %v3923 = vpack.c.b16 %v3915, %v3914
        %3932 = vmatpush.bf16.msra.mxu0 %v3923
        %3933 = vmatpush.bf16.msra.mxu0 %v3922
        %3934 = vmatpush.bf16.msra.mxu0 %v3921
        %3935 = vmatpush.bf16.msra.mxu0 %v3920
        %3936 = vmatpush.bf16.msra.mxu0 %v3919
        %3937 = vmatpush.bf16.msra.mxu0 %v3918
        %3938 = vmatpush.bf16.msra.mxu0 %v3917
        %3939 = vmatpush.bf16.msra.mxu0 %v3916
        %3940 = vmatmul.bf16.gmra.mxu0 %v3868
        %v3941 = vpop.f32.mrf.mxu0
        %v3942 = vadd.f32 0.0, %v3941
        %v3943 = vpop.f32.mrf.mxu0
        %v3944 = vadd.f32 0.0, %v3943
        %3945 = vmatmul.bf16.gmra.mxu0 %v3869
        %v3946 = vpop.f32.mrf.mxu0
        %v3947 = vadd.f32 0.0, %v3946
        %v3948 = vpop.f32.mrf.mxu0
        %v3949 = vadd.f32 0.0, %v3948
        %3950 = vmatmul.bf16.gmra.mxu0 %v3870
        %v3951 = vpop.f32.mrf.mxu0
        %v3952 = vadd.f32 0.0, %v3951
        %v3953 = vpop.f32.mrf.mxu0
        %v3954 = vadd.f32 0.0, %v3953
        %3955 = vmatmul.bf16.gmra.mxu0 %v3871
        %v3956 = vpop.f32.mrf.mxu0
        %v3957 = vadd.f32 0.0, %v3956
        %v3958 = vpop.f32.mrf.mxu0
        %v3959 = vadd.f32 0.0, %v3958
        %3960 = vmatmul.bf16.gmra.mxu0 %v3872
        %v3961 = vpop.f32.mrf.mxu0
        %v3962 = vadd.f32 0.0, %v3961
        %v3963 = vpop.f32.mrf.mxu0
        %v3964 = vadd.f32 0.0, %v3963
        %3965 = vmatmul.bf16.gmra.mxu0 %v3873
        %v3966 = vpop.f32.mrf.mxu0
        %v3967 = vadd.f32 0.0, %v3966
        %v3968 = vpop.f32.mrf.mxu0
        %v3969 = vadd.f32 0.0, %v3968
        %3970 = vmatmul.bf16.gmra.mxu0 %v3874
        %v3971 = vpop.f32.mrf.mxu0
        %v3972 = vadd.f32 0.0, %v3971
        %v3973 = vpop.f32.mrf.mxu0
        %v3974 = vadd.f32 0.0, %v3973
        %3975 = vmatmul.bf16.gmra.mxu0 %v3875
        %v3976 = vpop.f32.mrf.mxu0
        %v3977 = vadd.f32 0.0, %v3976
        %v3978 = vpop.f32.mrf.mxu0
        %v3979 = vadd.f32 0.0, %v3978
        %3980 = vdwg.mxu0
        %v3997 = vunpack.c.l.b16 %v3604
        %v3998 = vunpack.c.l.b16 %v3605
        %v3999 = vunpack.c.l.b16 %v3606
        %v4000 = vunpack.c.l.b16 %v3607
        %v4001 = vunpack.c.l.b16 %v3608
        %v4002 = vunpack.c.l.b16 %v3609
        %v4003 = vunpack.c.l.b16 %v3610
        %v4004 = vunpack.c.l.b16 %v3611
        %v4005 = vunpack.c.l.b16 %v3612
        %v4006 = vunpack.c.l.b16 %v3613
        %v4007 = vunpack.c.l.b16 %v3614
        %v4008 = vunpack.c.l.b16 %v3615
        %v4009 = vunpack.c.l.b16 %v3616
        %v4010 = vunpack.c.l.b16 %v3617
        %v4011 = vunpack.c.l.b16 %v3618
        %v4012 = vunpack.c.l.b16 %v3619
        %v4013 = vpack.c.b16 %v3998, %v3997
        %v4014 = vpack.c.b16 %v4000, %v3999
        %v4015 = vpack.c.b16 %v4002, %v4001
        %v4016 = vpack.c.b16 %v4004, %v4003
        %v4017 = vpack.c.b16 %v4006, %v4005
        %v4018 = vpack.c.b16 %v4008, %v4007
        %v4019 = vpack.c.b16 %v4010, %v4009
        %v4020 = vpack.c.b16 %v4012, %v4011
        %v4045 = vunpack.c.l.b16 %v3620
        %v4046 = vunpack.c.l.b16 %v3621
        %v4047 = vunpack.c.l.b16 %v3622
        %v4048 = vunpack.c.l.b16 %v3623
        %v4049 = vunpack.c.l.b16 %v3624
        %v4050 = vunpack.c.l.b16 %v3625
        %v4051 = vunpack.c.l.b16 %v3626
        %v4052 = vunpack.c.l.b16 %v3627
        %v4053 = vunpack.c.l.b16 %v3628
        %v4054 = vunpack.c.l.b16 %v3629
        %v4055 = vunpack.c.l.b16 %v3630
        %v4056 = vunpack.c.l.b16 %v3631
        %v4057 = vunpack.c.l.b16 %v3632
        %v4058 = vunpack.c.l.b16 %v3633
        %v4059 = vunpack.c.l.b16 %v3634
        %v4060 = vunpack.c.l.b16 %v3635
        %v4061 = vpack.c.b16 %v4046, %v4045
        %v4062 = vpack.c.b16 %v4048, %v4047
        %v4063 = vpack.c.b16 %v4050, %v4049
        %v4064 = vpack.c.b16 %v4052, %v4051
        %v4065 = vpack.c.b16 %v4054, %v4053
        %v4066 = vpack.c.b16 %v4056, %v4055
        %v4067 = vpack.c.b16 %v4058, %v4057
        %v4068 = vpack.c.b16 %v4060, %v4059
        %4077 = vmatpush.bf16.msra.mxu0 %v4068
        %4078 = vmatpush.bf16.msra.mxu0 %v4067
        %4079 = vmatpush.bf16.msra.mxu0 %v4066
        %4080 = vmatpush.bf16.msra.mxu0 %v4065
        %4081 = vmatpush.bf16.msra.mxu0 %v4064
        %4082 = vmatpush.bf16.msra.mxu0 %v4063
        %4083 = vmatpush.bf16.msra.mxu0 %v4062
        %4084 = vmatpush.bf16.msra.mxu0 %v4061
        %4085 = vmatmul.bf16.gmra.mxu0 %v4013
        %v4086 = vpop.f32.mrf.mxu0
        %v4087 = vadd.f32 %v3942, %v4086
        %v4088 = vpop.f32.mrf.mxu0
        %v4089 = vadd.f32 %v3944, %v4088
        %4090 = vmatmul.bf16.gmra.mxu0 %v4014
        %v4091 = vpop.f32.mrf.mxu0
        %v4092 = vadd.f32 %v3947, %v4091
        %v4093 = vpop.f32.mrf.mxu0
        %v4094 = vadd.f32 %v3949, %v4093
        %4095 = vmatmul.bf16.gmra.mxu0 %v4015
        %v4096 = vpop.f32.mrf.mxu0
        %v4097 = vadd.f32 %v3952, %v4096
        %v4098 = vpop.f32.mrf.mxu0
        %v4099 = vadd.f32 %v3954, %v4098
        %4100 = vmatmul.bf16.gmra.mxu0 %v4016
        %v4101 = vpop.f32.mrf.mxu0
        %v4102 = vadd.f32 %v3957, %v4101
        %v4103 = vpop.f32.mrf.mxu0
        %v4104 = vadd.f32 %v3959, %v4103
        %4105 = vmatmul.bf16.gmra.mxu0 %v4017
        %v4106 = vpop.f32.mrf.mxu0
        %v4107 = vadd.f32 %v3962, %v4106
        %v4108 = vpop.f32.mrf.mxu0
        %v4109 = vadd.f32 %v3964, %v4108
        %4110 = vmatmul.bf16.gmra.mxu0 %v4018
        %v4111 = vpop.f32.mrf.mxu0
        %v4112 = vadd.f32 %v3967, %v4111
        %v4113 = vpop.f32.mrf.mxu0
        %v4114 = vadd.f32 %v3969, %v4113
        %4115 = vmatmul.bf16.gmra.mxu0 %v4019
        %v4116 = vpop.f32.mrf.mxu0
        %v4117 = vadd.f32 %v3972, %v4116
        %v4118 = vpop.f32.mrf.mxu0
        %v4119 = vadd.f32 %v3974, %v4118
        %4120 = vmatmul.bf16.gmra.mxu0 %v4020
        %v4121 = vpop.f32.mrf.mxu0
        %v4122 = vadd.f32 %v3977, %v4121
        %v4123 = vpop.f32.mrf.mxu0
        %v4124 = vadd.f32 %v3979, %v4123
        %4125 = vdwg.mxu0
        %v4126 = vld [vmem:[%s3603] sm:$0xe]
        %v4127 = vld [vmem:[%s3603 + $0xc] sm:$0xe]
        %v4128 = vld [vmem:[%s3603 + $0x18] sm:$0xe]
        %v4129 = vld [vmem:[%s3603 + $0x24] sm:$0xe]
        %v4130 = vld [vmem:[%s3603 + $0x30] sm:$0xe]
        %v4131 = vld [vmem:[%s3603 + $0x3c] sm:$0xe]
        %v4132 = vld [vmem:[%s3603 + $0x48] sm:$0xe]
        %v4133 = vld [vmem:[%s3603 + $0x54] sm:$0xe]
        %v4150 = vrot.slane %v4126, 5
        %v4151 = vrot.slane %v4150, 4
        %v4152 = vrot.slane %v3605, 5
        %v4153 = vsel %vm1448, %v4151, %v4152
        %v4154 = vrot.slane %v4152, 4
        %v4155 = vrot.slane %v3636, 5
        %v4156 = vsel %vm1448, %v4154, %v4155
        %v4157 = vrot.slane %v4127, 5
        %v4158 = vrot.slane %v4157, 4
        %v4159 = vrot.slane %v3607, 5
        %v4160 = vsel %vm1448, %v4158, %v4159
        %v4161 = vrot.slane %v4159, 4
        %v4162 = vrot.slane %v3637, 5
        %v4163 = vsel %vm1448, %v4161, %v4162
        %v4164 = vrot.slane %v4128, 5
        %v4165 = vrot.slane %v4164, 4
        %v4166 = vrot.slane %v3609, 5
        %v4167 = vsel %vm1448, %v4165, %v4166
        %v4168 = vrot.slane %v4166, 4
        %v4169 = vrot.slane %v3638, 5
        %v4170 = vsel %vm1448, %v4168, %v4169
        %v4171 = vrot.slane %v4129, 5
        %v4172 = vrot.slane %v4171, 4
        %v4173 = vrot.slane %v3611, 5
        %v4174 = vsel %vm1448, %v4172, %v4173
        %v4175 = vrot.slane %v4173, 4
        %v4176 = vrot.slane %v3639, 5
        %v4177 = vsel %vm1448, %v4175, %v4176
        %v4178 = vrot.slane %v4130, 5
        %v4179 = vrot.slane %v4178, 4
        %v4180 = vrot.slane %v3613, 5
        %v4181 = vsel %vm1448, %v4179, %v4180
        %v4182 = vrot.slane %v4180, 4
        %v4183 = vrot.slane %v3640, 5
        %v4184 = vsel %vm1448, %v4182, %v4183
        %v4185 = vrot.slane %v4131, 5
        %v4186 = vrot.slane %v4185, 4
        %v4187 = vrot.slane %v3615, 5
        %v4188 = vsel %vm1448, %v4186, %v4187
        %v4189 = vrot.slane %v4187, 4
        %v4190 = vrot.slane %v3641, 5
        %v4191 = vsel %vm1448, %v4189, %v4190
        %v4192 = vrot.slane %v4132, 5
        %v4193 = vrot.slane %v4192, 4
        %v4194 = vrot.slane %v3617, 5
        %v4195 = vsel %vm1448, %v4193, %v4194
        %v4196 = vrot.slane %v4194, 4
        %v4197 = vrot.slane %v3642, 5
        %v4198 = vsel %vm1448, %v4196, %v4197
        %v4199 = vrot.slane %v4133, 5
        %v4200 = vrot.slane %v4199, 4
        %v4201 = vrot.slane %v3619, 5
        %v4202 = vsel %vm1448, %v4200, %v4201
        %v4203 = vrot.slane %v4201, 4
        %v4204 = vrot.slane %v3643, 5
        %v4205 = vsel %vm1448, %v4203, %v4204
        %v4206 = vld [vmem:[%s1505] sm:$0xf]
        %v4207 = vld [vmem:[%s1505 + $0x4] sm:$0xf]
        %v4208 = vld [vmem:[%s1505 + $0x8] sm:$0xf]
        %v4209 = vld [vmem:[%s1505 + $0xc] sm:$0xf]
        %v4210 = vld [vmem:[%s1505 + $0x10] sm:$0xf]
        %v4211 = vld [vmem:[%s1505 + $0x14] sm:$0xf]
        %v4212 = vld [vmem:[%s1505 + $0x18] sm:$0xf]
        %v4213 = vld [vmem:[%s1505 + $0x1c] sm:$0xf]
        %v4214 = vld [vmem:[%s1505 + $0x20] sm:$0xf]
        %v4215 = vld [vmem:[%s1505 + $0x24] sm:$0xf]
        %v4216 = vld [vmem:[%s1505 + $0x28] sm:$0xf]
        %v4217 = vld [vmem:[%s1505 + $0x2c] sm:$0xf]
        %v4218 = vld [vmem:[%s1505 + $0x30] sm:$0xf]
        %v4219 = vld [vmem:[%s1505 + $0x34] sm:$0xf]
        %v4220 = vld [vmem:[%s1505 + $0x38] sm:$0xf]
        %v4221 = vld [vmem:[%s1505 + $0x3c] sm:$0xf]
        %v4222 = vunpack.c.l.b16 %v4153
        %v4223 = vunpack.c.l.b16 %v4156
        %v4224 = vunpack.c.l.b16 %v4160
        %v4225 = vunpack.c.l.b16 %v4163
        %v4226 = vunpack.c.l.b16 %v4167
        %v4227 = vunpack.c.l.b16 %v4170
        %v4228 = vunpack.c.l.b16 %v4174
        %v4229 = vunpack.c.l.b16 %v4177
        %v4230 = vunpack.c.l.b16 %v4181
        %v4231 = vunpack.c.l.b16 %v4184
        %v4232 = vunpack.c.l.b16 %v4188
        %v4233 = vunpack.c.l.b16 %v4191
        %v4234 = vunpack.c.l.b16 %v4195
        %v4235 = vunpack.c.l.b16 %v4198
        %v4236 = vunpack.c.l.b16 %v4202
        %v4237 = vunpack.c.l.b16 %v4205
        %v4238 = vpack.c.b16 %v4223, %v4222
        %v4239 = vpack.c.b16 %v4225, %v4224
        %v4240 = vpack.c.b16 %v4227, %v4226
        %v4241 = vpack.c.b16 %v4229, %v4228
        %v4242 = vpack.c.b16 %v4231, %v4230
        %v4243 = vpack.c.b16 %v4233, %v4232
        %v4244 = vpack.c.b16 %v4235, %v4234
        %v4245 = vpack.c.b16 %v4237, %v4236
        %v4270 = vunpack.c.l.b16 %v4206
        %v4271 = vunpack.c.l.b16 %v4207
        %v4272 = vunpack.c.l.b16 %v4208
        %v4273 = vunpack.c.l.b16 %v4209
        %v4274 = vunpack.c.l.b16 %v4210
        %v4275 = vunpack.c.l.b16 %v4211
        %v4276 = vunpack.c.l.b16 %v4212
        %v4277 = vunpack.c.l.b16 %v4213
        %v4278 = vunpack.c.l.b16 %v4214
        %v4279 = vunpack.c.l.b16 %v4215
        %v4280 = vunpack.c.l.b16 %v4216
        %v4281 = vunpack.c.l.b16 %v4217
        %v4282 = vunpack.c.l.b16 %v4218
        %v4283 = vunpack.c.l.b16 %v4219
        %v4284 = vunpack.c.l.b16 %v4220
        %v4285 = vunpack.c.l.b16 %v4221
        %v4286 = vpack.c.b16 %v4271, %v4270
        %v4287 = vpack.c.b16 %v4273, %v4272
        %v4288 = vpack.c.b16 %v4275, %v4274
        %v4289 = vpack.c.b16 %v4277, %v4276
        %v4290 = vpack.c.b16 %v4279, %v4278
        %v4291 = vpack.c.b16 %v4281, %v4280
        %v4292 = vpack.c.b16 %v4283, %v4282
        %v4293 = vpack.c.b16 %v4285, %v4284
        %4302 = vmatpush.bf16.msra.mxu0 %v4293
        %4303 = vmatpush.bf16.msra.mxu0 %v4292
        %4304 = vmatpush.bf16.msra.mxu0 %v4291
        %4305 = vmatpush.bf16.msra.mxu0 %v4290
        %4306 = vmatpush.bf16.msra.mxu0 %v4289
        %4307 = vmatpush.bf16.msra.mxu0 %v4288
        %4308 = vmatpush.bf16.msra.mxu0 %v4287
        %4309 = vmatpush.bf16.msra.mxu0 %v4286
        %4310 = vmatmul.bf16.gmra.mxu0 %v4238
        %v4311 = vpop.f32.mrf.mxu0
        %v4312 = vadd.f32 0.0, %v4311
        %v4313 = vpop.f32.mrf.mxu0
        %v4314 = vadd.f32 0.0, %v4313
        %4315 = vmatmul.bf16.gmra.mxu0 %v4239
        %v4316 = vpop.f32.mrf.mxu0
        %v4317 = vadd.f32 0.0, %v4316
        %v4318 = vpop.f32.mrf.mxu0
        %v4319 = vadd.f32 0.0, %v4318
        %4320 = vmatmul.bf16.gmra.mxu0 %v4240
        %v4321 = vpop.f32.mrf.mxu0
        %v4322 = vadd.f32 0.0, %v4321
        %v4323 = vpop.f32.mrf.mxu0
        %v4324 = vadd.f32 0.0, %v4323
        %4325 = vmatmul.bf16.gmra.mxu0 %v4241
        %v4326 = vpop.f32.mrf.mxu0
        %v4327 = vadd.f32 0.0, %v4326
        %v4328 = vpop.f32.mrf.mxu0
        %v4329 = vadd.f32 0.0, %v4328
        %4330 = vmatmul.bf16.gmra.mxu0 %v4242
        %v4331 = vpop.f32.mrf.mxu0
        %v4332 = vadd.f32 0.0, %v4331
        %v4333 = vpop.f32.mrf.mxu0
        %v4334 = vadd.f32 0.0, %v4333
        %4335 = vmatmul.bf16.gmra.mxu0 %v4243
        %v4336 = vpop.f32.mrf.mxu0
        %v4337 = vadd.f32 0.0, %v4336
        %v4338 = vpop.f32.mrf.mxu0
        %v4339 = vadd.f32 0.0, %v4338
        %4340 = vmatmul.bf16.gmra.mxu0 %v4244
        %v4341 = vpop.f32.mrf.mxu0
        %v4342 = vadd.f32 0.0, %v4341
        %v4343 = vpop.f32.mrf.mxu0
        %v4344 = vadd.f32 0.0, %v4343
        %4345 = vmatmul.bf16.gmra.mxu0 %v4245
        %v4346 = vpop.f32.mrf.mxu0
        %v4347 = vadd.f32 0.0, %v4346
        %v4348 = vpop.f32.mrf.mxu0
        %v4349 = vadd.f32 0.0, %v4348
        %4350 = vdwg.mxu0
        %v4351 = vadd.f32 %v4087, %v4312
        %v4352 = vadd.f32 %v4089, %v4314
        %v4353 = vadd.f32 %v4092, %v4317
        %v4354 = vadd.f32 %v4094, %v4319
        %v4355 = vadd.f32 %v4097, %v4322
        %v4356 = vadd.f32 %v4099, %v4324
        %v4357 = vadd.f32 %v4102, %v4327
        %v4358 = vadd.f32 %v4104, %v4329
        %v4359 = vadd.f32 %v4107, %v4332
        %v4360 = vadd.f32 %v4109, %v4334
        %v4361 = vadd.f32 %v4112, %v4337
        %v4362 = vadd.f32 %v4114, %v4339
        %v4363 = vadd.f32 %v4117, %v4342
        %v4364 = vadd.f32 %v4119, %v4344
        %v4365 = vadd.f32 %v4122, %v4347
        %v4366 = vadd.f32 %v4124, %v4349
        %s4367 = scalar_lea.vmem [#allocation2], 108
        %v4368 = vld [vmem:[%s4367] sm:$0xf]
        %v4369 = vld [vmem:[%s4367 + $0x4] sm:$0xf]
        %v4370 = vld [vmem:[%s4367 + $0xc] sm:$0xf]
        %v4371 = vld [vmem:[%s4367 + $0x10] sm:$0xf]
        %v4372 = vld [vmem:[%s4367 + $0x18] sm:$0xf]
        %v4373 = vld [vmem:[%s4367 + $0x1c] sm:$0xf]
        %v4374 = vld [vmem:[%s4367 + $0x24] sm:$0xf]
        %v4375 = vld [vmem:[%s4367 + $0x28] sm:$0xf]
        %v4376 = vld [vmem:[%s4367 + $0x30] sm:$0xf]
        %v4377 = vld [vmem:[%s4367 + $0x34] sm:$0xf]
        %v4378 = vld [vmem:[%s4367 + $0x3c] sm:$0xf]
        %v4379 = vld [vmem:[%s4367 + $0x40] sm:$0xf]
        %v4380 = vld [vmem:[%s4367 + $0x48] sm:$0xf]
        %v4381 = vld [vmem:[%s4367 + $0x4c] sm:$0xf]
        %v4382 = vld [vmem:[%s4367 + $0x54] sm:$0xf]
        %v4383 = vld [vmem:[%s4367 + $0x58] sm:$0xf]
        %v4384 = vld [vmem:[%s1683] sm:$0xf]
        %v4385 = vld [vmem:[%s1683 + $0x4] sm:$0xf]
        %v4386 = vld [vmem:[%s1683 + $0x8] sm:$0xf]
        %v4387 = vld [vmem:[%s1683 + $0xc] sm:$0xf]
        %v4388 = vld [vmem:[%s1683 + $0x10] sm:$0xf]
        %v4389 = vld [vmem:[%s1683 + $0x14] sm:$0xf]
        %v4390 = vld [vmem:[%s1683 + $0x18] sm:$0xf]
        %v4391 = vld [vmem:[%s1683 + $0x1c] sm:$0xf]
        %v4392 = vld [vmem:[%s1683 + $0x20] sm:$0xf]
        %v4393 = vld [vmem:[%s1683 + $0x24] sm:$0xf]
        %v4394 = vld [vmem:[%s1683 + $0x28] sm:$0xf]
        %v4395 = vld [vmem:[%s1683 + $0x2c] sm:$0xf]
        %v4396 = vld [vmem:[%s1683 + $0x30] sm:$0xf]
        %v4397 = vld [vmem:[%s1683 + $0x34] sm:$0xf]
        %v4398 = vld [vmem:[%s1683 + $0x38] sm:$0xf]
        %v4399 = vld [vmem:[%s1683 + $0x3c] sm:$0xf]
        %v4416 = vunpack.c.l.b16 %v4368
        %v4417 = vunpack.c.l.b16 %v4369
        %v4418 = vunpack.c.l.b16 %v4370
        %v4419 = vunpack.c.l.b16 %v4371
        %v4420 = vunpack.c.l.b16 %v4372
        %v4421 = vunpack.c.l.b16 %v4373
        %v4422 = vunpack.c.l.b16 %v4374
        %v4423 = vunpack.c.l.b16 %v4375
        %v4424 = vunpack.c.l.b16 %v4376
        %v4425 = vunpack.c.l.b16 %v4377
        %v4426 = vunpack.c.l.b16 %v4378
        %v4427 = vunpack.c.l.b16 %v4379
        %v4428 = vunpack.c.l.b16 %v4380
        %v4429 = vunpack.c.l.b16 %v4381
        %v4430 = vunpack.c.l.b16 %v4382
        %v4431 = vunpack.c.l.b16 %v4383
        %v4432 = vpack.c.b16 %v4417, %v4416
        %v4433 = vpack.c.b16 %v4419, %v4418
        %v4434 = vpack.c.b16 %v4421, %v4420
        %v4435 = vpack.c.b16 %v4423, %v4422
        %v4436 = vpack.c.b16 %v4425, %v4424
        %v4437 = vpack.c.b16 %v4427, %v4426
        %v4438 = vpack.c.b16 %v4429, %v4428
        %v4439 = vpack.c.b16 %v4431, %v4430
        %v4464 = vunpack.c.l.b16 %v4384
        %v4465 = vunpack.c.l.b16 %v4385
        %v4466 = vunpack.c.l.b16 %v4386
        %v4467 = vunpack.c.l.b16 %v4387
        %v4468 = vunpack.c.l.b16 %v4388
        %v4469 = vunpack.c.l.b16 %v4389
        %v4470 = vunpack.c.l.b16 %v4390
        %v4471 = vunpack.c.l.b16 %v4391
        %v4472 = vunpack.c.l.b16 %v4392
        %v4473 = vunpack.c.l.b16 %v4393
        %v4474 = vunpack.c.l.b16 %v4394
        %v4475 = vunpack.c.l.b16 %v4395
        %v4476 = vunpack.c.l.b16 %v4396
        %v4477 = vunpack.c.l.b16 %v4397
        %v4478 = vunpack.c.l.b16 %v4398
        %v4479 = vunpack.c.l.b16 %v4399
        %v4480 = vpack.c.b16 %v4465, %v4464
        %v4481 = vpack.c.b16 %v4467, %v4466
        %v4482 = vpack.c.b16 %v4469, %v4468
        %v4483 = vpack.c.b16 %v4471, %v4470
        %v4484 = vpack.c.b16 %v4473, %v4472
        %v4485 = vpack.c.b16 %v4475, %v4474
        %v4486 = vpack.c.b16 %v4477, %v4476
        %v4487 = vpack.c.b16 %v4479, %v4478
        %4496 = vmatpush.bf16.msra.mxu0 %v4487
        %4497 = vmatpush.bf16.msra.mxu0 %v4486
        %4498 = vmatpush.bf16.msra.mxu0 %v4485
        %4499 = vmatpush.bf16.msra.mxu0 %v4484
        %4500 = vmatpush.bf16.msra.mxu0 %v4483
        %4501 = vmatpush.bf16.msra.mxu0 %v4482
        %4502 = vmatpush.bf16.msra.mxu0 %v4481
        %4503 = vmatpush.bf16.msra.mxu0 %v4480
        %4504 = vmatmul.bf16.gmra.mxu0 %v4432
        %v4505 = vpop.f32.mrf.mxu0
        %v4506 = vadd.f32 0.0, %v4505
        %v4507 = vpop.f32.mrf.mxu0
        %v4508 = vadd.f32 0.0, %v4507
        %4509 = vmatmul.bf16.gmra.mxu0 %v4433
        %v4510 = vpop.f32.mrf.mxu0
        %v4511 = vadd.f32 0.0, %v4510
        %v4512 = vpop.f32.mrf.mxu0
        %v4513 = vadd.f32 0.0, %v4512
        %4514 = vmatmul.bf16.gmra.mxu0 %v4434
        %v4515 = vpop.f32.mrf.mxu0
        %v4516 = vadd.f32 0.0, %v4515
        %v4517 = vpop.f32.mrf.mxu0
        %v4518 = vadd.f32 0.0, %v4517
        %4519 = vmatmul.bf16.gmra.mxu0 %v4435
        %v4520 = vpop.f32.mrf.mxu0
        %v4521 = vadd.f32 0.0, %v4520
        %v4522 = vpop.f32.mrf.mxu0
        %v4523 = vadd.f32 0.0, %v4522
        %4524 = vmatmul.bf16.gmra.mxu0 %v4436
        %v4525 = vpop.f32.mrf.mxu0
        %v4526 = vadd.f32 0.0, %v4525
        %v4527 = vpop.f32.mrf.mxu0
        %v4528 = vadd.f32 0.0, %v4527
        %4529 = vmatmul.bf16.gmra.mxu0 %v4437
        %v4530 = vpop.f32.mrf.mxu0
        %v4531 = vadd.f32 0.0, %v4530
        %v4532 = vpop.f32.mrf.mxu0
        %v4533 = vadd.f32 0.0, %v4532
        %4534 = vmatmul.bf16.gmra.mxu0 %v4438
        %v4535 = vpop.f32.mrf.mxu0
        %v4536 = vadd.f32 0.0, %v4535
        %v4537 = vpop.f32.mrf.mxu0
        %v4538 = vadd.f32 0.0, %v4537
        %4539 = vmatmul.bf16.gmra.mxu0 %v4439
        %v4540 = vpop.f32.mrf.mxu0
        %v4541 = vadd.f32 0.0, %v4540
        %v4542 = vpop.f32.mrf.mxu0
        %v4543 = vadd.f32 0.0, %v4542
        %4544 = vdwg.mxu0
        %v4545 = vadd.f32 %v4351, %v4506
        %v4546 = vadd.f32 %v4352, %v4508
        %v4547 = vadd.f32 %v4353, %v4511
        %v4548 = vadd.f32 %v4354, %v4513
        %v4549 = vadd.f32 %v4355, %v4516
        %v4550 = vadd.f32 %v4356, %v4518
        %v4551 = vadd.f32 %v4357, %v4521
        %v4552 = vadd.f32 %v4358, %v4523
        %v4553 = vadd.f32 %v4359, %v4526
        %v4554 = vadd.f32 %v4360, %v4528
        %v4555 = vadd.f32 %v4361, %v4531
        %v4556 = vadd.f32 %v4362, %v4533
        %v4557 = vadd.f32 %v4363, %v4536
        %v4558 = vadd.f32 %v4364, %v4538
        %v4559 = vadd.f32 %v4365, %v4541
        %v4560 = vadd.f32 %v4366, %v4543
        %v4561 = vld [vmem:[%s4367] sm:$0xf]
        %v4562 = vld [vmem:[%s4367 + $0x4] sm:$0xf]
        %v4563 = vld [vmem:[%s4367 + $0x8] sm:$0x1]
        %v4564 = vld [vmem:[%s4367 + $0xc] sm:$0xf]
        %v4565 = vld [vmem:[%s4367 + $0x10] sm:$0xf]
        %v4566 = vld [vmem:[%s4367 + $0x14] sm:$0x1]
        %v4567 = vld [vmem:[%s4367 + $0x18] sm:$0xf]
        %v4568 = vld [vmem:[%s4367 + $0x1c] sm:$0xf]
        %v4569 = vld [vmem:[%s4367 + $0x20] sm:$0x1]
        %v4570 = vld [vmem:[%s4367 + $0x24] sm:$0xf]
        %v4571 = vld [vmem:[%s4367 + $0x28] sm:$0xf]
        %v4572 = vld [vmem:[%s4367 + $0x2c] sm:$0x1]
        %v4573 = vld [vmem:[%s4367 + $0x30] sm:$0xf]
        %v4574 = vld [vmem:[%s4367 + $0x34] sm:$0xf]
        %v4575 = vld [vmem:[%s4367 + $0x38] sm:$0x1]
        %v4576 = vld [vmem:[%s4367 + $0x3c] sm:$0xf]
        %v4577 = vld [vmem:[%s4367 + $0x40] sm:$0xf]
        %v4578 = vld [vmem:[%s4367 + $0x44] sm:$0x1]
        %v4579 = vld [vmem:[%s4367 + $0x48] sm:$0xf]
        %v4580 = vld [vmem:[%s4367 + $0x4c] sm:$0xf]
        %v4581 = vld [vmem:[%s4367 + $0x50] sm:$0x1]
        %v4582 = vld [vmem:[%s4367 + $0x54] sm:$0xf]
        %v4583 = vld [vmem:[%s4367 + $0x58] sm:$0xf]
        %v4584 = vld [vmem:[%s4367 + $0x5c] sm:$0x1]
        %v4586 = vshrl.u32 %v4561, 16
        %v4588 = vrot.slane %v4586, 4
        %v4589 = vshll.u32 %v4561, 16
        %v4591 = vrot.slane %v4589, 5
        %v4592 = vor.u32 %v4588, %v4591
        %v4593 = vrot.slane %v4592, 4
        %v4595 = vshll.u32 %v4562, 16
        %v4597 = vrot.slane %v4595, 5
        %v4598 = vsel %vm938, %v4593, %v4597
        %v4599 = vshrl.u32 %v4562, 16
        %v4601 = vrot.slane %v4599, 4
        %v4602 = vor.u32 %v4601, %v4597
        %v4603 = vrot.slane %v4602, 4
        %v4605 = vshll.u32 %v4563, 16
        %v4607 = vrot.slane %v4605, 5
        %v4608 = vsel %vm938, %v4603, %v4607
        %v4610 = vshrl.u32 %v4564, 16
        %v4612 = vrot.slane %v4610, 4
        %v4613 = vshll.u32 %v4564, 16
        %v4615 = vrot.slane %v4613, 5
        %v4616 = vor.u32 %v4612, %v4615
        %v4617 = vrot.slane %v4616, 4
        %v4619 = vshll.u32 %v4565, 16
        %v4621 = vrot.slane %v4619, 5
        %v4622 = vsel %vm938, %v4617, %v4621
        %v4623 = vshrl.u32 %v4565, 16
        %v4625 = vrot.slane %v4623, 4
        %v4626 = vor.u32 %v4625, %v4621
        %v4627 = vrot.slane %v4626, 4
        %v4629 = vshll.u32 %v4566, 16
        %v4631 = vrot.slane %v4629, 5
        %v4632 = vsel %vm938, %v4627, %v4631
        %v4634 = vshrl.u32 %v4567, 16
        %v4636 = vrot.slane %v4634, 4
        %v4637 = vshll.u32 %v4567, 16
        %v4639 = vrot.slane %v4637, 5
        %v4640 = vor.u32 %v4636, %v4639
        %v4641 = vrot.slane %v4640, 4
        %v4643 = vshll.u32 %v4568, 16
        %v4645 = vrot.slane %v4643, 5
        %v4646 = vsel %vm938, %v4641, %v4645
        %v4647 = vshrl.u32 %v4568, 16
        %v4649 = vrot.slane %v4647, 4
        %v4650 = vor.u32 %v4649, %v4645
        %v4651 = vrot.slane %v4650, 4
        %v4653 = vshll.u32 %v4569, 16
        %v4655 = vrot.slane %v4653, 5
        %v4656 = vsel %vm938, %v4651, %v4655
        %v4658 = vshrl.u32 %v4570, 16
        %v4660 = vrot.slane %v4658, 4
        %v4661 = vshll.u32 %v4570, 16
        %v4663 = vrot.slane %v4661, 5
        %v4664 = vor.u32 %v4660, %v4663
        %v4665 = vrot.slane %v4664, 4
        %v4667 = vshll.u32 %v4571, 16
        %v4669 = vrot.slane %v4667, 5
        %v4670 = vsel %vm938, %v4665, %v4669
        %v4671 = vshrl.u32 %v4571, 16
        %v4673 = vrot.slane %v4671, 4
        %v4674 = vor.u32 %v4673, %v4669
        %v4675 = vrot.slane %v4674, 4
        %v4677 = vshll.u32 %v4572, 16
        %v4679 = vrot.slane %v4677, 5
        %v4680 = vsel %vm938, %v4675, %v4679
        %v4682 = vshrl.u32 %v4573, 16
        %v4684 = vrot.slane %v4682, 4
        %v4685 = vshll.u32 %v4573, 16
        %v4687 = vrot.slane %v4685, 5
        %v4688 = vor.u32 %v4684, %v4687
        %v4689 = vrot.slane %v4688, 4
        %v4691 = vshll.u32 %v4574, 16
        %v4693 = vrot.slane %v4691, 5
        %v4694 = vsel %vm938, %v4689, %v4693
        %v4695 = vshrl.u32 %v4574, 16
        %v4697 = vrot.slane %v4695, 4
        %v4698 = vor.u32 %v4697, %v4693
        %v4699 = vrot.slane %v4698, 4
        %v4701 = vshll.u32 %v4575, 16
        %v4703 = vrot.slane %v4701, 5
        %v4704 = vsel %vm938, %v4699, %v4703
        %v4706 = vshrl.u32 %v4576, 16
        %v4708 = vrot.slane %v4706, 4
        %v4709 = vshll.u32 %v4576, 16
        %v4711 = vrot.slane %v4709, 5
        %v4712 = vor.u32 %v4708, %v4711
        %v4713 = vrot.slane %v4712, 4
        %v4715 = vshll.u32 %v4577, 16
        %v4717 = vrot.slane %v4715, 5
        %v4718 = vsel %vm938, %v4713, %v4717
        %v4719 = vshrl.u32 %v4577, 16
        %v4721 = vrot.slane %v4719, 4
        %v4722 = vor.u32 %v4721, %v4717
        %v4723 = vrot.slane %v4722, 4
        %v4725 = vshll.u32 %v4578, 16
        %v4727 = vrot.slane %v4725, 5
        %v4728 = vsel %vm938, %v4723, %v4727
        %v4730 = vshrl.u32 %v4579, 16
        %v4732 = vrot.slane %v4730, 4
        %v4733 = vshll.u32 %v4579, 16
        %v4735 = vrot.slane %v4733, 5
        %v4736 = vor.u32 %v4732, %v4735
        %v4737 = vrot.slane %v4736, 4
        %v4739 = vshll.u32 %v4580, 16
        %v4741 = vrot.slane %v4739, 5
        %v4742 = vsel %vm938, %v4737, %v4741
        %v4743 = vshrl.u32 %v4580, 16
        %v4745 = vrot.slane %v4743, 4
        %v4746 = vor.u32 %v4745, %v4741
        %v4747 = vrot.slane %v4746, 4
        %v4749 = vshll.u32 %v4581, 16
        %v4751 = vrot.slane %v4749, 5
        %v4752 = vsel %vm938, %v4747, %v4751
        %v4754 = vshrl.u32 %v4582, 16
        %v4756 = vrot.slane %v4754, 4
        %v4757 = vshll.u32 %v4582, 16
        %v4759 = vrot.slane %v4757, 5
        %v4760 = vor.u32 %v4756, %v4759
        %v4761 = vrot.slane %v4760, 4
        %v4763 = vshll.u32 %v4583, 16
        %v4765 = vrot.slane %v4763, 5
        %v4766 = vsel %vm938, %v4761, %v4765
        %v4767 = vshrl.u32 %v4583, 16
        %v4769 = vrot.slane %v4767, 4
        %v4770 = vor.u32 %v4769, %v4765
        %v4771 = vrot.slane %v4770, 4
        %v4773 = vshll.u32 %v4584, 16
        %v4775 = vrot.slane %v4773, 5
        %v4776 = vsel %vm938, %v4771, %v4775
        %v4777 = vld [vmem:[%s2077] sm:$0xf]
        %v4778 = vld [vmem:[%s2077 + $0x4] sm:$0xf]
        %v4779 = vld [vmem:[%s2077 + $0x8] sm:$0xf]
        %v4780 = vld [vmem:[%s2077 + $0xc] sm:$0xf]
        %v4781 = vld [vmem:[%s2077 + $0x10] sm:$0xf]
        %v4782 = vld [vmem:[%s2077 + $0x14] sm:$0xf]
        %v4783 = vld [vmem:[%s2077 + $0x18] sm:$0xf]
        %v4784 = vld [vmem:[%s2077 + $0x1c] sm:$0xf]
        %v4785 = vld [vmem:[%s2077 + $0x20] sm:$0xf]
        %v4786 = vld [vmem:[%s2077 + $0x24] sm:$0xf]
        %v4787 = vld [vmem:[%s2077 + $0x28] sm:$0xf]
        %v4788 = vld [vmem:[%s2077 + $0x2c] sm:$0xf]
        %v4789 = vld [vmem:[%s2077 + $0x30] sm:$0xf]
        %v4790 = vld [vmem:[%s2077 + $0x34] sm:$0xf]
        %v4791 = vld [vmem:[%s2077 + $0x38] sm:$0xf]
        %v4792 = vld [vmem:[%s2077 + $0x3c] sm:$0xf]
        %v4793 = vunpack.c.l.b16 %v4598
        %v4794 = vunpack.c.l.b16 %v4608
        %v4795 = vunpack.c.l.b16 %v4622
        %v4796 = vunpack.c.l.b16 %v4632
        %v4797 = vunpack.c.l.b16 %v4646
        %v4798 = vunpack.c.l.b16 %v4656
        %v4799 = vunpack.c.l.b16 %v4670
        %v4800 = vunpack.c.l.b16 %v4680
        %v4801 = vunpack.c.l.b16 %v4694
        %v4802 = vunpack.c.l.b16 %v4704
        %v4803 = vunpack.c.l.b16 %v4718
        %v4804 = vunpack.c.l.b16 %v4728
        %v4805 = vunpack.c.l.b16 %v4742
        %v4806 = vunpack.c.l.b16 %v4752
        %v4807 = vunpack.c.l.b16 %v4766
        %v4808 = vunpack.c.l.b16 %v4776
        %v4809 = vpack.c.b16 %v4794, %v4793
        %v4810 = vpack.c.b16 %v4796, %v4795
        %v4811 = vpack.c.b16 %v4798, %v4797
        %v4812 = vpack.c.b16 %v4800, %v4799
        %v4813 = vpack.c.b16 %v4802, %v4801
        %v4814 = vpack.c.b16 %v4804, %v4803
        %v4815 = vpack.c.b16 %v4806, %v4805
        %v4816 = vpack.c.b16 %v4808, %v4807
        %v4841 = vunpack.c.l.b16 %v4777
        %v4842 = vunpack.c.l.b16 %v4778
        %v4843 = vunpack.c.l.b16 %v4779
        %v4844 = vunpack.c.l.b16 %v4780
        %v4845 = vunpack.c.l.b16 %v4781
        %v4846 = vunpack.c.l.b16 %v4782
        %v4847 = vunpack.c.l.b16 %v4783
        %v4848 = vunpack.c.l.b16 %v4784
        %v4849 = vunpack.c.l.b16 %v4785
        %v4850 = vunpack.c.l.b16 %v4786
        %v4851 = vunpack.c.l.b16 %v4787
        %v4852 = vunpack.c.l.b16 %v4788
        %v4853 = vunpack.c.l.b16 %v4789
        %v4854 = vunpack.c.l.b16 %v4790
        %v4855 = vunpack.c.l.b16 %v4791
        %v4856 = vunpack.c.l.b16 %v4792
        %v4857 = vpack.c.b16 %v4842, %v4841
        %v4858 = vpack.c.b16 %v4844, %v4843
        %v4859 = vpack.c.b16 %v4846, %v4845
        %v4860 = vpack.c.b16 %v4848, %v4847
        %v4861 = vpack.c.b16 %v4850, %v4849
        %v4862 = vpack.c.b16 %v4852, %v4851
        %v4863 = vpack.c.b16 %v4854, %v4853
        %v4864 = vpack.c.b16 %v4856, %v4855
        %4873 = vmatpush.bf16.msra.mxu0 %v4864
        %4874 = vmatpush.bf16.msra.mxu0 %v4863
        %4875 = vmatpush.bf16.msra.mxu0 %v4862
        %4876 = vmatpush.bf16.msra.mxu0 %v4861
        %4877 = vmatpush.bf16.msra.mxu0 %v4860
        %4878 = vmatpush.bf16.msra.mxu0 %v4859
        %4879 = vmatpush.bf16.msra.mxu0 %v4858
        %4880 = vmatpush.bf16.msra.mxu0 %v4857
        %4881 = vmatmul.bf16.gmra.mxu0 %v4809
        %v4882 = vpop.f32.mrf.mxu0
        %v4883 = vadd.f32 0.0, %v4882
        %v4884 = vpop.f32.mrf.mxu0
        %v4885 = vadd.f32 0.0, %v4884
        %4886 = vmatmul.bf16.gmra.mxu0 %v4810
        %v4887 = vpop.f32.mrf.mxu0
        %v4888 = vadd.f32 0.0, %v4887
        %v4889 = vpop.f32.mrf.mxu0
        %v4890 = vadd.f32 0.0, %v4889
        %4891 = vmatmul.bf16.gmra.mxu0 %v4811
        %v4892 = vpop.f32.mrf.mxu0
        %v4893 = vadd.f32 0.0, %v4892
        %v4894 = vpop.f32.mrf.mxu0
        %v4895 = vadd.f32 0.0, %v4894
        %4896 = vmatmul.bf16.gmra.mxu0 %v4812
        %v4897 = vpop.f32.mrf.mxu0
        %v4898 = vadd.f32 0.0, %v4897
        %v4899 = vpop.f32.mrf.mxu0
        %v4900 = vadd.f32 0.0, %v4899
        %4901 = vmatmul.bf16.gmra.mxu0 %v4813
        %v4902 = vpop.f32.mrf.mxu0
        %v4903 = vadd.f32 0.0, %v4902
        %v4904 = vpop.f32.mrf.mxu0
        %v4905 = vadd.f32 0.0, %v4904
        %4906 = vmatmul.bf16.gmra.mxu0 %v4814
        %v4907 = vpop.f32.mrf.mxu0
        %v4908 = vadd.f32 0.0, %v4907
        %v4909 = vpop.f32.mrf.mxu0
        %v4910 = vadd.f32 0.0, %v4909
        %4911 = vmatmul.bf16.gmra.mxu0 %v4815
        %v4912 = vpop.f32.mrf.mxu0
        %v4913 = vadd.f32 0.0, %v4912
        %v4914 = vpop.f32.mrf.mxu0
        %v4915 = vadd.f32 0.0, %v4914
        %4916 = vmatmul.bf16.gmra.mxu0 %v4816
        %v4917 = vpop.f32.mrf.mxu0
        %v4918 = vadd.f32 0.0, %v4917
        %v4919 = vpop.f32.mrf.mxu0
        %v4920 = vadd.f32 0.0, %v4919
        %4921 = vdwg.mxu0
        %v4922 = vadd.f32 %v4545, %v4883
        %v4923 = vadd.f32 %v4546, %v4885
        %v4924 = vadd.f32 %v4547, %v4888
        %v4925 = vadd.f32 %v4548, %v4890
        %v4926 = vadd.f32 %v4549, %v4893
        %v4927 = vadd.f32 %v4550, %v4895
        %v4928 = vadd.f32 %v4551, %v4898
        %v4929 = vadd.f32 %v4552, %v4900
        %v4930 = vadd.f32 %v4553, %v4903
        %v4931 = vadd.f32 %v4554, %v4905
        %v4932 = vadd.f32 %v4555, %v4908
        %v4933 = vadd.f32 %v4556, %v4910
        %v4934 = vadd.f32 %v4557, %v4913
        %v4935 = vadd.f32 %v4558, %v4915
        %v4936 = vadd.f32 %v4559, %v4918
        %v4937 = vadd.f32 %v4560, %v4920
        %v4938 = vld [vmem:[%s4367] sm:$0xe]
        %v4939 = vld [vmem:[%s4367 + $0xc] sm:$0xe]
        %v4940 = vld [vmem:[%s4367 + $0x18] sm:$0xe]
        %v4941 = vld [vmem:[%s4367 + $0x24] sm:$0xe]
        %v4942 = vld [vmem:[%s4367 + $0x30] sm:$0xe]
        %v4943 = vld [vmem:[%s4367 + $0x3c] sm:$0xe]
        %v4944 = vld [vmem:[%s4367 + $0x48] sm:$0xe]
        %v4945 = vld [vmem:[%s4367 + $0x54] sm:$0xe]
        %v4970 = vrot.slane %v4938, 5
        %v4971 = vrot.slane %v4970, 4
        %v4972 = vrot.slane %v4562, 5
        %v4973 = vsel %vm1448, %v4971, %v4972
        %v4974 = vrot.slane %v4972, 4
        %v4975 = vrot.slane %v4563, 5
        %v4976 = vsel %vm1448, %v4974, %v4975
        %v4977 = vrot.slane %v4939, 5
        %v4978 = vrot.slane %v4977, 4
        %v4979 = vrot.slane %v4565, 5
        %v4980 = vsel %vm1448, %v4978, %v4979
        %v4981 = vrot.slane %v4979, 4
        %v4982 = vrot.slane %v4566, 5
        %v4983 = vsel %vm1448, %v4981, %v4982
        %v4984 = vrot.slane %v4940, 5
        %v4985 = vrot.slane %v4984, 4
        %v4986 = vrot.slane %v4568, 5
        %v4987 = vsel %vm1448, %v4985, %v4986
        %v4988 = vrot.slane %v4986, 4
        %v4989 = vrot.slane %v4569, 5
        %v4990 = vsel %vm1448, %v4988, %v4989
        %v4991 = vrot.slane %v4941, 5
        %v4992 = vrot.slane %v4991, 4
        %v4993 = vrot.slane %v4571, 5
        %v4994 = vsel %vm1448, %v4992, %v4993
        %v4995 = vrot.slane %v4993, 4
        %v4996 = vrot.slane %v4572, 5
        %v4997 = vsel %vm1448, %v4995, %v4996
        %v4998 = vrot.slane %v4942, 5
        %v4999 = vrot.slane %v4998, 4
        %v5000 = vrot.slane %v4574, 5
        %v5001 = vsel %vm1448, %v4999, %v5000
        %v5002 = vrot.slane %v5000, 4
        %v5003 = vrot.slane %v4575, 5
        %v5004 = vsel %vm1448, %v5002, %v5003
        %v5005 = vrot.slane %v4943, 5
        %v5006 = vrot.slane %v5005, 4
        %v5007 = vrot.slane %v4577, 5
        %v5008 = vsel %vm1448, %v5006, %v5007
        %v5009 = vrot.slane %v5007, 4
        %v5010 = vrot.slane %v4578, 5
        %v5011 = vsel %vm1448, %v5009, %v5010
        %v5012 = vrot.slane %v4944, 5
        %v5013 = vrot.slane %v5012, 4
        %v5014 = vrot.slane %v4580, 5
        %v5015 = vsel %vm1448, %v5013, %v5014
        %v5016 = vrot.slane %v5014, 4
        %v5017 = vrot.slane %v4581, 5
        %v5018 = vsel %vm1448, %v5016, %v5017
        %v5019 = vrot.slane %v4945, 5
        %v5020 = vrot.slane %v5019, 4
        %v5021 = vrot.slane %v4583, 5
        %v5022 = vsel %vm1448, %v5020, %v5021
        %v5023 = vrot.slane %v5021, 4
        %v5024 = vrot.slane %v4584, 5
        %v5025 = vsel %vm1448, %v5023, %v5024
        %v5026 = vld [vmem:[%s2327] sm:$0xf]
        %v5027 = vld [vmem:[%s2327 + $0x4] sm:$0xf]
        %v5028 = vld [vmem:[%s2327 + $0x8] sm:$0xf]
        %v5029 = vld [vmem:[%s2327 + $0xc] sm:$0xf]
        %v5030 = vld [vmem:[%s2327 + $0x10] sm:$0xf]
        %v5031 = vld [vmem:[%s2327 + $0x14] sm:$0xf]
        %v5032 = vld [vmem:[%s2327 + $0x18] sm:$0xf]
        %v5033 = vld [vmem:[%s2327 + $0x1c] sm:$0xf]
        %v5034 = vld [vmem:[%s2327 + $0x20] sm:$0xf]
        %v5035 = vld [vmem:[%s2327 + $0x24] sm:$0xf]
        %v5036 = vld [vmem:[%s2327 + $0x28] sm:$0xf]
        %v5037 = vld [vmem:[%s2327 + $0x2c] sm:$0xf]
        %v5038 = vld [vmem:[%s2327 + $0x30] sm:$0xf]
        %v5039 = vld [vmem:[%s2327 + $0x34] sm:$0xf]
        %v5040 = vld [vmem:[%s2327 + $0x38] sm:$0xf]
        %v5041 = vld [vmem:[%s2327 + $0x3c] sm:$0xf]
        %v5042 = vunpack.c.l.b16 %v4973
        %v5043 = vunpack.c.l.b16 %v4976
        %v5044 = vunpack.c.l.b16 %v4980
        %v5045 = vunpack.c.l.b16 %v4983
        %v5046 = vunpack.c.l.b16 %v4987
        %v5047 = vunpack.c.l.b16 %v4990
        %v5048 = vunpack.c.l.b16 %v4994
        %v5049 = vunpack.c.l.b16 %v4997
        %v5050 = vunpack.c.l.b16 %v5001
        %v5051 = vunpack.c.l.b16 %v5004
        %v5052 = vunpack.c.l.b16 %v5008
        %v5053 = vunpack.c.l.b16 %v5011
        %v5054 = vunpack.c.l.b16 %v5015
        %v5055 = vunpack.c.l.b16 %v5018
        %v5056 = vunpack.c.l.b16 %v5022
        %v5057 = vunpack.c.l.b16 %v5025
        %v5058 = vpack.c.b16 %v5043, %v5042
        %v5059 = vpack.c.b16 %v5045, %v5044
        %v5060 = vpack.c.b16 %v5047, %v5046
        %v5061 = vpack.c.b16 %v5049, %v5048
        %v5062 = vpack.c.b16 %v5051, %v5050
        %v5063 = vpack.c.b16 %v5053, %v5052
        %v5064 = vpack.c.b16 %v5055, %v5054
        %v5065 = vpack.c.b16 %v5057, %v5056
        %v5090 = vunpack.c.l.b16 %v5026
        %v5091 = vunpack.c.l.b16 %v5027
        %v5092 = vunpack.c.l.b16 %v5028
        %v5093 = vunpack.c.l.b16 %v5029
        %v5094 = vunpack.c.l.b16 %v5030
        %v5095 = vunpack.c.l.b16 %v5031
        %v5096 = vunpack.c.l.b16 %v5032
        %v5097 = vunpack.c.l.b16 %v5033
        %v5098 = vunpack.c.l.b16 %v5034
        %v5099 = vunpack.c.l.b16 %v5035
        %v5100 = vunpack.c.l.b16 %v5036
        %v5101 = vunpack.c.l.b16 %v5037
        %v5102 = vunpack.c.l.b16 %v5038
        %v5103 = vunpack.c.l.b16 %v5039
        %v5104 = vunpack.c.l.b16 %v5040
        %v5105 = vunpack.c.l.b16 %v5041
        %v5106 = vpack.c.b16 %v5091, %v5090
        %v5107 = vpack.c.b16 %v5093, %v5092
        %v5108 = vpack.c.b16 %v5095, %v5094
        %v5109 = vpack.c.b16 %v5097, %v5096
        %v5110 = vpack.c.b16 %v5099, %v5098
        %v5111 = vpack.c.b16 %v5101, %v5100
        %v5112 = vpack.c.b16 %v5103, %v5102
        %v5113 = vpack.c.b16 %v5105, %v5104
        %5122 = vmatpush.bf16.msra.mxu0 %v5113
        %5123 = vmatpush.bf16.msra.mxu0 %v5112
        %5124 = vmatpush.bf16.msra.mxu0 %v5111
        %5125 = vmatpush.bf16.msra.mxu0 %v5110
        %5126 = vmatpush.bf16.msra.mxu0 %v5109
        %5127 = vmatpush.bf16.msra.mxu0 %v5108
        %5128 = vmatpush.bf16.msra.mxu0 %v5107
        %5129 = vmatpush.bf16.msra.mxu0 %v5106
        %5130 = vmatmul.bf16.gmra.mxu0 %v5058
        %v5131 = vpop.f32.mrf.mxu0
        %v5132 = vadd.f32 0.0, %v5131
        %v5133 = vpop.f32.mrf.mxu0
        %v5134 = vadd.f32 0.0, %v5133
        %5135 = vmatmul.bf16.gmra.mxu0 %v5059
        %v5136 = vpop.f32.mrf.mxu0
        %v5137 = vadd.f32 0.0, %v5136
        %v5138 = vpop.f32.mrf.mxu0
        %v5139 = vadd.f32 0.0, %v5138
        %5140 = vmatmul.bf16.gmra.mxu0 %v5060
        %v5141 = vpop.f32.mrf.mxu0
        %v5142 = vadd.f32 0.0, %v5141
        %v5143 = vpop.f32.mrf.mxu0
        %v5144 = vadd.f32 0.0, %v5143
        %5145 = vmatmul.bf16.gmra.mxu0 %v5061
        %v5146 = vpop.f32.mrf.mxu0
        %v5147 = vadd.f32 0.0, %v5146
        %v5148 = vpop.f32.mrf.mxu0
        %v5149 = vadd.f32 0.0, %v5148
        %5150 = vmatmul.bf16.gmra.mxu0 %v5062
        %v5151 = vpop.f32.mrf.mxu0
        %v5152 = vadd.f32 0.0, %v5151
        %v5153 = vpop.f32.mrf.mxu0
        %v5154 = vadd.f32 0.0, %v5153
        %5155 = vmatmul.bf16.gmra.mxu0 %v5063
        %v5156 = vpop.f32.mrf.mxu0
        %v5157 = vadd.f32 0.0, %v5156
        %v5158 = vpop.f32.mrf.mxu0
        %v5159 = vadd.f32 0.0, %v5158
        %5160 = vmatmul.bf16.gmra.mxu0 %v5064
        %v5161 = vpop.f32.mrf.mxu0
        %v5162 = vadd.f32 0.0, %v5161
        %v5163 = vpop.f32.mrf.mxu0
        %v5164 = vadd.f32 0.0, %v5163
        %5165 = vmatmul.bf16.gmra.mxu0 %v5065
        %v5166 = vpop.f32.mrf.mxu0
        %v5167 = vadd.f32 0.0, %v5166
        %v5168 = vpop.f32.mrf.mxu0
        %v5169 = vadd.f32 0.0, %v5168
        %5170 = vdwg.mxu0
        %v5171 = vadd.f32 %v4922, %v5132
        %v5172 = vadd.f32 %v4923, %v5134
        %v5173 = vadd.f32 %v4924, %v5137
        %v5174 = vadd.f32 %v4925, %v5139
        %v5175 = vadd.f32 %v4926, %v5142
        %v5176 = vadd.f32 %v4927, %v5144
        %v5177 = vadd.f32 %v4928, %v5147
        %v5178 = vadd.f32 %v4929, %v5149
        %v5179 = vadd.f32 %v4930, %v5152
        %v5180 = vadd.f32 %v4931, %v5154
        %v5181 = vadd.f32 %v4932, %v5157
        %v5182 = vadd.f32 %v4933, %v5159
        %v5183 = vadd.f32 %v4934, %v5162
        %v5184 = vadd.f32 %v4935, %v5164
        %v5185 = vadd.f32 %v4936, %v5167
        %v5186 = vadd.f32 %v4937, %v5169
        %s5187 = scalar_lea.vmem [#allocation2], 120
        %v5188 = vld [vmem:[%s5187] sm:$0xf]
        %v5189 = vld [vmem:[%s5187 + $0x4] sm:$0xf]
        %v5190 = vld [vmem:[%s5187 + $0xc] sm:$0xf]
        %v5191 = vld [vmem:[%s5187 + $0x10] sm:$0xf]
        %v5192 = vld [vmem:[%s5187 + $0x18] sm:$0xf]
        %v5193 = vld [vmem:[%s5187 + $0x1c] sm:$0xf]
        %v5194 = vld [vmem:[%s5187 + $0x24] sm:$0xf]
        %v5195 = vld [vmem:[%s5187 + $0x28] sm:$0xf]
        %v5196 = vld [vmem:[%s5187 + $0x30] sm:$0xf]
        %v5197 = vld [vmem:[%s5187 + $0x34] sm:$0xf]
        %v5198 = vld [vmem:[%s5187 + $0x3c] sm:$0xf]
        %v5199 = vld [vmem:[%s5187 + $0x40] sm:$0xf]
        %v5200 = vld [vmem:[%s5187 + $0x48] sm:$0xf]
        %v5201 = vld [vmem:[%s5187 + $0x4c] sm:$0xf]
        %v5202 = vld [vmem:[%s5187 + $0x54] sm:$0xf]
        %v5203 = vld [vmem:[%s5187 + $0x58] sm:$0xf]
        %v5204 = vld [vmem:[%s2506] sm:$0xf]
        %v5205 = vld [vmem:[%s2506 + $0x4] sm:$0xf]
        %v5206 = vld [vmem:[%s2506 + $0x8] sm:$0xf]
        %v5207 = vld [vmem:[%s2506 + $0xc] sm:$0xf]
        %v5208 = vld [vmem:[%s2506 + $0x10] sm:$0xf]
        %v5209 = vld [vmem:[%s2506 + $0x14] sm:$0xf]
        %v5210 = vld [vmem:[%s2506 + $0x18] sm:$0xf]
        %v5211 = vld [vmem:[%s2506 + $0x1c] sm:$0xf]
        %v5212 = vld [vmem:[%s2506 + $0x20] sm:$0xf]
        %v5213 = vld [vmem:[%s2506 + $0x24] sm:$0xf]
        %v5214 = vld [vmem:[%s2506 + $0x28] sm:$0xf]
        %v5215 = vld [vmem:[%s2506 + $0x2c] sm:$0xf]
        %v5216 = vld [vmem:[%s2506 + $0x30] sm:$0xf]
        %v5217 = vld [vmem:[%s2506 + $0x34] sm:$0xf]
        %v5218 = vld [vmem:[%s2506 + $0x38] sm:$0xf]
        %v5219 = vld [vmem:[%s2506 + $0x3c] sm:$0xf]
        %v5236 = vunpack.c.l.b16 %v5188
        %v5237 = vunpack.c.l.b16 %v5189
        %v5238 = vunpack.c.l.b16 %v5190
        %v5239 = vunpack.c.l.b16 %v5191
        %v5240 = vunpack.c.l.b16 %v5192
        %v5241 = vunpack.c.l.b16 %v5193
        %v5242 = vunpack.c.l.b16 %v5194
        %v5243 = vunpack.c.l.b16 %v5195
        %v5244 = vunpack.c.l.b16 %v5196
        %v5245 = vunpack.c.l.b16 %v5197
        %v5246 = vunpack.c.l.b16 %v5198
        %v5247 = vunpack.c.l.b16 %v5199
        %v5248 = vunpack.c.l.b16 %v5200
        %v5249 = vunpack.c.l.b16 %v5201
        %v5250 = vunpack.c.l.b16 %v5202
        %v5251 = vunpack.c.l.b16 %v5203
        %v5252 = vpack.c.b16 %v5237, %v5236
        %v5253 = vpack.c.b16 %v5239, %v5238
        %v5254 = vpack.c.b16 %v5241, %v5240
        %v5255 = vpack.c.b16 %v5243, %v5242
        %v5256 = vpack.c.b16 %v5245, %v5244
        %v5257 = vpack.c.b16 %v5247, %v5246
        %v5258 = vpack.c.b16 %v5249, %v5248
        %v5259 = vpack.c.b16 %v5251, %v5250
        %v5284 = vunpack.c.l.b16 %v5204
        %v5285 = vunpack.c.l.b16 %v5205
        %v5286 = vunpack.c.l.b16 %v5206
        %v5287 = vunpack.c.l.b16 %v5207
        %v5288 = vunpack.c.l.b16 %v5208
        %v5289 = vunpack.c.l.b16 %v5209
        %v5290 = vunpack.c.l.b16 %v5210
        %v5291 = vunpack.c.l.b16 %v5211
        %v5292 = vunpack.c.l.b16 %v5212
        %v5293 = vunpack.c.l.b16 %v5213
        %v5294 = vunpack.c.l.b16 %v5214
        %v5295 = vunpack.c.l.b16 %v5215
        %v5296 = vunpack.c.l.b16 %v5216
        %v5297 = vunpack.c.l.b16 %v5217
        %v5298 = vunpack.c.l.b16 %v5218
        %v5299 = vunpack.c.l.b16 %v5219
        %v5300 = vpack.c.b16 %v5285, %v5284
        %v5301 = vpack.c.b16 %v5287, %v5286
        %v5302 = vpack.c.b16 %v5289, %v5288
        %v5303 = vpack.c.b16 %v5291, %v5290
        %v5304 = vpack.c.b16 %v5293, %v5292
        %v5305 = vpack.c.b16 %v5295, %v5294
        %v5306 = vpack.c.b16 %v5297, %v5296
        %v5307 = vpack.c.b16 %v5299, %v5298
        %5316 = vmatpush.bf16.msra.mxu0 %v5307
        %5317 = vmatpush.bf16.msra.mxu0 %v5306
        %5318 = vmatpush.bf16.msra.mxu0 %v5305
        %5319 = vmatpush.bf16.msra.mxu0 %v5304
        %5320 = vmatpush.bf16.msra.mxu0 %v5303
        %5321 = vmatpush.bf16.msra.mxu0 %v5302
        %5322 = vmatpush.bf16.msra.mxu0 %v5301
        %5323 = vmatpush.bf16.msra.mxu0 %v5300
        %5324 = vmatmul.bf16.gmra.mxu0 %v5252
        %v5325 = vpop.f32.mrf.mxu0
        %v5326 = vadd.f32 0.0, %v5325
        %v5327 = vpop.f32.mrf.mxu0
        %v5328 = vadd.f32 0.0, %v5327
        %5329 = vmatmul.bf16.gmra.mxu0 %v5253
        %v5330 = vpop.f32.mrf.mxu0
        %v5331 = vadd.f32 0.0, %v5330
        %v5332 = vpop.f32.mrf.mxu0
        %v5333 = vadd.f32 0.0, %v5332
        %5334 = vmatmul.bf16.gmra.mxu0 %v5254
        %v5335 = vpop.f32.mrf.mxu0
        %v5336 = vadd.f32 0.0, %v5335
        %v5337 = vpop.f32.mrf.mxu0
        %v5338 = vadd.f32 0.0, %v5337
        %5339 = vmatmul.bf16.gmra.mxu0 %v5255
        %v5340 = vpop.f32.mrf.mxu0
        %v5341 = vadd.f32 0.0, %v5340
        %v5342 = vpop.f32.mrf.mxu0
        %v5343 = vadd.f32 0.0, %v5342
        %5344 = vmatmul.bf16.gmra.mxu0 %v5256
        %v5345 = vpop.f32.mrf.mxu0
        %v5346 = vadd.f32 0.0, %v5345
        %v5347 = vpop.f32.mrf.mxu0
        %v5348 = vadd.f32 0.0, %v5347
        %5349 = vmatmul.bf16.gmra.mxu0 %v5257
        %v5350 = vpop.f32.mrf.mxu0
        %v5351 = vadd.f32 0.0, %v5350
        %v5352 = vpop.f32.mrf.mxu0
        %v5353 = vadd.f32 0.0, %v5352
        %5354 = vmatmul.bf16.gmra.mxu0 %v5258
        %v5355 = vpop.f32.mrf.mxu0
        %v5356 = vadd.f32 0.0, %v5355
        %v5357 = vpop.f32.mrf.mxu0
        %v5358 = vadd.f32 0.0, %v5357
        %5359 = vmatmul.bf16.gmra.mxu0 %v5259
        %v5360 = vpop.f32.mrf.mxu0
        %v5361 = vadd.f32 0.0, %v5360
        %v5362 = vpop.f32.mrf.mxu0
        %v5363 = vadd.f32 0.0, %v5362
        %5364 = vdwg.mxu0
        %v5365 = vadd.f32 %v5171, %v5326
        %v5366 = vadd.f32 %v5172, %v5328
        %v5367 = vadd.f32 %v5173, %v5331
        %v5368 = vadd.f32 %v5174, %v5333
        %v5369 = vadd.f32 %v5175, %v5336
        %v5370 = vadd.f32 %v5176, %v5338
        %v5371 = vadd.f32 %v5177, %v5341
        %v5372 = vadd.f32 %v5178, %v5343
        %v5373 = vadd.f32 %v5179, %v5346
        %v5374 = vadd.f32 %v5180, %v5348
        %v5375 = vadd.f32 %v5181, %v5351
        %v5376 = vadd.f32 %v5182, %v5353
        %v5377 = vadd.f32 %v5183, %v5356
        %v5378 = vadd.f32 %v5184, %v5358
        %v5379 = vadd.f32 %v5185, %v5361
        %v5380 = vadd.f32 %v5186, %v5363
        %v5381 = vld [vmem:[%s5187] sm:$0xf]
        %v5382 = vld [vmem:[%s5187 + $0x4] sm:$0xf]
        %v5383 = vld [vmem:[%s5187 + $0x8] sm:$0x1]
        %v5384 = vld [vmem:[%s5187 + $0xc] sm:$0xf]
        %v5385 = vld [vmem:[%s5187 + $0x10] sm:$0xf]
        %v5386 = vld [vmem:[%s5187 + $0x14] sm:$0x1]
        %v5387 = vld [vmem:[%s5187 + $0x18] sm:$0xf]
        %v5388 = vld [vmem:[%s5187 + $0x1c] sm:$0xf]
        %v5389 = vld [vmem:[%s5187 + $0x20] sm:$0x1]
        %v5390 = vld [vmem:[%s5187 + $0x24] sm:$0xf]
        %v5391 = vld [vmem:[%s5187 + $0x28] sm:$0xf]
        %v5392 = vld [vmem:[%s5187 + $0x2c] sm:$0x1]
        %v5393 = vld [vmem:[%s5187 + $0x30] sm:$0xf]
        %v5394 = vld [vmem:[%s5187 + $0x34] sm:$0xf]
        %v5395 = vld [vmem:[%s5187 + $0x38] sm:$0x1]
        %v5396 = vld [vmem:[%s5187 + $0x3c] sm:$0xf]
        %v5397 = vld [vmem:[%s5187 + $0x40] sm:$0xf]
        %v5398 = vld [vmem:[%s5187 + $0x44] sm:$0x1]
        %v5399 = vld [vmem:[%s5187 + $0x48] sm:$0xf]
        %v5400 = vld [vmem:[%s5187 + $0x4c] sm:$0xf]
        %v5401 = vld [vmem:[%s5187 + $0x50] sm:$0x1]
        %v5402 = vld [vmem:[%s5187 + $0x54] sm:$0xf]
        %v5403 = vld [vmem:[%s5187 + $0x58] sm:$0xf]
        %v5404 = vld [vmem:[%s5187 + $0x5c] sm:$0x1]
        %v5406 = vshrl.u32 %v5381, 16
        %v5408 = vrot.slane %v5406, 4
        %v5409 = vshll.u32 %v5381, 16
        %v5411 = vrot.slane %v5409, 5
        %v5412 = vor.u32 %v5408, %v5411
        %v5413 = vrot.slane %v5412, 4
        %v5415 = vshll.u32 %v5382, 16
        %v5417 = vrot.slane %v5415, 5
        %v5418 = vsel %vm938, %v5413, %v5417
        %v5419 = vshrl.u32 %v5382, 16
        %v5421 = vrot.slane %v5419, 4
        %v5422 = vor.u32 %v5421, %v5417
        %v5423 = vrot.slane %v5422, 4
        %v5425 = vshll.u32 %v5383, 16
        %v5427 = vrot.slane %v5425, 5
        %v5428 = vsel %vm938, %v5423, %v5427
        %v5430 = vshrl.u32 %v5384, 16
        %v5432 = vrot.slane %v5430, 4
        %v5433 = vshll.u32 %v5384, 16
        %v5435 = vrot.slane %v5433, 5
        %v5436 = vor.u32 %v5432, %v5435
        %v5437 = vrot.slane %v5436, 4
        %v5439 = vshll.u32 %v5385, 16
        %v5441 = vrot.slane %v5439, 5
        %v5442 = vsel %vm938, %v5437, %v5441
        %v5443 = vshrl.u32 %v5385, 16
        %v5445 = vrot.slane %v5443, 4
        %v5446 = vor.u32 %v5445, %v5441
        %v5447 = vrot.slane %v5446, 4
        %v5449 = vshll.u32 %v5386, 16
        %v5451 = vrot.slane %v5449, 5
        %v5452 = vsel %vm938, %v5447, %v5451
        %v5454 = vshrl.u32 %v5387, 16
        %v5456 = vrot.slane %v5454, 4
        %v5457 = vshll.u32 %v5387, 16
        %v5459 = vrot.slane %v5457, 5
        %v5460 = vor.u32 %v5456, %v5459
        %v5461 = vrot.slane %v5460, 4
        %v5463 = vshll.u32 %v5388, 16
        %v5465 = vrot.slane %v5463, 5
        %v5466 = vsel %vm938, %v5461, %v5465
        %v5467 = vshrl.u32 %v5388, 16
        %v5469 = vrot.slane %v5467, 4
        %v5470 = vor.u32 %v5469, %v5465
        %v5471 = vrot.slane %v5470, 4
        %v5473 = vshll.u32 %v5389, 16
        %v5475 = vrot.slane %v5473, 5
        %v5476 = vsel %vm938, %v5471, %v5475
        %v5478 = vshrl.u32 %v5390, 16
        %v5480 = vrot.slane %v5478, 4
        %v5481 = vshll.u32 %v5390, 16
        %v5483 = vrot.slane %v5481, 5
        %v5484 = vor.u32 %v5480, %v5483
        %v5485 = vrot.slane %v5484, 4
        %v5487 = vshll.u32 %v5391, 16
        %v5489 = vrot.slane %v5487, 5
        %v5490 = vsel %vm938, %v5485, %v5489
        %v5491 = vshrl.u32 %v5391, 16
        %v5493 = vrot.slane %v5491, 4
        %v5494 = vor.u32 %v5493, %v5489
        %v5495 = vrot.slane %v5494, 4
        %v5497 = vshll.u32 %v5392, 16
        %v5499 = vrot.slane %v5497, 5
        %v5500 = vsel %vm938, %v5495, %v5499
        %v5502 = vshrl.u32 %v5393, 16
        %v5504 = vrot.slane %v5502, 4
        %v5505 = vshll.u32 %v5393, 16
        %v5507 = vrot.slane %v5505, 5
        %v5508 = vor.u32 %v5504, %v5507
        %v5509 = vrot.slane %v5508, 4
        %v5511 = vshll.u32 %v5394, 16
        %v5513 = vrot.slane %v5511, 5
        %v5514 = vsel %vm938, %v5509, %v5513
        %v5515 = vshrl.u32 %v5394, 16
        %v5517 = vrot.slane %v5515, 4
        %v5518 = vor.u32 %v5517, %v5513
        %v5519 = vrot.slane %v5518, 4
        %v5521 = vshll.u32 %v5395, 16
        %v5523 = vrot.slane %v5521, 5
        %v5524 = vsel %vm938, %v5519, %v5523
        %v5526 = vshrl.u32 %v5396, 16
        %v5528 = vrot.slane %v5526, 4
        %v5529 = vshll.u32 %v5396, 16
        %v5531 = vrot.slane %v5529, 5
        %v5532 = vor.u32 %v5528, %v5531
        %v5533 = vrot.slane %v5532, 4
        %v5535 = vshll.u32 %v5397, 16
        %v5537 = vrot.slane %v5535, 5
        %v5538 = vsel %vm938, %v5533, %v5537
        %v5539 = vshrl.u32 %v5397, 16
        %v5541 = vrot.slane %v5539, 4
        %v5542 = vor.u32 %v5541, %v5537
        %v5543 = vrot.slane %v5542, 4
        %v5545 = vshll.u32 %v5398, 16
        %v5547 = vrot.slane %v5545, 5
        %v5548 = vsel %vm938, %v5543, %v5547
        %v5550 = vshrl.u32 %v5399, 16
        %v5552 = vrot.slane %v5550, 4
        %v5553 = vshll.u32 %v5399, 16
        %v5555 = vrot.slane %v5553, 5
        %v5556 = vor.u32 %v5552, %v5555
        %v5557 = vrot.slane %v5556, 4
        %v5559 = vshll.u32 %v5400, 16
        %v5561 = vrot.slane %v5559, 5
        %v5562 = vsel %vm938, %v5557, %v5561
        %v5563 = vshrl.u32 %v5400, 16
        %v5565 = vrot.slane %v5563, 4
        %v5566 = vor.u32 %v5565, %v5561
        %v5567 = vrot.slane %v5566, 4
        %v5569 = vshll.u32 %v5401, 16
        %v5571 = vrot.slane %v5569, 5
        %v5572 = vsel %vm938, %v5567, %v5571
        %v5574 = vshrl.u32 %v5402, 16
        %v5576 = vrot.slane %v5574, 4
        %v5577 = vshll.u32 %v5402, 16
        %v5579 = vrot.slane %v5577, 5
        %v5580 = vor.u32 %v5576, %v5579
        %v5581 = vrot.slane %v5580, 4
        %v5583 = vshll.u32 %v5403, 16
        %v5585 = vrot.slane %v5583, 5
        %v5586 = vsel %vm938, %v5581, %v5585
        %v5587 = vshrl.u32 %v5403, 16
        %v5589 = vrot.slane %v5587, 4
        %v5590 = vor.u32 %v5589, %v5585
        %v5591 = vrot.slane %v5590, 4
        %v5593 = vshll.u32 %v5404, 16
        %v5595 = vrot.slane %v5593, 5
        %v5596 = vsel %vm938, %v5591, %v5595
        %v5597 = vld [vmem:[%s2900] sm:$0xf]
        %v5598 = vld [vmem:[%s2900 + $0x4] sm:$0xf]
        %v5599 = vld [vmem:[%s2900 + $0x8] sm:$0xf]
        %v5600 = vld [vmem:[%s2900 + $0xc] sm:$0xf]
        %v5601 = vld [vmem:[%s2900 + $0x10] sm:$0xf]
        %v5602 = vld [vmem:[%s2900 + $0x14] sm:$0xf]
        %v5603 = vld [vmem:[%s2900 + $0x18] sm:$0xf]
        %v5604 = vld [vmem:[%s2900 + $0x1c] sm:$0xf]
        %v5605 = vld [vmem:[%s2900 + $0x20] sm:$0xf]
        %v5606 = vld [vmem:[%s2900 + $0x24] sm:$0xf]
        %v5607 = vld [vmem:[%s2900 + $0x28] sm:$0xf]
        %v5608 = vld [vmem:[%s2900 + $0x2c] sm:$0xf]
        %v5609 = vld [vmem:[%s2900 + $0x30] sm:$0xf]
        %v5610 = vld [vmem:[%s2900 + $0x34] sm:$0xf]
        %v5611 = vld [vmem:[%s2900 + $0x38] sm:$0xf]
        %v5612 = vld [vmem:[%s2900 + $0x3c] sm:$0xf]
        %v5613 = vunpack.c.l.b16 %v5418
        %v5614 = vunpack.c.l.b16 %v5428
        %v5615 = vunpack.c.l.b16 %v5442
        %v5616 = vunpack.c.l.b16 %v5452
        %v5617 = vunpack.c.l.b16 %v5466
        %v5618 = vunpack.c.l.b16 %v5476
        %v5619 = vunpack.c.l.b16 %v5490
        %v5620 = vunpack.c.l.b16 %v5500
        %v5621 = vunpack.c.l.b16 %v5514
        %v5622 = vunpack.c.l.b16 %v5524
        %v5623 = vunpack.c.l.b16 %v5538
        %v5624 = vunpack.c.l.b16 %v5548
        %v5625 = vunpack.c.l.b16 %v5562
        %v5626 = vunpack.c.l.b16 %v5572
        %v5627 = vunpack.c.l.b16 %v5586
        %v5628 = vunpack.c.l.b16 %v5596
        %v5629 = vpack.c.b16 %v5614, %v5613
        %v5630 = vpack.c.b16 %v5616, %v5615
        %v5631 = vpack.c.b16 %v5618, %v5617
        %v5632 = vpack.c.b16 %v5620, %v5619
        %v5633 = vpack.c.b16 %v5622, %v5621
        %v5634 = vpack.c.b16 %v5624, %v5623
        %v5635 = vpack.c.b16 %v5626, %v5625
        %v5636 = vpack.c.b16 %v5628, %v5627
        %v5661 = vunpack.c.l.b16 %v5597
        %v5662 = vunpack.c.l.b16 %v5598
        %v5663 = vunpack.c.l.b16 %v5599
        %v5664 = vunpack.c.l.b16 %v5600
        %v5665 = vunpack.c.l.b16 %v5601
        %v5666 = vunpack.c.l.b16 %v5602
        %v5667 = vunpack.c.l.b16 %v5603
        %v5668 = vunpack.c.l.b16 %v5604
        %v5669 = vunpack.c.l.b16 %v5605
        %v5670 = vunpack.c.l.b16 %v5606
        %v5671 = vunpack.c.l.b16 %v5607
        %v5672 = vunpack.c.l.b16 %v5608
        %v5673 = vunpack.c.l.b16 %v5609
        %v5674 = vunpack.c.l.b16 %v5610
        %v5675 = vunpack.c.l.b16 %v5611
        %v5676 = vunpack.c.l.b16 %v5612
        %v5677 = vpack.c.b16 %v5662, %v5661
        %v5678 = vpack.c.b16 %v5664, %v5663
        %v5679 = vpack.c.b16 %v5666, %v5665
        %v5680 = vpack.c.b16 %v5668, %v5667
        %v5681 = vpack.c.b16 %v5670, %v5669
        %v5682 = vpack.c.b16 %v5672, %v5671
        %v5683 = vpack.c.b16 %v5674, %v5673
        %v5684 = vpack.c.b16 %v5676, %v5675
        %5693 = vmatpush.bf16.msra.mxu0 %v5684
        %5694 = vmatpush.bf16.msra.mxu0 %v5683
        %5695 = vmatpush.bf16.msra.mxu0 %v5682
        %5696 = vmatpush.bf16.msra.mxu0 %v5681
        %5697 = vmatpush.bf16.msra.mxu0 %v5680
        %5698 = vmatpush.bf16.msra.mxu0 %v5679
        %5699 = vmatpush.bf16.msra.mxu0 %v5678
        %5700 = vmatpush.bf16.msra.mxu0 %v5677
        %5701 = vmatmul.bf16.gmra.mxu0 %v5629
        %v5702 = vpop.f32.mrf.mxu0
        %v5703 = vadd.f32 0.0, %v5702
        %v5704 = vpop.f32.mrf.mxu0
        %v5705 = vadd.f32 0.0, %v5704
        %5706 = vmatmul.bf16.gmra.mxu0 %v5630
        %v5707 = vpop.f32.mrf.mxu0
        %v5708 = vadd.f32 0.0, %v5707
        %v5709 = vpop.f32.mrf.mxu0
        %v5710 = vadd.f32 0.0, %v5709
        %5711 = vmatmul.bf16.gmra.mxu0 %v5631
        %v5712 = vpop.f32.mrf.mxu0
        %v5713 = vadd.f32 0.0, %v5712
        %v5714 = vpop.f32.mrf.mxu0
        %v5715 = vadd.f32 0.0, %v5714
        %5716 = vmatmul.bf16.gmra.mxu0 %v5632
        %v5717 = vpop.f32.mrf.mxu0
        %v5718 = vadd.f32 0.0, %v5717
        %v5719 = vpop.f32.mrf.mxu0
        %v5720 = vadd.f32 0.0, %v5719
        %5721 = vmatmul.bf16.gmra.mxu0 %v5633
        %v5722 = vpop.f32.mrf.mxu0
        %v5723 = vadd.f32 0.0, %v5722
        %v5724 = vpop.f32.mrf.mxu0
        %v5725 = vadd.f32 0.0, %v5724
        %5726 = vmatmul.bf16.gmra.mxu0 %v5634
        %v5727 = vpop.f32.mrf.mxu0
        %v5728 = vadd.f32 0.0, %v5727
        %v5729 = vpop.f32.mrf.mxu0
        %v5730 = vadd.f32 0.0, %v5729
        %5731 = vmatmul.bf16.gmra.mxu0 %v5635
        %v5732 = vpop.f32.mrf.mxu0
        %v5733 = vadd.f32 0.0, %v5732
        %v5734 = vpop.f32.mrf.mxu0
        %v5735 = vadd.f32 0.0, %v5734
        %5736 = vmatmul.bf16.gmra.mxu0 %v5636
        %v5737 = vpop.f32.mrf.mxu0
        %v5738 = vadd.f32 0.0, %v5737
        %v5739 = vpop.f32.mrf.mxu0
        %v5740 = vadd.f32 0.0, %v5739
        %5741 = vdwg.mxu0
        %v5742 = vadd.f32 %v5365, %v5703
        %v5743 = vadd.f32 %v5366, %v5705
        %v5744 = vadd.f32 %v5367, %v5708
        %v5745 = vadd.f32 %v5368, %v5710
        %v5746 = vadd.f32 %v5369, %v5713
        %v5747 = vadd.f32 %v5370, %v5715
        %v5748 = vadd.f32 %v5371, %v5718
        %v5749 = vadd.f32 %v5372, %v5720
        %v5750 = vadd.f32 %v5373, %v5723
        %v5751 = vadd.f32 %v5374, %v5725
        %v5752 = vadd.f32 %v5375, %v5728
        %v5753 = vadd.f32 %v5376, %v5730
        %v5754 = vadd.f32 %v5377, %v5733
        %v5755 = vadd.f32 %v5378, %v5735
        %v5756 = vadd.f32 %v5379, %v5738
        %v5757 = vadd.f32 %v5380, %v5740
        %v5758 = vld [vmem:[%s5187] sm:$0xe]
        %v5759 = vld [vmem:[%s5187 + $0xc] sm:$0xe]
        %v5760 = vld [vmem:[%s5187 + $0x18] sm:$0xe]
        %v5761 = vld [vmem:[%s5187 + $0x24] sm:$0xe]
        %v5762 = vld [vmem:[%s5187 + $0x30] sm:$0xe]
        %v5763 = vld [vmem:[%s5187 + $0x3c] sm:$0xe]
        %v5764 = vld [vmem:[%s5187 + $0x48] sm:$0xe]
        %v5765 = vld [vmem:[%s5187 + $0x54] sm:$0xe]
        %v5790 = vrot.slane %v5758, 5
        %v5791 = vrot.slane %v5790, 4
        %v5792 = vrot.slane %v5382, 5
        %v5793 = vsel %vm1448, %v5791, %v5792
        %v5794 = vrot.slane %v5792, 4
        %v5795 = vrot.slane %v5383, 5
        %v5796 = vsel %vm1448, %v5794, %v5795
        %v5797 = vrot.slane %v5759, 5
        %v5798 = vrot.slane %v5797, 4
        %v5799 = vrot.slane %v5385, 5
        %v5800 = vsel %vm1448, %v5798, %v5799
        %v5801 = vrot.slane %v5799, 4
        %v5802 = vrot.slane %v5386, 5
        %v5803 = vsel %vm1448, %v5801, %v5802
        %v5804 = vrot.slane %v5760, 5
        %v5805 = vrot.slane %v5804, 4
        %v5806 = vrot.slane %v5388, 5
        %v5807 = vsel %vm1448, %v5805, %v5806
        %v5808 = vrot.slane %v5806, 4
        %v5809 = vrot.slane %v5389, 5
        %v5810 = vsel %vm1448, %v5808, %v5809
        %v5811 = vrot.slane %v5761, 5
        %v5812 = vrot.slane %v5811, 4
        %v5813 = vrot.slane %v5391, 5
        %v5814 = vsel %vm1448, %v5812, %v5813
        %v5815 = vrot.slane %v5813, 4
        %v5816 = vrot.slane %v5392, 5
        %v5817 = vsel %vm1448, %v5815, %v5816
        %v5818 = vrot.slane %v5762, 5
        %v5819 = vrot.slane %v5818, 4
        %v5820 = vrot.slane %v5394, 5
        %v5821 = vsel %vm1448, %v5819, %v5820
        %v5822 = vrot.slane %v5820, 4
        %v5823 = vrot.slane %v5395, 5
        %v5824 = vsel %vm1448, %v5822, %v5823
        %v5825 = vrot.slane %v5763, 5
        %v5826 = vrot.slane %v5825, 4
        %v5827 = vrot.slane %v5397, 5
        %v5828 = vsel %vm1448, %v5826, %v5827
        %v5829 = vrot.slane %v5827, 4
        %v5830 = vrot.slane %v5398, 5
        %v5831 = vsel %vm1448, %v5829, %v5830
        %v5832 = vrot.slane %v5764, 5
        %v5833 = vrot.slane %v5832, 4
        %v5834 = vrot.slane %v5400, 5
        %v5835 = vsel %vm1448, %v5833, %v5834
        %v5836 = vrot.slane %v5834, 4
        %v5837 = vrot.slane %v5401, 5
        %v5838 = vsel %vm1448, %v5836, %v5837
        %v5839 = vrot.slane %v5765, 5
        %v5840 = vrot.slane %v5839, 4
        %v5841 = vrot.slane %v5403, 5
        %v5842 = vsel %vm1448, %v5840, %v5841
        %v5843 = vrot.slane %v5841, 4
        %v5844 = vrot.slane %v5404, 5
        %v5845 = vsel %vm1448, %v5843, %v5844
        %v5846 = vld [vmem:[%s3150] sm:$0xf]
        %v5847 = vld [vmem:[%s3150 + $0x4] sm:$0xf]
        %v5848 = vld [vmem:[%s3150 + $0x8] sm:$0xf]
        %v5849 = vld [vmem:[%s3150 + $0xc] sm:$0xf]
        %v5850 = vld [vmem:[%s3150 + $0x10] sm:$0xf]
        %v5851 = vld [vmem:[%s3150 + $0x14] sm:$0xf]
        %v5852 = vld [vmem:[%s3150 + $0x18] sm:$0xf]
        %v5853 = vld [vmem:[%s3150 + $0x1c] sm:$0xf]
        %v5854 = vld [vmem:[%s3150 + $0x20] sm:$0xf]
        %v5855 = vld [vmem:[%s3150 + $0x24] sm:$0xf]
        %v5856 = vld [vmem:[%s3150 + $0x28] sm:$0xf]
        %v5857 = vld [vmem:[%s3150 + $0x2c] sm:$0xf]
        %v5858 = vld [vmem:[%s3150 + $0x30] sm:$0xf]
        %v5859 = vld [vmem:[%s3150 + $0x34] sm:$0xf]
        %v5860 = vld [vmem:[%s3150 + $0x38] sm:$0xf]
        %v5861 = vld [vmem:[%s3150 + $0x3c] sm:$0xf]
        %v5862 = vunpack.c.l.b16 %v5793
        %v5863 = vunpack.c.l.b16 %v5796
        %v5864 = vunpack.c.l.b16 %v5800
        %v5865 = vunpack.c.l.b16 %v5803
        %v5866 = vunpack.c.l.b16 %v5807
        %v5867 = vunpack.c.l.b16 %v5810
        %v5868 = vunpack.c.l.b16 %v5814
        %v5869 = vunpack.c.l.b16 %v5817
        %v5870 = vunpack.c.l.b16 %v5821
        %v5871 = vunpack.c.l.b16 %v5824
        %v5872 = vunpack.c.l.b16 %v5828
        %v5873 = vunpack.c.l.b16 %v5831
        %v5874 = vunpack.c.l.b16 %v5835
        %v5875 = vunpack.c.l.b16 %v5838
        %v5876 = vunpack.c.l.b16 %v5842
        %v5877 = vunpack.c.l.b16 %v5845
        %v5878 = vpack.c.b16 %v5863, %v5862
        %v5879 = vpack.c.b16 %v5865, %v5864
        %v5880 = vpack.c.b16 %v5867, %v5866
        %v5881 = vpack.c.b16 %v5869, %v5868
        %v5882 = vpack.c.b16 %v5871, %v5870
        %v5883 = vpack.c.b16 %v5873, %v5872
        %v5884 = vpack.c.b16 %v5875, %v5874
        %v5885 = vpack.c.b16 %v5877, %v5876
        %v5910 = vunpack.c.l.b16 %v5846
        %v5911 = vunpack.c.l.b16 %v5847
        %v5912 = vunpack.c.l.b16 %v5848
        %v5913 = vunpack.c.l.b16 %v5849
        %v5914 = vunpack.c.l.b16 %v5850
        %v5915 = vunpack.c.l.b16 %v5851
        %v5916 = vunpack.c.l.b16 %v5852
        %v5917 = vunpack.c.l.b16 %v5853
        %v5918 = vunpack.c.l.b16 %v5854
        %v5919 = vunpack.c.l.b16 %v5855
        %v5920 = vunpack.c.l.b16 %v5856
        %v5921 = vunpack.c.l.b16 %v5857
        %v5922 = vunpack.c.l.b16 %v5858
        %v5923 = vunpack.c.l.b16 %v5859
        %v5924 = vunpack.c.l.b16 %v5860
        %v5925 = vunpack.c.l.b16 %v5861
        %v5926 = vpack.c.b16 %v5911, %v5910
        %v5927 = vpack.c.b16 %v5913, %v5912
        %v5928 = vpack.c.b16 %v5915, %v5914
        %v5929 = vpack.c.b16 %v5917, %v5916
        %v5930 = vpack.c.b16 %v5919, %v5918
        %v5931 = vpack.c.b16 %v5921, %v5920
        %v5932 = vpack.c.b16 %v5923, %v5922
        %v5933 = vpack.c.b16 %v5925, %v5924
        %5942 = vmatpush.bf16.msra.mxu0 %v5933
        %5943 = vmatpush.bf16.msra.mxu0 %v5932
        %5944 = vmatpush.bf16.msra.mxu0 %v5931
        %5945 = vmatpush.bf16.msra.mxu0 %v5930
        %5946 = vmatpush.bf16.msra.mxu0 %v5929
        %5947 = vmatpush.bf16.msra.mxu0 %v5928
        %5948 = vmatpush.bf16.msra.mxu0 %v5927
        %5949 = vmatpush.bf16.msra.mxu0 %v5926
        %5950 = vmatmul.bf16.gmra.mxu0 %v5878
        %v5951 = vpop.f32.mrf.mxu0
        %v5952 = vadd.f32 0.0, %v5951
        %v5953 = vpop.f32.mrf.mxu0
        %v5954 = vadd.f32 0.0, %v5953
        %5955 = vmatmul.bf16.gmra.mxu0 %v5879
        %v5956 = vpop.f32.mrf.mxu0
        %v5957 = vadd.f32 0.0, %v5956
        %v5958 = vpop.f32.mrf.mxu0
        %v5959 = vadd.f32 0.0, %v5958
        %5960 = vmatmul.bf16.gmra.mxu0 %v5880
        %v5961 = vpop.f32.mrf.mxu0
        %v5962 = vadd.f32 0.0, %v5961
        %v5963 = vpop.f32.mrf.mxu0
        %v5964 = vadd.f32 0.0, %v5963
        %5965 = vmatmul.bf16.gmra.mxu0 %v5881
        %v5966 = vpop.f32.mrf.mxu0
        %v5967 = vadd.f32 0.0, %v5966
        %v5968 = vpop.f32.mrf.mxu0
        %v5969 = vadd.f32 0.0, %v5968
        %5970 = vmatmul.bf16.gmra.mxu0 %v5882
        %v5971 = vpop.f32.mrf.mxu0
        %v5972 = vadd.f32 0.0, %v5971
        %v5973 = vpop.f32.mrf.mxu0
        %v5974 = vadd.f32 0.0, %v5973
        %5975 = vmatmul.bf16.gmra.mxu0 %v5883
        %v5976 = vpop.f32.mrf.mxu0
        %v5977 = vadd.f32 0.0, %v5976
        %v5978 = vpop.f32.mrf.mxu0
        %v5979 = vadd.f32 0.0, %v5978
        %5980 = vmatmul.bf16.gmra.mxu0 %v5884
        %v5981 = vpop.f32.mrf.mxu0
        %v5982 = vadd.f32 0.0, %v5981
        %v5983 = vpop.f32.mrf.mxu0
        %v5984 = vadd.f32 0.0, %v5983
        %5985 = vmatmul.bf16.gmra.mxu0 %v5885
        %v5986 = vpop.f32.mrf.mxu0
        %v5987 = vadd.f32 0.0, %v5986
        %v5988 = vpop.f32.mrf.mxu0
        %v5989 = vadd.f32 0.0, %v5988
        %5990 = vdwg.mxu0
        %v5991 = vadd.f32 %v5742, %v5952
        %v5992 = vadd.f32 %v5743, %v5954
        %v5993 = vadd.f32 %v5744, %v5957
        %v5994 = vadd.f32 %v5745, %v5959
        %v5995 = vadd.f32 %v5746, %v5962
        %v5996 = vadd.f32 %v5747, %v5964
        %v5997 = vadd.f32 %v5748, %v5967
        %v5998 = vadd.f32 %v5749, %v5969
        %v5999 = vadd.f32 %v5750, %v5972
        %v6000 = vadd.f32 %v5751, %v5974
        %v6001 = vadd.f32 %v5752, %v5977
        %v6002 = vadd.f32 %v5753, %v5979
        %v6003 = vadd.f32 %v5754, %v5982
        %v6004 = vadd.f32 %v5755, %v5984
        %v6005 = vadd.f32 %v5756, %v5987
        %v6006 = vadd.f32 %v5757, %v5989
        %v6007 = vmul.f32 %v5991, %v3313
        %v6008 = vmul.f32 %v5992, %v3313
        %v6009 = vmul.f32 %v5993, %v3313
        %v6010 = vmul.f32 %v5994, %v3313
        %v6011 = vmul.f32 %v5995, %v3313
        %v6012 = vmul.f32 %v5996, %v3313
        %v6013 = vmul.f32 %v5997, %v3313
        %v6014 = vmul.f32 %v5998, %v3313
        %v6015 = vmul.f32 %v5999, %v3313
        %v6016 = vmul.f32 %v6000, %v3313
        %v6017 = vmul.f32 %v6001, %v3313
        %v6018 = vmul.f32 %v6002, %v3313
        %v6019 = vmul.f32 %v6003, %v3313
        %v6020 = vmul.f32 %v6004, %v3313
        %v6021 = vmul.f32 %v6005, %v3313
        %v6022 = vmul.f32 %v6006, %v3313
        %v6023 = vadd.f32 %v6007, %v3332
        %v6024 = vadd.f32 %v6008, %v3332
        %v6025 = vadd.f32 %v6009, %v3332
        %v6026 = vadd.f32 %v6010, %v3332
        %v6027 = vadd.f32 %v6011, %v3332
        %v6028 = vadd.f32 %v6012, %v3332
        %v6029 = vadd.f32 %v6013, %v3332
        %v6030 = vadd.f32 %v6014, %v3332
        %v6031 = vadd.f32 %v6015, %v3332
        %v6032 = vadd.f32 %v6016, %v3332
        %v6033 = vadd.f32 %v6017, %v3332
        %v6034 = vadd.f32 %v6018, %v3332
        %v6035 = vadd.f32 %v6019, %v3332
        %v6036 = vadd.f32 %v6020, %v3332
        %v6037 = vadd.f32 %v6021, %v3332
        %v6038 = vadd.f32 %v6022, %v3332
        %v6039 = vmax.f32 %v6023, 0.0
        %v6040 = vmax.f32 %v6024, 0.0
        %v6041 = vmax.f32 %v6025, 0.0
        %v6042 = vmax.f32 %v6026, 0.0
        %v6043 = vmax.f32 %v6027, 0.0
        %v6044 = vmax.f32 %v6028, 0.0
        %v6045 = vmax.f32 %v6029, 0.0
        %v6046 = vmax.f32 %v6030, 0.0
        %v6047 = vmax.f32 %v6031, 0.0
        %v6048 = vmax.f32 %v6032, 0.0
        %v6049 = vmax.f32 %v6033, 0.0
        %v6050 = vmax.f32 %v6034, 0.0
        %v6051 = vmax.f32 %v6035, 0.0
        %v6052 = vmax.f32 %v6036, 0.0
        %v6053 = vmax.f32 %v6037, 0.0
        %v6054 = vmax.f32 %v6038, 0.0
        %v6055 = vpack.c.bf16 %v6039, %v6039
        %v6056 = vpack.c.bf16 %v6040, %v6040
        %v6057 = vpack.c.bf16 %v6041, %v6041
        %v6058 = vpack.c.bf16 %v6042, %v6042
        %v6059 = vpack.c.bf16 %v6043, %v6043
        %v6060 = vpack.c.bf16 %v6044, %v6044
        %v6061 = vpack.c.bf16 %v6045, %v6045
        %v6062 = vpack.c.bf16 %v6046, %v6046
        %v6063 = vpack.c.bf16 %v6047, %v6047
        %v6064 = vpack.c.bf16 %v6048, %v6048
        %v6065 = vpack.c.bf16 %v6049, %v6049
        %v6066 = vpack.c.bf16 %v6050, %v6050
        %v6067 = vpack.c.bf16 %v6051, %v6051
        %v6068 = vpack.c.bf16 %v6052, %v6052
        %v6069 = vpack.c.bf16 %v6053, %v6053
        %v6070 = vpack.c.bf16 %v6054, %v6054
        %v6072 = vshrl.u32 %v6055, 16
        %v6074 = vrot.slane %v6072, 7
        %v6075 = vshll.u32 %v6055, 16
        %v6077 = vor.u32 %v6074, %v6075
        %v6078 = vrot.slane %v6074, 4
        %v6080 = vshrl.u32 %v6056, 16
        %v6082 = vrot.slane %v6080, 7
        %v6083 = vshll.u32 %v6056, 16
        %v6085 = vor.u32 %v6082, %v6083
        %v6086 = vsel %vm400, %v6078, %v6085
        %v6087 = vrot.slane %v6082, 4
        %v6089 = vshrl.u32 %v6057, 16
        %v6091 = vrot.slane %v6089, 7
        %v6092 = vshll.u32 %v6057, 16
        %v6094 = vor.u32 %v6091, %v6092
        %v6095 = vrot.slane %v6091, 4
        %v6097 = vshrl.u32 %v6058, 16
        %v6099 = vrot.slane %v6097, 7
        %v6100 = vshll.u32 %v6058, 16
        %v6102 = vor.u32 %v6099, %v6100
        %v6103 = vsel %vm400, %v6095, %v6102
        %v6104 = vrot.slane %v6099, 4
        %v6106 = vshrl.u32 %v6059, 16
        %v6108 = vrot.slane %v6106, 7
        %v6109 = vshll.u32 %v6059, 16
        %v6111 = vor.u32 %v6108, %v6109
        %v6112 = vrot.slane %v6108, 4
        %v6114 = vshrl.u32 %v6060, 16
        %v6116 = vrot.slane %v6114, 7
        %v6117 = vshll.u32 %v6060, 16
        %v6119 = vor.u32 %v6116, %v6117
        %v6120 = vsel %vm400, %v6112, %v6119
        %v6121 = vrot.slane %v6116, 4
        %v6123 = vshrl.u32 %v6061, 16
        %v6125 = vrot.slane %v6123, 7
        %v6126 = vshll.u32 %v6061, 16
        %v6128 = vor.u32 %v6125, %v6126
        %v6129 = vrot.slane %v6125, 4
        %v6131 = vshrl.u32 %v6062, 16
        %v6133 = vrot.slane %v6131, 7
        %v6134 = vshll.u32 %v6062, 16
        %v6136 = vor.u32 %v6133, %v6134
        %v6137 = vsel %vm400, %v6129, %v6136
        %v6138 = vrot.slane %v6133, 4
        %v6140 = vshrl.u32 %v6063, 16
        %v6142 = vrot.slane %v6140, 7
        %v6143 = vshll.u32 %v6063, 16
        %v6145 = vor.u32 %v6142, %v6143
        %v6146 = vrot.slane %v6142, 4
        %v6148 = vshrl.u32 %v6064, 16
        %v6150 = vrot.slane %v6148, 7
        %v6151 = vshll.u32 %v6064, 16
        %v6153 = vor.u32 %v6150, %v6151
        %v6154 = vsel %vm400, %v6146, %v6153
        %v6155 = vrot.slane %v6150, 4
        %v6157 = vshrl.u32 %v6065, 16
        %v6159 = vrot.slane %v6157, 7
        %v6160 = vshll.u32 %v6065, 16
        %v6162 = vor.u32 %v6159, %v6160
        %v6163 = vrot.slane %v6159, 4
        %v6165 = vshrl.u32 %v6066, 16
        %v6167 = vrot.slane %v6165, 7
        %v6168 = vshll.u32 %v6066, 16
        %v6170 = vor.u32 %v6167, %v6168
        %v6171 = vsel %vm400, %v6163, %v6170
        %v6172 = vrot.slane %v6167, 4
        %v6174 = vshrl.u32 %v6067, 16
        %v6176 = vrot.slane %v6174, 7
        %v6177 = vshll.u32 %v6067, 16
        %v6179 = vor.u32 %v6176, %v6177
        %v6180 = vrot.slane %v6176, 4
        %v6182 = vshrl.u32 %v6068, 16
        %v6184 = vrot.slane %v6182, 7
        %v6185 = vshll.u32 %v6068, 16
        %v6187 = vor.u32 %v6184, %v6185
        %v6188 = vsel %vm400, %v6180, %v6187
        %v6189 = vrot.slane %v6184, 4
        %v6191 = vshrl.u32 %v6069, 16
        %v6193 = vrot.slane %v6191, 7
        %v6194 = vshll.u32 %v6069, 16
        %v6196 = vor.u32 %v6193, %v6194
        %v6197 = vrot.slane %v6193, 4
        %v6199 = vshrl.u32 %v6070, 16
        %v6201 = vrot.slane %v6199, 7
        %v6202 = vshll.u32 %v6070, 16
        %v6204 = vor.u32 %v6201, %v6202
        %v6205 = vsel %vm400, %v6197, %v6204
        %v6206 = vrot.slane %v6201, 4
        %s6231 = scalar_lea.vmem [#allocation3], 108
        %v6232 = vld [vmem:[%s6231] sm:$0xf]
        %v6233 = vsel %vm3544, %v6077, %v6232
        %6234 = vst [vmem:[%s6231] sm:$0xf] %v6233
        %6235 = vst [vmem:[%s6231 + $0x4] sm:$0xf] %v6086
        %v6236 = vld [vmem:[%s6231 + $0x8] sm:$0x1]
        %v6237 = vsel %vm3550, %v6087, %v6236
        %6238 = vst [vmem:[%s6231 + $0x8] sm:$0x1] %v6237
        %v6239 = vld [vmem:[%s6231 + $0xc] sm:$0xf]
        %v6240 = vsel %vm3544, %v6094, %v6239
        %6241 = vst [vmem:[%s6231 + $0xc] sm:$0xf] %v6240
        %6242 = vst [vmem:[%s6231 + $0x10] sm:$0xf] %v6103
        %v6243 = vld [vmem:[%s6231 + $0x14] sm:$0x1]
        %v6244 = vsel %vm3550, %v6104, %v6243
        %6245 = vst [vmem:[%s6231 + $0x14] sm:$0x1] %v6244
        %v6246 = vld [vmem:[%s6231 + $0x18] sm:$0xf]
        %v6247 = vsel %vm3544, %v6111, %v6246
        %6248 = vst [vmem:[%s6231 + $0x18] sm:$0xf] %v6247
        %6249 = vst [vmem:[%s6231 + $0x1c] sm:$0xf] %v6120
        %v6250 = vld [vmem:[%s6231 + $0x20] sm:$0x1]
        %v6251 = vsel %vm3550, %v6121, %v6250
        %6252 = vst [vmem:[%s6231 + $0x20] sm:$0x1] %v6251
        %v6253 = vld [vmem:[%s6231 + $0x24] sm:$0xf]
        %v6254 = vsel %vm3544, %v6128, %v6253
        %6255 = vst [vmem:[%s6231 + $0x24] sm:$0xf] %v6254
        %6256 = vst [vmem:[%s6231 + $0x28] sm:$0xf] %v6137
        %v6257 = vld [vmem:[%s6231 + $0x2c] sm:$0x1]
        %v6258 = vsel %vm3550, %v6138, %v6257
        %6259 = vst [vmem:[%s6231 + $0x2c] sm:$0x1] %v6258
        %v6260 = vld [vmem:[%s6231 + $0x30] sm:$0xf]
        %v6261 = vsel %vm3544, %v6145, %v6260
        %6262 = vst [vmem:[%s6231 + $0x30] sm:$0xf] %v6261
        %6263 = vst [vmem:[%s6231 + $0x34] sm:$0xf] %v6154
        %v6264 = vld [vmem:[%s6231 + $0x38] sm:$0x1]
        %v6265 = vsel %vm3550, %v6155, %v6264
        %6266 = vst [vmem:[%s6231 + $0x38] sm:$0x1] %v6265
        %v6267 = vld [vmem:[%s6231 + $0x3c] sm:$0xf]
        %v6268 = vsel %vm3544, %v6162, %v6267
        %6269 = vst [vmem:[%s6231 + $0x3c] sm:$0xf] %v6268
        %6270 = vst [vmem:[%s6231 + $0x40] sm:$0xf] %v6171
        %v6271 = vld [vmem:[%s6231 + $0x44] sm:$0x1]
        %v6272 = vsel %vm3550, %v6172, %v6271
        %6273 = vst [vmem:[%s6231 + $0x44] sm:$0x1] %v6272
        %v6274 = vld [vmem:[%s6231 + $0x48] sm:$0xf]
        %v6275 = vsel %vm3544, %v6179, %v6274
        %6276 = vst [vmem:[%s6231 + $0x48] sm:$0xf] %v6275
        %6277 = vst [vmem:[%s6231 + $0x4c] sm:$0xf] %v6188
        %v6278 = vld [vmem:[%s6231 + $0x50] sm:$0x1]
        %v6279 = vsel %vm3550, %v6189, %v6278
        %6280 = vst [vmem:[%s6231 + $0x50] sm:$0x1] %v6279
        %v6281 = vld [vmem:[%s6231 + $0x54] sm:$0xf]
        %v6282 = vsel %vm3544, %v6196, %v6281
        %6283 = vst [vmem:[%s6231 + $0x54] sm:$0xf] %v6282
        %6284 = vst [vmem:[%s6231 + $0x58] sm:$0xf] %v6205
        %v6285 = vld [vmem:[%s6231 + $0x5c] sm:$0x1]
        %v6286 = vsel %vm3550, %v6206, %v6285
        %6287 = vst [vmem:[%s6231 + $0x5c] sm:$0x1] %v6286
        %v6288 = vld [vmem:[%s5] sm:$0x1]
        %v6289 = vld [vmem:[%s6] sm:$0x1]
        %v6290 = vld [vmem:[#allocation3] sm:$0xf]
        %v6291 = vld [vmem:[#allocation3 + $0x4] sm:$0xf]
        %v6292 = vld [vmem:[#allocation3 + $0xc] sm:$0xf]
        %v6293 = vld [vmem:[#allocation3 + $0x10] sm:$0xf]
        %v6294 = vld [vmem:[#allocation3 + $0x18] sm:$0xf]
        %v6295 = vld [vmem:[#allocation3 + $0x1c] sm:$0xf]
        %v6296 = vld [vmem:[#allocation3 + $0x24] sm:$0xf]
        %v6297 = vld [vmem:[#allocation3 + $0x28] sm:$0xf]
        %v6298 = vld [vmem:[#allocation3 + $0x30] sm:$0xf]
        %v6299 = vld [vmem:[#allocation3 + $0x34] sm:$0xf]
        %v6300 = vld [vmem:[#allocation3 + $0x3c] sm:$0xf]
        %v6301 = vld [vmem:[#allocation3 + $0x40] sm:$0xf]
        %v6302 = vld [vmem:[#allocation3 + $0x48] sm:$0xf]
        %v6303 = vld [vmem:[#allocation3 + $0x4c] sm:$0xf]
        %v6304 = vld [vmem:[#allocation3 + $0x54] sm:$0xf]
        %v6305 = vld [vmem:[#allocation3 + $0x58] sm:$0xf]
        %v6306 = vld [vmem:[#allocation7] sm:$0xf]
        %v6307 = vld [vmem:[#allocation7 + $0x4] sm:$0xf]
        %v6308 = vld [vmem:[#allocation7 + $0x8] sm:$0xf]
        %v6309 = vld [vmem:[#allocation7 + $0xc] sm:$0xf]
        %v6310 = vld [vmem:[#allocation7 + $0x10] sm:$0xf]
        %v6311 = vld [vmem:[#allocation7 + $0x14] sm:$0xf]
        %v6312 = vld [vmem:[#allocation7 + $0x18] sm:$0xf]
        %v6313 = vld [vmem:[#allocation7 + $0x1c] sm:$0xf]
        %v6314 = vld [vmem:[#allocation7 + $0x20] sm:$0xf]
        %v6315 = vld [vmem:[#allocation7 + $0x24] sm:$0xf]
        %v6316 = vld [vmem:[#allocation7 + $0x28] sm:$0xf]
        %v6317 = vld [vmem:[#allocation7 + $0x2c] sm:$0xf]
        %v6318 = vld [vmem:[#allocation7 + $0x30] sm:$0xf]
        %v6319 = vld [vmem:[#allocation7 + $0x34] sm:$0xf]
        %v6320 = vld [vmem:[#allocation7 + $0x38] sm:$0xf]
        %v6321 = vld [vmem:[#allocation7 + $0x3c] sm:$0xf]
        %v6322 = vld [vmem:[#allocation3 + $0x8] sm:$0x1]
        %v6323 = vld [vmem:[#allocation3 + $0x14] sm:$0x1]
        %v6324 = vld [vmem:[#allocation3 + $0x20] sm:$0x1]
        %v6325 = vld [vmem:[#allocation3 + $0x2c] sm:$0x1]
        %v6326 = vld [vmem:[#allocation3 + $0x38] sm:$0x1]
        %v6327 = vld [vmem:[#allocation3 + $0x44] sm:$0x1]
        %v6328 = vld [vmem:[#allocation3 + $0x50] sm:$0x1]
        %v6329 = vld [vmem:[#allocation3 + $0x5c] sm:$0x1]
        %v6331 = vshrl.u32 %v6290, 16
        %v6333 = vrot.slane %v6331, 4
        %v6334 = vshll.u32 %v6290, 16
        %v6336 = vrot.slane %v6334, 5
        %v6337 = vor.u32 %v6333, %v6336
        %v6338 = vrot.slane %v6337, 4
        %v6340 = vshll.u32 %v6291, 16
        %v6342 = vrot.slane %v6340, 5
        %v6343 = vsel %vm938, %v6338, %v6342
        %v6344 = vshrl.u32 %v6291, 16
        %v6346 = vrot.slane %v6344, 4
        %v6347 = vor.u32 %v6346, %v6342
        %v6348 = vrot.slane %v6347, 4
        %v6350 = vshll.u32 %v6322, 16
        %v6352 = vrot.slane %v6350, 5
        %v6353 = vsel %vm938, %v6348, %v6352
        %v6355 = vshrl.u32 %v6292, 16
        %v6357 = vrot.slane %v6355, 4
        %v6358 = vshll.u32 %v6292, 16
        %v6360 = vrot.slane %v6358, 5
        %v6361 = vor.u32 %v6357, %v6360
        %v6362 = vrot.slane %v6361, 4
        %v6364 = vshll.u32 %v6293, 16
        %v6366 = vrot.slane %v6364, 5
        %v6367 = vsel %vm938, %v6362, %v6366
        %v6368 = vshrl.u32 %v6293, 16
        %v6370 = vrot.slane %v6368, 4
        %v6371 = vor.u32 %v6370, %v6366
        %v6372 = vrot.slane %v6371, 4
        %v6374 = vshll.u32 %v6323, 16
        %v6376 = vrot.slane %v6374, 5
        %v6377 = vsel %vm938, %v6372, %v6376
        %v6379 = vshrl.u32 %v6294, 16
        %v6381 = vrot.slane %v6379, 4
        %v6382 = vshll.u32 %v6294, 16
        %v6384 = vrot.slane %v6382, 5
        %v6385 = vor.u32 %v6381, %v6384
        %v6386 = vrot.slane %v6385, 4
        %v6388 = vshll.u32 %v6295, 16
        %v6390 = vrot.slane %v6388, 5
        %v6391 = vsel %vm938, %v6386, %v6390
        %v6392 = vshrl.u32 %v6295, 16
        %v6394 = vrot.slane %v6392, 4
        %v6395 = vor.u32 %v6394, %v6390
        %v6396 = vrot.slane %v6395, 4
        %v6398 = vshll.u32 %v6324, 16
        %v6400 = vrot.slane %v6398, 5
        %v6401 = vsel %vm938, %v6396, %v6400
        %v6403 = vshrl.u32 %v6296, 16
        %v6405 = vrot.slane %v6403, 4
        %v6406 = vshll.u32 %v6296, 16
        %v6408 = vrot.slane %v6406, 5
        %v6409 = vor.u32 %v6405, %v6408
        %v6410 = vrot.slane %v6409, 4
        %v6412 = vshll.u32 %v6297, 16
        %v6414 = vrot.slane %v6412, 5
        %v6415 = vsel %vm938, %v6410, %v6414
        %v6416 = vshrl.u32 %v6297, 16
        %v6418 = vrot.slane %v6416, 4
        %v6419 = vor.u32 %v6418, %v6414
        %v6420 = vrot.slane %v6419, 4
        %v6422 = vshll.u32 %v6325, 16
        %v6424 = vrot.slane %v6422, 5
        %v6425 = vsel %vm938, %v6420, %v6424
        %v6427 = vshrl.u32 %v6298, 16
        %v6429 = vrot.slane %v6427, 4
        %v6430 = vshll.u32 %v6298, 16
        %v6432 = vrot.slane %v6430, 5
        %v6433 = vor.u32 %v6429, %v6432
        %v6434 = vrot.slane %v6433, 4
        %v6436 = vshll.u32 %v6299, 16
        %v6438 = vrot.slane %v6436, 5
        %v6439 = vsel %vm938, %v6434, %v6438
        %v6440 = vshrl.u32 %v6299, 16
        %v6442 = vrot.slane %v6440, 4
        %v6443 = vor.u32 %v6442, %v6438
        %v6444 = vrot.slane %v6443, 4
        %v6446 = vshll.u32 %v6326, 16
        %v6448 = vrot.slane %v6446, 5
        %v6449 = vsel %vm938, %v6444, %v6448
        %v6451 = vshrl.u32 %v6300, 16
        %v6453 = vrot.slane %v6451, 4
        %v6454 = vshll.u32 %v6300, 16
        %v6456 = vrot.slane %v6454, 5
        %v6457 = vor.u32 %v6453, %v6456
        %v6458 = vrot.slane %v6457, 4
        %v6460 = vshll.u32 %v6301, 16
        %v6462 = vrot.slane %v6460, 5
        %v6463 = vsel %vm938, %v6458, %v6462
        %v6464 = vshrl.u32 %v6301, 16
        %v6466 = vrot.slane %v6464, 4
        %v6467 = vor.u32 %v6466, %v6462
        %v6468 = vrot.slane %v6467, 4
        %v6470 = vshll.u32 %v6327, 16
        %v6472 = vrot.slane %v6470, 5
        %v6473 = vsel %vm938, %v6468, %v6472
        %v6475 = vshrl.u32 %v6302, 16
        %v6477 = vrot.slane %v6475, 4
        %v6478 = vshll.u32 %v6302, 16
        %v6480 = vrot.slane %v6478, 5
        %v6481 = vor.u32 %v6477, %v6480
        %v6482 = vrot.slane %v6481, 4
        %v6484 = vshll.u32 %v6303, 16
        %v6486 = vrot.slane %v6484, 5
        %v6487 = vsel %vm938, %v6482, %v6486
        %v6488 = vshrl.u32 %v6303, 16
        %v6490 = vrot.slane %v6488, 4
        %v6491 = vor.u32 %v6490, %v6486
        %v6492 = vrot.slane %v6491, 4
        %v6494 = vshll.u32 %v6328, 16
        %v6496 = vrot.slane %v6494, 5
        %v6497 = vsel %vm938, %v6492, %v6496
        %v6499 = vshrl.u32 %v6304, 16
        %v6501 = vrot.slane %v6499, 4
        %v6502 = vshll.u32 %v6304, 16
        %v6504 = vrot.slane %v6502, 5
        %v6505 = vor.u32 %v6501, %v6504
        %v6506 = vrot.slane %v6505, 4
        %v6508 = vshll.u32 %v6305, 16
        %v6510 = vrot.slane %v6508, 5
        %v6511 = vsel %vm938, %v6506, %v6510
        %v6512 = vshrl.u32 %v6305, 16
        %v6514 = vrot.slane %v6512, 4
        %v6515 = vor.u32 %v6514, %v6510
        %v6516 = vrot.slane %v6515, 4
        %v6518 = vshll.u32 %v6329, 16
        %v6520 = vrot.slane %v6518, 5
        %v6521 = vsel %vm938, %v6516, %v6520
        %s6522 = scalar_lea.vmem [#allocation7], 64
        %v6523 = vld [vmem:[%s6522] sm:$0xf]
        %v6524 = vld [vmem:[%s6522 + $0x4] sm:$0xf]
        %v6525 = vld [vmem:[%s6522 + $0x8] sm:$0xf]
        %v6526 = vld [vmem:[%s6522 + $0xc] sm:$0xf]
        %v6527 = vld [vmem:[%s6522 + $0x10] sm:$0xf]
        %v6528 = vld [vmem:[%s6522 + $0x14] sm:$0xf]
        %v6529 = vld [vmem:[%s6522 + $0x18] sm:$0xf]
        %v6530 = vld [vmem:[%s6522 + $0x1c] sm:$0xf]
        %v6531 = vld [vmem:[%s6522 + $0x20] sm:$0xf]
        %v6532 = vld [vmem:[%s6522 + $0x24] sm:$0xf]
        %v6533 = vld [vmem:[%s6522 + $0x28] sm:$0xf]
        %v6534 = vld [vmem:[%s6522 + $0x2c] sm:$0xf]
        %v6535 = vld [vmem:[%s6522 + $0x30] sm:$0xf]
        %v6536 = vld [vmem:[%s6522 + $0x34] sm:$0xf]
        %v6537 = vld [vmem:[%s6522 + $0x38] sm:$0xf]
        %v6538 = vld [vmem:[%s6522 + $0x3c] sm:$0xf]
        %v6539 = vunpack.c.l.b16 %v6343
        %v6540 = vunpack.c.l.b16 %v6353
        %v6541 = vunpack.c.l.b16 %v6367
        %v6542 = vunpack.c.l.b16 %v6377
        %v6543 = vunpack.c.l.b16 %v6391
        %v6544 = vunpack.c.l.b16 %v6401
        %v6545 = vunpack.c.l.b16 %v6415
        %v6546 = vunpack.c.l.b16 %v6425
        %v6547 = vunpack.c.l.b16 %v6439
        %v6548 = vunpack.c.l.b16 %v6449
        %v6549 = vunpack.c.l.b16 %v6463
        %v6550 = vunpack.c.l.b16 %v6473
        %v6551 = vunpack.c.l.b16 %v6487
        %v6552 = vunpack.c.l.b16 %v6497
        %v6553 = vunpack.c.l.b16 %v6511
        %v6554 = vunpack.c.l.b16 %v6521
        %v6555 = vpack.c.b16 %v6540, %v6539
        %v6556 = vpack.c.b16 %v6542, %v6541
        %v6557 = vpack.c.b16 %v6544, %v6543
        %v6558 = vpack.c.b16 %v6546, %v6545
        %v6559 = vpack.c.b16 %v6548, %v6547
        %v6560 = vpack.c.b16 %v6550, %v6549
        %v6561 = vpack.c.b16 %v6552, %v6551
        %v6562 = vpack.c.b16 %v6554, %v6553
        %v6587 = vunpack.c.l.b16 %v6523
        %v6588 = vunpack.c.l.b16 %v6524
        %v6589 = vunpack.c.l.b16 %v6525
        %v6590 = vunpack.c.l.b16 %v6526
        %v6591 = vunpack.c.l.b16 %v6527
        %v6592 = vunpack.c.l.b16 %v6528
        %v6593 = vunpack.c.l.b16 %v6529
        %v6594 = vunpack.c.l.b16 %v6530
        %v6595 = vunpack.c.l.b16 %v6531
        %v6596 = vunpack.c.l.b16 %v6532
        %v6597 = vunpack.c.l.b16 %v6533
        %v6598 = vunpack.c.l.b16 %v6534
        %v6599 = vunpack.c.l.b16 %v6535
        %v6600 = vunpack.c.l.b16 %v6536
        %v6601 = vunpack.c.l.b16 %v6537
        %v6602 = vunpack.c.l.b16 %v6538
        %v6603 = vpack.c.b16 %v6588, %v6587
        %v6604 = vpack.c.b16 %v6590, %v6589
        %v6605 = vpack.c.b16 %v6592, %v6591
        %v6606 = vpack.c.b16 %v6594, %v6593
        %v6607 = vpack.c.b16 %v6596, %v6595
        %v6608 = vpack.c.b16 %v6598, %v6597
        %v6609 = vpack.c.b16 %v6600, %v6599
        %v6610 = vpack.c.b16 %v6602, %v6601
        %6619 = vmatpush.bf16.msra.mxu0 %v6610
        %6620 = vmatpush.bf16.msra.mxu0 %v6609
        %6621 = vmatpush.bf16.msra.mxu0 %v6608
        %6622 = vmatpush.bf16.msra.mxu0 %v6607
        %6623 = vmatpush.bf16.msra.mxu0 %v6606
        %6624 = vmatpush.bf16.msra.mxu0 %v6605
        %6625 = vmatpush.bf16.msra.mxu0 %v6604
        %6626 = vmatpush.bf16.msra.mxu0 %v6603
        %6627 = vmatmul.bf16.gmra.mxu0 %v6555
        %v6628 = vpop.f32.mrf.mxu0
        %v6629 = vadd.f32 0.0, %v6628
        %v6630 = vpop.f32.mrf.mxu0
        %v6631 = vadd.f32 0.0, %v6630
        %6632 = vmatmul.bf16.gmra.mxu0 %v6556
        %v6633 = vpop.f32.mrf.mxu0
        %v6634 = vadd.f32 0.0, %v6633
        %v6635 = vpop.f32.mrf.mxu0
        %v6636 = vadd.f32 0.0, %v6635
        %6637 = vmatmul.bf16.gmra.mxu0 %v6557
        %v6638 = vpop.f32.mrf.mxu0
        %v6639 = vadd.f32 0.0, %v6638
        %v6640 = vpop.f32.mrf.mxu0
        %v6641 = vadd.f32 0.0, %v6640
        %6642 = vmatmul.bf16.gmra.mxu0 %v6558
        %v6643 = vpop.f32.mrf.mxu0
        %v6644 = vadd.f32 0.0, %v6643
        %v6645 = vpop.f32.mrf.mxu0
        %v6646 = vadd.f32 0.0, %v6645
        %6647 = vmatmul.bf16.gmra.mxu0 %v6559
        %v6648 = vpop.f32.mrf.mxu0
        %v6649 = vadd.f32 0.0, %v6648
        %v6650 = vpop.f32.mrf.mxu0
        %v6651 = vadd.f32 0.0, %v6650
        %6652 = vmatmul.bf16.gmra.mxu0 %v6560
        %v6653 = vpop.f32.mrf.mxu0
        %v6654 = vadd.f32 0.0, %v6653
        %v6655 = vpop.f32.mrf.mxu0
        %v6656 = vadd.f32 0.0, %v6655
        %6657 = vmatmul.bf16.gmra.mxu0 %v6561
        %v6658 = vpop.f32.mrf.mxu0
        %v6659 = vadd.f32 0.0, %v6658
        %v6660 = vpop.f32.mrf.mxu0
        %v6661 = vadd.f32 0.0, %v6660
        %6662 = vmatmul.bf16.gmra.mxu0 %v6562
        %v6663 = vpop.f32.mrf.mxu0
        %v6664 = vadd.f32 0.0, %v6663
        %v6665 = vpop.f32.mrf.mxu0
        %v6666 = vadd.f32 0.0, %v6665
        %6667 = vdwg.mxu0
        %v6684 = vunpack.c.l.b16 %v6290
        %v6685 = vunpack.c.l.b16 %v6291
        %v6686 = vunpack.c.l.b16 %v6292
        %v6687 = vunpack.c.l.b16 %v6293
        %v6688 = vunpack.c.l.b16 %v6294
        %v6689 = vunpack.c.l.b16 %v6295
        %v6690 = vunpack.c.l.b16 %v6296
        %v6691 = vunpack.c.l.b16 %v6297
        %v6692 = vunpack.c.l.b16 %v6298
        %v6693 = vunpack.c.l.b16 %v6299
        %v6694 = vunpack.c.l.b16 %v6300
        %v6695 = vunpack.c.l.b16 %v6301
        %v6696 = vunpack.c.l.b16 %v6302
        %v6697 = vunpack.c.l.b16 %v6303
        %v6698 = vunpack.c.l.b16 %v6304
        %v6699 = vunpack.c.l.b16 %v6305
        %v6700 = vpack.c.b16 %v6685, %v6684
        %v6701 = vpack.c.b16 %v6687, %v6686
        %v6702 = vpack.c.b16 %v6689, %v6688
        %v6703 = vpack.c.b16 %v6691, %v6690
        %v6704 = vpack.c.b16 %v6693, %v6692
        %v6705 = vpack.c.b16 %v6695, %v6694
        %v6706 = vpack.c.b16 %v6697, %v6696
        %v6707 = vpack.c.b16 %v6699, %v6698
        %v6732 = vunpack.c.l.b16 %v6306
        %v6733 = vunpack.c.l.b16 %v6307
        %v6734 = vunpack.c.l.b16 %v6308
        %v6735 = vunpack.c.l.b16 %v6309
        %v6736 = vunpack.c.l.b16 %v6310
        %v6737 = vunpack.c.l.b16 %v6311
        %v6738 = vunpack.c.l.b16 %v6312
        %v6739 = vunpack.c.l.b16 %v6313
        %v6740 = vunpack.c.l.b16 %v6314
        %v6741 = vunpack.c.l.b16 %v6315
        %v6742 = vunpack.c.l.b16 %v6316
        %v6743 = vunpack.c.l.b16 %v6317
        %v6744 = vunpack.c.l.b16 %v6318
        %v6745 = vunpack.c.l.b16 %v6319
        %v6746 = vunpack.c.l.b16 %v6320
        %v6747 = vunpack.c.l.b16 %v6321
        %v6748 = vpack.c.b16 %v6733, %v6732
        %v6749 = vpack.c.b16 %v6735, %v6734
        %v6750 = vpack.c.b16 %v6737, %v6736
        %v6751 = vpack.c.b16 %v6739, %v6738
        %v6752 = vpack.c.b16 %v6741, %v6740
        %v6753 = vpack.c.b16 %v6743, %v6742
        %v6754 = vpack.c.b16 %v6745, %v6744
        %v6755 = vpack.c.b16 %v6747, %v6746
        %6764 = vmatpush.bf16.msra.mxu0 %v6755
        %6765 = vmatpush.bf16.msra.mxu0 %v6754
        %6766 = vmatpush.bf16.msra.mxu0 %v6753
        %6767 = vmatpush.bf16.msra.mxu0 %v6752
        %6768 = vmatpush.bf16.msra.mxu0 %v6751
        %6769 = vmatpush.bf16.msra.mxu0 %v6750
        %6770 = vmatpush.bf16.msra.mxu0 %v6749
        %6771 = vmatpush.bf16.msra.mxu0 %v6748
        %6772 = vmatmul.bf16.gmra.mxu0 %v6700
        %v6773 = vpop.f32.mrf.mxu0
        %v6774 = vadd.f32 %v6629, %v6773
        %v6775 = vpop.f32.mrf.mxu0
        %v6776 = vadd.f32 %v6631, %v6775
        %6777 = vmatmul.bf16.gmra.mxu0 %v6701
        %v6778 = vpop.f32.mrf.mxu0
        %v6779 = vadd.f32 %v6634, %v6778
        %v6780 = vpop.f32.mrf.mxu0
        %v6781 = vadd.f32 %v6636, %v6780
        %6782 = vmatmul.bf16.gmra.mxu0 %v6702
        %v6783 = vpop.f32.mrf.mxu0
        %v6784 = vadd.f32 %v6639, %v6783
        %v6785 = vpop.f32.mrf.mxu0
        %v6786 = vadd.f32 %v6641, %v6785
        %6787 = vmatmul.bf16.gmra.mxu0 %v6703
        %v6788 = vpop.f32.mrf.mxu0
        %v6789 = vadd.f32 %v6644, %v6788
        %v6790 = vpop.f32.mrf.mxu0
        %v6791 = vadd.f32 %v6646, %v6790
        %6792 = vmatmul.bf16.gmra.mxu0 %v6704
        %v6793 = vpop.f32.mrf.mxu0
        %v6794 = vadd.f32 %v6649, %v6793
        %v6795 = vpop.f32.mrf.mxu0
        %v6796 = vadd.f32 %v6651, %v6795
        %6797 = vmatmul.bf16.gmra.mxu0 %v6705
        %v6798 = vpop.f32.mrf.mxu0
        %v6799 = vadd.f32 %v6654, %v6798
        %v6800 = vpop.f32.mrf.mxu0
        %v6801 = vadd.f32 %v6656, %v6800
        %6802 = vmatmul.bf16.gmra.mxu0 %v6706
        %v6803 = vpop.f32.mrf.mxu0
        %v6804 = vadd.f32 %v6659, %v6803
        %v6805 = vpop.f32.mrf.mxu0
        %v6806 = vadd.f32 %v6661, %v6805
        %6807 = vmatmul.bf16.gmra.mxu0 %v6707
        %v6808 = vpop.f32.mrf.mxu0
        %v6809 = vadd.f32 %v6664, %v6808
        %v6810 = vpop.f32.mrf.mxu0
        %v6811 = vadd.f32 %v6666, %v6810
        %6812 = vdwg.mxu0
        %v6813 = vld [vmem:[#allocation3] sm:$0xe]
        %v6814 = vld [vmem:[#allocation3 + $0xc] sm:$0xe]
        %v6815 = vld [vmem:[#allocation3 + $0x18] sm:$0xe]
        %v6816 = vld [vmem:[#allocation3 + $0x24] sm:$0xe]
        %v6817 = vld [vmem:[#allocation3 + $0x30] sm:$0xe]
        %v6818 = vld [vmem:[#allocation3 + $0x3c] sm:$0xe]
        %v6819 = vld [vmem:[#allocation3 + $0x48] sm:$0xe]
        %v6820 = vld [vmem:[#allocation3 + $0x54] sm:$0xe]
        %v6837 = vrot.slane %v6813, 5
        %v6838 = vrot.slane %v6837, 4
        %v6839 = vrot.slane %v6291, 5
        %v6840 = vsel %vm1448, %v6838, %v6839
        %v6841 = vrot.slane %v6839, 4
        %v6842 = vrot.slane %v6322, 5
        %v6843 = vsel %vm1448, %v6841, %v6842
        %v6844 = vrot.slane %v6814, 5
        %v6845 = vrot.slane %v6844, 4
        %v6846 = vrot.slane %v6293, 5
        %v6847 = vsel %vm1448, %v6845, %v6846
        %v6848 = vrot.slane %v6846, 4
        %v6849 = vrot.slane %v6323, 5
        %v6850 = vsel %vm1448, %v6848, %v6849
        %v6851 = vrot.slane %v6815, 5
        %v6852 = vrot.slane %v6851, 4
        %v6853 = vrot.slane %v6295, 5
        %v6854 = vsel %vm1448, %v6852, %v6853
        %v6855 = vrot.slane %v6853, 4
        %v6856 = vrot.slane %v6324, 5
        %v6857 = vsel %vm1448, %v6855, %v6856
        %v6858 = vrot.slane %v6816, 5
        %v6859 = vrot.slane %v6858, 4
        %v6860 = vrot.slane %v6297, 5
        %v6861 = vsel %vm1448, %v6859, %v6860
        %v6862 = vrot.slane %v6860, 4
        %v6863 = vrot.slane %v6325, 5
        %v6864 = vsel %vm1448, %v6862, %v6863
        %v6865 = vrot.slane %v6817, 5
        %v6866 = vrot.slane %v6865, 4
        %v6867 = vrot.slane %v6299, 5
        %v6868 = vsel %vm1448, %v6866, %v6867
        %v6869 = vrot.slane %v6867, 4
        %v6870 = vrot.slane %v6326, 5
        %v6871 = vsel %vm1448, %v6869, %v6870
        %v6872 = vrot.slane %v6818, 5
        %v6873 = vrot.slane %v6872, 4
        %v6874 = vrot.slane %v6301, 5
        %v6875 = vsel %vm1448, %v6873, %v6874
        %v6876 = vrot.slane %v6874, 4
        %v6877 = vrot.slane %v6327, 5
        %v6878 = vsel %vm1448, %v6876, %v6877
        %v6879 = vrot.slane %v6819, 5
        %v6880 = vrot.slane %v6879, 4
        %v6881 = vrot.slane %v6303, 5
        %v6882 = vsel %vm1448, %v6880, %v6881
        %v6883 = vrot.slane %v6881, 4
        %v6884 = vrot.slane %v6328, 5
        %v6885 = vsel %vm1448, %v6883, %v6884
        %v6886 = vrot.slane %v6820, 5
        %v6887 = vrot.slane %v6886, 4
        %v6888 = vrot.slane %v6305, 5
        %v6889 = vsel %vm1448, %v6887, %v6888
        %v6890 = vrot.slane %v6888, 4
        %v6891 = vrot.slane %v6329, 5
        %v6892 = vsel %vm1448, %v6890, %v6891
        %s6893 = scalar_lea.vmem [#allocation7], 128
        %v6894 = vld [vmem:[%s6893] sm:$0xf]
        %v6895 = vld [vmem:[%s6893 + $0x4] sm:$0xf]
        %v6896 = vld [vmem:[%s6893 + $0x8] sm:$0xf]
        %v6897 = vld [vmem:[%s6893 + $0xc] sm:$0xf]
        %v6898 = vld [vmem:[%s6893 + $0x10] sm:$0xf]
        %v6899 = vld [vmem:[%s6893 + $0x14] sm:$0xf]
        %v6900 = vld [vmem:[%s6893 + $0x18] sm:$0xf]
        %v6901 = vld [vmem:[%s6893 + $0x1c] sm:$0xf]
        %v6902 = vld [vmem:[%s6893 + $0x20] sm:$0xf]
        %v6903 = vld [vmem:[%s6893 + $0x24] sm:$0xf]
        %v6904 = vld [vmem:[%s6893 + $0x28] sm:$0xf]
        %v6905 = vld [vmem:[%s6893 + $0x2c] sm:$0xf]
        %v6906 = vld [vmem:[%s6893 + $0x30] sm:$0xf]
        %v6907 = vld [vmem:[%s6893 + $0x34] sm:$0xf]
        %v6908 = vld [vmem:[%s6893 + $0x38] sm:$0xf]
        %v6909 = vld [vmem:[%s6893 + $0x3c] sm:$0xf]
        %v6910 = vunpack.c.l.b16 %v6840
        %v6911 = vunpack.c.l.b16 %v6843
        %v6912 = vunpack.c.l.b16 %v6847
        %v6913 = vunpack.c.l.b16 %v6850
        %v6914 = vunpack.c.l.b16 %v6854
        %v6915 = vunpack.c.l.b16 %v6857
        %v6916 = vunpack.c.l.b16 %v6861
        %v6917 = vunpack.c.l.b16 %v6864
        %v6918 = vunpack.c.l.b16 %v6868
        %v6919 = vunpack.c.l.b16 %v6871
        %v6920 = vunpack.c.l.b16 %v6875
        %v6921 = vunpack.c.l.b16 %v6878
        %v6922 = vunpack.c.l.b16 %v6882
        %v6923 = vunpack.c.l.b16 %v6885
        %v6924 = vunpack.c.l.b16 %v6889
        %v6925 = vunpack.c.l.b16 %v6892
        %v6926 = vpack.c.b16 %v6911, %v6910
        %v6927 = vpack.c.b16 %v6913, %v6912
        %v6928 = vpack.c.b16 %v6915, %v6914
        %v6929 = vpack.c.b16 %v6917, %v6916
        %v6930 = vpack.c.b16 %v6919, %v6918
        %v6931 = vpack.c.b16 %v6921, %v6920
        %v6932 = vpack.c.b16 %v6923, %v6922
        %v6933 = vpack.c.b16 %v6925, %v6924
        %v6958 = vunpack.c.l.b16 %v6894
        %v6959 = vunpack.c.l.b16 %v6895
        %v6960 = vunpack.c.l.b16 %v6896
        %v6961 = vunpack.c.l.b16 %v6897
        %v6962 = vunpack.c.l.b16 %v6898
        %v6963 = vunpack.c.l.b16 %v6899
        %v6964 = vunpack.c.l.b16 %v6900
        %v6965 = vunpack.c.l.b16 %v6901
        %v6966 = vunpack.c.l.b16 %v6902
        %v6967 = vunpack.c.l.b16 %v6903
        %v6968 = vunpack.c.l.b16 %v6904
        %v6969 = vunpack.c.l.b16 %v6905
        %v6970 = vunpack.c.l.b16 %v6906
        %v6971 = vunpack.c.l.b16 %v6907
        %v6972 = vunpack.c.l.b16 %v6908
        %v6973 = vunpack.c.l.b16 %v6909
        %v6974 = vpack.c.b16 %v6959, %v6958
        %v6975 = vpack.c.b16 %v6961, %v6960
        %v6976 = vpack.c.b16 %v6963, %v6962
        %v6977 = vpack.c.b16 %v6965, %v6964
        %v6978 = vpack.c.b16 %v6967, %v6966
        %v6979 = vpack.c.b16 %v6969, %v6968
        %v6980 = vpack.c.b16 %v6971, %v6970
        %v6981 = vpack.c.b16 %v6973, %v6972
        %6990 = vmatpush.bf16.msra.mxu0 %v6981
        %6991 = vmatpush.bf16.msra.mxu0 %v6980
        %6992 = vmatpush.bf16.msra.mxu0 %v6979
        %6993 = vmatpush.bf16.msra.mxu0 %v6978
        %6994 = vmatpush.bf16.msra.mxu0 %v6977
        %6995 = vmatpush.bf16.msra.mxu0 %v6976
        %6996 = vmatpush.bf16.msra.mxu0 %v6975
        %6997 = vmatpush.bf16.msra.mxu0 %v6974
        %6998 = vmatmul.bf16.gmra.mxu0 %v6926
        %v6999 = vpop.f32.mrf.mxu0
        %v7000 = vadd.f32 0.0, %v6999
        %v7001 = vpop.f32.mrf.mxu0
        %v7002 = vadd.f32 0.0, %v7001
        %7003 = vmatmul.bf16.gmra.mxu0 %v6927
        %v7004 = vpop.f32.mrf.mxu0
        %v7005 = vadd.f32 0.0, %v7004
        %v7006 = vpop.f32.mrf.mxu0
        %v7007 = vadd.f32 0.0, %v7006
        %7008 = vmatmul.bf16.gmra.mxu0 %v6928
        %v7009 = vpop.f32.mrf.mxu0
        %v7010 = vadd.f32 0.0, %v7009
        %v7011 = vpop.f32.mrf.mxu0
        %v7012 = vadd.f32 0.0, %v7011
        %7013 = vmatmul.bf16.gmra.mxu0 %v6929
        %v7014 = vpop.f32.mrf.mxu0
        %v7015 = vadd.f32 0.0, %v7014
        %v7016 = vpop.f32.mrf.mxu0
        %v7017 = vadd.f32 0.0, %v7016
        %7018 = vmatmul.bf16.gmra.mxu0 %v6930
        %v7019 = vpop.f32.mrf.mxu0
        %v7020 = vadd.f32 0.0, %v7019
        %v7021 = vpop.f32.mrf.mxu0
        %v7022 = vadd.f32 0.0, %v7021
        %7023 = vmatmul.bf16.gmra.mxu0 %v6931
        %v7024 = vpop.f32.mrf.mxu0
        %v7025 = vadd.f32 0.0, %v7024
        %v7026 = vpop.f32.mrf.mxu0
        %v7027 = vadd.f32 0.0, %v7026
        %7028 = vmatmul.bf16.gmra.mxu0 %v6932
        %v7029 = vpop.f32.mrf.mxu0
        %v7030 = vadd.f32 0.0, %v7029
        %v7031 = vpop.f32.mrf.mxu0
        %v7032 = vadd.f32 0.0, %v7031
        %7033 = vmatmul.bf16.gmra.mxu0 %v6933
        %v7034 = vpop.f32.mrf.mxu0
        %v7035 = vadd.f32 0.0, %v7034
        %v7036 = vpop.f32.mrf.mxu0
        %v7037 = vadd.f32 0.0, %v7036
        %7038 = vdwg.mxu0
        %v7039 = vadd.f32 %v6774, %v7000
        %v7040 = vadd.f32 %v6776, %v7002
        %v7041 = vadd.f32 %v6779, %v7005
        %v7042 = vadd.f32 %v6781, %v7007
        %v7043 = vadd.f32 %v6784, %v7010
        %v7044 = vadd.f32 %v6786, %v7012
        %v7045 = vadd.f32 %v6789, %v7015
        %v7046 = vadd.f32 %v6791, %v7017
        %v7047 = vadd.f32 %v6794, %v7020
        %v7048 = vadd.f32 %v6796, %v7022
        %v7049 = vadd.f32 %v6799, %v7025
        %v7050 = vadd.f32 %v6801, %v7027
        %v7051 = vadd.f32 %v6804, %v7030
        %v7052 = vadd.f32 %v6806, %v7032
        %v7053 = vadd.f32 %v6809, %v7035
        %v7054 = vadd.f32 %v6811, %v7037
        %v7055 = vld [vmem:[%s3542] sm:$0xf]
        %v7056 = vld [vmem:[%s3542 + $0x4] sm:$0xf]
        %v7057 = vld [vmem:[%s3542 + $0xc] sm:$0xf]
        %v7058 = vld [vmem:[%s3542 + $0x10] sm:$0xf]
        %v7059 = vld [vmem:[%s3542 + $0x18] sm:$0xf]
        %v7060 = vld [vmem:[%s3542 + $0x1c] sm:$0xf]
        %v7061 = vld [vmem:[%s3542 + $0x24] sm:$0xf]
        %v7062 = vld [vmem:[%s3542 + $0x28] sm:$0xf]
        %v7063 = vld [vmem:[%s3542 + $0x30] sm:$0xf]
        %v7064 = vld [vmem:[%s3542 + $0x34] sm:$0xf]
        %v7065 = vld [vmem:[%s3542 + $0x3c] sm:$0xf]
        %v7066 = vld [vmem:[%s3542 + $0x40] sm:$0xf]
        %v7067 = vld [vmem:[%s3542 + $0x48] sm:$0xf]
        %v7068 = vld [vmem:[%s3542 + $0x4c] sm:$0xf]
        %v7069 = vld [vmem:[%s3542 + $0x54] sm:$0xf]
        %v7070 = vld [vmem:[%s3542 + $0x58] sm:$0xf]
        %s7071 = scalar_lea.vmem [#allocation7], 192
        %v7072 = vld [vmem:[%s7071] sm:$0xf]
        %v7073 = vld [vmem:[%s7071 + $0x4] sm:$0xf]
        %v7074 = vld [vmem:[%s7071 + $0x8] sm:$0xf]
        %v7075 = vld [vmem:[%s7071 + $0xc] sm:$0xf]
        %v7076 = vld [vmem:[%s7071 + $0x10] sm:$0xf]
        %v7077 = vld [vmem:[%s7071 + $0x14] sm:$0xf]
        %v7078 = vld [vmem:[%s7071 + $0x18] sm:$0xf]
        %v7079 = vld [vmem:[%s7071 + $0x1c] sm:$0xf]
        %v7080 = vld [vmem:[%s7071 + $0x20] sm:$0xf]
        %v7081 = vld [vmem:[%s7071 + $0x24] sm:$0xf]
        %v7082 = vld [vmem:[%s7071 + $0x28] sm:$0xf]
        %v7083 = vld [vmem:[%s7071 + $0x2c] sm:$0xf]
        %v7084 = vld [vmem:[%s7071 + $0x30] sm:$0xf]
        %v7085 = vld [vmem:[%s7071 + $0x34] sm:$0xf]
        %v7086 = vld [vmem:[%s7071 + $0x38] sm:$0xf]
        %v7087 = vld [vmem:[%s7071 + $0x3c] sm:$0xf]
        %v7104 = vunpack.c.l.b16 %v7055
        %v7105 = vunpack.c.l.b16 %v7056
        %v7106 = vunpack.c.l.b16 %v7057
        %v7107 = vunpack.c.l.b16 %v7058
        %v7108 = vunpack.c.l.b16 %v7059
        %v7109 = vunpack.c.l.b16 %v7060
        %v7110 = vunpack.c.l.b16 %v7061
        %v7111 = vunpack.c.l.b16 %v7062
        %v7112 = vunpack.c.l.b16 %v7063
        %v7113 = vunpack.c.l.b16 %v7064
        %v7114 = vunpack.c.l.b16 %v7065
        %v7115 = vunpack.c.l.b16 %v7066
        %v7116 = vunpack.c.l.b16 %v7067
        %v7117 = vunpack.c.l.b16 %v7068
        %v7118 = vunpack.c.l.b16 %v7069
        %v7119 = vunpack.c.l.b16 %v7070
        %v7120 = vpack.c.b16 %v7105, %v7104
        %v7121 = vpack.c.b16 %v7107, %v7106
        %v7122 = vpack.c.b16 %v7109, %v7108
        %v7123 = vpack.c.b16 %v7111, %v7110
        %v7124 = vpack.c.b16 %v7113, %v7112
        %v7125 = vpack.c.b16 %v7115, %v7114
        %v7126 = vpack.c.b16 %v7117, %v7116
        %v7127 = vpack.c.b16 %v7119, %v7118
        %v7152 = vunpack.c.l.b16 %v7072
        %v7153 = vunpack.c.l.b16 %v7073
        %v7154 = vunpack.c.l.b16 %v7074
        %v7155 = vunpack.c.l.b16 %v7075
        %v7156 = vunpack.c.l.b16 %v7076
        %v7157 = vunpack.c.l.b16 %v7077
        %v7158 = vunpack.c.l.b16 %v7078
        %v7159 = vunpack.c.l.b16 %v7079
        %v7160 = vunpack.c.l.b16 %v7080
        %v7161 = vunpack.c.l.b16 %v7081
        %v7162 = vunpack.c.l.b16 %v7082
        %v7163 = vunpack.c.l.b16 %v7083
        %v7164 = vunpack.c.l.b16 %v7084
        %v7165 = vunpack.c.l.b16 %v7085
        %v7166 = vunpack.c.l.b16 %v7086
        %v7167 = vunpack.c.l.b16 %v7087
        %v7168 = vpack.c.b16 %v7153, %v7152
        %v7169 = vpack.c.b16 %v7155, %v7154
        %v7170 = vpack.c.b16 %v7157, %v7156
        %v7171 = vpack.c.b16 %v7159, %v7158
        %v7172 = vpack.c.b16 %v7161, %v7160
        %v7173 = vpack.c.b16 %v7163, %v7162
        %v7174 = vpack.c.b16 %v7165, %v7164
        %v7175 = vpack.c.b16 %v7167, %v7166
        %7184 = vmatpush.bf16.msra.mxu0 %v7175
        %7185 = vmatpush.bf16.msra.mxu0 %v7174
        %7186 = vmatpush.bf16.msra.mxu0 %v7173
        %7187 = vmatpush.bf16.msra.mxu0 %v7172
        %7188 = vmatpush.bf16.msra.mxu0 %v7171
        %7189 = vmatpush.bf16.msra.mxu0 %v7170
        %7190 = vmatpush.bf16.msra.mxu0 %v7169
        %7191 = vmatpush.bf16.msra.mxu0 %v7168
        %7192 = vmatmul.bf16.gmra.mxu0 %v7120
        %v7193 = vpop.f32.mrf.mxu0
        %v7194 = vadd.f32 0.0, %v7193
        %v7195 = vpop.f32.mrf.mxu0
        %v7196 = vadd.f32 0.0, %v7195
        %7197 = vmatmul.bf16.gmra.mxu0 %v7121
        %v7198 = vpop.f32.mrf.mxu0
        %v7199 = vadd.f32 0.0, %v7198
        %v7200 = vpop.f32.mrf.mxu0
        %v7201 = vadd.f32 0.0, %v7200
        %7202 = vmatmul.bf16.gmra.mxu0 %v7122
        %v7203 = vpop.f32.mrf.mxu0
        %v7204 = vadd.f32 0.0, %v7203
        %v7205 = vpop.f32.mrf.mxu0
        %v7206 = vadd.f32 0.0, %v7205
        %7207 = vmatmul.bf16.gmra.mxu0 %v7123
        %v7208 = vpop.f32.mrf.mxu0
        %v7209 = vadd.f32 0.0, %v7208
        %v7210 = vpop.f32.mrf.mxu0
        %v7211 = vadd.f32 0.0, %v7210
        %7212 = vmatmul.bf16.gmra.mxu0 %v7124
        %v7213 = vpop.f32.mrf.mxu0
        %v7214 = vadd.f32 0.0, %v7213
        %v7215 = vpop.f32.mrf.mxu0
        %v7216 = vadd.f32 0.0, %v7215
        %7217 = vmatmul.bf16.gmra.mxu0 %v7125
        %v7218 = vpop.f32.mrf.mxu0
        %v7219 = vadd.f32 0.0, %v7218
        %v7220 = vpop.f32.mrf.mxu0
        %v7221 = vadd.f32 0.0, %v7220
        %7222 = vmatmul.bf16.gmra.mxu0 %v7126
        %v7223 = vpop.f32.mrf.mxu0
        %v7224 = vadd.f32 0.0, %v7223
        %v7225 = vpop.f32.mrf.mxu0
        %v7226 = vadd.f32 0.0, %v7225
        %7227 = vmatmul.bf16.gmra.mxu0 %v7127
        %v7228 = vpop.f32.mrf.mxu0
        %v7229 = vadd.f32 0.0, %v7228
        %v7230 = vpop.f32.mrf.mxu0
        %v7231 = vadd.f32 0.0, %v7230
        %7232 = vdwg.mxu0
        %v7233 = vadd.f32 %v7039, %v7194
        %v7234 = vadd.f32 %v7040, %v7196
        %v7235 = vadd.f32 %v7041, %v7199
        %v7236 = vadd.f32 %v7042, %v7201
        %v7237 = vadd.f32 %v7043, %v7204
        %v7238 = vadd.f32 %v7044, %v7206
        %v7239 = vadd.f32 %v7045, %v7209
        %v7240 = vadd.f32 %v7046, %v7211
        %v7241 = vadd.f32 %v7047, %v7214
        %v7242 = vadd.f32 %v7048, %v7216
        %v7243 = vadd.f32 %v7049, %v7219
        %v7244 = vadd.f32 %v7050, %v7221
        %v7245 = vadd.f32 %v7051, %v7224
        %v7246 = vadd.f32 %v7052, %v7226
        %v7247 = vadd.f32 %v7053, %v7229
        %v7248 = vadd.f32 %v7054, %v7231
        %v7249 = vld [vmem:[%s3542] sm:$0xf]
        %v7250 = vld [vmem:[%s3542 + $0x4] sm:$0xf]
        %v7251 = vld [vmem:[%s3542 + $0x8] sm:$0x1]
        %v7252 = vld [vmem:[%s3542 + $0xc] sm:$0xf]
        %v7253 = vld [vmem:[%s3542 + $0x10] sm:$0xf]
        %v7254 = vld [vmem:[%s3542 + $0x14] sm:$0x1]
        %v7255 = vld [vmem:[%s3542 + $0x18] sm:$0xf]
        %v7256 = vld [vmem:[%s3542 + $0x1c] sm:$0xf]
        %v7257 = vld [vmem:[%s3542 + $0x20] sm:$0x1]
        %v7258 = vld [vmem:[%s3542 + $0x24] sm:$0xf]
        %v7259 = vld [vmem:[%s3542 + $0x28] sm:$0xf]
        %v7260 = vld [vmem:[%s3542 + $0x2c] sm:$0x1]
        %v7261 = vld [vmem:[%s3542 + $0x30] sm:$0xf]
        %v7262 = vld [vmem:[%s3542 + $0x34] sm:$0xf]
        %v7263 = vld [vmem:[%s3542 + $0x38] sm:$0x1]
        %v7264 = vld [vmem:[%s3542 + $0x3c] sm:$0xf]
        %v7265 = vld [vmem:[%s3542 + $0x40] sm:$0xf]
        %v7266 = vld [vmem:[%s3542 + $0x44] sm:$0x1]
        %v7267 = vld [vmem:[%s3542 + $0x48] sm:$0xf]
        %v7268 = vld [vmem:[%s3542 + $0x4c] sm:$0xf]
        %v7269 = vld [vmem:[%s3542 + $0x50] sm:$0x1]
        %v7270 = vld [vmem:[%s3542 + $0x54] sm:$0xf]
        %v7271 = vld [vmem:[%s3542 + $0x58] sm:$0xf]
        %v7272 = vld [vmem:[%s3542 + $0x5c] sm:$0x1]
        %v7274 = vshrl.u32 %v7249, 16
        %v7276 = vrot.slane %v7274, 4
        %v7277 = vshll.u32 %v7249, 16
        %v7279 = vrot.slane %v7277, 5
        %v7280 = vor.u32 %v7276, %v7279
        %v7281 = vrot.slane %v7280, 4
        %v7283 = vshll.u32 %v7250, 16
        %v7285 = vrot.slane %v7283, 5
        %v7286 = vsel %vm938, %v7281, %v7285
        %v7287 = vshrl.u32 %v7250, 16
        %v7289 = vrot.slane %v7287, 4
        %v7290 = vor.u32 %v7289, %v7285
        %v7291 = vrot.slane %v7290, 4
        %v7293 = vshll.u32 %v7251, 16
        %v7295 = vrot.slane %v7293, 5
        %v7296 = vsel %vm938, %v7291, %v7295
        %v7298 = vshrl.u32 %v7252, 16
        %v7300 = vrot.slane %v7298, 4
        %v7301 = vshll.u32 %v7252, 16
        %v7303 = vrot.slane %v7301, 5
        %v7304 = vor.u32 %v7300, %v7303
        %v7305 = vrot.slane %v7304, 4
        %v7307 = vshll.u32 %v7253, 16
        %v7309 = vrot.slane %v7307, 5
        %v7310 = vsel %vm938, %v7305, %v7309
        %v7311 = vshrl.u32 %v7253, 16
        %v7313 = vrot.slane %v7311, 4
        %v7314 = vor.u32 %v7313, %v7309
        %v7315 = vrot.slane %v7314, 4
        %v7317 = vshll.u32 %v7254, 16
        %v7319 = vrot.slane %v7317, 5
        %v7320 = vsel %vm938, %v7315, %v7319
        %v7322 = vshrl.u32 %v7255, 16
        %v7324 = vrot.slane %v7322, 4
        %v7325 = vshll.u32 %v7255, 16
        %v7327 = vrot.slane %v7325, 5
        %v7328 = vor.u32 %v7324, %v7327
        %v7329 = vrot.slane %v7328, 4
        %v7331 = vshll.u32 %v7256, 16
        %v7333 = vrot.slane %v7331, 5
        %v7334 = vsel %vm938, %v7329, %v7333
        %v7335 = vshrl.u32 %v7256, 16
        %v7337 = vrot.slane %v7335, 4
        %v7338 = vor.u32 %v7337, %v7333
        %v7339 = vrot.slane %v7338, 4
        %v7341 = vshll.u32 %v7257, 16
        %v7343 = vrot.slane %v7341, 5
        %v7344 = vsel %vm938, %v7339, %v7343
        %v7346 = vshrl.u32 %v7258, 16
        %v7348 = vrot.slane %v7346, 4
        %v7349 = vshll.u32 %v7258, 16
        %v7351 = vrot.slane %v7349, 5
        %v7352 = vor.u32 %v7348, %v7351
        %v7353 = vrot.slane %v7352, 4
        %v7355 = vshll.u32 %v7259, 16
        %v7357 = vrot.slane %v7355, 5
        %v7358 = vsel %vm938, %v7353, %v7357
        %v7359 = vshrl.u32 %v7259, 16
        %v7361 = vrot.slane %v7359, 4
        %v7362 = vor.u32 %v7361, %v7357
        %v7363 = vrot.slane %v7362, 4
        %v7365 = vshll.u32 %v7260, 16
        %v7367 = vrot.slane %v7365, 5
        %v7368 = vsel %vm938, %v7363, %v7367
        %v7370 = vshrl.u32 %v7261, 16
        %v7372 = vrot.slane %v7370, 4
        %v7373 = vshll.u32 %v7261, 16
        %v7375 = vrot.slane %v7373, 5
        %v7376 = vor.u32 %v7372, %v7375
        %v7377 = vrot.slane %v7376, 4
        %v7379 = vshll.u32 %v7262, 16
        %v7381 = vrot.slane %v7379, 5
        %v7382 = vsel %vm938, %v7377, %v7381
        %v7383 = vshrl.u32 %v7262, 16
        %v7385 = vrot.slane %v7383, 4
        %v7386 = vor.u32 %v7385, %v7381
        %v7387 = vrot.slane %v7386, 4
        %v7389 = vshll.u32 %v7263, 16
        %v7391 = vrot.slane %v7389, 5
        %v7392 = vsel %vm938, %v7387, %v7391
        %v7394 = vshrl.u32 %v7264, 16
        %v7396 = vrot.slane %v7394, 4
        %v7397 = vshll.u32 %v7264, 16
        %v7399 = vrot.slane %v7397, 5
        %v7400 = vor.u32 %v7396, %v7399
        %v7401 = vrot.slane %v7400, 4
        %v7403 = vshll.u32 %v7265, 16
        %v7405 = vrot.slane %v7403, 5
        %v7406 = vsel %vm938, %v7401, %v7405
        %v7407 = vshrl.u32 %v7265, 16
        %v7409 = vrot.slane %v7407, 4
        %v7410 = vor.u32 %v7409, %v7405
        %v7411 = vrot.slane %v7410, 4
        %v7413 = vshll.u32 %v7266, 16
        %v7415 = vrot.slane %v7413, 5
        %v7416 = vsel %vm938, %v7411, %v7415
        %v7418 = vshrl.u32 %v7267, 16
        %v7420 = vrot.slane %v7418, 4
        %v7421 = vshll.u32 %v7267, 16
        %v7423 = vrot.slane %v7421, 5
        %v7424 = vor.u32 %v7420, %v7423
        %v7425 = vrot.slane %v7424, 4
        %v7427 = vshll.u32 %v7268, 16
        %v7429 = vrot.slane %v7427, 5
        %v7430 = vsel %vm938, %v7425, %v7429
        %v7431 = vshrl.u32 %v7268, 16
        %v7433 = vrot.slane %v7431, 4
        %v7434 = vor.u32 %v7433, %v7429
        %v7435 = vrot.slane %v7434, 4
        %v7437 = vshll.u32 %v7269, 16
        %v7439 = vrot.slane %v7437, 5
        %v7440 = vsel %vm938, %v7435, %v7439
        %v7442 = vshrl.u32 %v7270, 16
        %v7444 = vrot.slane %v7442, 4
        %v7445 = vshll.u32 %v7270, 16
        %v7447 = vrot.slane %v7445, 5
        %v7448 = vor.u32 %v7444, %v7447
        %v7449 = vrot.slane %v7448, 4
        %v7451 = vshll.u32 %v7271, 16
        %v7453 = vrot.slane %v7451, 5
        %v7454 = vsel %vm938, %v7449, %v7453
        %v7455 = vshrl.u32 %v7271, 16
        %v7457 = vrot.slane %v7455, 4
        %v7458 = vor.u32 %v7457, %v7453
        %v7459 = vrot.slane %v7458, 4
        %v7461 = vshll.u32 %v7272, 16
        %v7463 = vrot.slane %v7461, 5
        %v7464 = vsel %vm938, %v7459, %v7463
        %s7465 = scalar_lea.vmem [#allocation7], 256
        %v7466 = vld [vmem:[%s7465] sm:$0xf]
        %v7467 = vld [vmem:[%s7465 + $0x4] sm:$0xf]
        %v7468 = vld [vmem:[%s7465 + $0x8] sm:$0xf]
        %v7469 = vld [vmem:[%s7465 + $0xc] sm:$0xf]
        %v7470 = vld [vmem:[%s7465 + $0x10] sm:$0xf]
        %v7471 = vld [vmem:[%s7465 + $0x14] sm:$0xf]
        %v7472 = vld [vmem:[%s7465 + $0x18] sm:$0xf]
        %v7473 = vld [vmem:[%s7465 + $0x1c] sm:$0xf]
        %v7474 = vld [vmem:[%s7465 + $0x20] sm:$0xf]
        %v7475 = vld [vmem:[%s7465 + $0x24] sm:$0xf]
        %v7476 = vld [vmem:[%s7465 + $0x28] sm:$0xf]
        %v7477 = vld [vmem:[%s7465 + $0x2c] sm:$0xf]
        %v7478 = vld [vmem:[%s7465 + $0x30] sm:$0xf]
        %v7479 = vld [vmem:[%s7465 + $0x34] sm:$0xf]
        %v7480 = vld [vmem:[%s7465 + $0x38] sm:$0xf]
        %v7481 = vld [vmem:[%s7465 + $0x3c] sm:$0xf]
        %v7482 = vunpack.c.l.b16 %v7286
        %v7483 = vunpack.c.l.b16 %v7296
        %v7484 = vunpack.c.l.b16 %v7310
        %v7485 = vunpack.c.l.b16 %v7320
        %v7486 = vunpack.c.l.b16 %v7334
        %v7487 = vunpack.c.l.b16 %v7344
        %v7488 = vunpack.c.l.b16 %v7358
        %v7489 = vunpack.c.l.b16 %v7368
        %v7490 = vunpack.c.l.b16 %v7382
        %v7491 = vunpack.c.l.b16 %v7392
        %v7492 = vunpack.c.l.b16 %v7406
        %v7493 = vunpack.c.l.b16 %v7416
        %v7494 = vunpack.c.l.b16 %v7430
        %v7495 = vunpack.c.l.b16 %v7440
        %v7496 = vunpack.c.l.b16 %v7454
        %v7497 = vunpack.c.l.b16 %v7464
        %v7498 = vpack.c.b16 %v7483, %v7482
        %v7499 = vpack.c.b16 %v7485, %v7484
        %v7500 = vpack.c.b16 %v7487, %v7486
        %v7501 = vpack.c.b16 %v7489, %v7488
        %v7502 = vpack.c.b16 %v7491, %v7490
        %v7503 = vpack.c.b16 %v7493, %v7492
        %v7504 = vpack.c.b16 %v7495, %v7494
        %v7505 = vpack.c.b16 %v7497, %v7496
        %v7530 = vunpack.c.l.b16 %v7466
        %v7531 = vunpack.c.l.b16 %v7467
        %v7532 = vunpack.c.l.b16 %v7468
        %v7533 = vunpack.c.l.b16 %v7469
        %v7534 = vunpack.c.l.b16 %v7470
        %v7535 = vunpack.c.l.b16 %v7471
        %v7536 = vunpack.c.l.b16 %v7472
        %v7537 = vunpack.c.l.b16 %v7473
        %v7538 = vunpack.c.l.b16 %v7474
        %v7539 = vunpack.c.l.b16 %v7475
        %v7540 = vunpack.c.l.b16 %v7476
        %v7541 = vunpack.c.l.b16 %v7477
        %v7542 = vunpack.c.l.b16 %v7478
        %v7543 = vunpack.c.l.b16 %v7479
        %v7544 = vunpack.c.l.b16 %v7480
        %v7545 = vunpack.c.l.b16 %v7481
        %v7546 = vpack.c.b16 %v7531, %v7530
        %v7547 = vpack.c.b16 %v7533, %v7532
        %v7548 = vpack.c.b16 %v7535, %v7534
        %v7549 = vpack.c.b16 %v7537, %v7536
        %v7550 = vpack.c.b16 %v7539, %v7538
        %v7551 = vpack.c.b16 %v7541, %v7540
        %v7552 = vpack.c.b16 %v7543, %v7542
        %v7553 = vpack.c.b16 %v7545, %v7544
        %7562 = vmatpush.bf16.msra.mxu0 %v7553
        %7563 = vmatpush.bf16.msra.mxu0 %v7552
        %7564 = vmatpush.bf16.msra.mxu0 %v7551
        %7565 = vmatpush.bf16.msra.mxu0 %v7550
        %7566 = vmatpush.bf16.msra.mxu0 %v7549
        %7567 = vmatpush.bf16.msra.mxu0 %v7548
        %7568 = vmatpush.bf16.msra.mxu0 %v7547
        %7569 = vmatpush.bf16.msra.mxu0 %v7546
        %7570 = vmatmul.bf16.gmra.mxu0 %v7498
        %v7571 = vpop.f32.mrf.mxu0
        %v7572 = vadd.f32 0.0, %v7571
        %v7573 = vpop.f32.mrf.mxu0
        %v7574 = vadd.f32 0.0, %v7573
        %7575 = vmatmul.bf16.gmra.mxu0 %v7499
        %v7576 = vpop.f32.mrf.mxu0
        %v7577 = vadd.f32 0.0, %v7576
        %v7578 = vpop.f32.mrf.mxu0
        %v7579 = vadd.f32 0.0, %v7578
        %7580 = vmatmul.bf16.gmra.mxu0 %v7500
        %v7581 = vpop.f32.mrf.mxu0
        %v7582 = vadd.f32 0.0, %v7581
        %v7583 = vpop.f32.mrf.mxu0
        %v7584 = vadd.f32 0.0, %v7583
        %7585 = vmatmul.bf16.gmra.mxu0 %v7501
        %v7586 = vpop.f32.mrf.mxu0
        %v7587 = vadd.f32 0.0, %v7586
        %v7588 = vpop.f32.mrf.mxu0
        %v7589 = vadd.f32 0.0, %v7588
        %7590 = vmatmul.bf16.gmra.mxu0 %v7502
        %v7591 = vpop.f32.mrf.mxu0
        %v7592 = vadd.f32 0.0, %v7591
        %v7593 = vpop.f32.mrf.mxu0
        %v7594 = vadd.f32 0.0, %v7593
        %7595 = vmatmul.bf16.gmra.mxu0 %v7503
        %v7596 = vpop.f32.mrf.mxu0
        %v7597 = vadd.f32 0.0, %v7596
        %v7598 = vpop.f32.mrf.mxu0
        %v7599 = vadd.f32 0.0, %v7598
        %7600 = vmatmul.bf16.gmra.mxu0 %v7504
        %v7601 = vpop.f32.mrf.mxu0
        %v7602 = vadd.f32 0.0, %v7601
        %v7603 = vpop.f32.mrf.mxu0
        %v7604 = vadd.f32 0.0, %v7603
        %7605 = vmatmul.bf16.gmra.mxu0 %v7505
        %v7606 = vpop.f32.mrf.mxu0
        %v7607 = vadd.f32 0.0, %v7606
        %v7608 = vpop.f32.mrf.mxu0
        %v7609 = vadd.f32 0.0, %v7608
        %7610 = vdwg.mxu0
        %v7611 = vadd.f32 %v7233, %v7572
        %v7612 = vadd.f32 %v7234, %v7574
        %v7613 = vadd.f32 %v7235, %v7577
        %v7614 = vadd.f32 %v7236, %v7579
        %v7615 = vadd.f32 %v7237, %v7582
        %v7616 = vadd.f32 %v7238, %v7584
        %v7617 = vadd.f32 %v7239, %v7587
        %v7618 = vadd.f32 %v7240, %v7589
        %v7619 = vadd.f32 %v7241, %v7592
        %v7620 = vadd.f32 %v7242, %v7594
        %v7621 = vadd.f32 %v7243, %v7597
        %v7622 = vadd.f32 %v7244, %v7599
        %v7623 = vadd.f32 %v7245, %v7602
        %v7624 = vadd.f32 %v7246, %v7604
        %v7625 = vadd.f32 %v7247, %v7607
        %v7626 = vadd.f32 %v7248, %v7609
        %v7627 = vld [vmem:[%s3542] sm:$0xe]
        %v7628 = vld [vmem:[%s3542 + $0xc] sm:$0xe]
        %v7629 = vld [vmem:[%s3542 + $0x18] sm:$0xe]
        %v7630 = vld [vmem:[%s3542 + $0x24] sm:$0xe]
        %v7631 = vld [vmem:[%s3542 + $0x30] sm:$0xe]
        %v7632 = vld [vmem:[%s3542 + $0x3c] sm:$0xe]
        %v7633 = vld [vmem:[%s3542 + $0x48] sm:$0xe]
        %v7634 = vld [vmem:[%s3542 + $0x54] sm:$0xe]
        %v7659 = vrot.slane %v7627, 5
        %v7660 = vrot.slane %v7659, 4
        %v7661 = vrot.slane %v7250, 5
        %v7662 = vsel %vm1448, %v7660, %v7661
        %v7663 = vrot.slane %v7661, 4
        %v7664 = vrot.slane %v7251, 5
        %v7665 = vsel %vm1448, %v7663, %v7664
        %v7666 = vrot.slane %v7628, 5
        %v7667 = vrot.slane %v7666, 4
        %v7668 = vrot.slane %v7253, 5
        %v7669 = vsel %vm1448, %v7667, %v7668
        %v7670 = vrot.slane %v7668, 4
        %v7671 = vrot.slane %v7254, 5
        %v7672 = vsel %vm1448, %v7670, %v7671
        %v7673 = vrot.slane %v7629, 5
        %v7674 = vrot.slane %v7673, 4
        %v7675 = vrot.slane %v7256, 5
        %v7676 = vsel %vm1448, %v7674, %v7675
        %v7677 = vrot.slane %v7675, 4
        %v7678 = vrot.slane %v7257, 5
        %v7679 = vsel %vm1448, %v7677, %v7678
        %v7680 = vrot.slane %v7630, 5
        %v7681 = vrot.slane %v7680, 4
        %v7682 = vrot.slane %v7259, 5
        %v7683 = vsel %vm1448, %v7681, %v7682
        %v7684 = vrot.slane %v7682, 4
        %v7685 = vrot.slane %v7260, 5
        %v7686 = vsel %vm1448, %v7684, %v7685
        %v7687 = vrot.slane %v7631, 5
        %v7688 = vrot.slane %v7687, 4
        %v7689 = vrot.slane %v7262, 5
        %v7690 = vsel %vm1448, %v7688, %v7689
        %v7691 = vrot.slane %v7689, 4
        %v7692 = vrot.slane %v7263, 5
        %v7693 = vsel %vm1448, %v7691, %v7692
        %v7694 = vrot.slane %v7632, 5
        %v7695 = vrot.slane %v7694, 4
        %v7696 = vrot.slane %v7265, 5
        %v7697 = vsel %vm1448, %v7695, %v7696
        %v7698 = vrot.slane %v7696, 4
        %v7699 = vrot.slane %v7266, 5
        %v7700 = vsel %vm1448, %v7698, %v7699
        %v7701 = vrot.slane %v7633, 5
        %v7702 = vrot.slane %v7701, 4
        %v7703 = vrot.slane %v7268, 5
        %v7704 = vsel %vm1448, %v7702, %v7703
        %v7705 = vrot.slane %v7703, 4
        %v7706 = vrot.slane %v7269, 5
        %v7707 = vsel %vm1448, %v7705, %v7706
        %v7708 = vrot.slane %v7634, 5
        %v7709 = vrot.slane %v7708, 4
        %v7710 = vrot.slane %v7271, 5
        %v7711 = vsel %vm1448, %v7709, %v7710
        %v7712 = vrot.slane %v7710, 4
        %v7713 = vrot.slane %v7272, 5
        %v7714 = vsel %vm1448, %v7712, %v7713
        %s7715 = scalar_lea.vmem [#allocation7], 320
        %v7716 = vld [vmem:[%s7715] sm:$0xf]
        %v7717 = vld [vmem:[%s7715 + $0x4] sm:$0xf]
        %v7718 = vld [vmem:[%s7715 + $0x8] sm:$0xf]
        %v7719 = vld [vmem:[%s7715 + $0xc] sm:$0xf]
        %v7720 = vld [vmem:[%s7715 + $0x10] sm:$0xf]
        %v7721 = vld [vmem:[%s7715 + $0x14] sm:$0xf]
        %v7722 = vld [vmem:[%s7715 + $0x18] sm:$0xf]
        %v7723 = vld [vmem:[%s7715 + $0x1c] sm:$0xf]
        %v7724 = vld [vmem:[%s7715 + $0x20] sm:$0xf]
        %v7725 = vld [vmem:[%s7715 + $0x24] sm:$0xf]
        %v7726 = vld [vmem:[%s7715 + $0x28] sm:$0xf]
        %v7727 = vld [vmem:[%s7715 + $0x2c] sm:$0xf]
        %v7728 = vld [vmem:[%s7715 + $0x30] sm:$0xf]
        %v7729 = vld [vmem:[%s7715 + $0x34] sm:$0xf]
        %v7730 = vld [vmem:[%s7715 + $0x38] sm:$0xf]
        %v7731 = vld [vmem:[%s7715 + $0x3c] sm:$0xf]
        %v7732 = vunpack.c.l.b16 %v7662
        %v7733 = vunpack.c.l.b16 %v7665
        %v7734 = vunpack.c.l.b16 %v7669
        %v7735 = vunpack.c.l.b16 %v7672
        %v7736 = vunpack.c.l.b16 %v7676
        %v7737 = vunpack.c.l.b16 %v7679
        %v7738 = vunpack.c.l.b16 %v7683
        %v7739 = vunpack.c.l.b16 %v7686
        %v7740 = vunpack.c.l.b16 %v7690
        %v7741 = vunpack.c.l.b16 %v7693
        %v7742 = vunpack.c.l.b16 %v7697
        %v7743 = vunpack.c.l.b16 %v7700
        %v7744 = vunpack.c.l.b16 %v7704
        %v7745 = vunpack.c.l.b16 %v7707
        %v7746 = vunpack.c.l.b16 %v7711
        %v7747 = vunpack.c.l.b16 %v7714
        %v7748 = vpack.c.b16 %v7733, %v7732
        %v7749 = vpack.c.b16 %v7735, %v7734
        %v7750 = vpack.c.b16 %v7737, %v7736
        %v7751 = vpack.c.b16 %v7739, %v7738
        %v7752 = vpack.c.b16 %v7741, %v7740
        %v7753 = vpack.c.b16 %v7743, %v7742
        %v7754 = vpack.c.b16 %v7745, %v7744
        %v7755 = vpack.c.b16 %v7747, %v7746
        %v7780 = vunpack.c.l.b16 %v7716
        %v7781 = vunpack.c.l.b16 %v7717
        %v7782 = vunpack.c.l.b16 %v7718
        %v7783 = vunpack.c.l.b16 %v7719
        %v7784 = vunpack.c.l.b16 %v7720
        %v7785 = vunpack.c.l.b16 %v7721
        %v7786 = vunpack.c.l.b16 %v7722
        %v7787 = vunpack.c.l.b16 %v7723
        %v7788 = vunpack.c.l.b16 %v7724
        %v7789 = vunpack.c.l.b16 %v7725
        %v7790 = vunpack.c.l.b16 %v7726
        %v7791 = vunpack.c.l.b16 %v7727
        %v7792 = vunpack.c.l.b16 %v7728
        %v7793 = vunpack.c.l.b16 %v7729
        %v7794 = vunpack.c.l.b16 %v7730
        %v7795 = vunpack.c.l.b16 %v7731
        %v7796 = vpack.c.b16 %v7781, %v7780
        %v7797 = vpack.c.b16 %v7783, %v7782
        %v7798 = vpack.c.b16 %v7785, %v7784
        %v7799 = vpack.c.b16 %v7787, %v7786
        %v7800 = vpack.c.b16 %v7789, %v7788
        %v7801 = vpack.c.b16 %v7791, %v7790
        %v7802 = vpack.c.b16 %v7793, %v7792
        %v7803 = vpack.c.b16 %v7795, %v7794
        %7812 = vmatpush.bf16.msra.mxu0 %v7803
        %7813 = vmatpush.bf16.msra.mxu0 %v7802
        %7814 = vmatpush.bf16.msra.mxu0 %v7801
        %7815 = vmatpush.bf16.msra.mxu0 %v7800
        %7816 = vmatpush.bf16.msra.mxu0 %v7799
        %7817 = vmatpush.bf16.msra.mxu0 %v7798
        %7818 = vmatpush.bf16.msra.mxu0 %v7797
        %7819 = vmatpush.bf16.msra.mxu0 %v7796
        %7820 = vmatmul.bf16.gmra.mxu0 %v7748
        %v7821 = vpop.f32.mrf.mxu0
        %v7822 = vadd.f32 0.0, %v7821
        %v7823 = vpop.f32.mrf.mxu0
        %v7824 = vadd.f32 0.0, %v7823
        %7825 = vmatmul.bf16.gmra.mxu0 %v7749
        %v7826 = vpop.f32.mrf.mxu0
        %v7827 = vadd.f32 0.0, %v7826
        %v7828 = vpop.f32.mrf.mxu0
        %v7829 = vadd.f32 0.0, %v7828
        %7830 = vmatmul.bf16.gmra.mxu0 %v7750
        %v7831 = vpop.f32.mrf.mxu0
        %v7832 = vadd.f32 0.0, %v7831
        %v7833 = vpop.f32.mrf.mxu0
        %v7834 = vadd.f32 0.0, %v7833
        %7835 = vmatmul.bf16.gmra.mxu0 %v7751
        %v7836 = vpop.f32.mrf.mxu0
        %v7837 = vadd.f32 0.0, %v7836
        %v7838 = vpop.f32.mrf.mxu0
        %v7839 = vadd.f32 0.0, %v7838
        %7840 = vmatmul.bf16.gmra.mxu0 %v7752
        %v7841 = vpop.f32.mrf.mxu0
        %v7842 = vadd.f32 0.0, %v7841
        %v7843 = vpop.f32.mrf.mxu0
        %v7844 = vadd.f32 0.0, %v7843
        %7845 = vmatmul.bf16.gmra.mxu0 %v7753
        %v7846 = vpop.f32.mrf.mxu0
        %v7847 = vadd.f32 0.0, %v7846
        %v7848 = vpop.f32.mrf.mxu0
        %v7849 = vadd.f32 0.0, %v7848
        %7850 = vmatmul.bf16.gmra.mxu0 %v7754
        %v7851 = vpop.f32.mrf.mxu0
        %v7852 = vadd.f32 0.0, %v7851
        %v7853 = vpop.f32.mrf.mxu0
        %v7854 = vadd.f32 0.0, %v7853
        %7855 = vmatmul.bf16.gmra.mxu0 %v7755
        %v7856 = vpop.f32.mrf.mxu0
        %v7857 = vadd.f32 0.0, %v7856
        %v7858 = vpop.f32.mrf.mxu0
        %v7859 = vadd.f32 0.0, %v7858
        %7860 = vdwg.mxu0
        %v7861 = vadd.f32 %v7611, %v7822
        %v7862 = vadd.f32 %v7612, %v7824
        %v7863 = vadd.f32 %v7613, %v7827
        %v7864 = vadd.f32 %v7614, %v7829
        %v7865 = vadd.f32 %v7615, %v7832
        %v7866 = vadd.f32 %v7616, %v7834
        %v7867 = vadd.f32 %v7617, %v7837
        %v7868 = vadd.f32 %v7618, %v7839
        %v7869 = vadd.f32 %v7619, %v7842
        %v7870 = vadd.f32 %v7620, %v7844
        %v7871 = vadd.f32 %v7621, %v7847
        %v7872 = vadd.f32 %v7622, %v7849
        %v7873 = vadd.f32 %v7623, %v7852
        %v7874 = vadd.f32 %v7624, %v7854
        %v7875 = vadd.f32 %v7625, %v7857
        %v7876 = vadd.f32 %v7626, %v7859
        %s7877 = scalar_lea.vmem [#allocation3], 24
        %v7878 = vld [vmem:[%s7877] sm:$0xf]
        %v7879 = vld [vmem:[%s7877 + $0x4] sm:$0xf]
        %v7880 = vld [vmem:[%s7877 + $0xc] sm:$0xf]
        %v7881 = vld [vmem:[%s7877 + $0x10] sm:$0xf]
        %v7882 = vld [vmem:[%s7877 + $0x18] sm:$0xf]
        %v7883 = vld [vmem:[%s7877 + $0x1c] sm:$0xf]
        %v7884 = vld [vmem:[%s7877 + $0x24] sm:$0xf]
        %v7885 = vld [vmem:[%s7877 + $0x28] sm:$0xf]
        %v7886 = vld [vmem:[%s7877 + $0x30] sm:$0xf]
        %v7887 = vld [vmem:[%s7877 + $0x34] sm:$0xf]
        %v7888 = vld [vmem:[%s7877 + $0x3c] sm:$0xf]
        %v7889 = vld [vmem:[%s7877 + $0x40] sm:$0xf]
        %v7890 = vld [vmem:[%s7877 + $0x48] sm:$0xf]
        %v7891 = vld [vmem:[%s7877 + $0x4c] sm:$0xf]
        %v7892 = vld [vmem:[%s7877 + $0x54] sm:$0xf]
        %v7893 = vld [vmem:[%s7877 + $0x58] sm:$0xf]
        %s7894 = scalar_lea.vmem [#allocation7], 384
        %v7895 = vld [vmem:[%s7894] sm:$0xf]
        %v7896 = vld [vmem:[%s7894 + $0x4] sm:$0xf]
        %v7897 = vld [vmem:[%s7894 + $0x8] sm:$0xf]
        %v7898 = vld [vmem:[%s7894 + $0xc] sm:$0xf]
        %v7899 = vld [vmem:[%s7894 + $0x10] sm:$0xf]
        %v7900 = vld [vmem:[%s7894 + $0x14] sm:$0xf]
        %v7901 = vld [vmem:[%s7894 + $0x18] sm:$0xf]
        %v7902 = vld [vmem:[%s7894 + $0x1c] sm:$0xf]
        %v7903 = vld [vmem:[%s7894 + $0x20] sm:$0xf]
        %v7904 = vld [vmem:[%s7894 + $0x24] sm:$0xf]
        %v7905 = vld [vmem:[%s7894 + $0x28] sm:$0xf]
        %v7906 = vld [vmem:[%s7894 + $0x2c] sm:$0xf]
        %v7907 = vld [vmem:[%s7894 + $0x30] sm:$0xf]
        %v7908 = vld [vmem:[%s7894 + $0x34] sm:$0xf]
        %v7909 = vld [vmem:[%s7894 + $0x38] sm:$0xf]
        %v7910 = vld [vmem:[%s7894 + $0x3c] sm:$0xf]
        %v7927 = vunpack.c.l.b16 %v7878
        %v7928 = vunpack.c.l.b16 %v7879
        %v7929 = vunpack.c.l.b16 %v7880
        %v7930 = vunpack.c.l.b16 %v7881
        %v7931 = vunpack.c.l.b16 %v7882
        %v7932 = vunpack.c.l.b16 %v7883
        %v7933 = vunpack.c.l.b16 %v7884
        %v7934 = vunpack.c.l.b16 %v7885
        %v7935 = vunpack.c.l.b16 %v7886
        %v7936 = vunpack.c.l.b16 %v7887
        %v7937 = vunpack.c.l.b16 %v7888
        %v7938 = vunpack.c.l.b16 %v7889
        %v7939 = vunpack.c.l.b16 %v7890
        %v7940 = vunpack.c.l.b16 %v7891
        %v7941 = vunpack.c.l.b16 %v7892
        %v7942 = vunpack.c.l.b16 %v7893
        %v7943 = vpack.c.b16 %v7928, %v7927
        %v7944 = vpack.c.b16 %v7930, %v7929
        %v7945 = vpack.c.b16 %v7932, %v7931
        %v7946 = vpack.c.b16 %v7934, %v7933
        %v7947 = vpack.c.b16 %v7936, %v7935
        %v7948 = vpack.c.b16 %v7938, %v7937
        %v7949 = vpack.c.b16 %v7940, %v7939
        %v7950 = vpack.c.b16 %v7942, %v7941
        %v7975 = vunpack.c.l.b16 %v7895
        %v7976 = vunpack.c.l.b16 %v7896
        %v7977 = vunpack.c.l.b16 %v7897
        %v7978 = vunpack.c.l.b16 %v7898
        %v7979 = vunpack.c.l.b16 %v7899
        %v7980 = vunpack.c.l.b16 %v7900
        %v7981 = vunpack.c.l.b16 %v7901
        %v7982 = vunpack.c.l.b16 %v7902
        %v7983 = vunpack.c.l.b16 %v7903
        %v7984 = vunpack.c.l.b16 %v7904
        %v7985 = vunpack.c.l.b16 %v7905
        %v7986 = vunpack.c.l.b16 %v7906
        %v7987 = vunpack.c.l.b16 %v7907
        %v7988 = vunpack.c.l.b16 %v7908
        %v7989 = vunpack.c.l.b16 %v7909
        %v7990 = vunpack.c.l.b16 %v7910
        %v7991 = vpack.c.b16 %v7976, %v7975
        %v7992 = vpack.c.b16 %v7978, %v7977
        %v7993 = vpack.c.b16 %v7980, %v7979
        %v7994 = vpack.c.b16 %v7982, %v7981
        %v7995 = vpack.c.b16 %v7984, %v7983
        %v7996 = vpack.c.b16 %v7986, %v7985
        %v7997 = vpack.c.b16 %v7988, %v7987
        %v7998 = vpack.c.b16 %v7990, %v7989
        %8007 = vmatpush.bf16.msra.mxu0 %v7998
        %8008 = vmatpush.bf16.msra.mxu0 %v7997
        %8009 = vmatpush.bf16.msra.mxu0 %v7996
        %8010 = vmatpush.bf16.msra.mxu0 %v7995
        %8011 = vmatpush.bf16.msra.mxu0 %v7994
        %8012 = vmatpush.bf16.msra.mxu0 %v7993
        %8013 = vmatpush.bf16.msra.mxu0 %v7992
        %8014 = vmatpush.bf16.msra.mxu0 %v7991
        %8015 = vmatmul.bf16.gmra.mxu0 %v7943
        %v8016 = vpop.f32.mrf.mxu0
        %v8017 = vadd.f32 0.0, %v8016
        %v8018 = vpop.f32.mrf.mxu0
        %v8019 = vadd.f32 0.0, %v8018
        %8020 = vmatmul.bf16.gmra.mxu0 %v7944
        %v8021 = vpop.f32.mrf.mxu0
        %v8022 = vadd.f32 0.0, %v8021
        %v8023 = vpop.f32.mrf.mxu0
        %v8024 = vadd.f32 0.0, %v8023
        %8025 = vmatmul.bf16.gmra.mxu0 %v7945
        %v8026 = vpop.f32.mrf.mxu0
        %v8027 = vadd.f32 0.0, %v8026
        %v8028 = vpop.f32.mrf.mxu0
        %v8029 = vadd.f32 0.0, %v8028
        %8030 = vmatmul.bf16.gmra.mxu0 %v7946
        %v8031 = vpop.f32.mrf.mxu0
        %v8032 = vadd.f32 0.0, %v8031
        %v8033 = vpop.f32.mrf.mxu0
        %v8034 = vadd.f32 0.0, %v8033
        %8035 = vmatmul.bf16.gmra.mxu0 %v7947
        %v8036 = vpop.f32.mrf.mxu0
        %v8037 = vadd.f32 0.0, %v8036
        %v8038 = vpop.f32.mrf.mxu0
        %v8039 = vadd.f32 0.0, %v8038
        %8040 = vmatmul.bf16.gmra.mxu0 %v7948
        %v8041 = vpop.f32.mrf.mxu0
        %v8042 = vadd.f32 0.0, %v8041
        %v8043 = vpop.f32.mrf.mxu0
        %v8044 = vadd.f32 0.0, %v8043
        %8045 = vmatmul.bf16.gmra.mxu0 %v7949
        %v8046 = vpop.f32.mrf.mxu0
        %v8047 = vadd.f32 0.0, %v8046
        %v8048 = vpop.f32.mrf.mxu0
        %v8049 = vadd.f32 0.0, %v8048
        %8050 = vmatmul.bf16.gmra.mxu0 %v7950
        %v8051 = vpop.f32.mrf.mxu0
        %v8052 = vadd.f32 0.0, %v8051
        %v8053 = vpop.f32.mrf.mxu0
        %v8054 = vadd.f32 0.0, %v8053
        %8055 = vdwg.mxu0
        %v8056 = vadd.f32 %v7861, %v8017
        %v8057 = vadd.f32 %v7862, %v8019
        %v8058 = vadd.f32 %v7863, %v8022
        %v8059 = vadd.f32 %v7864, %v8024
        %v8060 = vadd.f32 %v7865, %v8027
        %v8061 = vadd.f32 %v7866, %v8029
        %v8062 = vadd.f32 %v7867, %v8032
        %v8063 = vadd.f32 %v7868, %v8034
        %v8064 = vadd.f32 %v7869, %v8037
        %v8065 = vadd.f32 %v7870, %v8039
        %v8066 = vadd.f32 %v7871, %v8042
        %v8067 = vadd.f32 %v7872, %v8044
        %v8068 = vadd.f32 %v7873, %v8047
        %v8069 = vadd.f32 %v7874, %v8049
        %v8070 = vadd.f32 %v7875, %v8052
        %v8071 = vadd.f32 %v7876, %v8054
        %v8072 = vld [vmem:[%s7877] sm:$0xf]
        %v8073 = vld [vmem:[%s7877 + $0x4] sm:$0xf]
        %v8074 = vld [vmem:[%s7877 + $0x8] sm:$0x1]
        %v8075 = vld [vmem:[%s7877 + $0xc] sm:$0xf]
        %v8076 = vld [vmem:[%s7877 + $0x10] sm:$0xf]
        %v8077 = vld [vmem:[%s7877 + $0x14] sm:$0x1]
        %v8078 = vld [vmem:[%s7877 + $0x18] sm:$0xf]
        %v8079 = vld [vmem:[%s7877 + $0x1c] sm:$0xf]
        %v8080 = vld [vmem:[%s7877 + $0x20] sm:$0x1]
        %v8081 = vld [vmem:[%s7877 + $0x24] sm:$0xf]
        %v8082 = vld [vmem:[%s7877 + $0x28] sm:$0xf]
        %v8083 = vld [vmem:[%s7877 + $0x2c] sm:$0x1]
        %v8084 = vld [vmem:[%s7877 + $0x30] sm:$0xf]
        %v8085 = vld [vmem:[%s7877 + $0x34] sm:$0xf]
        %v8086 = vld [vmem:[%s7877 + $0x38] sm:$0x1]
        %v8087 = vld [vmem:[%s7877 + $0x3c] sm:$0xf]
        %v8088 = vld [vmem:[%s7877 + $0x40] sm:$0xf]
        %v8089 = vld [vmem:[%s7877 + $0x44] sm:$0x1]
        %v8090 = vld [vmem:[%s7877 + $0x48] sm:$0xf]
        %v8091 = vld [vmem:[%s7877 + $0x4c] sm:$0xf]
        %v8092 = vld [vmem:[%s7877 + $0x50] sm:$0x1]
        %v8093 = vld [vmem:[%s7877 + $0x54] sm:$0xf]
        %v8094 = vld [vmem:[%s7877 + $0x58] sm:$0xf]
        %v8095 = vld [vmem:[%s7877 + $0x5c] sm:$0x1]
        %v8097 = vshrl.u32 %v8072, 16
        %v8099 = vrot.slane %v8097, 4
        %v8100 = vshll.u32 %v8072, 16
        %v8102 = vrot.slane %v8100, 5
        %v8103 = vor.u32 %v8099, %v8102
        %v8104 = vrot.slane %v8103, 4
        %v8106 = vshll.u32 %v8073, 16
        %v8108 = vrot.slane %v8106, 5
        %v8109 = vsel %vm938, %v8104, %v8108
        %v8110 = vshrl.u32 %v8073, 16
        %v8112 = vrot.slane %v8110, 4
        %v8113 = vor.u32 %v8112, %v8108
        %v8114 = vrot.slane %v8113, 4
        %v8116 = vshll.u32 %v8074, 16
        %v8118 = vrot.slane %v8116, 5
        %v8119 = vsel %vm938, %v8114, %v8118
        %v8121 = vshrl.u32 %v8075, 16
        %v8123 = vrot.slane %v8121, 4
        %v8124 = vshll.u32 %v8075, 16
        %v8126 = vrot.slane %v8124, 5
        %v8127 = vor.u32 %v8123, %v8126
        %v8128 = vrot.slane %v8127, 4
        %v8130 = vshll.u32 %v8076, 16
        %v8132 = vrot.slane %v8130, 5
        %v8133 = vsel %vm938, %v8128, %v8132
        %v8134 = vshrl.u32 %v8076, 16
        %v8136 = vrot.slane %v8134, 4
        %v8137 = vor.u32 %v8136, %v8132
        %v8138 = vrot.slane %v8137, 4
        %v8140 = vshll.u32 %v8077, 16
        %v8142 = vrot.slane %v8140, 5
        %v8143 = vsel %vm938, %v8138, %v8142
        %v8145 = vshrl.u32 %v8078, 16
        %v8147 = vrot.slane %v8145, 4
        %v8148 = vshll.u32 %v8078, 16
        %v8150 = vrot.slane %v8148, 5
        %v8151 = vor.u32 %v8147, %v8150
        %v8152 = vrot.slane %v8151, 4
        %v8154 = vshll.u32 %v8079, 16
        %v8156 = vrot.slane %v8154, 5
        %v8157 = vsel %vm938, %v8152, %v8156
        %v8158 = vshrl.u32 %v8079, 16
        %v8160 = vrot.slane %v8158, 4
        %v8161 = vor.u32 %v8160, %v8156
        %v8162 = vrot.slane %v8161, 4
        %v8164 = vshll.u32 %v8080, 16
        %v8166 = vrot.slane %v8164, 5
        %v8167 = vsel %vm938, %v8162, %v8166
        %v8169 = vshrl.u32 %v8081, 16
        %v8171 = vrot.slane %v8169, 4
        %v8172 = vshll.u32 %v8081, 16
        %v8174 = vrot.slane %v8172, 5
        %v8175 = vor.u32 %v8171, %v8174
        %v8176 = vrot.slane %v8175, 4
        %v8178 = vshll.u32 %v8082, 16
        %v8180 = vrot.slane %v8178, 5
        %v8181 = vsel %vm938, %v8176, %v8180
        %v8182 = vshrl.u32 %v8082, 16
        %v8184 = vrot.slane %v8182, 4
        %v8185 = vor.u32 %v8184, %v8180
        %v8186 = vrot.slane %v8185, 4
        %v8188 = vshll.u32 %v8083, 16
        %v8190 = vrot.slane %v8188, 5
        %v8191 = vsel %vm938, %v8186, %v8190
        %v8193 = vshrl.u32 %v8084, 16
        %v8195 = vrot.slane %v8193, 4
        %v8196 = vshll.u32 %v8084, 16
        %v8198 = vrot.slane %v8196, 5
        %v8199 = vor.u32 %v8195, %v8198
        %v8200 = vrot.slane %v8199, 4
        %v8202 = vshll.u32 %v8085, 16
        %v8204 = vrot.slane %v8202, 5
        %v8205 = vsel %vm938, %v8200, %v8204
        %v8206 = vshrl.u32 %v8085, 16
        %v8208 = vrot.slane %v8206, 4
        %v8209 = vor.u32 %v8208, %v8204
        %v8210 = vrot.slane %v8209, 4
        %v8212 = vshll.u32 %v8086, 16
        %v8214 = vrot.slane %v8212, 5
        %v8215 = vsel %vm938, %v8210, %v8214
        %v8217 = vshrl.u32 %v8087, 16
        %v8219 = vrot.slane %v8217, 4
        %v8220 = vshll.u32 %v8087, 16
        %v8222 = vrot.slane %v8220, 5
        %v8223 = vor.u32 %v8219, %v8222
        %v8224 = vrot.slane %v8223, 4
        %v8226 = vshll.u32 %v8088, 16
        %v8228 = vrot.slane %v8226, 5
        %v8229 = vsel %vm938, %v8224, %v8228
        %v8230 = vshrl.u32 %v8088, 16
        %v8232 = vrot.slane %v8230, 4
        %v8233 = vor.u32 %v8232, %v8228
        %v8234 = vrot.slane %v8233, 4
        %v8236 = vshll.u32 %v8089, 16
        %v8238 = vrot.slane %v8236, 5
        %v8239 = vsel %vm938, %v8234, %v8238
        %v8241 = vshrl.u32 %v8090, 16
        %v8243 = vrot.slane %v8241, 4
        %v8244 = vshll.u32 %v8090, 16
        %v8246 = vrot.slane %v8244, 5
        %v8247 = vor.u32 %v8243, %v8246
        %v8248 = vrot.slane %v8247, 4
        %v8250 = vshll.u32 %v8091, 16
        %v8252 = vrot.slane %v8250, 5
        %v8253 = vsel %vm938, %v8248, %v8252
        %v8254 = vshrl.u32 %v8091, 16
        %v8256 = vrot.slane %v8254, 4
        %v8257 = vor.u32 %v8256, %v8252
        %v8258 = vrot.slane %v8257, 4
        %v8260 = vshll.u32 %v8092, 16
        %v8262 = vrot.slane %v8260, 5
        %v8263 = vsel %vm938, %v8258, %v8262
        %v8265 = vshrl.u32 %v8093, 16
        %v8267 = vrot.slane %v8265, 4
        %v8268 = vshll.u32 %v8093, 16
        %v8270 = vrot.slane %v8268, 5
        %v8271 = vor.u32 %v8267, %v8270
        %v8272 = vrot.slane %v8271, 4
        %v8274 = vshll.u32 %v8094, 16
        %v8276 = vrot.slane %v8274, 5
        %v8277 = vsel %vm938, %v8272, %v8276
        %v8278 = vshrl.u32 %v8094, 16
        %v8280 = vrot.slane %v8278, 4
        %v8281 = vor.u32 %v8280, %v8276
        %v8282 = vrot.slane %v8281, 4
        %v8284 = vshll.u32 %v8095, 16
        %v8286 = vrot.slane %v8284, 5
        %v8287 = vsel %vm938, %v8282, %v8286
        %s8288 = scalar_lea.vmem [#allocation7], 448
        %v8289 = vld [vmem:[%s8288] sm:$0xf]
        %v8290 = vld [vmem:[%s8288 + $0x4] sm:$0xf]
        %v8291 = vld [vmem:[%s8288 + $0x8] sm:$0xf]
        %v8292 = vld [vmem:[%s8288 + $0xc] sm:$0xf]
        %v8293 = vld [vmem:[%s8288 + $0x10] sm:$0xf]
        %v8294 = vld [vmem:[%s8288 + $0x14] sm:$0xf]
        %v8295 = vld [vmem:[%s8288 + $0x18] sm:$0xf]
        %v8296 = vld [vmem:[%s8288 + $0x1c] sm:$0xf]
        %v8297 = vld [vmem:[%s8288 + $0x20] sm:$0xf]
        %v8298 = vld [vmem:[%s8288 + $0x24] sm:$0xf]
        %v8299 = vld [vmem:[%s8288 + $0x28] sm:$0xf]
        %v8300 = vld [vmem:[%s8288 + $0x2c] sm:$0xf]
        %v8301 = vld [vmem:[%s8288 + $0x30] sm:$0xf]
        %v8302 = vld [vmem:[%s8288 + $0x34] sm:$0xf]
        %v8303 = vld [vmem:[%s8288 + $0x38] sm:$0xf]
        %v8304 = vld [vmem:[%s8288 + $0x3c] sm:$0xf]
        %v8305 = vunpack.c.l.b16 %v8109
        %v8306 = vunpack.c.l.b16 %v8119
        %v8307 = vunpack.c.l.b16 %v8133
        %v8308 = vunpack.c.l.b16 %v8143
        %v8309 = vunpack.c.l.b16 %v8157
        %v8310 = vunpack.c.l.b16 %v8167
        %v8311 = vunpack.c.l.b16 %v8181
        %v8312 = vunpack.c.l.b16 %v8191
        %v8313 = vunpack.c.l.b16 %v8205
        %v8314 = vunpack.c.l.b16 %v8215
        %v8315 = vunpack.c.l.b16 %v8229
        %v8316 = vunpack.c.l.b16 %v8239
        %v8317 = vunpack.c.l.b16 %v8253
        %v8318 = vunpack.c.l.b16 %v8263
        %v8319 = vunpack.c.l.b16 %v8277
        %v8320 = vunpack.c.l.b16 %v8287
        %v8321 = vpack.c.b16 %v8306, %v8305
        %v8322 = vpack.c.b16 %v8308, %v8307
        %v8323 = vpack.c.b16 %v8310, %v8309
        %v8324 = vpack.c.b16 %v8312, %v8311
        %v8325 = vpack.c.b16 %v8314, %v8313
        %v8326 = vpack.c.b16 %v8316, %v8315
        %v8327 = vpack.c.b16 %v8318, %v8317
        %v8328 = vpack.c.b16 %v8320, %v8319
        %v8353 = vunpack.c.l.b16 %v8289
        %v8354 = vunpack.c.l.b16 %v8290
        %v8355 = vunpack.c.l.b16 %v8291
        %v8356 = vunpack.c.l.b16 %v8292
        %v8357 = vunpack.c.l.b16 %v8293
        %v8358 = vunpack.c.l.b16 %v8294
        %v8359 = vunpack.c.l.b16 %v8295
        %v8360 = vunpack.c.l.b16 %v8296
        %v8361 = vunpack.c.l.b16 %v8297
        %v8362 = vunpack.c.l.b16 %v8298
        %v8363 = vunpack.c.l.b16 %v8299
        %v8364 = vunpack.c.l.b16 %v8300
        %v8365 = vunpack.c.l.b16 %v8301
        %v8366 = vunpack.c.l.b16 %v8302
        %v8367 = vunpack.c.l.b16 %v8303
        %v8368 = vunpack.c.l.b16 %v8304
        %v8369 = vpack.c.b16 %v8354, %v8353
        %v8370 = vpack.c.b16 %v8356, %v8355
        %v8371 = vpack.c.b16 %v8358, %v8357
        %v8372 = vpack.c.b16 %v8360, %v8359
        %v8373 = vpack.c.b16 %v8362, %v8361
        %v8374 = vpack.c.b16 %v8364, %v8363
        %v8375 = vpack.c.b16 %v8366, %v8365
        %v8376 = vpack.c.b16 %v8368, %v8367
        %8385 = vmatpush.bf16.msra.mxu0 %v8376
        %8386 = vmatpush.bf16.msra.mxu0 %v8375
        %8387 = vmatpush.bf16.msra.mxu0 %v8374
        %8388 = vmatpush.bf16.msra.mxu0 %v8373
        %8389 = vmatpush.bf16.msra.mxu0 %v8372
        %8390 = vmatpush.bf16.msra.mxu0 %v8371
        %8391 = vmatpush.bf16.msra.mxu0 %v8370
        %8392 = vmatpush.bf16.msra.mxu0 %v8369
        %8393 = vmatmul.bf16.gmra.mxu0 %v8321
        %v8394 = vpop.f32.mrf.mxu0
        %v8395 = vadd.f32 0.0, %v8394
        %v8396 = vpop.f32.mrf.mxu0
        %v8397 = vadd.f32 0.0, %v8396
        %8398 = vmatmul.bf16.gmra.mxu0 %v8322
        %v8399 = vpop.f32.mrf.mxu0
        %v8400 = vadd.f32 0.0, %v8399
        %v8401 = vpop.f32.mrf.mxu0
        %v8402 = vadd.f32 0.0, %v8401
        %8403 = vmatmul.bf16.gmra.mxu0 %v8323
        %v8404 = vpop.f32.mrf.mxu0
        %v8405 = vadd.f32 0.0, %v8404
        %v8406 = vpop.f32.mrf.mxu0
        %v8407 = vadd.f32 0.0, %v8406
        %8408 = vmatmul.bf16.gmra.mxu0 %v8324
        %v8409 = vpop.f32.mrf.mxu0
        %v8410 = vadd.f32 0.0, %v8409
        %v8411 = vpop.f32.mrf.mxu0
        %v8412 = vadd.f32 0.0, %v8411
        %8413 = vmatmul.bf16.gmra.mxu0 %v8325
        %v8414 = vpop.f32.mrf.mxu0
        %v8415 = vadd.f32 0.0, %v8414
        %v8416 = vpop.f32.mrf.mxu0
        %v8417 = vadd.f32 0.0, %v8416
        %8418 = vmatmul.bf16.gmra.mxu0 %v8326
        %v8419 = vpop.f32.mrf.mxu0
        %v8420 = vadd.f32 0.0, %v8419
        %v8421 = vpop.f32.mrf.mxu0
        %v8422 = vadd.f32 0.0, %v8421
        %8423 = vmatmul.bf16.gmra.mxu0 %v8327
        %v8424 = vpop.f32.mrf.mxu0
        %v8425 = vadd.f32 0.0, %v8424
        %v8426 = vpop.f32.mrf.mxu0
        %v8427 = vadd.f32 0.0, %v8426
        %8428 = vmatmul.bf16.gmra.mxu0 %v8328
        %v8429 = vpop.f32.mrf.mxu0
        %v8430 = vadd.f32 0.0, %v8429
        %v8431 = vpop.f32.mrf.mxu0
        %v8432 = vadd.f32 0.0, %v8431
        %8433 = vdwg.mxu0
        %v8434 = vadd.f32 %v8056, %v8395
        %v8435 = vadd.f32 %v8057, %v8397
        %v8436 = vadd.f32 %v8058, %v8400
        %v8437 = vadd.f32 %v8059, %v8402
        %v8438 = vadd.f32 %v8060, %v8405
        %v8439 = vadd.f32 %v8061, %v8407
        %v8440 = vadd.f32 %v8062, %v8410
        %v8441 = vadd.f32 %v8063, %v8412
        %v8442 = vadd.f32 %v8064, %v8415
        %v8443 = vadd.f32 %v8065, %v8417
        %v8444 = vadd.f32 %v8066, %v8420
        %v8445 = vadd.f32 %v8067, %v8422
        %v8446 = vadd.f32 %v8068, %v8425
        %v8447 = vadd.f32 %v8069, %v8427
        %v8448 = vadd.f32 %v8070, %v8430
        %v8449 = vadd.f32 %v8071, %v8432
        %v8450 = vld [vmem:[%s7877] sm:$0xe]
        %v8451 = vld [vmem:[%s7877 + $0xc] sm:$0xe]
        %v8452 = vld [vmem:[%s7877 + $0x18] sm:$0xe]
        %v8453 = vld [vmem:[%s7877 + $0x24] sm:$0xe]
        %v8454 = vld [vmem:[%s7877 + $0x30] sm:$0xe]
        %v8455 = vld [vmem:[%s7877 + $0x3c] sm:$0xe]
        %v8456 = vld [vmem:[%s7877 + $0x48] sm:$0xe]
        %v8457 = vld [vmem:[%s7877 + $0x54] sm:$0xe]
        %v8482 = vrot.slane %v8450, 5
        %v8483 = vrot.slane %v8482, 4
        %v8484 = vrot.slane %v8073, 5
        %v8485 = vsel %vm1448, %v8483, %v8484
        %v8486 = vrot.slane %v8484, 4
        %v8487 = vrot.slane %v8074, 5
        %v8488 = vsel %vm1448, %v8486, %v8487
        %v8489 = vrot.slane %v8451, 5
        %v8490 = vrot.slane %v8489, 4
        %v8491 = vrot.slane %v8076, 5
        %v8492 = vsel %vm1448, %v8490, %v8491
        %v8493 = vrot.slane %v8491, 4
        %v8494 = vrot.slane %v8077, 5
        %v8495 = vsel %vm1448, %v8493, %v8494
        %v8496 = vrot.slane %v8452, 5
        %v8497 = vrot.slane %v8496, 4
        %v8498 = vrot.slane %v8079, 5
        %v8499 = vsel %vm1448, %v8497, %v8498
        %v8500 = vrot.slane %v8498, 4
        %v8501 = vrot.slane %v8080, 5
        %v8502 = vsel %vm1448, %v8500, %v8501
        %v8503 = vrot.slane %v8453, 5
        %v8504 = vrot.slane %v8503, 4
        %v8505 = vrot.slane %v8082, 5
        %v8506 = vsel %vm1448, %v8504, %v8505
        %v8507 = vrot.slane %v8505, 4
        %v8508 = vrot.slane %v8083, 5
        %v8509 = vsel %vm1448, %v8507, %v8508
        %v8510 = vrot.slane %v8454, 5
        %v8511 = vrot.slane %v8510, 4
        %v8512 = vrot.slane %v8085, 5
        %v8513 = vsel %vm1448, %v8511, %v8512
        %v8514 = vrot.slane %v8512, 4
        %v8515 = vrot.slane %v8086, 5
        %v8516 = vsel %vm1448, %v8514, %v8515
        %v8517 = vrot.slane %v8455, 5
        %v8518 = vrot.slane %v8517, 4
        %v8519 = vrot.slane %v8088, 5
        %v8520 = vsel %vm1448, %v8518, %v8519
        %v8521 = vrot.slane %v8519, 4
        %v8522 = vrot.slane %v8089, 5
        %v8523 = vsel %vm1448, %v8521, %v8522
        %v8524 = vrot.slane %v8456, 5
        %v8525 = vrot.slane %v8524, 4
        %v8526 = vrot.slane %v8091, 5
        %v8527 = vsel %vm1448, %v8525, %v8526
        %v8528 = vrot.slane %v8526, 4
        %v8529 = vrot.slane %v8092, 5
        %v8530 = vsel %vm1448, %v8528, %v8529
        %v8531 = vrot.slane %v8457, 5
        %v8532 = vrot.slane %v8531, 4
        %v8533 = vrot.slane %v8094, 5
        %v8534 = vsel %vm1448, %v8532, %v8533
        %v8535 = vrot.slane %v8533, 4
        %v8536 = vrot.slane %v8095, 5
        %v8537 = vsel %vm1448, %v8535, %v8536
        %s8538 = scalar_lea.vmem [#allocation7], 512
        %v8539 = vld [vmem:[%s8538] sm:$0xf]
        %v8540 = vld [vmem:[%s8538 + $0x4] sm:$0xf]
        %v8541 = vld [vmem:[%s8538 + $0x8] sm:$0xf]
        %v8542 = vld [vmem:[%s8538 + $0xc] sm:$0xf]
        %v8543 = vld [vmem:[%s8538 + $0x10] sm:$0xf]
        %v8544 = vld [vmem:[%s8538 + $0x14] sm:$0xf]
        %v8545 = vld [vmem:[%s8538 + $0x18] sm:$0xf]
        %v8546 = vld [vmem:[%s8538 + $0x1c] sm:$0xf]
        %v8547 = vld [vmem:[%s8538 + $0x20] sm:$0xf]
        %v8548 = vld [vmem:[%s8538 + $0x24] sm:$0xf]
        %v8549 = vld [vmem:[%s8538 + $0x28] sm:$0xf]
        %v8550 = vld [vmem:[%s8538 + $0x2c] sm:$0xf]
        %v8551 = vld [vmem:[%s8538 + $0x30] sm:$0xf]
        %v8552 = vld [vmem:[%s8538 + $0x34] sm:$0xf]
        %v8553 = vld [vmem:[%s8538 + $0x38] sm:$0xf]
        %v8554 = vld [vmem:[%s8538 + $0x3c] sm:$0xf]
        %v8555 = vunpack.c.l.b16 %v8485
        %v8556 = vunpack.c.l.b16 %v8488
        %v8557 = vunpack.c.l.b16 %v8492
        %v8558 = vunpack.c.l.b16 %v8495
        %v8559 = vunpack.c.l.b16 %v8499
        %v8560 = vunpack.c.l.b16 %v8502
        %v8561 = vunpack.c.l.b16 %v8506
        %v8562 = vunpack.c.l.b16 %v8509
        %v8563 = vunpack.c.l.b16 %v8513
        %v8564 = vunpack.c.l.b16 %v8516
        %v8565 = vunpack.c.l.b16 %v8520
        %v8566 = vunpack.c.l.b16 %v8523
        %v8567 = vunpack.c.l.b16 %v8527
        %v8568 = vunpack.c.l.b16 %v8530
        %v8569 = vunpack.c.l.b16 %v8534
        %v8570 = vunpack.c.l.b16 %v8537
        %v8571 = vpack.c.b16 %v8556, %v8555
        %v8572 = vpack.c.b16 %v8558, %v8557
        %v8573 = vpack.c.b16 %v8560, %v8559
        %v8574 = vpack.c.b16 %v8562, %v8561
        %v8575 = vpack.c.b16 %v8564, %v8563
        %v8576 = vpack.c.b16 %v8566, %v8565
        %v8577 = vpack.c.b16 %v8568, %v8567
        %v8578 = vpack.c.b16 %v8570, %v8569
        %v8603 = vunpack.c.l.b16 %v8539
        %v8604 = vunpack.c.l.b16 %v8540
        %v8605 = vunpack.c.l.b16 %v8541
        %v8606 = vunpack.c.l.b16 %v8542
        %v8607 = vunpack.c.l.b16 %v8543
        %v8608 = vunpack.c.l.b16 %v8544
        %v8609 = vunpack.c.l.b16 %v8545
        %v8610 = vunpack.c.l.b16 %v8546
        %v8611 = vunpack.c.l.b16 %v8547
        %v8612 = vunpack.c.l.b16 %v8548
        %v8613 = vunpack.c.l.b16 %v8549
        %v8614 = vunpack.c.l.b16 %v8550
        %v8615 = vunpack.c.l.b16 %v8551
        %v8616 = vunpack.c.l.b16 %v8552
        %v8617 = vunpack.c.l.b16 %v8553
        %v8618 = vunpack.c.l.b16 %v8554
        %v8619 = vpack.c.b16 %v8604, %v8603
        %v8620 = vpack.c.b16 %v8606, %v8605
        %v8621 = vpack.c.b16 %v8608, %v8607
        %v8622 = vpack.c.b16 %v8610, %v8609
        %v8623 = vpack.c.b16 %v8612, %v8611
        %v8624 = vpack.c.b16 %v8614, %v8613
        %v8625 = vpack.c.b16 %v8616, %v8615
        %v8626 = vpack.c.b16 %v8618, %v8617
        %8635 = vmatpush.bf16.msra.mxu0 %v8626
        %8636 = vmatpush.bf16.msra.mxu0 %v8625
        %8637 = vmatpush.bf16.msra.mxu0 %v8624
        %8638 = vmatpush.bf16.msra.mxu0 %v8623
        %8639 = vmatpush.bf16.msra.mxu0 %v8622
        %8640 = vmatpush.bf16.msra.mxu0 %v8621
        %8641 = vmatpush.bf16.msra.mxu0 %v8620
        %8642 = vmatpush.bf16.msra.mxu0 %v8619
        %8643 = vmatmul.bf16.gmra.mxu0 %v8571
        %v8644 = vpop.f32.mrf.mxu0
        %v8645 = vadd.f32 0.0, %v8644
        %v8646 = vpop.f32.mrf.mxu0
        %v8647 = vadd.f32 0.0, %v8646
        %8648 = vmatmul.bf16.gmra.mxu0 %v8572
        %v8649 = vpop.f32.mrf.mxu0
        %v8650 = vadd.f32 0.0, %v8649
        %v8651 = vpop.f32.mrf.mxu0
        %v8652 = vadd.f32 0.0, %v8651
        %8653 = vmatmul.bf16.gmra.mxu0 %v8573
        %v8654 = vpop.f32.mrf.mxu0
        %v8655 = vadd.f32 0.0, %v8654
        %v8656 = vpop.f32.mrf.mxu0
        %v8657 = vadd.f32 0.0, %v8656
        %8658 = vmatmul.bf16.gmra.mxu0 %v8574
        %v8659 = vpop.f32.mrf.mxu0
        %v8660 = vadd.f32 0.0, %v8659
        %v8661 = vpop.f32.mrf.mxu0
        %v8662 = vadd.f32 0.0, %v8661
        %8663 = vmatmul.bf16.gmra.mxu0 %v8575
        %v8664 = vpop.f32.mrf.mxu0
        %v8665 = vadd.f32 0.0, %v8664
        %v8666 = vpop.f32.mrf.mxu0
        %v8667 = vadd.f32 0.0, %v8666
        %8668 = vmatmul.bf16.gmra.mxu0 %v8576
        %v8669 = vpop.f32.mrf.mxu0
        %v8670 = vadd.f32 0.0, %v8669
        %v8671 = vpop.f32.mrf.mxu0
        %v8672 = vadd.f32 0.0, %v8671
        %8673 = vmatmul.bf16.gmra.mxu0 %v8577
        %v8674 = vpop.f32.mrf.mxu0
        %v8675 = vadd.f32 0.0, %v8674
        %v8676 = vpop.f32.mrf.mxu0
        %v8677 = vadd.f32 0.0, %v8676
        %8678 = vmatmul.bf16.gmra.mxu0 %v8578
        %v8679 = vpop.f32.mrf.mxu0
        %v8680 = vadd.f32 0.0, %v8679
        %v8681 = vpop.f32.mrf.mxu0
        %v8682 = vadd.f32 0.0, %v8681
        %8683 = vdwg.mxu0
        %v8684 = vadd.f32 %v8434, %v8645
        %v8685 = vadd.f32 %v8435, %v8647
        %v8686 = vadd.f32 %v8436, %v8650
        %v8687 = vadd.f32 %v8437, %v8652
        %v8688 = vadd.f32 %v8438, %v8655
        %v8689 = vadd.f32 %v8439, %v8657
        %v8690 = vadd.f32 %v8440, %v8660
        %v8691 = vadd.f32 %v8441, %v8662
        %v8692 = vadd.f32 %v8442, %v8665
        %v8693 = vadd.f32 %v8443, %v8667
        %v8694 = vadd.f32 %v8444, %v8670
        %v8695 = vadd.f32 %v8445, %v8672
        %v8696 = vadd.f32 %v8446, %v8675
        %v8697 = vadd.f32 %v8447, %v8677
        %v8698 = vadd.f32 %v8448, %v8680
        %v8699 = vadd.f32 %v8449, %v8682
        %v8701 = vperm.slane %v6288, 0
        %v8703 = vmul.f32 %v8684, %v8701
        %v8704 = vmul.f32 %v8685, %v8701
        %v8705 = vmul.f32 %v8686, %v8701
        %v8706 = vmul.f32 %v8687, %v8701
        %v8707 = vmul.f32 %v8688, %v8701
        %v8708 = vmul.f32 %v8689, %v8701
        %v8709 = vmul.f32 %v8690, %v8701
        %v8710 = vmul.f32 %v8691, %v8701
        %v8711 = vmul.f32 %v8692, %v8701
        %v8712 = vmul.f32 %v8693, %v8701
        %v8713 = vmul.f32 %v8694, %v8701
        %v8714 = vmul.f32 %v8695, %v8701
        %v8715 = vmul.f32 %v8696, %v8701
        %v8716 = vmul.f32 %v8697, %v8701
        %v8717 = vmul.f32 %v8698, %v8701
        %v8718 = vmul.f32 %v8699, %v8701
        %v8720 = vperm.slane %v6289, 0
        %v8722 = vadd.f32 %v8703, %v8720
        %v8723 = vadd.f32 %v8704, %v8720
        %v8724 = vadd.f32 %v8705, %v8720
        %v8725 = vadd.f32 %v8706, %v8720
        %v8726 = vadd.f32 %v8707, %v8720
        %v8727 = vadd.f32 %v8708, %v8720
        %v8728 = vadd.f32 %v8709, %v8720
        %v8729 = vadd.f32 %v8710, %v8720
        %v8730 = vadd.f32 %v8711, %v8720
        %v8731 = vadd.f32 %v8712, %v8720
        %v8732 = vadd.f32 %v8713, %v8720
        %v8733 = vadd.f32 %v8714, %v8720
        %v8734 = vadd.f32 %v8715, %v8720
        %v8735 = vadd.f32 %v8716, %v8720
        %v8736 = vadd.f32 %v8717, %v8720
        %v8737 = vadd.f32 %v8718, %v8720
        %v8738 = vmax.f32 %v8722, 0.0
        %v8739 = vmax.f32 %v8723, 0.0
        %v8740 = vmax.f32 %v8724, 0.0
        %v8741 = vmax.f32 %v8725, 0.0
        %v8742 = vmax.f32 %v8726, 0.0
        %v8743 = vmax.f32 %v8727, 0.0
        %v8744 = vmax.f32 %v8728, 0.0
        %v8745 = vmax.f32 %v8729, 0.0
        %v8746 = vmax.f32 %v8730, 0.0
        %v8747 = vmax.f32 %v8731, 0.0
        %v8748 = vmax.f32 %v8732, 0.0
        %v8749 = vmax.f32 %v8733, 0.0
        %v8750 = vmax.f32 %v8734, 0.0
        %v8751 = vmax.f32 %v8735, 0.0
        %v8752 = vmax.f32 %v8736, 0.0
        %v8753 = vmax.f32 %v8737, 0.0
        %v8754 = vpack.c.bf16 %v8738, %v8738
        %v8755 = vpack.c.bf16 %v8739, %v8739
        %v8756 = vpack.c.bf16 %v8740, %v8740
        %v8757 = vpack.c.bf16 %v8741, %v8741
        %v8758 = vpack.c.bf16 %v8742, %v8742
        %v8759 = vpack.c.bf16 %v8743, %v8743
        %v8760 = vpack.c.bf16 %v8744, %v8744
        %v8761 = vpack.c.bf16 %v8745, %v8745
        %v8762 = vpack.c.bf16 %v8746, %v8746
        %v8763 = vpack.c.bf16 %v8747, %v8747
        %v8764 = vpack.c.bf16 %v8748, %v8748
        %v8765 = vpack.c.bf16 %v8749, %v8749
        %v8766 = vpack.c.bf16 %v8750, %v8750
        %v8767 = vpack.c.bf16 %v8751, %v8751
        %v8768 = vpack.c.bf16 %v8752, %v8752
        %v8769 = vpack.c.bf16 %v8753, %v8753
        %8770 = vst [vmem:[%s305] sm:$0xf] %v8754
        %8771 = vst [vmem:[%s305 + $0x4] sm:$0xf] %v8755
        %8772 = vst [vmem:[%s305 + $0x8] sm:$0xf] %v8756
        %8773 = vst [vmem:[%s305 + $0xc] sm:$0xf] %v8757
        %8774 = vst [vmem:[%s305 + $0x10] sm:$0xf] %v8758
        %8775 = vst [vmem:[%s305 + $0x14] sm:$0xf] %v8759
        %8776 = vst [vmem:[%s305 + $0x18] sm:$0xf] %v8760
        %8777 = vst [vmem:[%s305 + $0x1c] sm:$0xf] %v8761
        %8778 = vst [vmem:[%s305 + $0x20] sm:$0xf] %v8762
        %8779 = vst [vmem:[%s305 + $0x24] sm:$0xf] %v8763
        %8780 = vst [vmem:[%s305 + $0x28] sm:$0xf] %v8764
        %8781 = vst [vmem:[%s305 + $0x2c] sm:$0xf] %v8765
        %8782 = vst [vmem:[%s305 + $0x30] sm:$0xf] %v8766
        %8783 = vst [vmem:[%s305 + $0x34] sm:$0xf] %v8767
        %8784 = vst [vmem:[%s305 + $0x38] sm:$0xf] %v8768
        %8785 = vst [vmem:[%s305 + $0x3c] sm:$0xf] %v8769
        %s8786 = scalar_lea.vmem [#allocation3], 96
        %v8787 = vld [vmem:[%s8786] sm:$0xf]
        %v8788 = vld [vmem:[%s8786 + $0x4] sm:$0xf]
        %v8789 = vld [vmem:[%s8786 + $0xc] sm:$0xf]
        %v8790 = vld [vmem:[%s8786 + $0x10] sm:$0xf]
        %v8791 = vld [vmem:[%s8786 + $0x18] sm:$0xf]
        %v8792 = vld [vmem:[%s8786 + $0x1c] sm:$0xf]
        %v8793 = vld [vmem:[%s8786 + $0x24] sm:$0xf]
        %v8794 = vld [vmem:[%s8786 + $0x28] sm:$0xf]
        %v8795 = vld [vmem:[%s8786 + $0x30] sm:$0xf]
        %v8796 = vld [vmem:[%s8786 + $0x34] sm:$0xf]
        %v8797 = vld [vmem:[%s8786 + $0x3c] sm:$0xf]
        %v8798 = vld [vmem:[%s8786 + $0x40] sm:$0xf]
        %v8799 = vld [vmem:[%s8786 + $0x48] sm:$0xf]
        %v8800 = vld [vmem:[%s8786 + $0x4c] sm:$0xf]
        %v8801 = vld [vmem:[%s8786 + $0x54] sm:$0xf]
        %v8802 = vld [vmem:[%s8786 + $0x58] sm:$0xf]
        %v8803 = vld [vmem:[#allocation7] sm:$0xf]
        %v8804 = vld [vmem:[#allocation7 + $0x4] sm:$0xf]
        %v8805 = vld [vmem:[#allocation7 + $0x8] sm:$0xf]
        %v8806 = vld [vmem:[#allocation7 + $0xc] sm:$0xf]
        %v8807 = vld [vmem:[#allocation7 + $0x10] sm:$0xf]
        %v8808 = vld [vmem:[#allocation7 + $0x14] sm:$0xf]
        %v8809 = vld [vmem:[#allocation7 + $0x18] sm:$0xf]
        %v8810 = vld [vmem:[#allocation7 + $0x1c] sm:$0xf]
        %v8811 = vld [vmem:[#allocation7 + $0x20] sm:$0xf]
        %v8812 = vld [vmem:[#allocation7 + $0x24] sm:$0xf]
        %v8813 = vld [vmem:[#allocation7 + $0x28] sm:$0xf]
        %v8814 = vld [vmem:[#allocation7 + $0x2c] sm:$0xf]
        %v8815 = vld [vmem:[#allocation7 + $0x30] sm:$0xf]
        %v8816 = vld [vmem:[#allocation7 + $0x34] sm:$0xf]
        %v8817 = vld [vmem:[#allocation7 + $0x38] sm:$0xf]
        %v8818 = vld [vmem:[#allocation7 + $0x3c] sm:$0xf]
        %v8819 = vld [vmem:[%s8786 + $0x8] sm:$0x1]
        %v8820 = vld [vmem:[%s8786 + $0x14] sm:$0x1]
        %v8821 = vld [vmem:[%s8786 + $0x20] sm:$0x1]
        %v8822 = vld [vmem:[%s8786 + $0x2c] sm:$0x1]
        %v8823 = vld [vmem:[%s8786 + $0x38] sm:$0x1]
        %v8824 = vld [vmem:[%s8786 + $0x44] sm:$0x1]
        %v8825 = vld [vmem:[%s8786 + $0x50] sm:$0x1]
        %v8826 = vld [vmem:[%s8786 + $0x5c] sm:$0x1]
        %v8828 = vshrl.u32 %v8787, 16
        %v8830 = vrot.slane %v8828, 4
        %v8831 = vshll.u32 %v8787, 16
        %v8833 = vrot.slane %v8831, 5
        %v8834 = vor.u32 %v8830, %v8833
        %v8835 = vrot.slane %v8834, 4
        %v8837 = vshll.u32 %v8788, 16
        %v8839 = vrot.slane %v8837, 5
        %v8840 = vsel %vm938, %v8835, %v8839
        %v8841 = vshrl.u32 %v8788, 16
        %v8843 = vrot.slane %v8841, 4
        %v8844 = vor.u32 %v8843, %v8839
        %v8845 = vrot.slane %v8844, 4
        %v8847 = vshll.u32 %v8819, 16
        %v8849 = vrot.slane %v8847, 5
        %v8850 = vsel %vm938, %v8845, %v8849
        %v8852 = vshrl.u32 %v8789, 16
        %v8854 = vrot.slane %v8852, 4
        %v8855 = vshll.u32 %v8789, 16
        %v8857 = vrot.slane %v8855, 5
        %v8858 = vor.u32 %v8854, %v8857
        %v8859 = vrot.slane %v8858, 4
        %v8861 = vshll.u32 %v8790, 16
        %v8863 = vrot.slane %v8861, 5
        %v8864 = vsel %vm938, %v8859, %v8863
        %v8865 = vshrl.u32 %v8790, 16
        %v8867 = vrot.slane %v8865, 4
        %v8868 = vor.u32 %v8867, %v8863
        %v8869 = vrot.slane %v8868, 4
        %v8871 = vshll.u32 %v8820, 16
        %v8873 = vrot.slane %v8871, 5
        %v8874 = vsel %vm938, %v8869, %v8873
        %v8876 = vshrl.u32 %v8791, 16
        %v8878 = vrot.slane %v8876, 4
        %v8879 = vshll.u32 %v8791, 16
        %v8881 = vrot.slane %v8879, 5
        %v8882 = vor.u32 %v8878, %v8881
        %v8883 = vrot.slane %v8882, 4
        %v8885 = vshll.u32 %v8792, 16
        %v8887 = vrot.slane %v8885, 5
        %v8888 = vsel %vm938, %v8883, %v8887
        %v8889 = vshrl.u32 %v8792, 16
        %v8891 = vrot.slane %v8889, 4
        %v8892 = vor.u32 %v8891, %v8887
        %v8893 = vrot.slane %v8892, 4
        %v8895 = vshll.u32 %v8821, 16
        %v8897 = vrot.slane %v8895, 5
        %v8898 = vsel %vm938, %v8893, %v8897
        %v8900 = vshrl.u32 %v8793, 16
        %v8902 = vrot.slane %v8900, 4
        %v8903 = vshll.u32 %v8793, 16
        %v8905 = vrot.slane %v8903, 5
        %v8906 = vor.u32 %v8902, %v8905
        %v8907 = vrot.slane %v8906, 4
        %v8909 = vshll.u32 %v8794, 16
        %v8911 = vrot.slane %v8909, 5
        %v8912 = vsel %vm938, %v8907, %v8911
        %v8913 = vshrl.u32 %v8794, 16
        %v8915 = vrot.slane %v8913, 4
        %v8916 = vor.u32 %v8915, %v8911
        %v8917 = vrot.slane %v8916, 4
        %v8919 = vshll.u32 %v8822, 16
        %v8921 = vrot.slane %v8919, 5
        %v8922 = vsel %vm938, %v8917, %v8921
        %v8924 = vshrl.u32 %v8795, 16
        %v8926 = vrot.slane %v8924, 4
        %v8927 = vshll.u32 %v8795, 16
        %v8929 = vrot.slane %v8927, 5
        %v8930 = vor.u32 %v8926, %v8929
        %v8931 = vrot.slane %v8930, 4
        %v8933 = vshll.u32 %v8796, 16
        %v8935 = vrot.slane %v8933, 5
        %v8936 = vsel %vm938, %v8931, %v8935
        %v8937 = vshrl.u32 %v8796, 16
        %v8939 = vrot.slane %v8937, 4
        %v8940 = vor.u32 %v8939, %v8935
        %v8941 = vrot.slane %v8940, 4
        %v8943 = vshll.u32 %v8823, 16
        %v8945 = vrot.slane %v8943, 5
        %v8946 = vsel %vm938, %v8941, %v8945
        %v8948 = vshrl.u32 %v8797, 16
        %v8950 = vrot.slane %v8948, 4
        %v8951 = vshll.u32 %v8797, 16
        %v8953 = vrot.slane %v8951, 5
        %v8954 = vor.u32 %v8950, %v8953
        %v8955 = vrot.slane %v8954, 4
        %v8957 = vshll.u32 %v8798, 16
        %v8959 = vrot.slane %v8957, 5
        %v8960 = vsel %vm938, %v8955, %v8959
        %v8961 = vshrl.u32 %v8798, 16
        %v8963 = vrot.slane %v8961, 4
        %v8964 = vor.u32 %v8963, %v8959
        %v8965 = vrot.slane %v8964, 4
        %v8967 = vshll.u32 %v8824, 16
        %v8969 = vrot.slane %v8967, 5
        %v8970 = vsel %vm938, %v8965, %v8969
        %v8972 = vshrl.u32 %v8799, 16
        %v8974 = vrot.slane %v8972, 4
        %v8975 = vshll.u32 %v8799, 16
        %v8977 = vrot.slane %v8975, 5
        %v8978 = vor.u32 %v8974, %v8977
        %v8979 = vrot.slane %v8978, 4
        %v8981 = vshll.u32 %v8800, 16
        %v8983 = vrot.slane %v8981, 5
        %v8984 = vsel %vm938, %v8979, %v8983
        %v8985 = vshrl.u32 %v8800, 16
        %v8987 = vrot.slane %v8985, 4
        %v8988 = vor.u32 %v8987, %v8983
        %v8989 = vrot.slane %v8988, 4
        %v8991 = vshll.u32 %v8825, 16
        %v8993 = vrot.slane %v8991, 5
        %v8994 = vsel %vm938, %v8989, %v8993
        %v8996 = vshrl.u32 %v8801, 16
        %v8998 = vrot.slane %v8996, 4
        %v8999 = vshll.u32 %v8801, 16
        %v9001 = vrot.slane %v8999, 5
        %v9002 = vor.u32 %v8998, %v9001
        %v9003 = vrot.slane %v9002, 4
        %v9005 = vshll.u32 %v8802, 16
        %v9007 = vrot.slane %v9005, 5
        %v9008 = vsel %vm938, %v9003, %v9007
        %v9009 = vshrl.u32 %v8802, 16
        %v9011 = vrot.slane %v9009, 4
        %v9012 = vor.u32 %v9011, %v9007
        %v9013 = vrot.slane %v9012, 4
        %v9015 = vshll.u32 %v8826, 16
        %v9017 = vrot.slane %v9015, 5
        %v9018 = vsel %vm938, %v9013, %v9017
        %v9019 = vld [vmem:[%s6522] sm:$0xf]
        %v9020 = vld [vmem:[%s6522 + $0x4] sm:$0xf]
        %v9021 = vld [vmem:[%s6522 + $0x8] sm:$0xf]
        %v9022 = vld [vmem:[%s6522 + $0xc] sm:$0xf]
        %v9023 = vld [vmem:[%s6522 + $0x10] sm:$0xf]
        %v9024 = vld [vmem:[%s6522 + $0x14] sm:$0xf]
        %v9025 = vld [vmem:[%s6522 + $0x18] sm:$0xf]
        %v9026 = vld [vmem:[%s6522 + $0x1c] sm:$0xf]
        %v9027 = vld [vmem:[%s6522 + $0x20] sm:$0xf]
        %v9028 = vld [vmem:[%s6522 + $0x24] sm:$0xf]
        %v9029 = vld [vmem:[%s6522 + $0x28] sm:$0xf]
        %v9030 = vld [vmem:[%s6522 + $0x2c] sm:$0xf]
        %v9031 = vld [vmem:[%s6522 + $0x30] sm:$0xf]
        %v9032 = vld [vmem:[%s6522 + $0x34] sm:$0xf]
        %v9033 = vld [vmem:[%s6522 + $0x38] sm:$0xf]
        %v9034 = vld [vmem:[%s6522 + $0x3c] sm:$0xf]
        %v9035 = vunpack.c.l.b16 %v8840
        %v9036 = vunpack.c.l.b16 %v8850
        %v9037 = vunpack.c.l.b16 %v8864
        %v9038 = vunpack.c.l.b16 %v8874
        %v9039 = vunpack.c.l.b16 %v8888
        %v9040 = vunpack.c.l.b16 %v8898
        %v9041 = vunpack.c.l.b16 %v8912
        %v9042 = vunpack.c.l.b16 %v8922
        %v9043 = vunpack.c.l.b16 %v8936
        %v9044 = vunpack.c.l.b16 %v8946
        %v9045 = vunpack.c.l.b16 %v8960
        %v9046 = vunpack.c.l.b16 %v8970
        %v9047 = vunpack.c.l.b16 %v8984
        %v9048 = vunpack.c.l.b16 %v8994
        %v9049 = vunpack.c.l.b16 %v9008
        %v9050 = vunpack.c.l.b16 %v9018
        %v9051 = vpack.c.b16 %v9036, %v9035
        %v9052 = vpack.c.b16 %v9038, %v9037
        %v9053 = vpack.c.b16 %v9040, %v9039
        %v9054 = vpack.c.b16 %v9042, %v9041
        %v9055 = vpack.c.b16 %v9044, %v9043
        %v9056 = vpack.c.b16 %v9046, %v9045
        %v9057 = vpack.c.b16 %v9048, %v9047
        %v9058 = vpack.c.b16 %v9050, %v9049
        %v9083 = vunpack.c.l.b16 %v9019
        %v9084 = vunpack.c.l.b16 %v9020
        %v9085 = vunpack.c.l.b16 %v9021
        %v9086 = vunpack.c.l.b16 %v9022
        %v9087 = vunpack.c.l.b16 %v9023
        %v9088 = vunpack.c.l.b16 %v9024
        %v9089 = vunpack.c.l.b16 %v9025
        %v9090 = vunpack.c.l.b16 %v9026
        %v9091 = vunpack.c.l.b16 %v9027
        %v9092 = vunpack.c.l.b16 %v9028
        %v9093 = vunpack.c.l.b16 %v9029
        %v9094 = vunpack.c.l.b16 %v9030
        %v9095 = vunpack.c.l.b16 %v9031
        %v9096 = vunpack.c.l.b16 %v9032
        %v9097 = vunpack.c.l.b16 %v9033
        %v9098 = vunpack.c.l.b16 %v9034
        %v9099 = vpack.c.b16 %v9084, %v9083
        %v9100 = vpack.c.b16 %v9086, %v9085
        %v9101 = vpack.c.b16 %v9088, %v9087
        %v9102 = vpack.c.b16 %v9090, %v9089
        %v9103 = vpack.c.b16 %v9092, %v9091
        %v9104 = vpack.c.b16 %v9094, %v9093
        %v9105 = vpack.c.b16 %v9096, %v9095
        %v9106 = vpack.c.b16 %v9098, %v9097
        %9115 = vmatpush.bf16.msra.mxu0 %v9106
        %9116 = vmatpush.bf16.msra.mxu0 %v9105
        %9117 = vmatpush.bf16.msra.mxu0 %v9104
        %9118 = vmatpush.bf16.msra.mxu0 %v9103
        %9119 = vmatpush.bf16.msra.mxu0 %v9102
        %9120 = vmatpush.bf16.msra.mxu0 %v9101
        %9121 = vmatpush.bf16.msra.mxu0 %v9100
        %9122 = vmatpush.bf16.msra.mxu0 %v9099
        %9123 = vmatmul.bf16.gmra.mxu0 %v9051
        %v9124 = vpop.f32.mrf.mxu0
        %v9125 = vadd.f32 0.0, %v9124
        %v9126 = vpop.f32.mrf.mxu0
        %v9127 = vadd.f32 0.0, %v9126
        %9128 = vmatmul.bf16.gmra.mxu0 %v9052
        %v9129 = vpop.f32.mrf.mxu0
        %v9130 = vadd.f32 0.0, %v9129
        %v9131 = vpop.f32.mrf.mxu0
        %v9132 = vadd.f32 0.0, %v9131
        %9133 = vmatmul.bf16.gmra.mxu0 %v9053
        %v9134 = vpop.f32.mrf.mxu0
        %v9135 = vadd.f32 0.0, %v9134
        %v9136 = vpop.f32.mrf.mxu0
        %v9137 = vadd.f32 0.0, %v9136
        %9138 = vmatmul.bf16.gmra.mxu0 %v9054
        %v9139 = vpop.f32.mrf.mxu0
        %v9140 = vadd.f32 0.0, %v9139
        %v9141 = vpop.f32.mrf.mxu0
        %v9142 = vadd.f32 0.0, %v9141
        %9143 = vmatmul.bf16.gmra.mxu0 %v9055
        %v9144 = vpop.f32.mrf.mxu0
        %v9145 = vadd.f32 0.0, %v9144
        %v9146 = vpop.f32.mrf.mxu0
        %v9147 = vadd.f32 0.0, %v9146
        %9148 = vmatmul.bf16.gmra.mxu0 %v9056
        %v9149 = vpop.f32.mrf.mxu0
        %v9150 = vadd.f32 0.0, %v9149
        %v9151 = vpop.f32.mrf.mxu0
        %v9152 = vadd.f32 0.0, %v9151
        %9153 = vmatmul.bf16.gmra.mxu0 %v9057
        %v9154 = vpop.f32.mrf.mxu0
        %v9155 = vadd.f32 0.0, %v9154
        %v9156 = vpop.f32.mrf.mxu0
        %v9157 = vadd.f32 0.0, %v9156
        %9158 = vmatmul.bf16.gmra.mxu0 %v9058
        %v9159 = vpop.f32.mrf.mxu0
        %v9160 = vadd.f32 0.0, %v9159
        %v9161 = vpop.f32.mrf.mxu0
        %v9162 = vadd.f32 0.0, %v9161
        %9163 = vdwg.mxu0
        %v9180 = vunpack.c.l.b16 %v8787
        %v9181 = vunpack.c.l.b16 %v8788
        %v9182 = vunpack.c.l.b16 %v8789
        %v9183 = vunpack.c.l.b16 %v8790
        %v9184 = vunpack.c.l.b16 %v8791
        %v9185 = vunpack.c.l.b16 %v8792
        %v9186 = vunpack.c.l.b16 %v8793
        %v9187 = vunpack.c.l.b16 %v8794
        %v9188 = vunpack.c.l.b16 %v8795
        %v9189 = vunpack.c.l.b16 %v8796
        %v9190 = vunpack.c.l.b16 %v8797
        %v9191 = vunpack.c.l.b16 %v8798
        %v9192 = vunpack.c.l.b16 %v8799
        %v9193 = vunpack.c.l.b16 %v8800
        %v9194 = vunpack.c.l.b16 %v8801
        %v9195 = vunpack.c.l.b16 %v8802
        %v9196 = vpack.c.b16 %v9181, %v9180
        %v9197 = vpack.c.b16 %v9183, %v9182
        %v9198 = vpack.c.b16 %v9185, %v9184
        %v9199 = vpack.c.b16 %v9187, %v9186
        %v9200 = vpack.c.b16 %v9189, %v9188
        %v9201 = vpack.c.b16 %v9191, %v9190
        %v9202 = vpack.c.b16 %v9193, %v9192
        %v9203 = vpack.c.b16 %v9195, %v9194
        %v9228 = vunpack.c.l.b16 %v8803
        %v9229 = vunpack.c.l.b16 %v8804
        %v9230 = vunpack.c.l.b16 %v8805
        %v9231 = vunpack.c.l.b16 %v8806
        %v9232 = vunpack.c.l.b16 %v8807
        %v9233 = vunpack.c.l.b16 %v8808
        %v9234 = vunpack.c.l.b16 %v8809
        %v9235 = vunpack.c.l.b16 %v8810
        %v9236 = vunpack.c.l.b16 %v8811
        %v9237 = vunpack.c.l.b16 %v8812
        %v9238 = vunpack.c.l.b16 %v8813
        %v9239 = vunpack.c.l.b16 %v8814
        %v9240 = vunpack.c.l.b16 %v8815
        %v9241 = vunpack.c.l.b16 %v8816
        %v9242 = vunpack.c.l.b16 %v8817
        %v9243 = vunpack.c.l.b16 %v8818
        %v9244 = vpack.c.b16 %v9229, %v9228
        %v9245 = vpack.c.b16 %v9231, %v9230
        %v9246 = vpack.c.b16 %v9233, %v9232
        %v9247 = vpack.c.b16 %v9235, %v9234
        %v9248 = vpack.c.b16 %v9237, %v9236
        %v9249 = vpack.c.b16 %v9239, %v9238
        %v9250 = vpack.c.b16 %v9241, %v9240
        %v9251 = vpack.c.b16 %v9243, %v9242
        %9260 = vmatpush.bf16.msra.mxu0 %v9251
        %9261 = vmatpush.bf16.msra.mxu0 %v9250
        %9262 = vmatpush.bf16.msra.mxu0 %v9249
        %9263 = vmatpush.bf16.msra.mxu0 %v9248
        %9264 = vmatpush.bf16.msra.mxu0 %v9247
        %9265 = vmatpush.bf16.msra.mxu0 %v9246
        %9266 = vmatpush.bf16.msra.mxu0 %v9245
        %9267 = vmatpush.bf16.msra.mxu0 %v9244
        %9268 = vmatmul.bf16.gmra.mxu0 %v9196
        %v9269 = vpop.f32.mrf.mxu0
        %v9270 = vadd.f32 %v9125, %v9269
        %v9271 = vpop.f32.mrf.mxu0
        %v9272 = vadd.f32 %v9127, %v9271
        %9273 = vmatmul.bf16.gmra.mxu0 %v9197
        %v9274 = vpop.f32.mrf.mxu0
        %v9275 = vadd.f32 %v9130, %v9274
        %v9276 = vpop.f32.mrf.mxu0
        %v9277 = vadd.f32 %v9132, %v9276
        %9278 = vmatmul.bf16.gmra.mxu0 %v9198
        %v9279 = vpop.f32.mrf.mxu0
        %v9280 = vadd.f32 %v9135, %v9279
        %v9281 = vpop.f32.mrf.mxu0
        %v9282 = vadd.f32 %v9137, %v9281
        %9283 = vmatmul.bf16.gmra.mxu0 %v9199
        %v9284 = vpop.f32.mrf.mxu0
        %v9285 = vadd.f32 %v9140, %v9284
        %v9286 = vpop.f32.mrf.mxu0
        %v9287 = vadd.f32 %v9142, %v9286
        %9288 = vmatmul.bf16.gmra.mxu0 %v9200
        %v9289 = vpop.f32.mrf.mxu0
        %v9290 = vadd.f32 %v9145, %v9289
        %v9291 = vpop.f32.mrf.mxu0
        %v9292 = vadd.f32 %v9147, %v9291
        %9293 = vmatmul.bf16.gmra.mxu0 %v9201
        %v9294 = vpop.f32.mrf.mxu0
        %v9295 = vadd.f32 %v9150, %v9294
        %v9296 = vpop.f32.mrf.mxu0
        %v9297 = vadd.f32 %v9152, %v9296
        %9298 = vmatmul.bf16.gmra.mxu0 %v9202
        %v9299 = vpop.f32.mrf.mxu0
        %v9300 = vadd.f32 %v9155, %v9299
        %v9301 = vpop.f32.mrf.mxu0
        %v9302 = vadd.f32 %v9157, %v9301
        %9303 = vmatmul.bf16.gmra.mxu0 %v9203
        %v9304 = vpop.f32.mrf.mxu0
        %v9305 = vadd.f32 %v9160, %v9304
        %v9306 = vpop.f32.mrf.mxu0
        %v9307 = vadd.f32 %v9162, %v9306
        %9308 = vdwg.mxu0
        %v9309 = vld [vmem:[%s8786] sm:$0xe]
        %v9310 = vld [vmem:[%s8786 + $0xc] sm:$0xe]
        %v9311 = vld [vmem:[%s8786 + $0x18] sm:$0xe]
        %v9312 = vld [vmem:[%s8786 + $0x24] sm:$0xe]
        %v9313 = vld [vmem:[%s8786 + $0x30] sm:$0xe]
        %v9314 = vld [vmem:[%s8786 + $0x3c] sm:$0xe]
        %v9315 = vld [vmem:[%s8786 + $0x48] sm:$0xe]
        %v9316 = vld [vmem:[%s8786 + $0x54] sm:$0xe]
        %v9333 = vrot.slane %v9309, 5
        %v9334 = vrot.slane %v9333, 4
        %v9335 = vrot.slane %v8788, 5
        %v9336 = vsel %vm1448, %v9334, %v9335
        %v9337 = vrot.slane %v9335, 4
        %v9338 = vrot.slane %v8819, 5
        %v9339 = vsel %vm1448, %v9337, %v9338
        %v9340 = vrot.slane %v9310, 5
        %v9341 = vrot.slane %v9340, 4
        %v9342 = vrot.slane %v8790, 5
        %v9343 = vsel %vm1448, %v9341, %v9342
        %v9344 = vrot.slane %v9342, 4
        %v9345 = vrot.slane %v8820, 5
        %v9346 = vsel %vm1448, %v9344, %v9345
        %v9347 = vrot.slane %v9311, 5
        %v9348 = vrot.slane %v9347, 4
        %v9349 = vrot.slane %v8792, 5
        %v9350 = vsel %vm1448, %v9348, %v9349
        %v9351 = vrot.slane %v9349, 4
        %v9352 = vrot.slane %v8821, 5
        %v9353 = vsel %vm1448, %v9351, %v9352
        %v9354 = vrot.slane %v9312, 5
        %v9355 = vrot.slane %v9354, 4
        %v9356 = vrot.slane %v8794, 5
        %v9357 = vsel %vm1448, %v9355, %v9356
        %v9358 = vrot.slane %v9356, 4
        %v9359 = vrot.slane %v8822, 5
        %v9360 = vsel %vm1448, %v9358, %v9359
        %v9361 = vrot.slane %v9313, 5
        %v9362 = vrot.slane %v9361, 4
        %v9363 = vrot.slane %v8796, 5
        %v9364 = vsel %vm1448, %v9362, %v9363
        %v9365 = vrot.slane %v9363, 4
        %v9366 = vrot.slane %v8823, 5
        %v9367 = vsel %vm1448, %v9365, %v9366
        %v9368 = vrot.slane %v9314, 5
        %v9369 = vrot.slane %v9368, 4
        %v9370 = vrot.slane %v8798, 5
        %v9371 = vsel %vm1448, %v9369, %v9370
        %v9372 = vrot.slane %v9370, 4
        %v9373 = vrot.slane %v8824, 5
        %v9374 = vsel %vm1448, %v9372, %v9373
        %v9375 = vrot.slane %v9315, 5
        %v9376 = vrot.slane %v9375, 4
        %v9377 = vrot.slane %v8800, 5
        %v9378 = vsel %vm1448, %v9376, %v9377
        %v9379 = vrot.slane %v9377, 4
        %v9380 = vrot.slane %v8825, 5
        %v9381 = vsel %vm1448, %v9379, %v9380
        %v9382 = vrot.slane %v9316, 5
        %v9383 = vrot.slane %v9382, 4
        %v9384 = vrot.slane %v8802, 5
        %v9385 = vsel %vm1448, %v9383, %v9384
        %v9386 = vrot.slane %v9384, 4
        %v9387 = vrot.slane %v8826, 5
        %v9388 = vsel %vm1448, %v9386, %v9387
        %v9389 = vld [vmem:[%s6893] sm:$0xf]
        %v9390 = vld [vmem:[%s6893 + $0x4] sm:$0xf]
        %v9391 = vld [vmem:[%s6893 + $0x8] sm:$0xf]
        %v9392 = vld [vmem:[%s6893 + $0xc] sm:$0xf]
        %v9393 = vld [vmem:[%s6893 + $0x10] sm:$0xf]
        %v9394 = vld [vmem:[%s6893 + $0x14] sm:$0xf]
        %v9395 = vld [vmem:[%s6893 + $0x18] sm:$0xf]
        %v9396 = vld [vmem:[%s6893 + $0x1c] sm:$0xf]
        %v9397 = vld [vmem:[%s6893 + $0x20] sm:$0xf]
        %v9398 = vld [vmem:[%s6893 + $0x24] sm:$0xf]
        %v9399 = vld [vmem:[%s6893 + $0x28] sm:$0xf]
        %v9400 = vld [vmem:[%s6893 + $0x2c] sm:$0xf]
        %v9401 = vld [vmem:[%s6893 + $0x30] sm:$0xf]
        %v9402 = vld [vmem:[%s6893 + $0x34] sm:$0xf]
        %v9403 = vld [vmem:[%s6893 + $0x38] sm:$0xf]
        %v9404 = vld [vmem:[%s6893 + $0x3c] sm:$0xf]
        %v9405 = vunpack.c.l.b16 %v9336
        %v9406 = vunpack.c.l.b16 %v9339
        %v9407 = vunpack.c.l.b16 %v9343
        %v9408 = vunpack.c.l.b16 %v9346
        %v9409 = vunpack.c.l.b16 %v9350
        %v9410 = vunpack.c.l.b16 %v9353
        %v9411 = vunpack.c.l.b16 %v9357
        %v9412 = vunpack.c.l.b16 %v9360
        %v9413 = vunpack.c.l.b16 %v9364
        %v9414 = vunpack.c.l.b16 %v9367
        %v9415 = vunpack.c.l.b16 %v9371
        %v9416 = vunpack.c.l.b16 %v9374
        %v9417 = vunpack.c.l.b16 %v9378
        %v9418 = vunpack.c.l.b16 %v9381
        %v9419 = vunpack.c.l.b16 %v9385
        %v9420 = vunpack.c.l.b16 %v9388
        %v9421 = vpack.c.b16 %v9406, %v9405
        %v9422 = vpack.c.b16 %v9408, %v9407
        %v9423 = vpack.c.b16 %v9410, %v9409
        %v9424 = vpack.c.b16 %v9412, %v9411
        %v9425 = vpack.c.b16 %v9414, %v9413
        %v9426 = vpack.c.b16 %v9416, %v9415
        %v9427 = vpack.c.b16 %v9418, %v9417
        %v9428 = vpack.c.b16 %v9420, %v9419
        %v9453 = vunpack.c.l.b16 %v9389
        %v9454 = vunpack.c.l.b16 %v9390
        %v9455 = vunpack.c.l.b16 %v9391
        %v9456 = vunpack.c.l.b16 %v9392
        %v9457 = vunpack.c.l.b16 %v9393
        %v9458 = vunpack.c.l.b16 %v9394
        %v9459 = vunpack.c.l.b16 %v9395
        %v9460 = vunpack.c.l.b16 %v9396
        %v9461 = vunpack.c.l.b16 %v9397
        %v9462 = vunpack.c.l.b16 %v9398
        %v9463 = vunpack.c.l.b16 %v9399
        %v9464 = vunpack.c.l.b16 %v9400
        %v9465 = vunpack.c.l.b16 %v9401
        %v9466 = vunpack.c.l.b16 %v9402
        %v9467 = vunpack.c.l.b16 %v9403
        %v9468 = vunpack.c.l.b16 %v9404
        %v9469 = vpack.c.b16 %v9454, %v9453
        %v9470 = vpack.c.b16 %v9456, %v9455
        %v9471 = vpack.c.b16 %v9458, %v9457
        %v9472 = vpack.c.b16 %v9460, %v9459
        %v9473 = vpack.c.b16 %v9462, %v9461
        %v9474 = vpack.c.b16 %v9464, %v9463
        %v9475 = vpack.c.b16 %v9466, %v9465
        %v9476 = vpack.c.b16 %v9468, %v9467
        %9485 = vmatpush.bf16.msra.mxu0 %v9476
        %9486 = vmatpush.bf16.msra.mxu0 %v9475
        %9487 = vmatpush.bf16.msra.mxu0 %v9474
        %9488 = vmatpush.bf16.msra.mxu0 %v9473
        %9489 = vmatpush.bf16.msra.mxu0 %v9472
        %9490 = vmatpush.bf16.msra.mxu0 %v9471
        %9491 = vmatpush.bf16.msra.mxu0 %v9470
        %9492 = vmatpush.bf16.msra.mxu0 %v9469
        %9493 = vmatmul.bf16.gmra.mxu0 %v9421
        %v9494 = vpop.f32.mrf.mxu0
        %v9495 = vadd.f32 0.0, %v9494
        %v9496 = vpop.f32.mrf.mxu0
        %v9497 = vadd.f32 0.0, %v9496
        %9498 = vmatmul.bf16.gmra.mxu0 %v9422
        %v9499 = vpop.f32.mrf.mxu0
        %v9500 = vadd.f32 0.0, %v9499
        %v9501 = vpop.f32.mrf.mxu0
        %v9502 = vadd.f32 0.0, %v9501
        %9503 = vmatmul.bf16.gmra.mxu0 %v9423
        %v9504 = vpop.f32.mrf.mxu0
        %v9505 = vadd.f32 0.0, %v9504
        %v9506 = vpop.f32.mrf.mxu0
        %v9507 = vadd.f32 0.0, %v9506
        %9508 = vmatmul.bf16.gmra.mxu0 %v9424
        %v9509 = vpop.f32.mrf.mxu0
        %v9510 = vadd.f32 0.0, %v9509
        %v9511 = vpop.f32.mrf.mxu0
        %v9512 = vadd.f32 0.0, %v9511
        %9513 = vmatmul.bf16.gmra.mxu0 %v9425
        %v9514 = vpop.f32.mrf.mxu0
        %v9515 = vadd.f32 0.0, %v9514
        %v9516 = vpop.f32.mrf.mxu0
        %v9517 = vadd.f32 0.0, %v9516
        %9518 = vmatmul.bf16.gmra.mxu0 %v9426
        %v9519 = vpop.f32.mrf.mxu0
        %v9520 = vadd.f32 0.0, %v9519
        %v9521 = vpop.f32.mrf.mxu0
        %v9522 = vadd.f32 0.0, %v9521
        %9523 = vmatmul.bf16.gmra.mxu0 %v9427
        %v9524 = vpop.f32.mrf.mxu0
        %v9525 = vadd.f32 0.0, %v9524
        %v9526 = vpop.f32.mrf.mxu0
        %v9527 = vadd.f32 0.0, %v9526
        %9528 = vmatmul.bf16.gmra.mxu0 %v9428
        %v9529 = vpop.f32.mrf.mxu0
        %v9530 = vadd.f32 0.0, %v9529
        %v9531 = vpop.f32.mrf.mxu0
        %v9532 = vadd.f32 0.0, %v9531
        %9533 = vdwg.mxu0
        %v9534 = vadd.f32 %v9270, %v9495
        %v9535 = vadd.f32 %v9272, %v9497
        %v9536 = vadd.f32 %v9275, %v9500
        %v9537 = vadd.f32 %v9277, %v9502
        %v9538 = vadd.f32 %v9280, %v9505
        %v9539 = vadd.f32 %v9282, %v9507
        %v9540 = vadd.f32 %v9285, %v9510
        %v9541 = vadd.f32 %v9287, %v9512
        %v9542 = vadd.f32 %v9290, %v9515
        %v9543 = vadd.f32 %v9292, %v9517
        %v9544 = vadd.f32 %v9295, %v9520
        %v9545 = vadd.f32 %v9297, %v9522
        %v9546 = vadd.f32 %v9300, %v9525
        %v9547 = vadd.f32 %v9302, %v9527
        %v9548 = vadd.f32 %v9305, %v9530
        %v9549 = vadd.f32 %v9307, %v9532
        %v9550 = vld [vmem:[%s6231] sm:$0xf]
        %v9551 = vld [vmem:[%s6231 + $0x4] sm:$0xf]
        %v9552 = vld [vmem:[%s6231 + $0xc] sm:$0xf]
        %v9553 = vld [vmem:[%s6231 + $0x10] sm:$0xf]
        %v9554 = vld [vmem:[%s6231 + $0x18] sm:$0xf]
        %v9555 = vld [vmem:[%s6231 + $0x1c] sm:$0xf]
        %v9556 = vld [vmem:[%s6231 + $0x24] sm:$0xf]
        %v9557 = vld [vmem:[%s6231 + $0x28] sm:$0xf]
        %v9558 = vld [vmem:[%s6231 + $0x30] sm:$0xf]
        %v9559 = vld [vmem:[%s6231 + $0x34] sm:$0xf]
        %v9560 = vld [vmem:[%s6231 + $0x3c] sm:$0xf]
        %v9561 = vld [vmem:[%s6231 + $0x40] sm:$0xf]
        %v9562 = vld [vmem:[%s6231 + $0x48] sm:$0xf]
        %v9563 = vld [vmem:[%s6231 + $0x4c] sm:$0xf]
        %v9564 = vld [vmem:[%s6231 + $0x54] sm:$0xf]
        %v9565 = vld [vmem:[%s6231 + $0x58] sm:$0xf]
        %v9566 = vld [vmem:[%s7071] sm:$0xf]
        %v9567 = vld [vmem:[%s7071 + $0x4] sm:$0xf]
        %v9568 = vld [vmem:[%s7071 + $0x8] sm:$0xf]
        %v9569 = vld [vmem:[%s7071 + $0xc] sm:$0xf]
        %v9570 = vld [vmem:[%s7071 + $0x10] sm:$0xf]
        %v9571 = vld [vmem:[%s7071 + $0x14] sm:$0xf]
        %v9572 = vld [vmem:[%s7071 + $0x18] sm:$0xf]
        %v9573 = vld [vmem:[%s7071 + $0x1c] sm:$0xf]
        %v9574 = vld [vmem:[%s7071 + $0x20] sm:$0xf]
        %v9575 = vld [vmem:[%s7071 + $0x24] sm:$0xf]
        %v9576 = vld [vmem:[%s7071 + $0x28] sm:$0xf]
        %v9577 = vld [vmem:[%s7071 + $0x2c] sm:$0xf]
        %v9578 = vld [vmem:[%s7071 + $0x30] sm:$0xf]
        %v9579 = vld [vmem:[%s7071 + $0x34] sm:$0xf]
        %v9580 = vld [vmem:[%s7071 + $0x38] sm:$0xf]
        %v9581 = vld [vmem:[%s7071 + $0x3c] sm:$0xf]
        %v9598 = vunpack.c.l.b16 %v9550
        %v9599 = vunpack.c.l.b16 %v9551
        %v9600 = vunpack.c.l.b16 %v9552
        %v9601 = vunpack.c.l.b16 %v9553
        %v9602 = vunpack.c.l.b16 %v9554
        %v9603 = vunpack.c.l.b16 %v9555
        %v9604 = vunpack.c.l.b16 %v9556
        %v9605 = vunpack.c.l.b16 %v9557
        %v9606 = vunpack.c.l.b16 %v9558
        %v9607 = vunpack.c.l.b16 %v9559
        %v9608 = vunpack.c.l.b16 %v9560
        %v9609 = vunpack.c.l.b16 %v9561
        %v9610 = vunpack.c.l.b16 %v9562
        %v9611 = vunpack.c.l.b16 %v9563
        %v9612 = vunpack.c.l.b16 %v9564
        %v9613 = vunpack.c.l.b16 %v9565
        %v9614 = vpack.c.b16 %v9599, %v9598
        %v9615 = vpack.c.b16 %v9601, %v9600
        %v9616 = vpack.c.b16 %v9603, %v9602
        %v9617 = vpack.c.b16 %v9605, %v9604
        %v9618 = vpack.c.b16 %v9607, %v9606
        %v9619 = vpack.c.b16 %v9609, %v9608
        %v9620 = vpack.c.b16 %v9611, %v9610
        %v9621 = vpack.c.b16 %v9613, %v9612
        %v9646 = vunpack.c.l.b16 %v9566
        %v9647 = vunpack.c.l.b16 %v9567
        %v9648 = vunpack.c.l.b16 %v9568
        %v9649 = vunpack.c.l.b16 %v9569
        %v9650 = vunpack.c.l.b16 %v9570
        %v9651 = vunpack.c.l.b16 %v9571
        %v9652 = vunpack.c.l.b16 %v9572
        %v9653 = vunpack.c.l.b16 %v9573
        %v9654 = vunpack.c.l.b16 %v9574
        %v9655 = vunpack.c.l.b16 %v9575
        %v9656 = vunpack.c.l.b16 %v9576
        %v9657 = vunpack.c.l.b16 %v9577
        %v9658 = vunpack.c.l.b16 %v9578
        %v9659 = vunpack.c.l.b16 %v9579
        %v9660 = vunpack.c.l.b16 %v9580
        %v9661 = vunpack.c.l.b16 %v9581
        %v9662 = vpack.c.b16 %v9647, %v9646
        %v9663 = vpack.c.b16 %v9649, %v9648
        %v9664 = vpack.c.b16 %v9651, %v9650
        %v9665 = vpack.c.b16 %v9653, %v9652
        %v9666 = vpack.c.b16 %v9655, %v9654
        %v9667 = vpack.c.b16 %v9657, %v9656
        %v9668 = vpack.c.b16 %v9659, %v9658
        %v9669 = vpack.c.b16 %v9661, %v9660
        %9678 = vmatpush.bf16.msra.mxu0 %v9669
        %9679 = vmatpush.bf16.msra.mxu0 %v9668
        %9680 = vmatpush.bf16.msra.mxu0 %v9667
        %9681 = vmatpush.bf16.msra.mxu0 %v9666
        %9682 = vmatpush.bf16.msra.mxu0 %v9665
        %9683 = vmatpush.bf16.msra.mxu0 %v9664
        %9684 = vmatpush.bf16.msra.mxu0 %v9663
        %9685 = vmatpush.bf16.msra.mxu0 %v9662
        %9686 = vmatmul.bf16.gmra.mxu0 %v9614
        %v9687 = vpop.f32.mrf.mxu0
        %v9688 = vadd.f32 0.0, %v9687
        %v9689 = vpop.f32.mrf.mxu0
        %v9690 = vadd.f32 0.0, %v9689
        %9691 = vmatmul.bf16.gmra.mxu0 %v9615
        %v9692 = vpop.f32.mrf.mxu0
        %v9693 = vadd.f32 0.0, %v9692
        %v9694 = vpop.f32.mrf.mxu0
        %v9695 = vadd.f32 0.0, %v9694
        %9696 = vmatmul.bf16.gmra.mxu0 %v9616
        %v9697 = vpop.f32.mrf.mxu0
        %v9698 = vadd.f32 0.0, %v9697
        %v9699 = vpop.f32.mrf.mxu0
        %v9700 = vadd.f32 0.0, %v9699
        %9701 = vmatmul.bf16.gmra.mxu0 %v9617
        %v9702 = vpop.f32.mrf.mxu0
        %v9703 = vadd.f32 0.0, %v9702
        %v9704 = vpop.f32.mrf.mxu0
        %v9705 = vadd.f32 0.0, %v9704
        %9706 = vmatmul.bf16.gmra.mxu0 %v9618
        %v9707 = vpop.f32.mrf.mxu0
        %v9708 = vadd.f32 0.0, %v9707
        %v9709 = vpop.f32.mrf.mxu0
        %v9710 = vadd.f32 0.0, %v9709
        %9711 = vmatmul.bf16.gmra.mxu0 %v9619
        %v9712 = vpop.f32.mrf.mxu0
        %v9713 = vadd.f32 0.0, %v9712
        %v9714 = vpop.f32.mrf.mxu0
        %v9715 = vadd.f32 0.0, %v9714
        %9716 = vmatmul.bf16.gmra.mxu0 %v9620
        %v9717 = vpop.f32.mrf.mxu0
        %v9718 = vadd.f32 0.0, %v9717
        %v9719 = vpop.f32.mrf.mxu0
        %v9720 = vadd.f32 0.0, %v9719
        %9721 = vmatmul.bf16.gmra.mxu0 %v9621
        %v9722 = vpop.f32.mrf.mxu0
        %v9723 = vadd.f32 0.0, %v9722
        %v9724 = vpop.f32.mrf.mxu0
        %v9725 = vadd.f32 0.0, %v9724
        %9726 = vdwg.mxu0
        %v9727 = vadd.f32 %v9534, %v9688
        %v9728 = vadd.f32 %v9535, %v9690
        %v9729 = vadd.f32 %v9536, %v9693
        %v9730 = vadd.f32 %v9537, %v9695
        %v9731 = vadd.f32 %v9538, %v9698
        %v9732 = vadd.f32 %v9539, %v9700
        %v9733 = vadd.f32 %v9540, %v9703
        %v9734 = vadd.f32 %v9541, %v9705
        %v9735 = vadd.f32 %v9542, %v9708
        %v9736 = vadd.f32 %v9543, %v9710
        %v9737 = vadd.f32 %v9544, %v9713
        %v9738 = vadd.f32 %v9545, %v9715
        %v9739 = vadd.f32 %v9546, %v9718
        %v9740 = vadd.f32 %v9547, %v9720
        %v9741 = vadd.f32 %v9548, %v9723
        %v9742 = vadd.f32 %v9549, %v9725
        %v9743 = vld [vmem:[%s6231] sm:$0xf]
        %v9744 = vld [vmem:[%s6231 + $0x4] sm:$0xf]
        %v9745 = vld [vmem:[%s6231 + $0x8] sm:$0x1]
        %v9746 = vld [vmem:[%s6231 + $0xc] sm:$0xf]
        %v9747 = vld [vmem:[%s6231 + $0x10] sm:$0xf]
        %v9748 = vld [vmem:[%s6231 + $0x14] sm:$0x1]
        %v9749 = vld [vmem:[%s6231 + $0x18] sm:$0xf]
        %v9750 = vld [vmem:[%s6231 + $0x1c] sm:$0xf]
        %v9751 = vld [vmem:[%s6231 + $0x20] sm:$0x1]
        %v9752 = vld [vmem:[%s6231 + $0x24] sm:$0xf]
        %v9753 = vld [vmem:[%s6231 + $0x28] sm:$0xf]
        %v9754 = vld [vmem:[%s6231 + $0x2c] sm:$0x1]
        %v9755 = vld [vmem:[%s6231 + $0x30] sm:$0xf]
        %v9756 = vld [vmem:[%s6231 + $0x34] sm:$0xf]
        %v9757 = vld [vmem:[%s6231 + $0x38] sm:$0x1]
        %v9758 = vld [vmem:[%s6231 + $0x3c] sm:$0xf]
        %v9759 = vld [vmem:[%s6231 + $0x40] sm:$0xf]
        %v9760 = vld [vmem:[%s6231 + $0x44] sm:$0x1]
        %v9761 = vld [vmem:[%s6231 + $0x48] sm:$0xf]
        %v9762 = vld [vmem:[%s6231 + $0x4c] sm:$0xf]
        %v9763 = vld [vmem:[%s6231 + $0x50] sm:$0x1]
        %v9764 = vld [vmem:[%s6231 + $0x54] sm:$0xf]
        %v9765 = vld [vmem:[%s6231 + $0x58] sm:$0xf]
        %v9766 = vld [vmem:[%s6231 + $0x5c] sm:$0x1]
        %v9768 = vshrl.u32 %v9743, 16
        %v9770 = vrot.slane %v9768, 4
        %v9771 = vshll.u32 %v9743, 16
        %v9773 = vrot.slane %v9771, 5
        %v9774 = vor.u32 %v9770, %v9773
        %v9775 = vrot.slane %v9774, 4
        %v9777 = vshll.u32 %v9744, 16
        %v9779 = vrot.slane %v9777, 5
        %v9780 = vsel %vm938, %v9775, %v9779
        %v9781 = vshrl.u32 %v9744, 16
        %v9783 = vrot.slane %v9781, 4
        %v9784 = vor.u32 %v9783, %v9779
        %v9785 = vrot.slane %v9784, 4
        %v9787 = vshll.u32 %v9745, 16
        %v9789 = vrot.slane %v9787, 5
        %v9790 = vsel %vm938, %v9785, %v9789
        %v9792 = vshrl.u32 %v9746, 16
        %v9794 = vrot.slane %v9792, 4
        %v9795 = vshll.u32 %v9746, 16
        %v9797 = vrot.slane %v9795, 5
        %v9798 = vor.u32 %v9794, %v9797
        %v9799 = vrot.slane %v9798, 4
        %v9801 = vshll.u32 %v9747, 16
        %v9803 = vrot.slane %v9801, 5
        %v9804 = vsel %vm938, %v9799, %v9803
        %v9805 = vshrl.u32 %v9747, 16
        %v9807 = vrot.slane %v9805, 4
        %v9808 = vor.u32 %v9807, %v9803
        %v9809 = vrot.slane %v9808, 4
        %v9811 = vshll.u32 %v9748, 16
        %v9813 = vrot.slane %v9811, 5
        %v9814 = vsel %vm938, %v9809, %v9813
        %v9816 = vshrl.u32 %v9749, 16
        %v9818 = vrot.slane %v9816, 4
        %v9819 = vshll.u32 %v9749, 16
        %v9821 = vrot.slane %v9819, 5
        %v9822 = vor.u32 %v9818, %v9821
        %v9823 = vrot.slane %v9822, 4
        %v9825 = vshll.u32 %v9750, 16
        %v9827 = vrot.slane %v9825, 5
        %v9828 = vsel %vm938, %v9823, %v9827
        %v9829 = vshrl.u32 %v9750, 16
        %v9831 = vrot.slane %v9829, 4
        %v9832 = vor.u32 %v9831, %v9827
        %v9833 = vrot.slane %v9832, 4
        %v9835 = vshll.u32 %v9751, 16
        %v9837 = vrot.slane %v9835, 5
        %v9838 = vsel %vm938, %v9833, %v9837
        %v9840 = vshrl.u32 %v9752, 16
        %v9842 = vrot.slane %v9840, 4
        %v9843 = vshll.u32 %v9752, 16
        %v9845 = vrot.slane %v9843, 5
        %v9846 = vor.u32 %v9842, %v9845
        %v9847 = vrot.slane %v9846, 4
        %v9849 = vshll.u32 %v9753, 16
        %v9851 = vrot.slane %v9849, 5
        %v9852 = vsel %vm938, %v9847, %v9851
        %v9853 = vshrl.u32 %v9753, 16
        %v9855 = vrot.slane %v9853, 4
        %v9856 = vor.u32 %v9855, %v9851
        %v9857 = vrot.slane %v9856, 4
        %v9859 = vshll.u32 %v9754, 16
        %v9861 = vrot.slane %v9859, 5
        %v9862 = vsel %vm938, %v9857, %v9861
        %v9864 = vshrl.u32 %v9755, 16
        %v9866 = vrot.slane %v9864, 4
        %v9867 = vshll.u32 %v9755, 16
        %v9869 = vrot.slane %v9867, 5
        %v9870 = vor.u32 %v9866, %v9869
        %v9871 = vrot.slane %v9870, 4
        %v9873 = vshll.u32 %v9756, 16
        %v9875 = vrot.slane %v9873, 5
        %v9876 = vsel %vm938, %v9871, %v9875
        %v9877 = vshrl.u32 %v9756, 16
        %v9879 = vrot.slane %v9877, 4
        %v9880 = vor.u32 %v9879, %v9875
        %v9881 = vrot.slane %v9880, 4
        %v9883 = vshll.u32 %v9757, 16
        %v9885 = vrot.slane %v9883, 5
        %v9886 = vsel %vm938, %v9881, %v9885
        %v9888 = vshrl.u32 %v9758, 16
        %v9890 = vrot.slane %v9888, 4
        %v9891 = vshll.u32 %v9758, 16
        %v9893 = vrot.slane %v9891, 5
        %v9894 = vor.u32 %v9890, %v9893
        %v9895 = vrot.slane %v9894, 4
        %v9897 = vshll.u32 %v9759, 16
        %v9899 = vrot.slane %v9897, 5
        %v9900 = vsel %vm938, %v9895, %v9899
        %v9901 = vshrl.u32 %v9759, 16
        %v9903 = vrot.slane %v9901, 4
        %v9904 = vor.u32 %v9903, %v9899
        %v9905 = vrot.slane %v9904, 4
        %v9907 = vshll.u32 %v9760, 16
        %v9909 = vrot.slane %v9907, 5
        %v9910 = vsel %vm938, %v9905, %v9909
        %v9912 = vshrl.u32 %v9761, 16
        %v9914 = vrot.slane %v9912, 4
        %v9915 = vshll.u32 %v9761, 16
        %v9917 = vrot.slane %v9915, 5
        %v9918 = vor.u32 %v9914, %v9917
        %v9919 = vrot.slane %v9918, 4
        %v9921 = vshll.u32 %v9762, 16
        %v9923 = vrot.slane %v9921, 5
        %v9924 = vsel %vm938, %v9919, %v9923
        %v9925 = vshrl.u32 %v9762, 16
        %v9927 = vrot.slane %v9925, 4
        %v9928 = vor.u32 %v9927, %v9923
        %v9929 = vrot.slane %v9928, 4
        %v9931 = vshll.u32 %v9763, 16
        %v9933 = vrot.slane %v9931, 5
        %v9934 = vsel %vm938, %v9929, %v9933
        %v9936 = vshrl.u32 %v9764, 16
        %v9938 = vrot.slane %v9936, 4
        %v9939 = vshll.u32 %v9764, 16
        %v9941 = vrot.slane %v9939, 5
        %v9942 = vor.u32 %v9938, %v9941
        %v9943 = vrot.slane %v9942, 4
        %v9945 = vshll.u32 %v9765, 16
        %v9947 = vrot.slane %v9945, 5
        %v9948 = vsel %vm938, %v9943, %v9947
        %v9949 = vshrl.u32 %v9765, 16
        %v9951 = vrot.slane %v9949, 4
        %v9952 = vor.u32 %v9951, %v9947
        %v9953 = vrot.slane %v9952, 4
        %v9955 = vshll.u32 %v9766, 16
        %v9957 = vrot.slane %v9955, 5
        %v9958 = vsel %vm938, %v9953, %v9957
        %v9959 = vld [vmem:[%s7465] sm:$0xf]
        %v9960 = vld [vmem:[%s7465 + $0x4] sm:$0xf]
        %v9961 = vld [vmem:[%s7465 + $0x8] sm:$0xf]
        %v9962 = vld [vmem:[%s7465 + $0xc] sm:$0xf]
        %v9963 = vld [vmem:[%s7465 + $0x10] sm:$0xf]
        %v9964 = vld [vmem:[%s7465 + $0x14] sm:$0xf]
        %v9965 = vld [vmem:[%s7465 + $0x18] sm:$0xf]
        %v9966 = vld [vmem:[%s7465 + $0x1c] sm:$0xf]
        %v9967 = vld [vmem:[%s7465 + $0x20] sm:$0xf]
        %v9968 = vld [vmem:[%s7465 + $0x24] sm:$0xf]
        %v9969 = vld [vmem:[%s7465 + $0x28] sm:$0xf]
        %v9970 = vld [vmem:[%s7465 + $0x2c] sm:$0xf]
        %v9971 = vld [vmem:[%s7465 + $0x30] sm:$0xf]
        %v9972 = vld [vmem:[%s7465 + $0x34] sm:$0xf]
        %v9973 = vld [vmem:[%s7465 + $0x38] sm:$0xf]
        %v9974 = vld [vmem:[%s7465 + $0x3c] sm:$0xf]
        %v9975 = vunpack.c.l.b16 %v9780
        %v9976 = vunpack.c.l.b16 %v9790
        %v9977 = vunpack.c.l.b16 %v9804
        %v9978 = vunpack.c.l.b16 %v9814
        %v9979 = vunpack.c.l.b16 %v9828
        %v9980 = vunpack.c.l.b16 %v9838
        %v9981 = vunpack.c.l.b16 %v9852
        %v9982 = vunpack.c.l.b16 %v9862
        %v9983 = vunpack.c.l.b16 %v9876
        %v9984 = vunpack.c.l.b16 %v9886
        %v9985 = vunpack.c.l.b16 %v9900
        %v9986 = vunpack.c.l.b16 %v9910
        %v9987 = vunpack.c.l.b16 %v9924
        %v9988 = vunpack.c.l.b16 %v9934
        %v9989 = vunpack.c.l.b16 %v9948
        %v9990 = vunpack.c.l.b16 %v9958
        %v9991 = vpack.c.b16 %v9976, %v9975
        %v9992 = vpack.c.b16 %v9978, %v9977
        %v9993 = vpack.c.b16 %v9980, %v9979
        %v9994 = vpack.c.b16 %v9982, %v9981
        %v9995 = vpack.c.b16 %v9984, %v9983
        %v9996 = vpack.c.b16 %v9986, %v9985
        %v9997 = vpack.c.b16 %v9988, %v9987
        %v9998 = vpack.c.b16 %v9990, %v9989
        %v10023 = vunpack.c.l.b16 %v9959
        %v10024 = vunpack.c.l.b16 %v9960
        %v10025 = vunpack.c.l.b16 %v9961
        %v10026 = vunpack.c.l.b16 %v9962
        %v10027 = vunpack.c.l.b16 %v9963
        %v10028 = vunpack.c.l.b16 %v9964
        %v10029 = vunpack.c.l.b16 %v9965
        %v10030 = vunpack.c.l.b16 %v9966
        %v10031 = vunpack.c.l.b16 %v9967
        %v10032 = vunpack.c.l.b16 %v9968
        %v10033 = vunpack.c.l.b16 %v9969
        %v10034 = vunpack.c.l.b16 %v9970
        %v10035 = vunpack.c.l.b16 %v9971
        %v10036 = vunpack.c.l.b16 %v9972
        %v10037 = vunpack.c.l.b16 %v9973
        %v10038 = vunpack.c.l.b16 %v9974
        %v10039 = vpack.c.b16 %v10024, %v10023
        %v10040 = vpack.c.b16 %v10026, %v10025
        %v10041 = vpack.c.b16 %v10028, %v10027
        %v10042 = vpack.c.b16 %v10030, %v10029
        %v10043 = vpack.c.b16 %v10032, %v10031
        %v10044 = vpack.c.b16 %v10034, %v10033
        %v10045 = vpack.c.b16 %v10036, %v10035
        %v10046 = vpack.c.b16 %v10038, %v10037
        %10055 = vmatpush.bf16.msra.mxu0 %v10046
        %10056 = vmatpush.bf16.msra.mxu0 %v10045
        %10057 = vmatpush.bf16.msra.mxu0 %v10044
        %10058 = vmatpush.bf16.msra.mxu0 %v10043
        %10059 = vmatpush.bf16.msra.mxu0 %v10042
        %10060 = vmatpush.bf16.msra.mxu0 %v10041
        %10061 = vmatpush.bf16.msra.mxu0 %v10040
        %10062 = vmatpush.bf16.msra.mxu0 %v10039
        %10063 = vmatmul.bf16.gmra.mxu0 %v9991
        %v10064 = vpop.f32.mrf.mxu0
        %v10065 = vadd.f32 0.0, %v10064
        %v10066 = vpop.f32.mrf.mxu0
        %v10067 = vadd.f32 0.0, %v10066
        %10068 = vmatmul.bf16.gmra.mxu0 %v9992
        %v10069 = vpop.f32.mrf.mxu0
        %v10070 = vadd.f32 0.0, %v10069
        %v10071 = vpop.f32.mrf.mxu0
        %v10072 = vadd.f32 0.0, %v10071
        %10073 = vmatmul.bf16.gmra.mxu0 %v9993
        %v10074 = vpop.f32.mrf.mxu0
        %v10075 = vadd.f32 0.0, %v10074
        %v10076 = vpop.f32.mrf.mxu0
        %v10077 = vadd.f32 0.0, %v10076
        %10078 = vmatmul.bf16.gmra.mxu0 %v9994
        %v10079 = vpop.f32.mrf.mxu0
        %v10080 = vadd.f32 0.0, %v10079
        %v10081 = vpop.f32.mrf.mxu0
        %v10082 = vadd.f32 0.0, %v10081
        %10083 = vmatmul.bf16.gmra.mxu0 %v9995
        %v10084 = vpop.f32.mrf.mxu0
        %v10085 = vadd.f32 0.0, %v10084
        %v10086 = vpop.f32.mrf.mxu0
        %v10087 = vadd.f32 0.0, %v10086
        %10088 = vmatmul.bf16.gmra.mxu0 %v9996
        %v10089 = vpop.f32.mrf.mxu0
        %v10090 = vadd.f32 0.0, %v10089
        %v10091 = vpop.f32.mrf.mxu0
        %v10092 = vadd.f32 0.0, %v10091
        %10093 = vmatmul.bf16.gmra.mxu0 %v9997
        %v10094 = vpop.f32.mrf.mxu0
        %v10095 = vadd.f32 0.0, %v10094
        %v10096 = vpop.f32.mrf.mxu0
        %v10097 = vadd.f32 0.0, %v10096
        %10098 = vmatmul.bf16.gmra.mxu0 %v9998
        %v10099 = vpop.f32.mrf.mxu0
        %v10100 = vadd.f32 0.0, %v10099
        %v10101 = vpop.f32.mrf.mxu0
        %v10102 = vadd.f32 0.0, %v10101
        %10103 = vdwg.mxu0
        %v10104 = vadd.f32 %v9727, %v10065
        %v10105 = vadd.f32 %v9728, %v10067
        %v10106 = vadd.f32 %v9729, %v10070
        %v10107 = vadd.f32 %v9730, %v10072
        %v10108 = vadd.f32 %v9731, %v10075
        %v10109 = vadd.f32 %v9732, %v10077
        %v10110 = vadd.f32 %v9733, %v10080
        %v10111 = vadd.f32 %v9734, %v10082
        %v10112 = vadd.f32 %v9735, %v10085
        %v10113 = vadd.f32 %v9736, %v10087
        %v10114 = vadd.f32 %v9737, %v10090
        %v10115 = vadd.f32 %v9738, %v10092
        %v10116 = vadd.f32 %v9739, %v10095
        %v10117 = vadd.f32 %v9740, %v10097
        %v10118 = vadd.f32 %v9741, %v10100
        %v10119 = vadd.f32 %v9742, %v10102
        %v10120 = vld [vmem:[%s6231] sm:$0xe]
        %v10121 = vld [vmem:[%s6231 + $0xc] sm:$0xe]
        %v10122 = vld [vmem:[%s6231 + $0x18] sm:$0xe]
        %v10123 = vld [vmem:[%s6231 + $0x24] sm:$0xe]
        %v10124 = vld [vmem:[%s6231 + $0x30] sm:$0xe]
        %v10125 = vld [vmem:[%s6231 + $0x3c] sm:$0xe]
        %v10126 = vld [vmem:[%s6231 + $0x48] sm:$0xe]
        %v10127 = vld [vmem:[%s6231 + $0x54] sm:$0xe]
        %v10152 = vrot.slane %v10120, 5
        %v10153 = vrot.slane %v10152, 4
        %v10154 = vrot.slane %v9744, 5
        %v10155 = vsel %vm1448, %v10153, %v10154
        %v10156 = vrot.slane %v10154, 4
        %v10157 = vrot.slane %v9745, 5
        %v10158 = vsel %vm1448, %v10156, %v10157
        %v10159 = vrot.slane %v10121, 5
        %v10160 = vrot.slane %v10159, 4
        %v10161 = vrot.slane %v9747, 5
        %v10162 = vsel %vm1448, %v10160, %v10161
        %v10163 = vrot.slane %v10161, 4
        %v10164 = vrot.slane %v9748, 5
        %v10165 = vsel %vm1448, %v10163, %v10164
        %v10166 = vrot.slane %v10122, 5
        %v10167 = vrot.slane %v10166, 4
        %v10168 = vrot.slane %v9750, 5
        %v10169 = vsel %vm1448, %v10167, %v10168
        %v10170 = vrot.slane %v10168, 4
        %v10171 = vrot.slane %v9751, 5
        %v10172 = vsel %vm1448, %v10170, %v10171
        %v10173 = vrot.slane %v10123, 5
        %v10174 = vrot.slane %v10173, 4
        %v10175 = vrot.slane %v9753, 5
        %v10176 = vsel %vm1448, %v10174, %v10175
        %v10177 = vrot.slane %v10175, 4
        %v10178 = vrot.slane %v9754, 5
        %v10179 = vsel %vm1448, %v10177, %v10178
        %v10180 = vrot.slane %v10124, 5
        %v10181 = vrot.slane %v10180, 4
        %v10182 = vrot.slane %v9756, 5
        %v10183 = vsel %vm1448, %v10181, %v10182
        %v10184 = vrot.slane %v10182, 4
        %v10185 = vrot.slane %v9757, 5
        %v10186 = vsel %vm1448, %v10184, %v10185
        %v10187 = vrot.slane %v10125, 5
        %v10188 = vrot.slane %v10187, 4
        %v10189 = vrot.slane %v9759, 5
        %v10190 = vsel %vm1448, %v10188, %v10189
        %v10191 = vrot.slane %v10189, 4
        %v10192 = vrot.slane %v9760, 5
        %v10193 = vsel %vm1448, %v10191, %v10192
        %v10194 = vrot.slane %v10126, 5
        %v10195 = vrot.slane %v10194, 4
        %v10196 = vrot.slane %v9762, 5
        %v10197 = vsel %vm1448, %v10195, %v10196
        %v10198 = vrot.slane %v10196, 4
        %v10199 = vrot.slane %v9763, 5
        %v10200 = vsel %vm1448, %v10198, %v10199
        %v10201 = vrot.slane %v10127, 5
        %v10202 = vrot.slane %v10201, 4
        %v10203 = vrot.slane %v9765, 5
        %v10204 = vsel %vm1448, %v10202, %v10203
        %v10205 = vrot.slane %v10203, 4
        %v10206 = vrot.slane %v9766, 5
        %v10207 = vsel %vm1448, %v10205, %v10206
        %v10208 = vld [vmem:[%s7715] sm:$0xf]
        %v10209 = vld [vmem:[%s7715 + $0x4] sm:$0xf]
        %v10210 = vld [vmem:[%s7715 + $0x8] sm:$0xf]
        %v10211 = vld [vmem:[%s7715 + $0xc] sm:$0xf]
        %v10212 = vld [vmem:[%s7715 + $0x10] sm:$0xf]
        %v10213 = vld [vmem:[%s7715 + $0x14] sm:$0xf]
        %v10214 = vld [vmem:[%s7715 + $0x18] sm:$0xf]
        %v10215 = vld [vmem:[%s7715 + $0x1c] sm:$0xf]
        %v10216 = vld [vmem:[%s7715 + $0x20] sm:$0xf]
        %v10217 = vld [vmem:[%s7715 + $0x24] sm:$0xf]
        %v10218 = vld [vmem:[%s7715 + $0x28] sm:$0xf]
        %v10219 = vld [vmem:[%s7715 + $0x2c] sm:$0xf]
        %v10220 = vld [vmem:[%s7715 + $0x30] sm:$0xf]
        %v10221 = vld [vmem:[%s7715 + $0x34] sm:$0xf]
        %v10222 = vld [vmem:[%s7715 + $0x38] sm:$0xf]
        %v10223 = vld [vmem:[%s7715 + $0x3c] sm:$0xf]
        %v10224 = vunpack.c.l.b16 %v10155
        %v10225 = vunpack.c.l.b16 %v10158
        %v10226 = vunpack.c.l.b16 %v10162
        %v10227 = vunpack.c.l.b16 %v10165
        %v10228 = vunpack.c.l.b16 %v10169
        %v10229 = vunpack.c.l.b16 %v10172
        %v10230 = vunpack.c.l.b16 %v10176
        %v10231 = vunpack.c.l.b16 %v10179
        %v10232 = vunpack.c.l.b16 %v10183
        %v10233 = vunpack.c.l.b16 %v10186
        %v10234 = vunpack.c.l.b16 %v10190
        %v10235 = vunpack.c.l.b16 %v10193
        %v10236 = vunpack.c.l.b16 %v10197
        %v10237 = vunpack.c.l.b16 %v10200
        %v10238 = vunpack.c.l.b16 %v10204
        %v10239 = vunpack.c.l.b16 %v10207
        %v10240 = vpack.c.b16 %v10225, %v10224
        %v10241 = vpack.c.b16 %v10227, %v10226
        %v10242 = vpack.c.b16 %v10229, %v10228
        %v10243 = vpack.c.b16 %v10231, %v10230
        %v10244 = vpack.c.b16 %v10233, %v10232
        %v10245 = vpack.c.b16 %v10235, %v10234
        %v10246 = vpack.c.b16 %v10237, %v10236
        %v10247 = vpack.c.b16 %v10239, %v10238
        %v10272 = vunpack.c.l.b16 %v10208
        %v10273 = vunpack.c.l.b16 %v10209
        %v10274 = vunpack.c.l.b16 %v10210
        %v10275 = vunpack.c.l.b16 %v10211
        %v10276 = vunpack.c.l.b16 %v10212
        %v10277 = vunpack.c.l.b16 %v10213
        %v10278 = vunpack.c.l.b16 %v10214
        %v10279 = vunpack.c.l.b16 %v10215
        %v10280 = vunpack.c.l.b16 %v10216
        %v10281 = vunpack.c.l.b16 %v10217
        %v10282 = vunpack.c.l.b16 %v10218
        %v10283 = vunpack.c.l.b16 %v10219
        %v10284 = vunpack.c.l.b16 %v10220
        %v10285 = vunpack.c.l.b16 %v10221
        %v10286 = vunpack.c.l.b16 %v10222
        %v10287 = vunpack.c.l.b16 %v10223
        %v10288 = vpack.c.b16 %v10273, %v10272
        %v10289 = vpack.c.b16 %v10275, %v10274
        %v10290 = vpack.c.b16 %v10277, %v10276
        %v10291 = vpack.c.b16 %v10279, %v10278
        %v10292 = vpack.c.b16 %v10281, %v10280
        %v10293 = vpack.c.b16 %v10283, %v10282
        %v10294 = vpack.c.b16 %v10285, %v10284
        %v10295 = vpack.c.b16 %v10287, %v10286
        %10304 = vmatpush.bf16.msra.mxu0 %v10295
        %10305 = vmatpush.bf16.msra.mxu0 %v10294
        %10306 = vmatpush.bf16.msra.mxu0 %v10293
        %10307 = vmatpush.bf16.msra.mxu0 %v10292
        %10308 = vmatpush.bf16.msra.mxu0 %v10291
        %10309 = vmatpush.bf16.msra.mxu0 %v10290
        %10310 = vmatpush.bf16.msra.mxu0 %v10289
        %10311 = vmatpush.bf16.msra.mxu0 %v10288
        %10312 = vmatmul.bf16.gmra.mxu0 %v10240
        %v10313 = vpop.f32.mrf.mxu0
        %v10314 = vadd.f32 0.0, %v10313
        %v10315 = vpop.f32.mrf.mxu0
        %v10316 = vadd.f32 0.0, %v10315
        %10317 = vmatmul.bf16.gmra.mxu0 %v10241
        %v10318 = vpop.f32.mrf.mxu0
        %v10319 = vadd.f32 0.0, %v10318
        %v10320 = vpop.f32.mrf.mxu0
        %v10321 = vadd.f32 0.0, %v10320
        %10322 = vmatmul.bf16.gmra.mxu0 %v10242
        %v10323 = vpop.f32.mrf.mxu0
        %v10324 = vadd.f32 0.0, %v10323
        %v10325 = vpop.f32.mrf.mxu0
        %v10326 = vadd.f32 0.0, %v10325
        %10327 = vmatmul.bf16.gmra.mxu0 %v10243
        %v10328 = vpop.f32.mrf.mxu0
        %v10329 = vadd.f32 0.0, %v10328
        %v10330 = vpop.f32.mrf.mxu0
        %v10331 = vadd.f32 0.0, %v10330
        %10332 = vmatmul.bf16.gmra.mxu0 %v10244
        %v10333 = vpop.f32.mrf.mxu0
        %v10334 = vadd.f32 0.0, %v10333
        %v10335 = vpop.f32.mrf.mxu0
        %v10336 = vadd.f32 0.0, %v10335
        %10337 = vmatmul.bf16.gmra.mxu0 %v10245
        %v10338 = vpop.f32.mrf.mxu0
        %v10339 = vadd.f32 0.0, %v10338
        %v10340 = vpop.f32.mrf.mxu0
        %v10341 = vadd.f32 0.0, %v10340
        %10342 = vmatmul.bf16.gmra.mxu0 %v10246
        %v10343 = vpop.f32.mrf.mxu0
        %v10344 = vadd.f32 0.0, %v10343
        %v10345 = vpop.f32.mrf.mxu0
        %v10346 = vadd.f32 0.0, %v10345
        %10347 = vmatmul.bf16.gmra.mxu0 %v10247
        %v10348 = vpop.f32.mrf.mxu0
        %v10349 = vadd.f32 0.0, %v10348
        %v10350 = vpop.f32.mrf.mxu0
        %v10351 = vadd.f32 0.0, %v10350
        %10352 = vdwg.mxu0
        %v10353 = vadd.f32 %v10104, %v10314
        %v10354 = vadd.f32 %v10105, %v10316
        %v10355 = vadd.f32 %v10106, %v10319
        %v10356 = vadd.f32 %v10107, %v10321
        %v10357 = vadd.f32 %v10108, %v10324
        %v10358 = vadd.f32 %v10109, %v10326
        %v10359 = vadd.f32 %v10110, %v10329
        %v10360 = vadd.f32 %v10111, %v10331
        %v10361 = vadd.f32 %v10112, %v10334
        %v10362 = vadd.f32 %v10113, %v10336
        %v10363 = vadd.f32 %v10114, %v10339
        %v10364 = vadd.f32 %v10115, %v10341
        %v10365 = vadd.f32 %v10116, %v10344
        %v10366 = vadd.f32 %v10117, %v10346
        %v10367 = vadd.f32 %v10118, %v10349
        %v10368 = vadd.f32 %v10119, %v10351
        %s10369 = scalar_lea.vmem [#allocation3], 120
        %v10370 = vld [vmem:[%s10369] sm:$0xf]
        %v10371 = vld [vmem:[%s10369 + $0x4] sm:$0xf]
        %v10372 = vld [vmem:[%s10369 + $0xc] sm:$0xf]
        %v10373 = vld [vmem:[%s10369 + $0x10] sm:$0xf]
        %v10374 = vld [vmem:[%s10369 + $0x18] sm:$0xf]
        %v10375 = vld [vmem:[%s10369 + $0x1c] sm:$0xf]
        %v10376 = vld [vmem:[%s10369 + $0x24] sm:$0xf]
        %v10377 = vld [vmem:[%s10369 + $0x28] sm:$0xf]
        %v10378 = vld [vmem:[%s10369 + $0x30] sm:$0xf]
        %v10379 = vld [vmem:[%s10369 + $0x34] sm:$0xf]
        %v10380 = vld [vmem:[%s10369 + $0x3c] sm:$0xf]
        %v10381 = vld [vmem:[%s10369 + $0x40] sm:$0xf]
        %v10382 = vld [vmem:[%s10369 + $0x48] sm:$0xf]
        %v10383 = vld [vmem:[%s10369 + $0x4c] sm:$0xf]
        %v10384 = vld [vmem:[%s10369 + $0x54] sm:$0xf]
        %v10385 = vld [vmem:[%s10369 + $0x58] sm:$0xf]
        %v10386 = vld [vmem:[%s7894] sm:$0xf]
        %v10387 = vld [vmem:[%s7894 + $0x4] sm:$0xf]
        %v10388 = vld [vmem:[%s7894 + $0x8] sm:$0xf]
        %v10389 = vld [vmem:[%s7894 + $0xc] sm:$0xf]
        %v10390 = vld [vmem:[%s7894 + $0x10] sm:$0xf]
        %v10391 = vld [vmem:[%s7894 + $0x14] sm:$0xf]
        %v10392 = vld [vmem:[%s7894 + $0x18] sm:$0xf]
        %v10393 = vld [vmem:[%s7894 + $0x1c] sm:$0xf]
        %v10394 = vld [vmem:[%s7894 + $0x20] sm:$0xf]
        %v10395 = vld [vmem:[%s7894 + $0x24] sm:$0xf]
        %v10396 = vld [vmem:[%s7894 + $0x28] sm:$0xf]
        %v10397 = vld [vmem:[%s7894 + $0x2c] sm:$0xf]
        %v10398 = vld [vmem:[%s7894 + $0x30] sm:$0xf]
        %v10399 = vld [vmem:[%s7894 + $0x34] sm:$0xf]
        %v10400 = vld [vmem:[%s7894 + $0x38] sm:$0xf]
        %v10401 = vld [vmem:[%s7894 + $0x3c] sm:$0xf]
        %v10418 = vunpack.c.l.b16 %v10370
        %v10419 = vunpack.c.l.b16 %v10371
        %v10420 = vunpack.c.l.b16 %v10372
        %v10421 = vunpack.c.l.b16 %v10373
        %v10422 = vunpack.c.l.b16 %v10374
        %v10423 = vunpack.c.l.b16 %v10375
        %v10424 = vunpack.c.l.b16 %v10376
        %v10425 = vunpack.c.l.b16 %v10377
        %v10426 = vunpack.c.l.b16 %v10378
        %v10427 = vunpack.c.l.b16 %v10379
        %v10428 = vunpack.c.l.b16 %v10380
        %v10429 = vunpack.c.l.b16 %v10381
        %v10430 = vunpack.c.l.b16 %v10382
        %v10431 = vunpack.c.l.b16 %v10383
        %v10432 = vunpack.c.l.b16 %v10384
        %v10433 = vunpack.c.l.b16 %v10385
        %v10434 = vpack.c.b16 %v10419, %v10418
        %v10435 = vpack.c.b16 %v10421, %v10420
        %v10436 = vpack.c.b16 %v10423, %v10422
        %v10437 = vpack.c.b16 %v10425, %v10424
        %v10438 = vpack.c.b16 %v10427, %v10426
        %v10439 = vpack.c.b16 %v10429, %v10428
        %v10440 = vpack.c.b16 %v10431, %v10430
        %v10441 = vpack.c.b16 %v10433, %v10432
        %v10466 = vunpack.c.l.b16 %v10386
        %v10467 = vunpack.c.l.b16 %v10387
        %v10468 = vunpack.c.l.b16 %v10388
        %v10469 = vunpack.c.l.b16 %v10389
        %v10470 = vunpack.c.l.b16 %v10390
        %v10471 = vunpack.c.l.b16 %v10391
        %v10472 = vunpack.c.l.b16 %v10392
        %v10473 = vunpack.c.l.b16 %v10393
        %v10474 = vunpack.c.l.b16 %v10394
        %v10475 = vunpack.c.l.b16 %v10395
        %v10476 = vunpack.c.l.b16 %v10396
        %v10477 = vunpack.c.l.b16 %v10397
        %v10478 = vunpack.c.l.b16 %v10398
        %v10479 = vunpack.c.l.b16 %v10399
        %v10480 = vunpack.c.l.b16 %v10400
        %v10481 = vunpack.c.l.b16 %v10401
        %v10482 = vpack.c.b16 %v10467, %v10466
        %v10483 = vpack.c.b16 %v10469, %v10468
        %v10484 = vpack.c.b16 %v10471, %v10470
        %v10485 = vpack.c.b16 %v10473, %v10472
        %v10486 = vpack.c.b16 %v10475, %v10474
        %v10487 = vpack.c.b16 %v10477, %v10476
        %v10488 = vpack.c.b16 %v10479, %v10478
        %v10489 = vpack.c.b16 %v10481, %v10480
        %10498 = vmatpush.bf16.msra.mxu0 %v10489
        %10499 = vmatpush.bf16.msra.mxu0 %v10488
        %10500 = vmatpush.bf16.msra.mxu0 %v10487
        %10501 = vmatpush.bf16.msra.mxu0 %v10486
        %10502 = vmatpush.bf16.msra.mxu0 %v10485
        %10503 = vmatpush.bf16.msra.mxu0 %v10484
        %10504 = vmatpush.bf16.msra.mxu0 %v10483
        %10505 = vmatpush.bf16.msra.mxu0 %v10482
        %10506 = vmatmul.bf16.gmra.mxu0 %v10434
        %v10507 = vpop.f32.mrf.mxu0
        %v10508 = vadd.f32 0.0, %v10507
        %v10509 = vpop.f32.mrf.mxu0
        %v10510 = vadd.f32 0.0, %v10509
        %10511 = vmatmul.bf16.gmra.mxu0 %v10435
        %v10512 = vpop.f32.mrf.mxu0
        %v10513 = vadd.f32 0.0, %v10512
        %v10514 = vpop.f32.mrf.mxu0
        %v10515 = vadd.f32 0.0, %v10514
        %10516 = vmatmul.bf16.gmra.mxu0 %v10436
        %v10517 = vpop.f32.mrf.mxu0
        %v10518 = vadd.f32 0.0, %v10517
        %v10519 = vpop.f32.mrf.mxu0
        %v10520 = vadd.f32 0.0, %v10519
        %10521 = vmatmul.bf16.gmra.mxu0 %v10437
        %v10522 = vpop.f32.mrf.mxu0
        %v10523 = vadd.f32 0.0, %v10522
        %v10524 = vpop.f32.mrf.mxu0
        %v10525 = vadd.f32 0.0, %v10524
        %10526 = vmatmul.bf16.gmra.mxu0 %v10438
        %v10527 = vpop.f32.mrf.mxu0
        %v10528 = vadd.f32 0.0, %v10527
        %v10529 = vpop.f32.mrf.mxu0
        %v10530 = vadd.f32 0.0, %v10529
        %10531 = vmatmul.bf16.gmra.mxu0 %v10439
        %v10532 = vpop.f32.mrf.mxu0
        %v10533 = vadd.f32 0.0, %v10532
        %v10534 = vpop.f32.mrf.mxu0
        %v10535 = vadd.f32 0.0, %v10534
        %10536 = vmatmul.bf16.gmra.mxu0 %v10440
        %v10537 = vpop.f32.mrf.mxu0
        %v10538 = vadd.f32 0.0, %v10537
        %v10539 = vpop.f32.mrf.mxu0
        %v10540 = vadd.f32 0.0, %v10539
        %10541 = vmatmul.bf16.gmra.mxu0 %v10441
        %v10542 = vpop.f32.mrf.mxu0
        %v10543 = vadd.f32 0.0, %v10542
        %v10544 = vpop.f32.mrf.mxu0
        %v10545 = vadd.f32 0.0, %v10544
        %10546 = vdwg.mxu0
        %v10547 = vadd.f32 %v10353, %v10508
        %v10548 = vadd.f32 %v10354, %v10510
        %v10549 = vadd.f32 %v10355, %v10513
        %v10550 = vadd.f32 %v10356, %v10515
        %v10551 = vadd.f32 %v10357, %v10518
        %v10552 = vadd.f32 %v10358, %v10520
        %v10553 = vadd.f32 %v10359, %v10523
        %v10554 = vadd.f32 %v10360, %v10525
        %v10555 = vadd.f32 %v10361, %v10528
        %v10556 = vadd.f32 %v10362, %v10530
        %v10557 = vadd.f32 %v10363, %v10533
        %v10558 = vadd.f32 %v10364, %v10535
        %v10559 = vadd.f32 %v10365, %v10538
        %v10560 = vadd.f32 %v10366, %v10540
        %v10561 = vadd.f32 %v10367, %v10543
        %v10562 = vadd.f32 %v10368, %v10545
        %v10563 = vld [vmem:[%s10369] sm:$0xf]
        %v10564 = vld [vmem:[%s10369 + $0x4] sm:$0xf]
        %v10565 = vld [vmem:[%s10369 + $0x8] sm:$0x1]
        %v10566 = vld [vmem:[%s10369 + $0xc] sm:$0xf]
        %v10567 = vld [vmem:[%s10369 + $0x10] sm:$0xf]
        %v10568 = vld [vmem:[%s10369 + $0x14] sm:$0x1]
        %v10569 = vld [vmem:[%s10369 + $0x18] sm:$0xf]
        %v10570 = vld [vmem:[%s10369 + $0x1c] sm:$0xf]
        %v10571 = vld [vmem:[%s10369 + $0x20] sm:$0x1]
        %v10572 = vld [vmem:[%s10369 + $0x24] sm:$0xf]
        %v10573 = vld [vmem:[%s10369 + $0x28] sm:$0xf]
        %v10574 = vld [vmem:[%s10369 + $0x2c] sm:$0x1]
        %v10575 = vld [vmem:[%s10369 + $0x30] sm:$0xf]
        %v10576 = vld [vmem:[%s10369 + $0x34] sm:$0xf]
        %v10577 = vld [vmem:[%s10369 + $0x38] sm:$0x1]
        %v10578 = vld [vmem:[%s10369 + $0x3c] sm:$0xf]
        %v10579 = vld [vmem:[%s10369 + $0x40] sm:$0xf]
        %v10580 = vld [vmem:[%s10369 + $0x44] sm:$0x1]
        %v10581 = vld [vmem:[%s10369 + $0x48] sm:$0xf]
        %v10582 = vld [vmem:[%s10369 + $0x4c] sm:$0xf]
        %v10583 = vld [vmem:[%s10369 + $0x50] sm:$0x1]
        %v10584 = vld [vmem:[%s10369 + $0x54] sm:$0xf]
        %v10585 = vld [vmem:[%s10369 + $0x58] sm:$0xf]
        %v10586 = vld [vmem:[%s10369 + $0x5c] sm:$0x1]
        %v10588 = vshrl.u32 %v10563, 16
        %v10590 = vrot.slane %v10588, 4
        %v10591 = vshll.u32 %v10563, 16
        %v10593 = vrot.slane %v10591, 5
        %v10594 = vor.u32 %v10590, %v10593
        %v10595 = vrot.slane %v10594, 4
        %v10597 = vshll.u32 %v10564, 16
        %v10599 = vrot.slane %v10597, 5
        %v10600 = vsel %vm938, %v10595, %v10599
        %v10601 = vshrl.u32 %v10564, 16
        %v10603 = vrot.slane %v10601, 4
        %v10604 = vor.u32 %v10603, %v10599
        %v10605 = vrot.slane %v10604, 4
        %v10607 = vshll.u32 %v10565, 16
        %v10609 = vrot.slane %v10607, 5
        %v10610 = vsel %vm938, %v10605, %v10609
        %v10612 = vshrl.u32 %v10566, 16
        %v10614 = vrot.slane %v10612, 4
        %v10615 = vshll.u32 %v10566, 16
        %v10617 = vrot.slane %v10615, 5
        %v10618 = vor.u32 %v10614, %v10617
        %v10619 = vrot.slane %v10618, 4
        %v10621 = vshll.u32 %v10567, 16
        %v10623 = vrot.slane %v10621, 5
        %v10624 = vsel %vm938, %v10619, %v10623
        %v10625 = vshrl.u32 %v10567, 16
        %v10627 = vrot.slane %v10625, 4
        %v10628 = vor.u32 %v10627, %v10623
        %v10629 = vrot.slane %v10628, 4
        %v10631 = vshll.u32 %v10568, 16
        %v10633 = vrot.slane %v10631, 5
        %v10634 = vsel %vm938, %v10629, %v10633
        %v10636 = vshrl.u32 %v10569, 16
        %v10638 = vrot.slane %v10636, 4
        %v10639 = vshll.u32 %v10569, 16
        %v10641 = vrot.slane %v10639, 5
        %v10642 = vor.u32 %v10638, %v10641
        %v10643 = vrot.slane %v10642, 4
        %v10645 = vshll.u32 %v10570, 16
        %v10647 = vrot.slane %v10645, 5
        %v10648 = vsel %vm938, %v10643, %v10647
        %v10649 = vshrl.u32 %v10570, 16
        %v10651 = vrot.slane %v10649, 4
        %v10652 = vor.u32 %v10651, %v10647
        %v10653 = vrot.slane %v10652, 4
        %v10655 = vshll.u32 %v10571, 16
        %v10657 = vrot.slane %v10655, 5
        %v10658 = vsel %vm938, %v10653, %v10657
        %v10660 = vshrl.u32 %v10572, 16
        %v10662 = vrot.slane %v10660, 4
        %v10663 = vshll.u32 %v10572, 16
        %v10665 = vrot.slane %v10663, 5
        %v10666 = vor.u32 %v10662, %v10665
        %v10667 = vrot.slane %v10666, 4
        %v10669 = vshll.u32 %v10573, 16
        %v10671 = vrot.slane %v10669, 5
        %v10672 = vsel %vm938, %v10667, %v10671
        %v10673 = vshrl.u32 %v10573, 16
        %v10675 = vrot.slane %v10673, 4
        %v10676 = vor.u32 %v10675, %v10671
        %v10677 = vrot.slane %v10676, 4
        %v10679 = vshll.u32 %v10574, 16
        %v10681 = vrot.slane %v10679, 5
        %v10682 = vsel %vm938, %v10677, %v10681
        %v10684 = vshrl.u32 %v10575, 16
        %v10686 = vrot.slane %v10684, 4
        %v10687 = vshll.u32 %v10575, 16
        %v10689 = vrot.slane %v10687, 5
        %v10690 = vor.u32 %v10686, %v10689
        %v10691 = vrot.slane %v10690, 4
        %v10693 = vshll.u32 %v10576, 16
        %v10695 = vrot.slane %v10693, 5
        %v10696 = vsel %vm938, %v10691, %v10695
        %v10697 = vshrl.u32 %v10576, 16
        %v10699 = vrot.slane %v10697, 4
        %v10700 = vor.u32 %v10699, %v10695
        %v10701 = vrot.slane %v10700, 4
        %v10703 = vshll.u32 %v10577, 16
        %v10705 = vrot.slane %v10703, 5
        %v10706 = vsel %vm938, %v10701, %v10705
        %v10708 = vshrl.u32 %v10578, 16
        %v10710 = vrot.slane %v10708, 4
        %v10711 = vshll.u32 %v10578, 16
        %v10713 = vrot.slane %v10711, 5
        %v10714 = vor.u32 %v10710, %v10713
        %v10715 = vrot.slane %v10714, 4
        %v10717 = vshll.u32 %v10579, 16
        %v10719 = vrot.slane %v10717, 5
        %v10720 = vsel %vm938, %v10715, %v10719
        %v10721 = vshrl.u32 %v10579, 16
        %v10723 = vrot.slane %v10721, 4
        %v10724 = vor.u32 %v10723, %v10719
        %v10725 = vrot.slane %v10724, 4
        %v10727 = vshll.u32 %v10580, 16
        %v10729 = vrot.slane %v10727, 5
        %v10730 = vsel %vm938, %v10725, %v10729
        %v10732 = vshrl.u32 %v10581, 16
        %v10734 = vrot.slane %v10732, 4
        %v10735 = vshll.u32 %v10581, 16
        %v10737 = vrot.slane %v10735, 5
        %v10738 = vor.u32 %v10734, %v10737
        %v10739 = vrot.slane %v10738, 4
        %v10741 = vshll.u32 %v10582, 16
        %v10743 = vrot.slane %v10741, 5
        %v10744 = vsel %vm938, %v10739, %v10743
        %v10745 = vshrl.u32 %v10582, 16
        %v10747 = vrot.slane %v10745, 4
        %v10748 = vor.u32 %v10747, %v10743
        %v10749 = vrot.slane %v10748, 4
        %v10751 = vshll.u32 %v10583, 16
        %v10753 = vrot.slane %v10751, 5
        %v10754 = vsel %vm938, %v10749, %v10753
        %v10756 = vshrl.u32 %v10584, 16
        %v10758 = vrot.slane %v10756, 4
        %v10759 = vshll.u32 %v10584, 16
        %v10761 = vrot.slane %v10759, 5
        %v10762 = vor.u32 %v10758, %v10761
        %v10763 = vrot.slane %v10762, 4
        %v10765 = vshll.u32 %v10585, 16
        %v10767 = vrot.slane %v10765, 5
        %v10768 = vsel %vm938, %v10763, %v10767
        %v10769 = vshrl.u32 %v10585, 16
        %v10771 = vrot.slane %v10769, 4
        %v10772 = vor.u32 %v10771, %v10767
        %v10773 = vrot.slane %v10772, 4
        %v10775 = vshll.u32 %v10586, 16
        %v10777 = vrot.slane %v10775, 5
        %v10778 = vsel %vm938, %v10773, %v10777
        %v10779 = vld [vmem:[%s8288] sm:$0xf]
        %v10780 = vld [vmem:[%s8288 + $0x4] sm:$0xf]
        %v10781 = vld [vmem:[%s8288 + $0x8] sm:$0xf]
        %v10782 = vld [vmem:[%s8288 + $0xc] sm:$0xf]
        %v10783 = vld [vmem:[%s8288 + $0x10] sm:$0xf]
        %v10784 = vld [vmem:[%s8288 + $0x14] sm:$0xf]
        %v10785 = vld [vmem:[%s8288 + $0x18] sm:$0xf]
        %v10786 = vld [vmem:[%s8288 + $0x1c] sm:$0xf]
        %v10787 = vld [vmem:[%s8288 + $0x20] sm:$0xf]
        %v10788 = vld [vmem:[%s8288 + $0x24] sm:$0xf]
        %v10789 = vld [vmem:[%s8288 + $0x28] sm:$0xf]
        %v10790 = vld [vmem:[%s8288 + $0x2c] sm:$0xf]
        %v10791 = vld [vmem:[%s8288 + $0x30] sm:$0xf]
        %v10792 = vld [vmem:[%s8288 + $0x34] sm:$0xf]
        %v10793 = vld [vmem:[%s8288 + $0x38] sm:$0xf]
        %v10794 = vld [vmem:[%s8288 + $0x3c] sm:$0xf]
        %v10795 = vunpack.c.l.b16 %v10600
        %v10796 = vunpack.c.l.b16 %v10610
        %v10797 = vunpack.c.l.b16 %v10624
        %v10798 = vunpack.c.l.b16 %v10634
        %v10799 = vunpack.c.l.b16 %v10648
        %v10800 = vunpack.c.l.b16 %v10658
        %v10801 = vunpack.c.l.b16 %v10672
        %v10802 = vunpack.c.l.b16 %v10682
        %v10803 = vunpack.c.l.b16 %v10696
        %v10804 = vunpack.c.l.b16 %v10706
        %v10805 = vunpack.c.l.b16 %v10720
        %v10806 = vunpack.c.l.b16 %v10730
        %v10807 = vunpack.c.l.b16 %v10744
        %v10808 = vunpack.c.l.b16 %v10754
        %v10809 = vunpack.c.l.b16 %v10768
        %v10810 = vunpack.c.l.b16 %v10778
        %v10811 = vpack.c.b16 %v10796, %v10795
        %v10812 = vpack.c.b16 %v10798, %v10797
        %v10813 = vpack.c.b16 %v10800, %v10799
        %v10814 = vpack.c.b16 %v10802, %v10801
        %v10815 = vpack.c.b16 %v10804, %v10803
        %v10816 = vpack.c.b16 %v10806, %v10805
        %v10817 = vpack.c.b16 %v10808, %v10807
        %v10818 = vpack.c.b16 %v10810, %v10809
        %v10843 = vunpack.c.l.b16 %v10779
        %v10844 = vunpack.c.l.b16 %v10780
        %v10845 = vunpack.c.l.b16 %v10781
        %v10846 = vunpack.c.l.b16 %v10782
        %v10847 = vunpack.c.l.b16 %v10783
        %v10848 = vunpack.c.l.b16 %v10784
        %v10849 = vunpack.c.l.b16 %v10785
        %v10850 = vunpack.c.l.b16 %v10786
        %v10851 = vunpack.c.l.b16 %v10787
        %v10852 = vunpack.c.l.b16 %v10788
        %v10853 = vunpack.c.l.b16 %v10789
        %v10854 = vunpack.c.l.b16 %v10790
        %v10855 = vunpack.c.l.b16 %v10791
        %v10856 = vunpack.c.l.b16 %v10792
        %v10857 = vunpack.c.l.b16 %v10793
        %v10858 = vunpack.c.l.b16 %v10794
        %v10859 = vpack.c.b16 %v10844, %v10843
        %v10860 = vpack.c.b16 %v10846, %v10845
        %v10861 = vpack.c.b16 %v10848, %v10847
        %v10862 = vpack.c.b16 %v10850, %v10849
        %v10863 = vpack.c.b16 %v10852, %v10851
        %v10864 = vpack.c.b16 %v10854, %v10853
        %v10865 = vpack.c.b16 %v10856, %v10855
        %v10866 = vpack.c.b16 %v10858, %v10857
        %10875 = vmatpush.bf16.msra.mxu0 %v10866
        %10876 = vmatpush.bf16.msra.mxu0 %v10865
        %10877 = vmatpush.bf16.msra.mxu0 %v10864
        %10878 = vmatpush.bf16.msra.mxu0 %v10863
        %10879 = vmatpush.bf16.msra.mxu0 %v10862
        %10880 = vmatpush.bf16.msra.mxu0 %v10861
        %10881 = vmatpush.bf16.msra.mxu0 %v10860
        %10882 = vmatpush.bf16.msra.mxu0 %v10859
        %10883 = vmatmul.bf16.gmra.mxu0 %v10811
        %v10884 = vpop.f32.mrf.mxu0
        %v10885 = vadd.f32 0.0, %v10884
        %v10886 = vpop.f32.mrf.mxu0
        %v10887 = vadd.f32 0.0, %v10886
        %10888 = vmatmul.bf16.gmra.mxu0 %v10812
        %v10889 = vpop.f32.mrf.mxu0
        %v10890 = vadd.f32 0.0, %v10889
        %v10891 = vpop.f32.mrf.mxu0
        %v10892 = vadd.f32 0.0, %v10891
        %10893 = vmatmul.bf16.gmra.mxu0 %v10813
        %v10894 = vpop.f32.mrf.mxu0
        %v10895 = vadd.f32 0.0, %v10894
        %v10896 = vpop.f32.mrf.mxu0
        %v10897 = vadd.f32 0.0, %v10896
        %10898 = vmatmul.bf16.gmra.mxu0 %v10814
        %v10899 = vpop.f32.mrf.mxu0
        %v10900 = vadd.f32 0.0, %v10899
        %v10901 = vpop.f32.mrf.mxu0
        %v10902 = vadd.f32 0.0, %v10901
        %10903 = vmatmul.bf16.gmra.mxu0 %v10815
        %v10904 = vpop.f32.mrf.mxu0
        %v10905 = vadd.f32 0.0, %v10904
        %v10906 = vpop.f32.mrf.mxu0
        %v10907 = vadd.f32 0.0, %v10906
        %10908 = vmatmul.bf16.gmra.mxu0 %v10816
        %v10909 = vpop.f32.mrf.mxu0
        %v10910 = vadd.f32 0.0, %v10909
        %v10911 = vpop.f32.mrf.mxu0
        %v10912 = vadd.f32 0.0, %v10911
        %10913 = vmatmul.bf16.gmra.mxu0 %v10817
        %v10914 = vpop.f32.mrf.mxu0
        %v10915 = vadd.f32 0.0, %v10914
        %v10916 = vpop.f32.mrf.mxu0
        %v10917 = vadd.f32 0.0, %v10916
        %10918 = vmatmul.bf16.gmra.mxu0 %v10818
        %v10919 = vpop.f32.mrf.mxu0
        %v10920 = vadd.f32 0.0, %v10919
        %v10921 = vpop.f32.mrf.mxu0
        %v10922 = vadd.f32 0.0, %v10921
        %10923 = vdwg.mxu0
        %v10924 = vadd.f32 %v10547, %v10885
        %v10925 = vadd.f32 %v10548, %v10887
        %v10926 = vadd.f32 %v10549, %v10890
        %v10927 = vadd.f32 %v10550, %v10892
        %v10928 = vadd.f32 %v10551, %v10895
        %v10929 = vadd.f32 %v10552, %v10897
        %v10930 = vadd.f32 %v10553, %v10900
        %v10931 = vadd.f32 %v10554, %v10902
        %v10932 = vadd.f32 %v10555, %v10905
        %v10933 = vadd.f32 %v10556, %v10907
        %v10934 = vadd.f32 %v10557, %v10910
        %v10935 = vadd.f32 %v10558, %v10912
        %v10936 = vadd.f32 %v10559, %v10915
        %v10937 = vadd.f32 %v10560, %v10917
        %v10938 = vadd.f32 %v10561, %v10920
        %v10939 = vadd.f32 %v10562, %v10922
        %v10940 = vld [vmem:[%s10369] sm:$0xe]
        %v10941 = vld [vmem:[%s10369 + $0xc] sm:$0xe]
        %v10942 = vld [vmem:[%s10369 + $0x18] sm:$0xe]
        %v10943 = vld [vmem:[%s10369 + $0x24] sm:$0xe]
        %v10944 = vld [vmem:[%s10369 + $0x30] sm:$0xe]
        %v10945 = vld [vmem:[%s10369 + $0x3c] sm:$0xe]
        %v10946 = vld [vmem:[%s10369 + $0x48] sm:$0xe]
        %v10947 = vld [vmem:[%s10369 + $0x54] sm:$0xe]
        %v10972 = vrot.slane %v10940, 5
        %v10973 = vrot.slane %v10972, 4
        %v10974 = vrot.slane %v10564, 5
        %v10975 = vsel %vm1448, %v10973, %v10974
        %v10976 = vrot.slane %v10974, 4
        %v10977 = vrot.slane %v10565, 5
        %v10978 = vsel %vm1448, %v10976, %v10977
        %v10979 = vrot.slane %v10941, 5
        %v10980 = vrot.slane %v10979, 4
        %v10981 = vrot.slane %v10567, 5
        %v10982 = vsel %vm1448, %v10980, %v10981
        %v10983 = vrot.slane %v10981, 4
        %v10984 = vrot.slane %v10568, 5
        %v10985 = vsel %vm1448, %v10983, %v10984
        %v10986 = vrot.slane %v10942, 5
        %v10987 = vrot.slane %v10986, 4
        %v10988 = vrot.slane %v10570, 5
        %v10989 = vsel %vm1448, %v10987, %v10988
        %v10990 = vrot.slane %v10988, 4
        %v10991 = vrot.slane %v10571, 5
        %v10992 = vsel %vm1448, %v10990, %v10991
        %v10993 = vrot.slane %v10943, 5
        %v10994 = vrot.slane %v10993, 4
        %v10995 = vrot.slane %v10573, 5
        %v10996 = vsel %vm1448, %v10994, %v10995
        %v10997 = vrot.slane %v10995, 4
        %v10998 = vrot.slane %v10574, 5
        %v10999 = vsel %vm1448, %v10997, %v10998
        %v11000 = vrot.slane %v10944, 5
        %v11001 = vrot.slane %v11000, 4
        %v11002 = vrot.slane %v10576, 5
        %v11003 = vsel %vm1448, %v11001, %v11002
        %v11004 = vrot.slane %v11002, 4
        %v11005 = vrot.slane %v10577, 5
        %v11006 = vsel %vm1448, %v11004, %v11005
        %v11007 = vrot.slane %v10945, 5
        %v11008 = vrot.slane %v11007, 4
        %v11009 = vrot.slane %v10579, 5
        %v11010 = vsel %vm1448, %v11008, %v11009
        %v11011 = vrot.slane %v11009, 4
        %v11012 = vrot.slane %v10580, 5
        %v11013 = vsel %vm1448, %v11011, %v11012
        %v11014 = vrot.slane %v10946, 5
        %v11015 = vrot.slane %v11014, 4
        %v11016 = vrot.slane %v10582, 5
        %v11017 = vsel %vm1448, %v11015, %v11016
        %v11018 = vrot.slane %v11016, 4
        %v11019 = vrot.slane %v10583, 5
        %v11020 = vsel %vm1448, %v11018, %v11019
        %v11021 = vrot.slane %v10947, 5
        %v11022 = vrot.slane %v11021, 4
        %v11023 = vrot.slane %v10585, 5
        %v11024 = vsel %vm1448, %v11022, %v11023
        %v11025 = vrot.slane %v11023, 4
        %v11026 = vrot.slane %v10586, 5
        %v11027 = vsel %vm1448, %v11025, %v11026
        %v11028 = vld [vmem:[%s8538] sm:$0xf]
        %v11029 = vld [vmem:[%s8538 + $0x4] sm:$0xf]
        %v11030 = vld [vmem:[%s8538 + $0x8] sm:$0xf]
        %v11031 = vld [vmem:[%s8538 + $0xc] sm:$0xf]
        %v11032 = vld [vmem:[%s8538 + $0x10] sm:$0xf]
        %v11033 = vld [vmem:[%s8538 + $0x14] sm:$0xf]
        %v11034 = vld [vmem:[%s8538 + $0x18] sm:$0xf]
        %v11035 = vld [vmem:[%s8538 + $0x1c] sm:$0xf]
        %v11036 = vld [vmem:[%s8538 + $0x20] sm:$0xf]
        %v11037 = vld [vmem:[%s8538 + $0x24] sm:$0xf]
        %v11038 = vld [vmem:[%s8538 + $0x28] sm:$0xf]
        %v11039 = vld [vmem:[%s8538 + $0x2c] sm:$0xf]
        %v11040 = vld [vmem:[%s8538 + $0x30] sm:$0xf]
        %v11041 = vld [vmem:[%s8538 + $0x34] sm:$0xf]
        %v11042 = vld [vmem:[%s8538 + $0x38] sm:$0xf]
        %v11043 = vld [vmem:[%s8538 + $0x3c] sm:$0xf]
        %v11044 = vunpack.c.l.b16 %v10975
        %v11045 = vunpack.c.l.b16 %v10978
        %v11046 = vunpack.c.l.b16 %v10982
        %v11047 = vunpack.c.l.b16 %v10985
        %v11048 = vunpack.c.l.b16 %v10989
        %v11049 = vunpack.c.l.b16 %v10992
        %v11050 = vunpack.c.l.b16 %v10996
        %v11051 = vunpack.c.l.b16 %v10999
        %v11052 = vunpack.c.l.b16 %v11003
        %v11053 = vunpack.c.l.b16 %v11006
        %v11054 = vunpack.c.l.b16 %v11010
        %v11055 = vunpack.c.l.b16 %v11013
        %v11056 = vunpack.c.l.b16 %v11017
        %v11057 = vunpack.c.l.b16 %v11020
        %v11058 = vunpack.c.l.b16 %v11024
        %v11059 = vunpack.c.l.b16 %v11027
        %v11060 = vpack.c.b16 %v11045, %v11044
        %v11061 = vpack.c.b16 %v11047, %v11046
        %v11062 = vpack.c.b16 %v11049, %v11048
        %v11063 = vpack.c.b16 %v11051, %v11050
        %v11064 = vpack.c.b16 %v11053, %v11052
        %v11065 = vpack.c.b16 %v11055, %v11054
        %v11066 = vpack.c.b16 %v11057, %v11056
        %v11067 = vpack.c.b16 %v11059, %v11058
        %v11092 = vunpack.c.l.b16 %v11028
        %v11093 = vunpack.c.l.b16 %v11029
        %v11094 = vunpack.c.l.b16 %v11030
        %v11095 = vunpack.c.l.b16 %v11031
        %v11096 = vunpack.c.l.b16 %v11032
        %v11097 = vunpack.c.l.b16 %v11033
        %v11098 = vunpack.c.l.b16 %v11034
        %v11099 = vunpack.c.l.b16 %v11035
        %v11100 = vunpack.c.l.b16 %v11036
        %v11101 = vunpack.c.l.b16 %v11037
        %v11102 = vunpack.c.l.b16 %v11038
        %v11103 = vunpack.c.l.b16 %v11039
        %v11104 = vunpack.c.l.b16 %v11040
        %v11105 = vunpack.c.l.b16 %v11041
        %v11106 = vunpack.c.l.b16 %v11042
        %v11107 = vunpack.c.l.b16 %v11043
        %v11108 = vpack.c.b16 %v11093, %v11092
        %v11109 = vpack.c.b16 %v11095, %v11094
        %v11110 = vpack.c.b16 %v11097, %v11096
        %v11111 = vpack.c.b16 %v11099, %v11098
        %v11112 = vpack.c.b16 %v11101, %v11100
        %v11113 = vpack.c.b16 %v11103, %v11102
        %v11114 = vpack.c.b16 %v11105, %v11104
        %v11115 = vpack.c.b16 %v11107, %v11106
        %11124 = vmatpush.bf16.msra.mxu0 %v11115
        %11125 = vmatpush.bf16.msra.mxu0 %v11114
        %11126 = vmatpush.bf16.msra.mxu0 %v11113
        %11127 = vmatpush.bf16.msra.mxu0 %v11112
        %11128 = vmatpush.bf16.msra.mxu0 %v11111
        %11129 = vmatpush.bf16.msra.mxu0 %v11110
        %11130 = vmatpush.bf16.msra.mxu0 %v11109
        %11131 = vmatpush.bf16.msra.mxu0 %v11108
        %11132 = vmatmul.bf16.gmra.mxu0 %v11060
        %v11133 = vpop.f32.mrf.mxu0
        %v11134 = vadd.f32 0.0, %v11133
        %v11135 = vpop.f32.mrf.mxu0
        %v11136 = vadd.f32 0.0, %v11135
        %11137 = vmatmul.bf16.gmra.mxu0 %v11061
        %v11138 = vpop.f32.mrf.mxu0
        %v11139 = vadd.f32 0.0, %v11138
        %v11140 = vpop.f32.mrf.mxu0
        %v11141 = vadd.f32 0.0, %v11140
        %11142 = vmatmul.bf16.gmra.mxu0 %v11062
        %v11143 = vpop.f32.mrf.mxu0
        %v11144 = vadd.f32 0.0, %v11143
        %v11145 = vpop.f32.mrf.mxu0
        %v11146 = vadd.f32 0.0, %v11145
        %11147 = vmatmul.bf16.gmra.mxu0 %v11063
        %v11148 = vpop.f32.mrf.mxu0
        %v11149 = vadd.f32 0.0, %v11148
        %v11150 = vpop.f32.mrf.mxu0
        %v11151 = vadd.f32 0.0, %v11150
        %11152 = vmatmul.bf16.gmra.mxu0 %v11064
        %v11153 = vpop.f32.mrf.mxu0
        %v11154 = vadd.f32 0.0, %v11153
        %v11155 = vpop.f32.mrf.mxu0
        %v11156 = vadd.f32 0.0, %v11155
        %11157 = vmatmul.bf16.gmra.mxu0 %v11065
        %v11158 = vpop.f32.mrf.mxu0
        %v11159 = vadd.f32 0.0, %v11158
        %v11160 = vpop.f32.mrf.mxu0
        %v11161 = vadd.f32 0.0, %v11160
        %11162 = vmatmul.bf16.gmra.mxu0 %v11066
        %v11163 = vpop.f32.mrf.mxu0
        %v11164 = vadd.f32 0.0, %v11163
        %v11165 = vpop.f32.mrf.mxu0
        %v11166 = vadd.f32 0.0, %v11165
        %11167 = vmatmul.bf16.gmra.mxu0 %v11067
        %v11168 = vpop.f32.mrf.mxu0
        %v11169 = vadd.f32 0.0, %v11168
        %v11170 = vpop.f32.mrf.mxu0
        %v11171 = vadd.f32 0.0, %v11170
        %11172 = vdwg.mxu0
        %v11173 = vadd.f32 %v10924, %v11134
        %v11174 = vadd.f32 %v10925, %v11136
        %v11175 = vadd.f32 %v10926, %v11139
        %v11176 = vadd.f32 %v10927, %v11141
        %v11177 = vadd.f32 %v10928, %v11144
        %v11178 = vadd.f32 %v10929, %v11146
        %v11179 = vadd.f32 %v10930, %v11149
        %v11180 = vadd.f32 %v10931, %v11151
        %v11181 = vadd.f32 %v10932, %v11154
        %v11182 = vadd.f32 %v10933, %v11156
        %v11183 = vadd.f32 %v10934, %v11159
        %v11184 = vadd.f32 %v10935, %v11161
        %v11185 = vadd.f32 %v10936, %v11164
        %v11186 = vadd.f32 %v10937, %v11166
        %v11187 = vadd.f32 %v10938, %v11169
        %v11188 = vadd.f32 %v10939, %v11171
        %v11189 = vmul.f32 %v11173, %v8701
        %v11190 = vmul.f32 %v11174, %v8701
        %v11191 = vmul.f32 %v11175, %v8701
        %v11192 = vmul.f32 %v11176, %v8701
        %v11193 = vmul.f32 %v11177, %v8701
        %v11194 = vmul.f32 %v11178, %v8701
        %v11195 = vmul.f32 %v11179, %v8701
        %v11196 = vmul.f32 %v11180, %v8701
        %v11197 = vmul.f32 %v11181, %v8701
        %v11198 = vmul.f32 %v11182, %v8701
        %v11199 = vmul.f32 %v11183, %v8701
        %v11200 = vmul.f32 %v11184, %v8701
        %v11201 = vmul.f32 %v11185, %v8701
        %v11202 = vmul.f32 %v11186, %v8701
        %v11203 = vmul.f32 %v11187, %v8701
        %v11204 = vmul.f32 %v11188, %v8701
        %v11205 = vadd.f32 %v11189, %v8720
        %v11206 = vadd.f32 %v11190, %v8720
        %v11207 = vadd.f32 %v11191, %v8720
        %v11208 = vadd.f32 %v11192, %v8720
        %v11209 = vadd.f32 %v11193, %v8720
        %v11210 = vadd.f32 %v11194, %v8720
        %v11211 = vadd.f32 %v11195, %v8720
        %v11212 = vadd.f32 %v11196, %v8720
        %v11213 = vadd.f32 %v11197, %v8720
        %v11214 = vadd.f32 %v11198, %v8720
        %v11215 = vadd.f32 %v11199, %v8720
        %v11216 = vadd.f32 %v11200, %v8720
        %v11217 = vadd.f32 %v11201, %v8720
        %v11218 = vadd.f32 %v11202, %v8720
        %v11219 = vadd.f32 %v11203, %v8720
        %v11220 = vadd.f32 %v11204, %v8720
        %v11221 = vmax.f32 %v11205, 0.0
        %v11222 = vmax.f32 %v11206, 0.0
        %v11223 = vmax.f32 %v11207, 0.0
        %v11224 = vmax.f32 %v11208, 0.0
        %v11225 = vmax.f32 %v11209, 0.0
        %v11226 = vmax.f32 %v11210, 0.0
        %v11227 = vmax.f32 %v11211, 0.0
        %v11228 = vmax.f32 %v11212, 0.0
        %v11229 = vmax.f32 %v11213, 0.0
        %v11230 = vmax.f32 %v11214, 0.0
        %v11231 = vmax.f32 %v11215, 0.0
        %v11232 = vmax.f32 %v11216, 0.0
        %v11233 = vmax.f32 %v11217, 0.0
        %v11234 = vmax.f32 %v11218, 0.0
        %v11235 = vmax.f32 %v11219, 0.0
        %v11236 = vmax.f32 %v11220, 0.0
        %v11237 = vpack.c.bf16 %v11221, %v11221
        %v11238 = vpack.c.bf16 %v11222, %v11222
        %v11239 = vpack.c.bf16 %v11223, %v11223
        %v11240 = vpack.c.bf16 %v11224, %v11224
        %v11241 = vpack.c.bf16 %v11225, %v11225
        %v11242 = vpack.c.bf16 %v11226, %v11226
        %v11243 = vpack.c.bf16 %v11227, %v11227
        %v11244 = vpack.c.bf16 %v11228, %v11228
        %v11245 = vpack.c.bf16 %v11229, %v11229
        %v11246 = vpack.c.bf16 %v11230, %v11230
        %v11247 = vpack.c.bf16 %v11231, %v11231
        %v11248 = vpack.c.bf16 %v11232, %v11232
        %v11249 = vpack.c.bf16 %v11233, %v11233
        %v11250 = vpack.c.bf16 %v11234, %v11234
        %v11251 = vpack.c.bf16 %v11235, %v11235
        %v11252 = vpack.c.bf16 %v11236, %v11236
        %s11253 = scalar_lea.vmem %s305, 64 [#allocation9]
        %11254 = vst [vmem:[%s11253] sm:$0xf] %v11237
        %11255 = vst [vmem:[%s11253 + $0x4] sm:$0xf] %v11238
        %11256 = vst [vmem:[%s11253 + $0x8] sm:$0xf] %v11239
        %11257 = vst [vmem:[%s11253 + $0xc] sm:$0xf] %v11240
        %11258 = vst [vmem:[%s11253 + $0x10] sm:$0xf] %v11241
        %11259 = vst [vmem:[%s11253 + $0x14] sm:$0xf] %v11242
        %11260 = vst [vmem:[%s11253 + $0x18] sm:$0xf] %v11243
        %11261 = vst [vmem:[%s11253 + $0x1c] sm:$0xf] %v11244
        %11262 = vst [vmem:[%s11253 + $0x20] sm:$0xf] %v11245
        %11263 = vst [vmem:[%s11253 + $0x24] sm:$0xf] %v11246
        %11264 = vst [vmem:[%s11253 + $0x28] sm:$0xf] %v11247
        %11265 = vst [vmem:[%s11253 + $0x2c] sm:$0xf] %v11248
        %11266 = vst [vmem:[%s11253 + $0x30] sm:$0xf] %v11249
        %11267 = vst [vmem:[%s11253 + $0x34] sm:$0xf] %v11250
        %11268 = vst [vmem:[%s11253 + $0x38] sm:$0xf] %v11251
        %11269 = vst [vmem:[%s11253 + $0x3c] sm:$0xf] %v11252
        %s11270 = sand.u32 %s183, 1
        %s11271 = scalar_lea.sflag [#allocation6], %s11270
        %s11272 = sand.u32 %s183, 1
        %s11273 = smul.addr %s11272, 128
        %s11274 = scalar_lea.vmem [#allocation9], %s11273
        // Predicated region
        $region57: #{tpu_custom_call.1} parent=47 // pred_check
          %p11275 = pneg %p193
        $region58: #{tpu_custom_call.1} parent=47 // pred_check_branch
          %11277 = sbr.rel (%p11275) target = $region60
        $region59: #{tpu_custom_call.1} parent=47 // pred_region
          %11279 = vsyncadd %s11271, 0
          %s11280 = smul.addr %s23, 32
          %s11281 = smul.addr %s11280, 4
          %s11282 = scalar_lea.hbm %s7, %s11281
          %s11283 = sshll.u32 %s11274, 4
          %s11284 = int_to_ptr.vmem [resolvable:$true] %s11283
          %s11285 = sshll.u32 %s11282, 4
          %s11286 = int_to_ptr.hbm [resolvable:$true] %s11285
          %11291 = dma.vmem_to_hbm [thread:$0]  %s11284, 2048, %s11286, %s11271, 64, 64, 4
        $region60: #{tpu_custom_call.1} parent=47 // pred_fallthru
          _
      $region48: #{tpu_custom_call.1} parent=5 // pred_fallthru
        _
      %p11292 = scmp.le.s32.totalorder 2, %s18
      // Predicated region
      $region61: #{tpu_custom_call.1} parent=5 // pred_check
        %p11293 = pneg %p11292
      $region62: #{tpu_custom_call.1} parent=5 // pred_check_branch
        %11295 = sbr.rel (%p11293) target = $region64
      $region63: #{tpu_custom_call.1} parent=5 // pred_region
        %s11296 = ssub.s32 %s18, 2
        // Predicated region
        $region65: #{tpu_custom_call.1} parent=63 // pred_check
          %p11297 = pneg %p199
        $region66: #{tpu_custom_call.1} parent=63 // pred_check_branch
          %11299 = sbr.rel (%p11297) target = $region68
        $region67: #{tpu_custom_call.1} parent=63 // pred_region
          %s11300 = sand.u32 %s184, 1
          %s11301 = scalar_lea.sflag [#allocation6], %s11300
          %s11302 = sand.u32 %s184, 1
          %s11303 = smul.addr %s11302, 128
          %s11304 = scalar_lea.vmem [#allocation9], %s11303
          %11306 = dma.done %s11301, 2048
        $region68: #{tpu_custom_call.1} parent=63 // pred_fallthru
          _
      $region64: #{tpu_custom_call.1} parent=5 // pred_fallthru
        _
    $region6: #{tpu_custom_call.1} parent=1 // loop_footer
      %s22 = sadd.s32 1, %s18
    $region7: #{tpu_custom_call.1} parent=1 // loop_footer_branch
      %17 = sbr.rel target = $region3
    $region8: #{tpu_custom_call.1} parent=1 // loop_exit
      _
    %11307 = vsyncpa [#allocation5], 1
    %s11308 = scalar_lea.sflag [#allocation5], 1
    %11309 = vsyncpa %s11308, 1
    %11310 = vsyncpa [#allocation8], 1
    %11311 = vsyncpa [#allocation6], 1
    %s11312 = scalar_lea.sflag [#allocation6], 1
    %11313 = vsyncpa %s11312, 1

</llo_original>
